<compile_context>
chip_gen: v7x
topology: tpu7x:2x2x1
jax: 0.10.0
libtpu: 0.0.40
codegen_flags: <defaults>
</compile_context>

<pallas_src>
import numpy as np

import jax
import jax.numpy as jnp
from jax.experimental import pallas as pl
from jax.experimental.pallas import tpu as pltpu

# MXU operand dtype (review item). Accumulation + epilogue remain f32.
COMPUTE_DTYPE = jnp.bfloat16


def _round_up(x, m):
    return ((x + m - 1) // m) * m


# ----------------------------------------------------------------------------
# Fused Pallas kernel: one grid step pushes a tile of B images through the net.
# Activations are channels-last slabs (rows = batch*height, lanes = width*ch).
# The row half of each 2x2 avg-pool is fused into the following conv's taps,
# producing a row-"dilated" output whose valid rows sit at even offsets.
# ----------------------------------------------------------------------------
def _lenet5_kernel(x_ref, m1_ref, b1_ref, pw1_ref,
                   m2_ref, b2_ref, pw2_ref,
                   m3_ref, b3_ref,
                   f1w_ref, f1b_ref, f2w_ref, f2b_ref,
                   o_ref):
    def dot32(a, b):
        return jnp.dot(a, b, preferred_element_type=jnp.float32)

    x = x_ref[...]                                        # (B, 28, 28)
    bsz = x.shape[0]
    dt = x.dtype

    # conv1 (5x5, 1->6) + ReLU: 5 banded taps, batch on the MXU M axis.
    acc = dot32(x[:, 0:24, :].reshape(bsz * 24, 28), m1_ref[0])
    for i in range(1, 5):
        acc = acc + dot32(x[:, i:i + 24, :].reshape(bsz * 24, 28), m1_ref[i])
    y1 = jnp.maximum(acc + b1_ref[...], 0.0).astype(dt)   # (B*24, 144) = 24x24x6

    # pool1, column half only (0.25 folded into pw1); row half fused below.
    q1 = dot32(y1, pw1_ref[...]).astype(dt).reshape(bsz, 24, 72)

    # conv2 (5x5, 6->16) + ReLU fused with pool1's row sum:
    #   acc[j] = sum_{k=0..9} q1[j+k] @ M2[k//2], valid conv2 rows at even j.
    acc = dot32(q1[:, 0:15, :].reshape(bsz * 15, 72), m2_ref[0])
    for k in range(1, 10):
        acc = acc + dot32(q1[:, k:k + 15, :].reshape(bsz * 15, 72),
                          m2_ref[k // 2])
    y2 = jnp.maximum(acc + b2_ref[...], 0.0).astype(dt)   # (B*15, 128), dilated

    # pool2, column half only (0.25 folded into pw2).
    q2 = dot32(y2, pw2_ref[...]).astype(dt).reshape(bsz, 15, 64)

    # conv3 (4x4, 16->120, 1x1 output) + ReLU fused with pool2's row sum:
    #   p2[i] = q2[4i] + q2[4i+2]  (valid rows of q2 sit at even offsets).
    acc = dot32(q2[:, 0, :] + q2[:, 2, :], m3_ref[0])
    for i in range(1, 4):
        acc = acc + dot32(q2[:, 4 * i, :] + q2[:, 4 * i + 2, :], m3_ref[i])
    y3 = jnp.maximum(acc + b3_ref[...], 0.0).astype(dt)   # (B, 120) == flatten

    # classifier: Linear(120->84) + Tanh + Linear(84->n, lane-padded to 128).
    h = jnp.tanh(dot32(y3, f1w_ref[...]) + f1b_ref[...])            # (B, 84) f32
    o = dot32(h.astype(dt), f2w_ref[...]) + f2b_ref[...]            # (B, 128) f32
    o_ref[...] = o.astype(o_ref.dtype)                    # lane-dense store


# ----------------------------------------------------------------------------
# Host-side (one-time) weight folding into the layout the kernel consumes.
# ----------------------------------------------------------------------------
def _band_matrices(w, H, W):
    """PyTorch OIHW conv weight -> (KH, W*Cin, OW*Cout) banded matrices so that
    conv(a) = sum_i a[i:i+OH, :] @ M[i] on the (H, W*Cin) layout."""
    w = np.asarray(w, np.float32)
    Cout, Cin, KH, KW = w.shape
    OW = W - KW + 1
    M = np.zeros((KH, W * Cin, OW * Cout), np.float32)
    for i in range(KH):
        for j in range(KW):
            wij = w[:, :, i, j].T                                  # (Cin, Cout)
            for ow in range(OW):
                M[i, (ow + j) * Cin:(ow + j + 1) * Cin,
                  ow * Cout:(ow + 1) * Cout] = wij
    return M


def _col_pool_matrix(W, C):
    """Column half of the 2x2 avg pool on the (rows, W*C) layout, with the
    full 0.25 window factor folded in (the row half is a plain sum)."""
    Pw = np.zeros((W * C, (W // 2) * C), np.float32)
    eye = 0.25 * np.eye(C, dtype=np.float32)
    for p in range(W // 2):
        for dj in range(2):
            Pw[(2 * p + dj) * C:(2 * p + dj + 1) * C, p * C:(p + 1) * C] = eye
    return Pw


def _tiled_bias(b, OW):
    """Bias for the (rows, OW*Cout) layout: repeat per output column group."""
    return np.tile(np.asarray(b, np.float32), OW)[None, :]


def prepare_params(params):
    """Fold PyTorch-layout parameters into kernel operands (done once)."""
    f1w = np.asarray(params["f1w"], np.float32)            # (84, 120)
    f2w_raw = np.asarray(params["f2w"], np.float32)        # (n_classes, 84)
    f2b_raw = np.asarray(params["f2b"], np.float32)        # (n_classes,)
    n_classes = f2w_raw.shape[0]
    out_lanes = max(128, _round_up(n_classes, 128))        # lane-dense output

    f2w = np.zeros((f2w_raw.shape[1], out_lanes), np.float32)
    f2w[:, :n_classes] = f2w_raw.T
    f2b = np.zeros((1, out_lanes), np.float32)
    f2b[0, :n_classes] = f2b_raw

    prep = {
        "m1": _band_matrices(params["c1w"], 28, 28),    # (5, 28, 144)
        "b1": _tiled_bias(params["c1b"], 24),           # (1, 144)
        "pw1": _col_pool_matrix(24, 6),                 # (144, 72), 0.25 folded
        "m2": _band_matrices(params["c2w"], 12, 12),    # (5, 72, 128)
        "b2": _tiled_bias(params["c2b"], 8),            # (1, 128)
        "pw2": _col_pool_matrix(8, 16),                 # (128, 64), 0.25 folded
        "m3": _band_matrices(params["c3w"], 4, 4),      # (4, 64, 120)
        "b3": _tiled_bias(params["c3b"], 1),            # (1, 120)
        "f1w": f1w.T,                                   # (120, 84)
        "f1b": np.asarray(params["f1b"], np.float32)[None, :],  # (1, 84)
        "f2w": f2w,                                     # (84, 128) padded
        "f2b": f2b,                                     # (1, 128)  padded
    }
    f32_names = {"b1", "b2", "b3", "f1b", "f2b"}        # f32 epilogue
    return {k: jnp.asarray(v, jnp.float32 if k in f32_names else COMPUTE_DTYPE)
            for k, v in prep.items()}


_WEIGHT_ORDER = ("m1", "b1", "pw1", "m2", "b2", "pw2",
                 "m3", "b3", "f1w", "f1b", "f2w", "f2b")


def lenet5_tanh_forward(prepared, x, n_classes, *, b_tile=128):
    """x: (N, 1, 28, 28) NCHW float input -> (N, n_classes) f32 logits."""
    N, C, H, W = x.shape
    assert (C, H, W) == (1, 28, 28), x.shape
    out_lanes = prepared["f2w"].shape[1]

    # Batch tile: big enough to fill the MXU M axis, but aim for >= 2 grid
    # steps so the ("parallel",) axis can shard across both TensorCores on
    # v7x (v5e/v6e have one TC; harmless there).  Multiple of 8 sublanes.
    bt = max(8, min(b_tile, _round_up(-(-N // 2), 8)))
    n_pad = _round_up(N, bt)

    x2 = x.reshape(N, 28, 28).astype(COMPUTE_DTYPE)      # C == 1, bf16 DMA
    if n_pad != N:
        x2 = jnp.concatenate(
            [x2, jnp.zeros((n_pad - N, 28, 28), COMPUTE_DTYPE)], axis=0)

    def whole_array_spec(shape):
        zeros = (0,) * len(shape)
        return pl.BlockSpec(shape, lambda n, _z=zeros: _z)   # resident weights

    in_specs = [pl.BlockSpec((bt, 28, 28), lambda n: (n, 0, 0))]
    operands = [x2]
    for name in _WEIGHT_ORDER:
        arr = prepared[name]
        in_specs.append(whole_array_spec(arr.shape))
        operands.append(arr)

    out = pl.pallas_call(
        _lenet5_kernel,
        grid=(n_pad // bt,),
        in_specs=in_specs,
        out_specs=pl.BlockSpec((bt, out_lanes), lambda n: (n, 0)),
        out_shape=jax.ShapeDtypeStruct((n_pad, out_lanes), jnp.float32),
        compiler_params=pltpu.CompilerParams(
            dimension_semantics=("parallel",)),          # megacore-shard batch
    )(*operands)
    return out[:N, :n_classes]


# ----------------------------------------------------------------------------
# Parameters + pure-JAX reference (correctness sanity check)
# ----------------------------------------------------------------------------
def _uniform(key, shape, fan_in):
    bound = 1.0 / (fan_in ** 0.5)
    return jax.random.uniform(key, shape, jnp.float32, -bound, bound)


def init_params(key, n_classes=10):
    ks = jax.random.split(key, 10)
    f = [6, 16, 120, 84]
    return {
        "c1w": _uniform(ks[0], (f[0], 1, 5, 5), 1 * 5 * 5),
        "c1b": _uniform(ks[1], (f[0],), 1 * 5 * 5),
        "c2w": _uniform(ks[2], (f[1], f[0], 5, 5), f[0] * 5 * 5),
        "c2b": _uniform(ks[3], (f[1],), f[0] * 5 * 5),
        "c3w": _uniform(ks[4], (f[2], f[1], 4, 4), f[1] * 4 * 4),
        "c3b": _uniform(ks[5], (f[2],), f[1] * 4 * 4),
        "f1w": _uniform(ks[6], (f[3], f[2]), f[2]),     # PyTorch Linear (out, in)
        "f1b": _uniform(ks[7], (f[3],), f[2]),
        "f2w": _uniform(ks[8], (n_classes, f[3]), f[3]),
        "f2b": _uniform(ks[9], (n_classes,), f[3]),
    }


def ref_forward(params, x):
    def conv(x, w, b):
        y = jax.lax.conv_general_dilated(
            x, w, (1, 1), "VALID", dimension_numbers=("NCHW", "OIHW", "NCHW"))
        return jax.nn.relu(y + b[None, :, None, None])

    def pool(x):
        N, C, H, W = x.shape
        return x.reshape(N, C, H // 2, 2, W // 2, 2).mean(axis=(3, 5))

    x = pool(conv(x, params["c1w"], params["c1b"]))
    x = pool(conv(x, params["c2w"], params["c2b"]))
    x = conv(x, params["c3w"], params["c3b"])
    x = x.reshape(x.shape[0], -1)
    x = jnp.tanh(x @ params["f1w"].T + params["f1b"])
    return x @ params["f2w"].T + params["f2b"]


if __name__ == "__main__":
    n_classes = 10
    key = jax.random.PRNGKey(0)
    k_in, k_par = jax.random.split(key)

    params = init_params(k_par, n_classes=n_classes)
    prepared = prepare_params(params)

    fwd = jax.jit(lenet5_tanh_forward, static_argnames=("n_classes", "b_tile"))

    # Small smoke test (exercises the batch-padding path: 2 -> one 8-image tile).
    x_small = jax.random.normal(k_in, (2, 1, 28, 28), dtype=jnp.float32)
    logits = fwd(prepared, x_small, n_classes=n_classes)
    jax.block_until_ready(logits)
    ref = ref_forward(params, x_small)
    assert logits.shape == (2, n_classes), logits.shape
    assert jnp.allclose(logits, ref, atol=5e-2, rtol=5e-2), (
        "Pallas output mismatch vs JAX reference (small batch)")

    # Larger batch: two grid steps of 128 images (megacore-shardable on v7x).
    x_big = jax.random.normal(jax.random.PRNGKey(1), (256, 1, 28, 28),
                              dtype=jnp.float32)
    logits_big = fwd(prepared, x_big, n_classes=n_classes)
    jax.block_until_ready(logits_big)
    ref_big = ref_forward(params, x_big)
    assert logits_big.shape == (256, n_classes), logits_big.shape
    assert jnp.allclose(logits_big, ref_big, atol=1e-1, rtol=1e-1), (
        "Pallas output mismatch vs JAX reference (batch 256)")

    print("KERNEL_OK")
</pallas_src>

<mosaic_0001>
module attributes {stable_mosaic.version = 11 : i64} {
  func.func @_lenet5_kernel(%arg0: i32, %arg1: memref<8x28x28xbf16, #tpu.memory_space<vmem>>, %arg2: memref<5x28x144xbf16, #tpu.memory_space<vmem>>, %arg3: memref<1x144xf32, #tpu.memory_space<vmem>>, %arg4: memref<144x72xbf16, #tpu.memory_space<vmem>>, %arg5: memref<5x72x128xbf16, #tpu.memory_space<vmem>>, %arg6: memref<1x128xf32, #tpu.memory_space<vmem>>, %arg7: memref<128x64xbf16, #tpu.memory_space<vmem>>, %arg8: memref<4x64x120xbf16, #tpu.memory_space<vmem>>, %arg9: memref<1x120xf32, #tpu.memory_space<vmem>>, %arg10: memref<120x84xbf16, #tpu.memory_space<vmem>>, %arg11: memref<1x84xf32, #tpu.memory_space<vmem>>, %arg12: memref<84x128xbf16, #tpu.memory_space<vmem>>, %arg13: memref<1x128xf32, #tpu.memory_space<vmem>>, %arg14: memref<8x128xf32, #tpu.memory_space<vmem>>) attributes {dimension_semantics = [#tpu.dimension_semantics<parallel>], iteration_bounds = array<i64: 1>, scalar_prefetch = 0 : i64, scratch_operands = 0 : i64, tpu.core_type = #tpu.core_type<tc>, window_params = [{transform_indices = @transform_0, window_bounds = array<i64: 8, 28, 28>}, {pipeline_mode = #tpu.pipeline_mode<synchronous>, transform_indices = @transform_1, window_bounds = array<i64: 5, 28, 144>}, {pipeline_mode = #tpu.pipeline_mode<synchronous>, transform_indices = @transform_2, window_bounds = array<i64: 1, 144>}, {pipeline_mode = #tpu.pipeline_mode<synchronous>, transform_indices = @transform_3, window_bounds = array<i64: 144, 72>}, {pipeline_mode = #tpu.pipeline_mode<synchronous>, transform_indices = @transform_4, window_bounds = array<i64: 5, 72, 128>}, {pipeline_mode = #tpu.pipeline_mode<synchronous>, transform_indices = @transform_5, window_bounds = array<i64: 1, 128>}, {pipeline_mode = #tpu.pipeline_mode<synchronous>, transform_indices = @transform_6, window_bounds = array<i64: 128, 64>}, {pipeline_mode = #tpu.pipeline_mode<synchronous>, transform_indices = @transform_7, window_bounds = array<i64: 4, 64, 120>}, {pipeline_mode = #tpu.pipeline_mode<synchronous>, transform_indices = @transform_8, window_bounds = array<i64: 1, 120>}, {pipeline_mode = #tpu.pipeline_mode<synchronous>, transform_indices = @transform_9, window_bounds = array<i64: 120, 84>}, {pipeline_mode = #tpu.pipeline_mode<synchronous>, transform_indices = @transform_10, window_bounds = array<i64: 1, 84>}, {pipeline_mode = #tpu.pipeline_mode<synchronous>, transform_indices = @transform_11, window_bounds = array<i64: 84, 128>}, {pipeline_mode = #tpu.pipeline_mode<synchronous>, transform_indices = @transform_12, window_bounds = array<i64: 1, 128>}, {transform_indices = @transform_13, window_bounds = array<i64: 8, 128>}]} {
    %c0 = arith.constant 0 : index
    %c0_0 = arith.constant 0 : index
    %c0_1 = arith.constant 0 : index
    %0 = vector.load %arg1[%c0, %c0_0, %c0_1] : memref<8x28x28xbf16, #tpu.memory_space<vmem>>, vector<8x28x28xbf16>
    %1 = vector.extract_strided_slice %0 {offsets = [0, 0, 0], sizes = [8, 24, 28], strides = [1, 1, 1]} : vector<8x28x28xbf16> to vector<8x24x28xbf16>
    %2 = vector.shape_cast %1 : vector<8x24x28xbf16> to vector<192x28xbf16>
    %c0_2 = arith.constant 0 : index
    %c0_3 = arith.constant 0 : index
    %c0_4 = arith.constant 0 : index
    %3 = vector.load %arg2[%c0_2, %c0_3, %c0_4] : memref<5x28x144xbf16, #tpu.memory_space<vmem>>, vector<1x28x144xbf16>
    %4 = vector.shape_cast %3 : vector<1x28x144xbf16> to vector<28x144xbf16>
    %cst = arith.constant dense<0.000000e+00> : vector<192x144xf32>
    %5 = tpu.matmul %2, %4, %cst {dimension_numbers = #tpu.dot_dimension_numbers<[1], [0], [0], [1], [0, 0, 1, 1], [], []>} : vector<192x28xbf16>, vector<28x144xbf16>, vector<192x144xf32> -> vector<192x144xf32>
    %6 = vector.extract_strided_slice %0 {offsets = [0, 1, 0], sizes = [8, 24, 28], strides = [1, 1, 1]} : vector<8x28x28xbf16> to vector<8x24x28xbf16>
    %7 = vector.shape_cast %6 : vector<8x24x28xbf16> to vector<192x28xbf16>
    %c1 = arith.constant 1 : index
    %c0_5 = arith.constant 0 : index
    %c0_6 = arith.constant 0 : index
    %8 = vector.load %arg2[%c1, %c0_5, %c0_6] : memref<5x28x144xbf16, #tpu.memory_space<vmem>>, vector<1x28x144xbf16>
    %9 = vector.shape_cast %8 : vector<1x28x144xbf16> to vector<28x144xbf16>
    %cst_7 = arith.constant dense<0.000000e+00> : vector<192x144xf32>
    %10 = tpu.matmul %7, %9, %cst_7 {dimension_numbers = #tpu.dot_dimension_numbers<[1], [0], [0], [1], [0, 0, 1, 1], [], []>} : vector<192x28xbf16>, vector<28x144xbf16>, vector<192x144xf32> -> vector<192x144xf32>
    %11 = arith.addf %5, %10 : vector<192x144xf32>
    %12 = vector.extract_strided_slice %0 {offsets = [0, 2, 0], sizes = [8, 24, 28], strides = [1, 1, 1]} : vector<8x28x28xbf16> to vector<8x24x28xbf16>
    %13 = vector.shape_cast %12 : vector<8x24x28xbf16> to vector<192x28xbf16>
    %c2 = arith.constant 2 : index
    %c0_8 = arith.constant 0 : index
    %c0_9 = arith.constant 0 : index
    %14 = vector.load %arg2[%c2, %c0_8, %c0_9] : memref<5x28x144xbf16, #tpu.memory_space<vmem>>, vector<1x28x144xbf16>
    %15 = vector.shape_cast %14 : vector<1x28x144xbf16> to vector<28x144xbf16>
    %cst_10 = arith.constant dense<0.000000e+00> : vector<192x144xf32>
    %16 = tpu.matmul %13, %15, %cst_10 {dimension_numbers = #tpu.dot_dimension_numbers<[1], [0], [0], [1], [0, 0, 1, 1], [], []>} : vector<192x28xbf16>, vector<28x144xbf16>, vector<192x144xf32> -> vector<192x144xf32>
    %17 = arith.addf %11, %16 : vector<192x144xf32>
    %18 = vector.extract_strided_slice %0 {offsets = [0, 3, 0], sizes = [8, 24, 28], strides = [1, 1, 1]} : vector<8x28x28xbf16> to vector<8x24x28xbf16>
    %19 = vector.shape_cast %18 : vector<8x24x28xbf16> to vector<192x28xbf16>
    %c3 = arith.constant 3 : index
    %c0_11 = arith.constant 0 : index
    %c0_12 = arith.constant 0 : index
    %20 = vector.load %arg2[%c3, %c0_11, %c0_12] : memref<5x28x144xbf16, #tpu.memory_space<vmem>>, vector<1x28x144xbf16>
    %21 = vector.shape_cast %20 : vector<1x28x144xbf16> to vector<28x144xbf16>
    %cst_13 = arith.constant dense<0.000000e+00> : vector<192x144xf32>
    %22 = tpu.matmul %19, %21, %cst_13 {dimension_numbers = #tpu.dot_dimension_numbers<[1], [0], [0], [1], [0, 0, 1, 1], [], []>} : vector<192x28xbf16>, vector<28x144xbf16>, vector<192x144xf32> -> vector<192x144xf32>
    %23 = arith.addf %17, %22 : vector<192x144xf32>
    %24 = vector.extract_strided_slice %0 {offsets = [0, 4, 0], sizes = [8, 24, 28], strides = [1, 1, 1]} : vector<8x28x28xbf16> to vector<8x24x28xbf16>
    %25 = vector.shape_cast %24 : vector<8x24x28xbf16> to vector<192x28xbf16>
    %c4 = arith.constant 4 : index
    %c0_14 = arith.constant 0 : index
    %c0_15 = arith.constant 0 : index
    %26 = vector.load %arg2[%c4, %c0_14, %c0_15] : memref<5x28x144xbf16, #tpu.memory_space<vmem>>, vector<1x28x144xbf16>
    %27 = vector.shape_cast %26 : vector<1x28x144xbf16> to vector<28x144xbf16>
    %cst_16 = arith.constant dense<0.000000e+00> : vector<192x144xf32>
    %28 = tpu.matmul %25, %27, %cst_16 {dimension_numbers = #tpu.dot_dimension_numbers<[1], [0], [0], [1], [0, 0, 1, 1], [], []>} : vector<192x28xbf16>, vector<28x144xbf16>, vector<192x144xf32> -> vector<192x144xf32>
    %29 = arith.addf %23, %28 : vector<192x144xf32>
    %c0_17 = arith.constant 0 : index
    %c0_18 = arith.constant 0 : index
    %30 = vector.load %arg3[%c0_17, %c0_18] : memref<1x144xf32, #tpu.memory_space<vmem>>, vector<1x144xf32>
    %31 = vector.broadcast %30 : vector<1x144xf32> to vector<192x144xf32>
    %32 = arith.addf %29, %31 : vector<192x144xf32>
    %cst_19 = arith.constant 0.000000e+00 : f32
    %33 = vector.broadcast %cst_19 : f32 to vector<192x144xf32>
    %34 = arith.maximumf %32, %33 : vector<192x144xf32>
    %35 = arith.truncf %34 : vector<192x144xf32> to vector<192x144xbf16>
    %c0_20 = arith.constant 0 : index
    %c0_21 = arith.constant 0 : index
    %36 = vector.load %arg4[%c0_20, %c0_21] : memref<144x72xbf16, #tpu.memory_space<vmem>>, vector<144x72xbf16>
    %cst_22 = arith.constant dense<0.000000e+00> : vector<192x72xf32>
    %37 = tpu.matmul %35, %36, %cst_22 {dimension_numbers = #tpu.dot_dimension_numbers<[1], [0], [0], [1], [0, 0, 1, 1], [], []>} : vector<192x144xbf16>, vector<144x72xbf16>, vector<192x72xf32> -> vector<192x72xf32>
    %38 = arith.truncf %37 : vector<192x72xf32> to vector<192x72xbf16>
    %39 = vector.shape_cast %38 : vector<192x72xbf16> to vector<8x24x72xbf16>
    %40 = vector.extract_strided_slice %39 {offsets = [0, 0, 0], sizes = [8, 15, 72], strides = [1, 1, 1]} : vector<8x24x72xbf16> to vector<8x15x72xbf16>
    %41 = vector.shape_cast %40 : vector<8x15x72xbf16> to vector<120x72xbf16>
    %c0_23 = arith.constant 0 : index
    %c0_24 = arith.constant 0 : index
    %c0_25 = arith.constant 0 : index
    %42 = vector.load %arg5[%c0_23, %c0_24, %c0_25] : memref<5x72x128xbf16, #tpu.memory_space<vmem>>, vector<1x72x128xbf16>
    %43 = vector.shape_cast %42 : vector<1x72x128xbf16> to vector<72x128xbf16>
    %cst_26 = arith.constant dense<0.000000e+00> : vector<120x128xf32>
    %44 = tpu.matmul %41, %43, %cst_26 {dimension_numbers = #tpu.dot_dimension_numbers<[1], [0], [0], [1], [0, 0, 1, 1], [], []>} : vector<120x72xbf16>, vector<72x128xbf16>, vector<120x128xf32> -> vector<120x128xf32>
    %45 = vector.extract_strided_slice %39 {offsets = [0, 1, 0], sizes = [8, 15, 72], strides = [1, 1, 1]} : vector<8x24x72xbf16> to vector<8x15x72xbf16>
    %46 = vector.shape_cast %45 : vector<8x15x72xbf16> to vector<120x72xbf16>
    %c0_27 = arith.constant 0 : index
    %c0_28 = arith.constant 0 : index
    %c0_29 = arith.constant 0 : index
    %47 = vector.load %arg5[%c0_27, %c0_28, %c0_29] : memref<5x72x128xbf16, #tpu.memory_space<vmem>>, vector<1x72x128xbf16>
    %48 = vector.shape_cast %47 : vector<1x72x128xbf16> to vector<72x128xbf16>
    %cst_30 = arith.constant dense<0.000000e+00> : vector<120x128xf32>
    %49 = tpu.matmul %46, %48, %cst_30 {dimension_numbers = #tpu.dot_dimension_numbers<[1], [0], [0], [1], [0, 0, 1, 1], [], []>} : vector<120x72xbf16>, vector<72x128xbf16>, vector<120x128xf32> -> vector<120x128xf32>
    %50 = arith.addf %44, %49 : vector<120x128xf32>
    %51 = vector.extract_strided_slice %39 {offsets = [0, 2, 0], sizes = [8, 15, 72], strides = [1, 1, 1]} : vector<8x24x72xbf16> to vector<8x15x72xbf16>
    %52 = vector.shape_cast %51 : vector<8x15x72xbf16> to vector<120x72xbf16>
    %c1_31 = arith.constant 1 : index
    %c0_32 = arith.constant 0 : index
    %c0_33 = arith.constant 0 : index
    %53 = vector.load %arg5[%c1_31, %c0_32, %c0_33] : memref<5x72x128xbf16, #tpu.memory_space<vmem>>, vector<1x72x128xbf16>
    %54 = vector.shape_cast %53 : vector<1x72x128xbf16> to vector<72x128xbf16>
    %cst_34 = arith.constant dense<0.000000e+00> : vector<120x128xf32>
    %55 = tpu.matmul %52, %54, %cst_34 {dimension_numbers = #tpu.dot_dimension_numbers<[1], [0], [0], [1], [0, 0, 1, 1], [], []>} : vector<120x72xbf16>, vector<72x128xbf16>, vector<120x128xf32> -> vector<120x128xf32>
    %56 = arith.addf %50, %55 : vector<120x128xf32>
    %57 = vector.extract_strided_slice %39 {offsets = [0, 3, 0], sizes = [8, 15, 72], strides = [1, 1, 1]} : vector<8x24x72xbf16> to vector<8x15x72xbf16>
    %58 = vector.shape_cast %57 : vector<8x15x72xbf16> to vector<120x72xbf16>
    %c1_35 = arith.constant 1 : index
    %c0_36 = arith.constant 0 : index
    %c0_37 = arith.constant 0 : index
    %59 = vector.load %arg5[%c1_35, %c0_36, %c0_37] : memref<5x72x128xbf16, #tpu.memory_space<vmem>>, vector<1x72x128xbf16>
    %60 = vector.shape_cast %59 : vector<1x72x128xbf16> to vector<72x128xbf16>
    %cst_38 = arith.constant dense<0.000000e+00> : vector<120x128xf32>
    %61 = tpu.matmul %58, %60, %cst_38 {dimension_numbers = #tpu.dot_dimension_numbers<[1], [0], [0], [1], [0, 0, 1, 1], [], []>} : vector<120x72xbf16>, vector<72x128xbf16>, vector<120x128xf32> -> vector<120x128xf32>
    %62 = arith.addf %56, %61 : vector<120x128xf32>
    %63 = vector.extract_strided_slice %39 {offsets = [0, 4, 0], sizes = [8, 15, 72], strides = [1, 1, 1]} : vector<8x24x72xbf16> to vector<8x15x72xbf16>
    %64 = vector.shape_cast %63 : vector<8x15x72xbf16> to vector<120x72xbf16>
    %c2_39 = arith.constant 2 : index
    %c0_40 = arith.constant 0 : index
    %c0_41 = arith.constant 0 : index
    %65 = vector.load %arg5[%c2_39, %c0_40, %c0_41] : memref<5x72x128xbf16, #tpu.memory_space<vmem>>, vector<1x72x128xbf16>
    %66 = vector.shape_cast %65 : vector<1x72x128xbf16> to vector<72x128xbf16>
    %cst_42 = arith.constant dense<0.000000e+00> : vector<120x128xf32>
    %67 = tpu.matmul %64, %66, %cst_42 {dimension_numbers = #tpu.dot_dimension_numbers<[1], [0], [0], [1], [0, 0, 1, 1], [], []>} : vector<120x72xbf16>, vector<72x128xbf16>, vector<120x128xf32> -> vector<120x128xf32>
    %68 = arith.addf %62, %67 : vector<120x128xf32>
    %69 = vector.extract_strided_slice %39 {offsets = [0, 5, 0], sizes = [8, 15, 72], strides = [1, 1, 1]} : vector<8x24x72xbf16> to vector<8x15x72xbf16>
    %70 = vector.shape_cast %69 : vector<8x15x72xbf16> to vector<120x72xbf16>
    %c2_43 = arith.constant 2 : index
    %c0_44 = arith.constant 0 : index
    %c0_45 = arith.constant 0 : index
    %71 = vector.load %arg5[%c2_43, %c0_44, %c0_45] : memref<5x72x128xbf16, #tpu.memory_space<vmem>>, vector<1x72x128xbf16>
    %72 = vector.shape_cast %71 : vector<1x72x128xbf16> to vector<72x128xbf16>
    %cst_46 = arith.constant dense<0.000000e+00> : vector<120x128xf32>
    %73 = tpu.matmul %70, %72, %cst_46 {dimension_numbers = #tpu.dot_dimension_numbers<[1], [0], [0], [1], [0, 0, 1, 1], [], []>} : vector<120x72xbf16>, vector<72x128xbf16>, vector<120x128xf32> -> vector<120x128xf32>
    %74 = arith.addf %68, %73 : vector<120x128xf32>
    %75 = vector.extract_strided_slice %39 {offsets = [0, 6, 0], sizes = [8, 15, 72], strides = [1, 1, 1]} : vector<8x24x72xbf16> to vector<8x15x72xbf16>
    %76 = vector.shape_cast %75 : vector<8x15x72xbf16> to vector<120x72xbf16>
    %c3_47 = arith.constant 3 : index
    %c0_48 = arith.constant 0 : index
    %c0_49 = arith.constant 0 : index
    %77 = vector.load %arg5[%c3_47, %c0_48, %c0_49] : memref<5x72x128xbf16, #tpu.memory_space<vmem>>, vector<1x72x128xbf16>
    %78 = vector.shape_cast %77 : vector<1x72x128xbf16> to vector<72x128xbf16>
    %cst_50 = arith.constant dense<0.000000e+00> : vector<120x128xf32>
    %79 = tpu.matmul %76, %78, %cst_50 {dimension_numbers = #tpu.dot_dimension_numbers<[1], [0], [0], [1], [0, 0, 1, 1], [], []>} : vector<120x72xbf16>, vector<72x128xbf16>, vector<120x128xf32> -> vector<120x128xf32>
    %80 = arith.addf %74, %79 : vector<120x128xf32>
    %81 = vector.extract_strided_slice %39 {offsets = [0, 7, 0], sizes = [8, 15, 72], strides = [1, 1, 1]} : vector<8x24x72xbf16> to vector<8x15x72xbf16>
    %82 = vector.shape_cast %81 : vector<8x15x72xbf16> to vector<120x72xbf16>
    %c3_51 = arith.constant 3 : index
    %c0_52 = arith.constant 0 : index
    %c0_53 = arith.constant 0 : index
    %83 = vector.load %arg5[%c3_51, %c0_52, %c0_53] : memref<5x72x128xbf16, #tpu.memory_space<vmem>>, vector<1x72x128xbf16>
    %84 = vector.shape_cast %83 : vector<1x72x128xbf16> to vector<72x128xbf16>
    %cst_54 = arith.constant dense<0.000000e+00> : vector<120x128xf32>
    %85 = tpu.matmul %82, %84, %cst_54 {dimension_numbers = #tpu.dot_dimension_numbers<[1], [0], [0], [1], [0, 0, 1, 1], [], []>} : vector<120x72xbf16>, vector<72x128xbf16>, vector<120x128xf32> -> vector<120x128xf32>
    %86 = arith.addf %80, %85 : vector<120x128xf32>
    %87 = vector.extract_strided_slice %39 {offsets = [0, 8, 0], sizes = [8, 15, 72], strides = [1, 1, 1]} : vector<8x24x72xbf16> to vector<8x15x72xbf16>
    %88 = vector.shape_cast %87 : vector<8x15x72xbf16> to vector<120x72xbf16>
    %c4_55 = arith.constant 4 : index
    %c0_56 = arith.constant 0 : index
    %c0_57 = arith.constant 0 : index
    %89 = vector.load %arg5[%c4_55, %c0_56, %c0_57] : memref<5x72x128xbf16, #tpu.memory_space<vmem>>, vector<1x72x128xbf16>
    %90 = vector.shape_cast %89 : vector<1x72x128xbf16> to vector<72x128xbf16>
    %cst_58 = arith.constant dense<0.000000e+00> : vector<120x128xf32>
    %91 = tpu.matmul %88, %90, %cst_58 {dimension_numbers = #tpu.dot_dimension_numbers<[1], [0], [0], [1], [0, 0, 1, 1], [], []>} : vector<120x72xbf16>, vector<72x128xbf16>, vector<120x128xf32> -> vector<120x128xf32>
    %92 = arith.addf %86, %91 : vector<120x128xf32>
    %93 = vector.extract_strided_slice %39 {offsets = [0, 9, 0], sizes = [8, 15, 72], strides = [1, 1, 1]} : vector<8x24x72xbf16> to vector<8x15x72xbf16>
    %94 = vector.shape_cast %93 : vector<8x15x72xbf16> to vector<120x72xbf16>
    %c4_59 = arith.constant 4 : index
    %c0_60 = arith.constant 0 : index
    %c0_61 = arith.constant 0 : index
    %95 = vector.load %arg5[%c4_59, %c0_60, %c0_61] : memref<5x72x128xbf16, #tpu.memory_space<vmem>>, vector<1x72x128xbf16>
    %96 = vector.shape_cast %95 : vector<1x72x128xbf16> to vector<72x128xbf16>
    %cst_62 = arith.constant dense<0.000000e+00> : vector<120x128xf32>
    %97 = tpu.matmul %94, %96, %cst_62 {dimension_numbers = #tpu.dot_dimension_numbers<[1], [0], [0], [1], [0, 0, 1, 1], [], []>} : vector<120x72xbf16>, vector<72x128xbf16>, vector<120x128xf32> -> vector<120x128xf32>
    %98 = arith.addf %92, %97 : vector<120x128xf32>
    %c0_63 = arith.constant 0 : index
    %c0_64 = arith.constant 0 : index
    %99 = vector.load %arg6[%c0_63, %c0_64] : memref<1x128xf32, #tpu.memory_space<vmem>>, vector<1x128xf32>
    %100 = vector.broadcast %99 : vector<1x128xf32> to vector<120x128xf32>
    %101 = arith.addf %98, %100 : vector<120x128xf32>
    %cst_65 = arith.constant 0.000000e+00 : f32
    %102 = vector.broadcast %cst_65 : f32 to vector<120x128xf32>
    %103 = arith.maximumf %101, %102 : vector<120x128xf32>
    %104 = arith.truncf %103 : vector<120x128xf32> to vector<120x128xbf16>
    %c0_66 = arith.constant 0 : index
    %c0_67 = arith.constant 0 : index
    %105 = vector.load %arg7[%c0_66, %c0_67] : memref<128x64xbf16, #tpu.memory_space<vmem>>, vector<128x64xbf16>
    %cst_68 = arith.constant dense<0.000000e+00> : vector<120x64xf32>
    %106 = tpu.matmul %104, %105, %cst_68 {dimension_numbers = #tpu.dot_dimension_numbers<[1], [0], [0], [1], [0, 0, 1, 1], [], []>} : vector<120x128xbf16>, vector<128x64xbf16>, vector<120x64xf32> -> vector<120x64xf32>
    %107 = arith.truncf %106 : vector<120x64xf32> to vector<120x64xbf16>
    %108 = vector.shape_cast %107 : vector<120x64xbf16> to vector<8x15x64xbf16>
    %109 = vector.extract_strided_slice %108 {offsets = [0, 0, 0], sizes = [8, 1, 64], strides = [1, 1, 1]} : vector<8x15x64xbf16> to vector<8x1x64xbf16>
    %110 = vector.shape_cast %109 : vector<8x1x64xbf16> to vector<8x64xbf16>
    %111 = vector.extract_strided_slice %108 {offsets = [0, 2, 0], sizes = [8, 1, 64], strides = [1, 1, 1]} : vector<8x15x64xbf16> to vector<8x1x64xbf16>
    %112 = vector.shape_cast %111 : vector<8x1x64xbf16> to vector<8x64xbf16>
    %113 = arith.addf %110, %112 : vector<8x64xbf16>
    %c0_69 = arith.constant 0 : index
    %c0_70 = arith.constant 0 : index
    %c0_71 = arith.constant 0 : index
    %114 = vector.load %arg8[%c0_69, %c0_70, %c0_71] : memref<4x64x120xbf16, #tpu.memory_space<vmem>>, vector<1x64x120xbf16>
    %115 = vector.shape_cast %114 : vector<1x64x120xbf16> to vector<64x120xbf16>
    %cst_72 = arith.constant dense<0.000000e+00> : vector<8x120xf32>
    %116 = tpu.matmul %113, %115, %cst_72 {dimension_numbers = #tpu.dot_dimension_numbers<[1], [0], [0], [1], [0, 0, 1, 1], [], []>} : vector<8x64xbf16>, vector<64x120xbf16>, vector<8x120xf32> -> vector<8x120xf32>
    %117 = vector.extract_strided_slice %108 {offsets = [0, 4, 0], sizes = [8, 1, 64], strides = [1, 1, 1]} : vector<8x15x64xbf16> to vector<8x1x64xbf16>
    %118 = vector.shape_cast %117 : vector<8x1x64xbf16> to vector<8x64xbf16>
    %119 = vector.extract_strided_slice %108 {offsets = [0, 6, 0], sizes = [8, 1, 64], strides = [1, 1, 1]} : vector<8x15x64xbf16> to vector<8x1x64xbf16>
    %120 = vector.shape_cast %119 : vector<8x1x64xbf16> to vector<8x64xbf16>
    %121 = arith.addf %118, %120 : vector<8x64xbf16>
    %c1_73 = arith.constant 1 : index
    %c0_74 = arith.constant 0 : index
    %c0_75 = arith.constant 0 : index
    %122 = vector.load %arg8[%c1_73, %c0_74, %c0_75] : memref<4x64x120xbf16, #tpu.memory_space<vmem>>, vector<1x64x120xbf16>
    %123 = vector.shape_cast %122 : vector<1x64x120xbf16> to vector<64x120xbf16>
    %cst_76 = arith.constant dense<0.000000e+00> : vector<8x120xf32>
    %124 = tpu.matmul %121, %123, %cst_76 {dimension_numbers = #tpu.dot_dimension_numbers<[1], [0], [0], [1], [0, 0, 1, 1], [], []>} : vector<8x64xbf16>, vector<64x120xbf16>, vector<8x120xf32> -> vector<8x120xf32>
    %125 = arith.addf %116, %124 : vector<8x120xf32>
    %126 = vector.extract_strided_slice %108 {offsets = [0, 8, 0], sizes = [8, 1, 64], strides = [1, 1, 1]} : vector<8x15x64xbf16> to vector<8x1x64xbf16>
    %127 = vector.shape_cast %126 : vector<8x1x64xbf16> to vector<8x64xbf16>
    %128 = vector.extract_strided_slice %108 {offsets = [0, 10, 0], sizes = [8, 1, 64], strides = [1, 1, 1]} : vector<8x15x64xbf16> to vector<8x1x64xbf16>
    %129 = vector.shape_cast %128 : vector<8x1x64xbf16> to vector<8x64xbf16>
    %130 = arith.addf %127, %129 : vector<8x64xbf16>
    %c2_77 = arith.constant 2 : index
    %c0_78 = arith.constant 0 : index
    %c0_79 = arith.constant 0 : index
    %131 = vector.load %arg8[%c2_77, %c0_78, %c0_79] : memref<4x64x120xbf16, #tpu.memory_space<vmem>>, vector<1x64x120xbf16>
    %132 = vector.shape_cast %131 : vector<1x64x120xbf16> to vector<64x120xbf16>
    %cst_80 = arith.constant dense<0.000000e+00> : vector<8x120xf32>
    %133 = tpu.matmul %130, %132, %cst_80 {dimension_numbers = #tpu.dot_dimension_numbers<[1], [0], [0], [1], [0, 0, 1, 1], [], []>} : vector<8x64xbf16>, vector<64x120xbf16>, vector<8x120xf32> -> vector<8x120xf32>
    %134 = arith.addf %125, %133 : vector<8x120xf32>
    %135 = vector.extract_strided_slice %108 {offsets = [0, 12, 0], sizes = [8, 1, 64], strides = [1, 1, 1]} : vector<8x15x64xbf16> to vector<8x1x64xbf16>
    %136 = vector.shape_cast %135 : vector<8x1x64xbf16> to vector<8x64xbf16>
    %137 = vector.extract_strided_slice %108 {offsets = [0, 14, 0], sizes = [8, 1, 64], strides = [1, 1, 1]} : vector<8x15x64xbf16> to vector<8x1x64xbf16>
    %138 = vector.shape_cast %137 : vector<8x1x64xbf16> to vector<8x64xbf16>
    %139 = arith.addf %136, %138 : vector<8x64xbf16>
    %c3_81 = arith.constant 3 : index
    %c0_82 = arith.constant 0 : index
    %c0_83 = arith.constant 0 : index
    %140 = vector.load %arg8[%c3_81, %c0_82, %c0_83] : memref<4x64x120xbf16, #tpu.memory_space<vmem>>, vector<1x64x120xbf16>
    %141 = vector.shape_cast %140 : vector<1x64x120xbf16> to vector<64x120xbf16>
    %cst_84 = arith.constant dense<0.000000e+00> : vector<8x120xf32>
    %142 = tpu.matmul %139, %141, %cst_84 {dimension_numbers = #tpu.dot_dimension_numbers<[1], [0], [0], [1], [0, 0, 1, 1], [], []>} : vector<8x64xbf16>, vector<64x120xbf16>, vector<8x120xf32> -> vector<8x120xf32>
    %143 = arith.addf %134, %142 : vector<8x120xf32>
    %c0_85 = arith.constant 0 : index
    %c0_86 = arith.constant 0 : index
    %144 = vector.load %arg9[%c0_85, %c0_86] : memref<1x120xf32, #tpu.memory_space<vmem>>, vector<1x120xf32>
    %145 = vector.broadcast %144 : vector<1x120xf32> to vector<8x120xf32>
    %146 = arith.addf %143, %145 : vector<8x120xf32>
    %cst_87 = arith.constant 0.000000e+00 : f32
    %147 = vector.broadcast %cst_87 : f32 to vector<8x120xf32>
    %148 = arith.maximumf %146, %147 : vector<8x120xf32>
    %149 = arith.truncf %148 : vector<8x120xf32> to vector<8x120xbf16>
    %c0_88 = arith.constant 0 : index
    %c0_89 = arith.constant 0 : index
    %150 = vector.load %arg10[%c0_88, %c0_89] : memref<120x84xbf16, #tpu.memory_space<vmem>>, vector<120x84xbf16>
    %cst_90 = arith.constant dense<0.000000e+00> : vector<8x84xf32>
    %151 = tpu.matmul %149, %150, %cst_90 {dimension_numbers = #tpu.dot_dimension_numbers<[1], [0], [0], [1], [0, 0, 1, 1], [], []>} : vector<8x120xbf16>, vector<120x84xbf16>, vector<8x84xf32> -> vector<8x84xf32>
    %c0_91 = arith.constant 0 : index
    %c0_92 = arith.constant 0 : index
    %152 = vector.load %arg11[%c0_91, %c0_92] : memref<1x84xf32, #tpu.memory_space<vmem>>, vector<1x84xf32>
    %153 = vector.broadcast %152 : vector<1x84xf32> to vector<8x84xf32>
    %154 = arith.addf %151, %153 : vector<8x84xf32>
    %155 = math.tanh %154 : vector<8x84xf32>
    %156 = arith.truncf %155 : vector<8x84xf32> to vector<8x84xbf16>
    %c0_93 = arith.constant 0 : index
    %c0_94 = arith.constant 0 : index
    %157 = vector.load %arg12[%c0_93, %c0_94] : memref<84x128xbf16, #tpu.memory_space<vmem>>, vector<84x128xbf16>
    %cst_95 = arith.constant dense<0.000000e+00> : vector<8x128xf32>
    %158 = tpu.matmul %156, %157, %cst_95 {dimension_numbers = #tpu.dot_dimension_numbers<[1], [0], [0], [1], [0, 0, 1, 1], [], []>} : vector<8x84xbf16>, vector<84x128xbf16>, vector<8x128xf32> -> vector<8x128xf32>
    %c0_96 = arith.constant 0 : index
    %c0_97 = arith.constant 0 : index
    %159 = vector.load %arg13[%c0_96, %c0_97] : memref<1x128xf32, #tpu.memory_space<vmem>>, vector<1x128xf32>
    %160 = vector.broadcast %159 : vector<1x128xf32> to vector<8x128xf32>
    %161 = arith.addf %158, %160 : vector<8x128xf32>
    %c0_98 = arith.constant 0 : index
    %c0_99 = arith.constant 0 : index
    %162 = vector.load %arg14[%c0_98, %c0_99] : memref<8x128xf32, #tpu.memory_space<vmem>>, vector<8x128xf32>
    tpu.vector_store %arg14[%c0_98, %c0_99], %161 {strides = array<i32>} : memref<8x128xf32, #tpu.memory_space<vmem>>, vector<8x128xf32>,
    return
  }
  func.func @transform_0(%arg0: i32) -> (i32, i32, i32) {
    %c0_i32 = arith.constant 0 : i32
    %c0_i32_0 = arith.constant 0 : i32
    %c0_i32_1 = arith.constant 0 : i32
    return %arg0, %c0_i32, %c0_i32_0 : i32, i32, i32
  }
  func.func @transform_1(%arg0: i32) -> (i32, i32, i32) {
    %c0_i32 = arith.constant 0 : i32
    %c0_i32_0 = arith.constant 0 : i32
    %c0_i32_1 = arith.constant 0 : i32
    %c0_i32_2 = arith.constant 0 : i32
    return %c0_i32, %c0_i32_0, %c0_i32_1 : i32, i32, i32
  }
  func.func @transform_2(%arg0: i32) -> (i32, i32) {
    %c0_i32 = arith.constant 0 : i32
    %c0_i32_0 = arith.constant 0 : i32
    %c0_i32_1 = arith.constant 0 : i32
    return %c0_i32, %c0_i32_0 : i32, i32
  }
  func.func @transform_3(%arg0: i32) -> (i32, i32) {
    %c0_i32 = arith.constant 0 : i32
    %c0_i32_0 = arith.constant 0 : i32
    %c0_i32_1 = arith.constant 0 : i32
    return %c0_i32, %c0_i32_0 : i32, i32
  }
  func.func @transform_4(%arg0: i32) -> (i32, i32, i32) {
    %c0_i32 = arith.constant 0 : i32
    %c0_i32_0 = arith.constant 0 : i32
    %c0_i32_1 = arith.constant 0 : i32
    %c0_i32_2 = arith.constant 0 : i32
    return %c0_i32, %c0_i32_0, %c0_i32_1 : i32, i32, i32
  }
  func.func @transform_5(%arg0: i32) -> (i32, i32) {
    %c0_i32 = arith.constant 0 : i32
    %c0_i32_0 = arith.constant 0 : i32
    %c0_i32_1 = arith.constant 0 : i32
    return %c0_i32, %c0_i32_0 : i32, i32
  }
  func.func @transform_6(%arg0: i32) -> (i32, i32) {
    %c0_i32 = arith.constant 0 : i32
    %c0_i32_0 = arith.constant 0 : i32
    %c0_i32_1 = arith.constant 0 : i32
    return %c0_i32, %c0_i32_0 : i32, i32
  }
  func.func @transform_7(%arg0: i32) -> (i32, i32, i32) {
    %c0_i32 = arith.constant 0 : i32
    %c0_i32_0 = arith.constant 0 : i32
    %c0_i32_1 = arith.constant 0 : i32
    %c0_i32_2 = arith.constant 0 : i32
    return %c0_i32, %c0_i32_0, %c0_i32_1 : i32, i32, i32
  }
  func.func @transform_8(%arg0: i32) -> (i32, i32) {
    %c0_i32 = arith.constant 0 : i32
    %c0_i32_0 = arith.constant 0 : i32
    %c0_i32_1 = arith.constant 0 : i32
    return %c0_i32, %c0_i32_0 : i32, i32
  }
  func.func @transform_9(%arg0: i32) -> (i32, i32) {
    %c0_i32 = arith.constant 0 : i32
    %c0_i32_0 = arith.constant 0 : i32
    %c0_i32_1 = arith.constant 0 : i32
    return %c0_i32, %c0_i32_0 : i32, i32
  }
  func.func @transform_10(%arg0: i32) -> (i32, i32) {
    %c0_i32 = arith.constant 0 : i32
    %c0_i32_0 = arith.constant 0 : i32
    %c0_i32_1 = arith.constant 0 : i32
    return %c0_i32, %c0_i32_0 : i32, i32
  }
  func.func @transform_11(%arg0: i32) -> (i32, i32) {
    %c0_i32 = arith.constant 0 : i32
    %c0_i32_0 = arith.constant 0 : i32
    %c0_i32_1 = arith.constant 0 : i32
    return %c0_i32, %c0_i32_0 : i32, i32
  }
  func.func @transform_12(%arg0: i32) -> (i32, i32) {
    %c0_i32 = arith.constant 0 : i32
    %c0_i32_0 = arith.constant 0 : i32
    %c0_i32_1 = arith.constant 0 : i32
    return %c0_i32, %c0_i32_0 : i32, i32
  }
  func.func @transform_13(%arg0: i32) -> (i32, i32) {
    %c0_i32 = arith.constant 0 : i32
    %c0_i32_0 = arith.constant 0 : i32
    return %arg0, %c0_i32 : i32, i32
  }
}

</mosaic_0001>

<llo_original>
// kernel: lenet5_tanh_forward.1
$region0: #{lenet5_tanh_forward.1}
  #allocation0 [shape = 'u32[]', space=smem, size = 0x4, offset = 0x4, fixed_abs, tag = 'smem constant byte address 0x4 - core index']
  #allocation1 [shape = 'u32[144,128]{1,0:T(1,128)}', space=vmem, size = 0x12000, scoped, tag = 'internal scratch']
  %s0 = inlined_call_operand.vmem [shape: bf16[8,28,28], index: 0, kind: input, shape index: {}]
  %s1 = inlined_call_operand.vmem [shape: bf16[5,28,144], index: 1, kind: input, shape index: {}]
  %s2 = inlined_call_operand.vmem [shape: f32[1,144], index: 2, kind: input, shape index: {}]
  %s3 = inlined_call_operand.vmem [shape: bf16[144,72], index: 3, kind: input, shape index: {}]
  %s4 = inlined_call_operand.vmem [shape: bf16[5,72,128], index: 4, kind: input, shape index: {}]
  %s5 = inlined_call_operand.hbm [shape: f32[1,128], index: 5, kind: input, shape index: {}]
  %s6 = inlined_call_operand.vmem [shape: bf16[128,64], index: 6, kind: input, shape index: {}]
  %s7 = inlined_call_operand.hbm [shape: bf16[4,64,120], index: 7, kind: input, shape index: {}]
  %s8 = inlined_call_operand.hbm [shape: f32[1,120], index: 8, kind: input, shape index: {}]
  %s9 = inlined_call_operand.vmem [shape: bf16[120,84], index: 9, kind: input, shape index: {}]
  %s10 = inlined_call_operand.hbm [shape: f32[1,84], index: 10, kind: input, shape index: {}]
  %s11 = inlined_call_operand.hbm [shape: bf16[84,128], index: 11, kind: input, shape index: {}]
  %s12 = inlined_call_operand.hbm [shape: f32[1,128], index: 12, kind: input, shape index: {}]
  %s13 = inlined_call_operand.vmem [shape: f32[8,128], index: 13, kind: output, shape index: {}]
  %s14 = sld [smem:[#allocation0]]
  $region86: #{lenet5_tanh_forward.1} parent=0
    _
  %s16 = ssub.s32 1, %s14
  %s17 = scalar_select 0, %s16, %s14
  $region1: #{lenet5_tanh_forward.1} parent=0
    #allocation2 [shape = 'u8[512]{0}', space=vmem, size = 0x400, scoped, tag = 'input window, operand 5, single buffered']
    #allocation3 [shape = 's32[1]{0}', space=sflag, size = 0x4, scoped, tag = 'scoped memory for lenet5_tanh_forward.1']
    #allocation4 [shape = 'u8[65536]{0}', space=vmem, size = 0x10000, scoped, tag = 'input window, operand 7, single buffered']
    #allocation5 [shape = 's32[1]{0}', space=sflag, size = 0x4, scoped, tag = 'scoped memory for lenet5_tanh_forward.1']
    #allocation6 [shape = 'u8[512]{0}', space=vmem, size = 0x400, scoped, tag = 'input window, operand 8, single buffered']
    #allocation7 [shape = 'u8[512]{0}', space=vmem, size = 0x400, scoped, tag = 'input window, operand 10, single buffered']
    #allocation8 [shape = 's32[1]{0}', space=sflag, size = 0x4, scoped, tag = 'scoped memory for lenet5_tanh_forward.1']
    #allocation9 [shape = 'u8[22528]{0}', space=vmem, size = 0x5800, scoped, tag = 'input window, operand 11, single buffered']
    #allocation10 [shape = 'u8[512]{0}', space=vmem, size = 0x400, scoped, tag = 'input window, operand 12, single buffered']
    #allocation11 [shape = 's32[1]{0}', space=sflag, size = 0x4, scoped, tag = 'scoped memory for lenet5_tanh_forward.1']
    %18 = vsyncpa [#allocation3], 0
    %19 = vsyncpa [#allocation5], 0
    %20 = vsyncpa [#allocation8], 0
    %21 = vsyncpa [#allocation11], 0
    // Predicated region
    $region2: #{lenet5_tanh_forward.1} parent=1 // pred_check
      _
    $region3: #{lenet5_tanh_forward.1} parent=1 // pred_check_branch
      %23 = sbr.rel (0) target = $region5
    $region4: #{lenet5_tanh_forward.1} parent=1 // pred_region
      _
    $region5: #{lenet5_tanh_forward.1} parent=1 // pred_fallthru
      _
    // Predicated region
    $region6: #{lenet5_tanh_forward.1} parent=1 // pred_check
      _
    $region7: #{lenet5_tanh_forward.1} parent=1 // pred_check_branch
      %25 = sbr.rel (0) target = $region9
    $region8: #{lenet5_tanh_forward.1} parent=1 // pred_region
      _
    $region9: #{lenet5_tanh_forward.1} parent=1 // pred_fallthru
      _
    // Predicated region
    $region10: #{lenet5_tanh_forward.1} parent=1 // pred_check
      _
    $region11: #{lenet5_tanh_forward.1} parent=1 // pred_check_branch
      %27 = sbr.rel (0) target = $region13
    $region12: #{lenet5_tanh_forward.1} parent=1 // pred_region
      _
    $region13: #{lenet5_tanh_forward.1} parent=1 // pred_fallthru
      _
    // Predicated region
    $region14: #{lenet5_tanh_forward.1} parent=1 // pred_check
      _
    $region15: #{lenet5_tanh_forward.1} parent=1 // pred_check_branch
      %29 = sbr.rel (0) target = $region17
    $region16: #{lenet5_tanh_forward.1} parent=1 // pred_region
      _
    $region17: #{lenet5_tanh_forward.1} parent=1 // pred_fallthru
      _
    // Predicated region
    $region18: #{lenet5_tanh_forward.1} parent=1 // pred_check
      _
    $region19: #{lenet5_tanh_forward.1} parent=1 // pred_check_branch
      %31 = sbr.rel (0) target = $region21
    $region20: #{lenet5_tanh_forward.1} parent=1 // pred_region
      _
    $region21: #{lenet5_tanh_forward.1} parent=1 // pred_fallthru
      _
    // Predicated region
    $region22: #{lenet5_tanh_forward.1} parent=1 // pred_check
      _
    $region23: #{lenet5_tanh_forward.1} parent=1 // pred_check_branch
      %33 = sbr.rel (0) target = $region25
    $region24: #{lenet5_tanh_forward.1} parent=1 // pred_region
      %s35 = ssub.s32 16, 16
      %36 = vsyncadd [#allocation3], %s35
      %s38 = sshll.u32 [#allocation2], 4
      %s39 = int_to_ptr.vmem [resolvable:$true] %s38
      %41 = dma.hbm_to_vmem [thread:$0]  %s5, 16, %s39, [#allocation3]
    $region25: #{lenet5_tanh_forward.1} parent=1 // pred_fallthru
      _
    // Predicated region
    $region26: #{lenet5_tanh_forward.1} parent=1 // pred_check
      _
    $region27: #{lenet5_tanh_forward.1} parent=1 // pred_check_branch
      %43 = sbr.rel (0) target = $region29
    $region28: #{lenet5_tanh_forward.1} parent=1 // pred_region
      _
    $region29: #{lenet5_tanh_forward.1} parent=1 // pred_fallthru
      _
    // Predicated region
    $region30: #{lenet5_tanh_forward.1} parent=1 // pred_check
      _
    $region31: #{lenet5_tanh_forward.1} parent=1 // pred_check_branch
      %45 = sbr.rel (0) target = $region33
    $region32: #{lenet5_tanh_forward.1} parent=1 // pred_region
      %s47 = ssub.s32 2048, 2048
      %48 = vsyncadd [#allocation5], %s47
      %s49 = sshll.u32 [#allocation4], 4
      %s50 = int_to_ptr.vmem [resolvable:$true] %s49
      %55 = dma.hbm_to_vmem [thread:$0]  %s7, 2048, %s50, [#allocation5], 64, 64, 4
    $region33: #{lenet5_tanh_forward.1} parent=1 // pred_fallthru
      _
    // Predicated region
    $region34: #{lenet5_tanh_forward.1} parent=1 // pred_check
      _
    $region35: #{lenet5_tanh_forward.1} parent=1 // pred_check_branch
      %57 = sbr.rel (0) target = $region37
    $region36: #{lenet5_tanh_forward.1} parent=1 // pred_region
      %s59 = ssub.s32 16, 16
      %60 = vsyncadd [#allocation5], %s59
      %s62 = sshll.u32 [#allocation6], 4
      %s63 = int_to_ptr.vmem [resolvable:$true] %s62
      %65 = dma.hbm_to_vmem [thread:$0]  %s8, 16, %s63, [#allocation5]
    $region37: #{lenet5_tanh_forward.1} parent=1 // pred_fallthru
      _
    // Predicated region
    $region38: #{lenet5_tanh_forward.1} parent=1 // pred_check
      _
    $region39: #{lenet5_tanh_forward.1} parent=1 // pred_check_branch
      %67 = sbr.rel (0) target = $region41
    $region40: #{lenet5_tanh_forward.1} parent=1 // pred_region
      _
    $region41: #{lenet5_tanh_forward.1} parent=1 // pred_fallthru
      _
    // Predicated region
    $region42: #{lenet5_tanh_forward.1} parent=1 // pred_check
      _
    $region43: #{lenet5_tanh_forward.1} parent=1 // pred_check_branch
      %69 = sbr.rel (0) target = $region45
    $region44: #{lenet5_tanh_forward.1} parent=1 // pred_region
      %s71 = ssub.s32 16, 16
      %72 = vsyncadd [#allocation8], %s71
      %s74 = sshll.u32 [#allocation7], 4
      %s75 = int_to_ptr.vmem [resolvable:$true] %s74
      %77 = dma.hbm_to_vmem [thread:$0]  %s10, 16, %s75, [#allocation8]
    $region45: #{lenet5_tanh_forward.1} parent=1 // pred_fallthru
      _
    // Predicated region
    $region46: #{lenet5_tanh_forward.1} parent=1 // pred_check
      _
    $region47: #{lenet5_tanh_forward.1} parent=1 // pred_check_branch
      %79 = sbr.rel (0) target = $region49
    $region48: #{lenet5_tanh_forward.1} parent=1 // pred_region
      %s81 = ssub.s32 704, 704
      %82 = vsyncadd [#allocation8], %s81
      %s83 = sshll.u32 [#allocation9], 4
      %s84 = int_to_ptr.vmem [resolvable:$true] %s83
      %89 = dma.hbm_to_vmem [thread:$0]  %s11, 704, %s84, [#allocation8], 64, 64, 4
    $region49: #{lenet5_tanh_forward.1} parent=1 // pred_fallthru
      _
    // Predicated region
    $region50: #{lenet5_tanh_forward.1} parent=1 // pred_check
      _
    $region51: #{lenet5_tanh_forward.1} parent=1 // pred_check_branch
      %91 = sbr.rel (0) target = $region53
    $region52: #{lenet5_tanh_forward.1} parent=1 // pred_region
      %s93 = ssub.s32 16, 16
      %94 = vsyncadd [#allocation11], %s93
      %s96 = sshll.u32 [#allocation10], 4
      %s97 = int_to_ptr.vmem [resolvable:$true] %s96
      %99 = dma.hbm_to_vmem [thread:$0]  %s12, 16, %s97, [#allocation11]
    $region53: #{lenet5_tanh_forward.1} parent=1 // pred_fallthru
      _
    // Predicated region
    $region54: #{lenet5_tanh_forward.1} parent=1 // pred_check
      _
    $region55: #{lenet5_tanh_forward.1} parent=1 // pred_check_branch
      %101 = sbr.rel (0) target = $region57
    $region56: #{lenet5_tanh_forward.1} parent=1 // pred_region
      %102 = dma.done [#allocation3], 16
    $region57: #{lenet5_tanh_forward.1} parent=1 // pred_fallthru
      _
    // Predicated region
    $region58: #{lenet5_tanh_forward.1} parent=1 // pred_check
      _
    $region59: #{lenet5_tanh_forward.1} parent=1 // pred_check_branch
      %104 = sbr.rel (0) target = $region61
    $region60: #{lenet5_tanh_forward.1} parent=1 // pred_region
      %105 = dma.done [#allocation5], 2048
    $region61: #{lenet5_tanh_forward.1} parent=1 // pred_fallthru
      _
    // Predicated region
    $region62: #{lenet5_tanh_forward.1} parent=1 // pred_check
      _
    $region63: #{lenet5_tanh_forward.1} parent=1 // pred_check_branch
      %107 = sbr.rel (0) target = $region65
    $region64: #{lenet5_tanh_forward.1} parent=1 // pred_region
      %108 = dma.done [#allocation5], 16
    $region65: #{lenet5_tanh_forward.1} parent=1 // pred_fallthru
      _
    // Predicated region
    $region66: #{lenet5_tanh_forward.1} parent=1 // pred_check
      _
    $region67: #{lenet5_tanh_forward.1} parent=1 // pred_check_branch
      %110 = sbr.rel (0) target = $region69
    $region68: #{lenet5_tanh_forward.1} parent=1 // pred_region
      %111 = dma.done [#allocation8], 16
    $region69: #{lenet5_tanh_forward.1} parent=1 // pred_fallthru
      _
    // Predicated region
    $region70: #{lenet5_tanh_forward.1} parent=1 // pred_check
      _
    $region71: #{lenet5_tanh_forward.1} parent=1 // pred_check_branch
      %113 = sbr.rel (0) target = $region73
    $region72: #{lenet5_tanh_forward.1} parent=1 // pred_region
      %114 = dma.done [#allocation8], 704
    $region73: #{lenet5_tanh_forward.1} parent=1 // pred_fallthru
      _
    // Predicated region
    $region74: #{lenet5_tanh_forward.1} parent=1 // pred_check
      _
    $region75: #{lenet5_tanh_forward.1} parent=1 // pred_check_branch
      %116 = sbr.rel (0) target = $region77
    $region76: #{lenet5_tanh_forward.1} parent=1 // pred_region
      %117 = dma.done [#allocation11], 16
    $region77: #{lenet5_tanh_forward.1} parent=1 // pred_fallthru
      _
    %v119 = vld [vmem:[%s0] sm:$0xf]
    %v120 = vld [vmem:[%s0 + $0x4] sm:$0xf]
    %v121 = vld [vmem:[%s0 + $0x8] sm:$0xf]
    %v122 = vld [vmem:[%s0 + $0xc] sm:$0x3]
    %v123 = vld [vmem:[%s0 + $0x10] sm:$0xf]
    %v124 = vld [vmem:[%s0 + $0x14] sm:$0xf]
    %v125 = vld [vmem:[%s0 + $0x18] sm:$0xf]
    %v126 = vld [vmem:[%s0 + $0x1c] sm:$0x3]
    %v127 = vld [vmem:[%s0 + $0x20] sm:$0xf]
    %v128 = vld [vmem:[%s0 + $0x24] sm:$0xf]
    %v129 = vld [vmem:[%s0 + $0x28] sm:$0xf]
    %v130 = vld [vmem:[%s0 + $0x2c] sm:$0x3]
    %v131 = vld [vmem:[%s0 + $0x30] sm:$0xf]
    %v132 = vld [vmem:[%s0 + $0x34] sm:$0xf]
    %v133 = vld [vmem:[%s0 + $0x38] sm:$0xf]
    %v134 = vld [vmem:[%s0 + $0x3c] sm:$0x3]
    %v135 = vld [vmem:[%s0 + $0x40] sm:$0xf]
    %v136 = vld [vmem:[%s0 + $0x44] sm:$0xf]
    %v137 = vld [vmem:[%s0 + $0x48] sm:$0xf]
    %v138 = vld [vmem:[%s0 + $0x4c] sm:$0x3]
    %v139 = vld [vmem:[%s0 + $0x50] sm:$0xf]
    %v140 = vld [vmem:[%s0 + $0x54] sm:$0xf]
    %v141 = vld [vmem:[%s0 + $0x58] sm:$0xf]
    %v142 = vld [vmem:[%s0 + $0x5c] sm:$0x3]
    %v143 = vld [vmem:[%s0 + $0x60] sm:$0xf]
    %v144 = vld [vmem:[%s0 + $0x64] sm:$0xf]
    %v145 = vld [vmem:[%s0 + $0x68] sm:$0xf]
    %v146 = vld [vmem:[%s0 + $0x6c] sm:$0x3]
    %v147 = vld [vmem:[%s0 + $0x70] sm:$0xf]
    %v148 = vld [vmem:[%s0 + $0x74] sm:$0xf]
    %v149 = vld [vmem:[%s0 + $0x78] sm:$0xf]
    %v150 = vld [vmem:[%s0 + $0x7c] sm:$0x3]
    %v151 = vld [vmem:[%s1] sm:$0xff]
    %v152 = vld [vmem:[%s1 + $0x8] sm:$0xff]
    %v153 = vld [vmem:[%s1 + $0x10] sm:$0xff]
    %v154 = vld [vmem:[%s1 + $0x18] sm:$0x33]
    %vm155 = vsmask.f32 3328
    %vm156 = vsmask.f32 7440
    %vm157 = vmor %vm155, %vm156
    %v159 = vshrl.u32 %v119, 16
    %v161 = vrot.slane %v159, 4
    %v162 = vshll.u32 %v119, 16
    %v164 = vrot.slane %v162, 5
    %v165 = vor.u32 %v161, %v164
    %v166 = vrot.slane %v165, 4
    %v168 = vshll.u32 %v120, 16
    %v170 = vrot.slane %v168, 5
    %v171 = vsel %vm157, %v166, %v170
    %v172 = vshrl.u32 %v120, 16
    %v174 = vrot.slane %v172, 4
    %v175 = vor.u32 %v174, %v170
    %v176 = vrot.slane %v175, 4
    %v178 = vshll.u32 %v121, 16
    %v180 = vrot.slane %v178, 5
    %v181 = vsel %vm157, %v176, %v180
    %v182 = vshrl.u32 %v121, 16
    %v184 = vrot.slane %v182, 4
    %v185 = vor.u32 %v184, %v180
    %v186 = vrot.slane %v185, 4
    %v188 = vshll.u32 %v122, 16
    %v190 = vrot.slane %v188, 5
    %v191 = vsel %vm157, %v186, %v190
    %v193 = vshrl.u32 %v123, 16
    %v195 = vrot.slane %v193, 4
    %v196 = vshll.u32 %v123, 16
    %v198 = vrot.slane %v196, 5
    %v199 = vor.u32 %v195, %v198
    %v200 = vrot.slane %v199, 4
    %v202 = vshll.u32 %v124, 16
    %v204 = vrot.slane %v202, 5
    %v205 = vsel %vm157, %v200, %v204
    %v206 = vshrl.u32 %v124, 16
    %v208 = vrot.slane %v206, 4
    %v209 = vor.u32 %v208, %v204
    %v210 = vrot.slane %v209, 4
    %v212 = vshll.u32 %v125, 16
    %v214 = vrot.slane %v212, 5
    %v215 = vsel %vm157, %v210, %v214
    %v216 = vshrl.u32 %v125, 16
    %v218 = vrot.slane %v216, 4
    %v219 = vor.u32 %v218, %v214
    %v220 = vrot.slane %v219, 4
    %v222 = vshll.u32 %v126, 16
    %v224 = vrot.slane %v222, 5
    %v225 = vsel %vm157, %v220, %v224
    %v227 = vshrl.u32 %v127, 16
    %v229 = vrot.slane %v227, 4
    %v230 = vshll.u32 %v127, 16
    %v232 = vrot.slane %v230, 5
    %v233 = vor.u32 %v229, %v232
    %v234 = vrot.slane %v233, 4
    %v236 = vshll.u32 %v128, 16
    %v238 = vrot.slane %v236, 5
    %v239 = vsel %vm157, %v234, %v238
    %v240 = vshrl.u32 %v128, 16
    %v242 = vrot.slane %v240, 4
    %v243 = vor.u32 %v242, %v238
    %v244 = vrot.slane %v243, 4
    %v246 = vshll.u32 %v129, 16
    %v248 = vrot.slane %v246, 5
    %v249 = vsel %vm157, %v244, %v248
    %v250 = vshrl.u32 %v129, 16
    %v252 = vrot.slane %v250, 4
    %v253 = vor.u32 %v252, %v248
    %v254 = vrot.slane %v253, 4
    %v256 = vshll.u32 %v130, 16
    %v258 = vrot.slane %v256, 5
    %v259 = vsel %vm157, %v254, %v258
    %v261 = vshrl.u32 %v131, 16
    %v263 = vrot.slane %v261, 4
    %v264 = vshll.u32 %v131, 16
    %v266 = vrot.slane %v264, 5
    %v267 = vor.u32 %v263, %v266
    %v268 = vrot.slane %v267, 4
    %v270 = vshll.u32 %v132, 16
    %v272 = vrot.slane %v270, 5
    %v273 = vsel %vm157, %v268, %v272
    %v274 = vshrl.u32 %v132, 16
    %v276 = vrot.slane %v274, 4
    %v277 = vor.u32 %v276, %v272
    %v278 = vrot.slane %v277, 4
    %v280 = vshll.u32 %v133, 16
    %v282 = vrot.slane %v280, 5
    %v283 = vsel %vm157, %v278, %v282
    %v284 = vshrl.u32 %v133, 16
    %v286 = vrot.slane %v284, 4
    %v287 = vor.u32 %v286, %v282
    %v288 = vrot.slane %v287, 4
    %v290 = vshll.u32 %v134, 16
    %v292 = vrot.slane %v290, 5
    %v293 = vsel %vm157, %v288, %v292
    %v295 = vshrl.u32 %v135, 16
    %v297 = vrot.slane %v295, 4
    %v298 = vshll.u32 %v135, 16
    %v300 = vrot.slane %v298, 5
    %v301 = vor.u32 %v297, %v300
    %v302 = vrot.slane %v301, 4
    %v304 = vshll.u32 %v136, 16
    %v306 = vrot.slane %v304, 5
    %v307 = vsel %vm157, %v302, %v306
    %v308 = vshrl.u32 %v136, 16
    %v310 = vrot.slane %v308, 4
    %v311 = vor.u32 %v310, %v306
    %v312 = vrot.slane %v311, 4
    %v314 = vshll.u32 %v137, 16
    %v316 = vrot.slane %v314, 5
    %v317 = vsel %vm157, %v312, %v316
    %v318 = vshrl.u32 %v137, 16
    %v320 = vrot.slane %v318, 4
    %v321 = vor.u32 %v320, %v316
    %v322 = vrot.slane %v321, 4
    %v324 = vshll.u32 %v138, 16
    %v326 = vrot.slane %v324, 5
    %v327 = vsel %vm157, %v322, %v326
    %v329 = vshrl.u32 %v139, 16
    %v331 = vrot.slane %v329, 4
    %v332 = vshll.u32 %v139, 16
    %v334 = vrot.slane %v332, 5
    %v335 = vor.u32 %v331, %v334
    %v336 = vrot.slane %v335, 4
    %v338 = vshll.u32 %v140, 16
    %v340 = vrot.slane %v338, 5
    %v341 = vsel %vm157, %v336, %v340
    %v342 = vshrl.u32 %v140, 16
    %v344 = vrot.slane %v342, 4
    %v345 = vor.u32 %v344, %v340
    %v346 = vrot.slane %v345, 4
    %v348 = vshll.u32 %v141, 16
    %v350 = vrot.slane %v348, 5
    %v351 = vsel %vm157, %v346, %v350
    %v352 = vshrl.u32 %v141, 16
    %v354 = vrot.slane %v352, 4
    %v355 = vor.u32 %v354, %v350
    %v356 = vrot.slane %v355, 4
    %v358 = vshll.u32 %v142, 16
    %v360 = vrot.slane %v358, 5
    %v361 = vsel %vm157, %v356, %v360
    %v363 = vshrl.u32 %v143, 16
    %v365 = vrot.slane %v363, 4
    %v366 = vshll.u32 %v143, 16
    %v368 = vrot.slane %v366, 5
    %v369 = vor.u32 %v365, %v368
    %v370 = vrot.slane %v369, 4
    %v372 = vshll.u32 %v144, 16
    %v374 = vrot.slane %v372, 5
    %v375 = vsel %vm157, %v370, %v374
    %v376 = vshrl.u32 %v144, 16
    %v378 = vrot.slane %v376, 4
    %v379 = vor.u32 %v378, %v374
    %v380 = vrot.slane %v379, 4
    %v382 = vshll.u32 %v145, 16
    %v384 = vrot.slane %v382, 5
    %v385 = vsel %vm157, %v380, %v384
    %v386 = vshrl.u32 %v145, 16
    %v388 = vrot.slane %v386, 4
    %v389 = vor.u32 %v388, %v384
    %v390 = vrot.slane %v389, 4
    %v392 = vshll.u32 %v146, 16
    %v394 = vrot.slane %v392, 5
    %v395 = vsel %vm157, %v390, %v394
    %v397 = vshrl.u32 %v147, 16
    %v399 = vrot.slane %v397, 4
    %v400 = vshll.u32 %v147, 16
    %v402 = vrot.slane %v400, 5
    %v403 = vor.u32 %v399, %v402
    %v404 = vrot.slane %v403, 4
    %v406 = vshll.u32 %v148, 16
    %v408 = vrot.slane %v406, 5
    %v409 = vsel %vm157, %v404, %v408
    %v410 = vshrl.u32 %v148, 16
    %v412 = vrot.slane %v410, 4
    %v413 = vor.u32 %v412, %v408
    %v414 = vrot.slane %v413, 4
    %v416 = vshll.u32 %v149, 16
    %v418 = vrot.slane %v416, 5
    %v419 = vsel %vm157, %v414, %v418
    %v420 = vshrl.u32 %v149, 16
    %v422 = vrot.slane %v420, 4
    %v423 = vor.u32 %v422, %v418
    %v424 = vrot.slane %v423, 4
    %v426 = vshll.u32 %v150, 16
    %v428 = vrot.slane %v426, 5
    %v429 = vsel %vm157, %v424, %v428
    %s430 = scalar_lea.vmem %s1, 32
    %v431 = vld [vmem:[%s430] sm:$0xff]
    %v432 = vld [vmem:[%s430 + $0x8] sm:$0xff]
    %v433 = vld [vmem:[%s430 + $0x10] sm:$0xff]
    %v434 = vld [vmem:[%s430 + $0x18] sm:$0x33]
    %v435 = vunpack.c.l.b16 %v171
    %v436 = vunpack.c.l.b16 %v181
    %v437 = vunpack.c.l.b16 %v191
    %v438 = vunpack.c.l.b16 %v205
    %v439 = vunpack.c.l.b16 %v215
    %v440 = vunpack.c.l.b16 %v225
    %v441 = vunpack.c.l.b16 %v239
    %v442 = vunpack.c.l.b16 %v249
    %v443 = vunpack.c.l.b16 %v259
    %v444 = vunpack.c.l.b16 %v273
    %v445 = vunpack.c.l.b16 %v283
    %v446 = vunpack.c.l.b16 %v293
    %v447 = vunpack.c.l.b16 %v307
    %v448 = vunpack.c.l.b16 %v317
    %v449 = vunpack.c.l.b16 %v327
    %v450 = vunpack.c.l.b16 %v341
    %v451 = vunpack.c.l.b16 %v351
    %v452 = vunpack.c.l.b16 %v361
    %v453 = vunpack.c.l.b16 %v375
    %v454 = vunpack.c.l.b16 %v385
    %v455 = vunpack.c.l.b16 %v395
    %v456 = vunpack.c.l.b16 %v409
    %v457 = vunpack.c.l.b16 %v419
    %v458 = vunpack.c.l.b16 %v429
    %v459 = vpack.c.b16 %v436, %v435
    %v460 = vpack.c.b16 %v438, %v437
    %v461 = vpack.c.b16 %v440, %v439
    %v462 = vpack.c.b16 %v442, %v441
    %v463 = vpack.c.b16 %v444, %v443
    %v464 = vpack.c.b16 %v446, %v445
    %v465 = vpack.c.b16 %v448, %v447
    %v466 = vpack.c.b16 %v450, %v449
    %v467 = vpack.c.b16 %v452, %v451
    %v468 = vpack.c.b16 %v454, %v453
    %v469 = vpack.c.b16 %v456, %v455
    %v470 = vpack.c.b16 %v458, %v457
    %v475 = vunpack.c.l.b16 %v431
    %v476 = vunpack.c.h.b16 %v431
    %v477 = vunpack.c.l.b16 %v432
    %v478 = vunpack.c.h.b16 %v432
    %v479 = vunpack.c.l.b16 %v433
    %v480 = vunpack.c.h.b16 %v433
    %v481 = vunpack.c.l.b16 %v434
    %v482 = vunpack.c.h.b16 %v434
    %v483 = vpack.c.b16 %v477, %v475
    %v484 = vpack.c.b16 %v478, %v476
    %v485 = vpack.c.b16 %v481, %v479
    %v486 = vpack.c.b16 %v482, %v480
    %vm489 = vcmask 228352
    %v491 = vsel %vm489, %v459, 0
    %v494 = vsel %vm489, %v460, 0
    %v497 = vsel %vm489, %v461, 0
    %v500 = vsel %vm489, %v462, 0
    %v503 = vsel %vm489, %v463, 0
    %v506 = vsel %vm489, %v464, 0
    %v509 = vsel %vm489, %v465, 0
    %v512 = vsel %vm489, %v466, 0
    %v515 = vsel %vm489, %v467, 0
    %v518 = vsel %vm489, %v468, 0
    %v521 = vsel %vm489, %v469, 0
    %v524 = vsel %vm489, %v470, 0
    %vm526 = vcmask 1045504
    %v528 = vsel %vm526, %v485, 0
    %v531 = vsel %vm526, %v486, 0
    %533 = vmatprep.subr.bf16.mxu0 %v484
    %534 = vmatpush1.bf16.msra.mxu0 %v483
    %535 = vmatprep.subr.bf16.mxu0 %v531
    %536 = vmatpush1.bf16.msra.mxu0 %v528
    %537 = vmatprep.subr.bf16.mxu0 0
    %538 = vmatpush1.bf16.msra.mxu0 0
    %539 = vmatprep.subr.bf16.mxu0 0
    %540 = vmatpush1.bf16.msra.mxu0 0
    %541 = vmatprep.subr.bf16.mxu0 0
    %542 = vmatpush1.bf16.msra.mxu0 0
    %543 = vmatprep.subr.bf16.mxu0 0
    %544 = vmatpush1.bf16.msra.mxu0 0
    %545 = vmatprep.subr.bf16.mxu0 0
    %546 = vmatpush1.bf16.msra.mxu0 0
    %547 = vmatprep.subr.bf16.mxu0 0
    %548 = vmatpush1.bf16.msra.mxu0 0
    %549 = vmatprep.subr.bf16.mxu0 0
    %550 = vmatpush1.bf16.msra.mxu0 0
    %551 = vmatprep.subr.bf16.mxu0 0
    %552 = vmatpush1.bf16.msra.mxu0 0
    %553 = vmatprep.subr.bf16.mxu0 0
    %554 = vmatpush1.bf16.msra.mxu0 0
    %555 = vmatprep.subr.bf16.mxu0 0
    %556 = vmatpush1.bf16.msra.mxu0 0
    %557 = vmatprep.subr.bf16.mxu0 0
    %558 = vmatpush1.bf16.msra.mxu0 0
    %559 = vmatprep.subr.bf16.mxu0 0
    %560 = vmatpush1.bf16.msra.mxu0 0
    %561 = vmatprep.subr.bf16.mxu0 0
    %562 = vmatpush1.bf16.msra.mxu0 0
    %563 = vmatprep.subr.bf16.mxu0 0
    %564 = vmatpush1.bf16.msra.mxu0 0
    %565 = vmatprep.mubr.bf16.mxu0 0
    %566 = vmatmul.mubr.bf16.gmra.mrb[0].mxu0 %v491
    %v567 = vpop.f32.mrb[0].mxu0
    %v568 = vadd.f32 0.0, %v567
    %v569 = vpop.f32.mrb[0].mxu0
    %v570 = vadd.f32 0.0, %v569
    %v571 = vpop.f32.mrb[0].mxu0
    %v572 = vadd.f32 0.0, %v571
    %v573 = vpop.f32.mrb[0].mxu0
    %v574 = vadd.f32 0.0, %v573
    %575 = vmatprep.mubr.bf16.mxu0 0
    %576 = vmatmul.mubr.bf16.gmra.mrb[0].mxu0 %v494
    %v577 = vpop.f32.mrb[0].mxu0
    %v578 = vadd.f32 0.0, %v577
    %v579 = vpop.f32.mrb[0].mxu0
    %v580 = vadd.f32 0.0, %v579
    %v581 = vpop.f32.mrb[0].mxu0
    %v582 = vadd.f32 0.0, %v581
    %v583 = vpop.f32.mrb[0].mxu0
    %v584 = vadd.f32 0.0, %v583
    %585 = vmatprep.mubr.bf16.mxu0 0
    %586 = vmatmul.mubr.bf16.gmra.mrb[0].mxu0 %v497
    %v587 = vpop.f32.mrb[0].mxu0
    %v588 = vadd.f32 0.0, %v587
    %v589 = vpop.f32.mrb[0].mxu0
    %v590 = vadd.f32 0.0, %v589
    %v591 = vpop.f32.mrb[0].mxu0
    %v592 = vadd.f32 0.0, %v591
    %v593 = vpop.f32.mrb[0].mxu0
    %v594 = vadd.f32 0.0, %v593
    %595 = vmatprep.mubr.bf16.mxu0 0
    %596 = vmatmul.mubr.bf16.gmra.mrb[0].mxu0 %v500
    %v597 = vpop.f32.mrb[0].mxu0
    %v598 = vadd.f32 0.0, %v597
    %v599 = vpop.f32.mrb[0].mxu0
    %v600 = vadd.f32 0.0, %v599
    %v601 = vpop.f32.mrb[0].mxu0
    %v602 = vadd.f32 0.0, %v601
    %v603 = vpop.f32.mrb[0].mxu0
    %v604 = vadd.f32 0.0, %v603
    %605 = vmatprep.mubr.bf16.mxu0 0
    %606 = vmatmul.mubr.bf16.gmra.mrb[0].mxu0 %v503
    %v607 = vpop.f32.mrb[0].mxu0
    %v608 = vadd.f32 0.0, %v607
    %v609 = vpop.f32.mrb[0].mxu0
    %v610 = vadd.f32 0.0, %v609
    %v611 = vpop.f32.mrb[0].mxu0
    %v612 = vadd.f32 0.0, %v611
    %v613 = vpop.f32.mrb[0].mxu0
    %v614 = vadd.f32 0.0, %v613
    %615 = vmatprep.mubr.bf16.mxu0 0
    %616 = vmatmul.mubr.bf16.gmra.mrb[0].mxu0 %v506
    %v617 = vpop.f32.mrb[0].mxu0
    %v618 = vadd.f32 0.0, %v617
    %v619 = vpop.f32.mrb[0].mxu0
    %v620 = vadd.f32 0.0, %v619
    %v621 = vpop.f32.mrb[0].mxu0
    %v622 = vadd.f32 0.0, %v621
    %v623 = vpop.f32.mrb[0].mxu0
    %v624 = vadd.f32 0.0, %v623
    %625 = vmatprep.mubr.bf16.mxu0 0
    %626 = vmatmul.mubr.bf16.gmra.mrb[0].mxu0 %v509
    %v627 = vpop.f32.mrb[0].mxu0
    %v628 = vadd.f32 0.0, %v627
    %v629 = vpop.f32.mrb[0].mxu0
    %v630 = vadd.f32 0.0, %v629
    %v631 = vpop.f32.mrb[0].mxu0
    %v632 = vadd.f32 0.0, %v631
    %v633 = vpop.f32.mrb[0].mxu0
    %v634 = vadd.f32 0.0, %v633
    %635 = vmatprep.mubr.bf16.mxu0 0
    %636 = vmatmul.mubr.bf16.gmra.mrb[0].mxu0 %v512
    %v637 = vpop.f32.mrb[0].mxu0
    %v638 = vadd.f32 0.0, %v637
    %v639 = vpop.f32.mrb[0].mxu0
    %v640 = vadd.f32 0.0, %v639
    %v641 = vpop.f32.mrb[0].mxu0
    %v642 = vadd.f32 0.0, %v641
    %v643 = vpop.f32.mrb[0].mxu0
    %v644 = vadd.f32 0.0, %v643
    %645 = vmatprep.mubr.bf16.mxu0 0
    %646 = vmatmul.mubr.bf16.gmra.mrb[0].mxu0 %v515
    %v647 = vpop.f32.mrb[0].mxu0
    %v648 = vadd.f32 0.0, %v647
    %v649 = vpop.f32.mrb[0].mxu0
    %v650 = vadd.f32 0.0, %v649
    %v651 = vpop.f32.mrb[0].mxu0
    %v652 = vadd.f32 0.0, %v651
    %v653 = vpop.f32.mrb[0].mxu0
    %v654 = vadd.f32 0.0, %v653
    %655 = vmatprep.mubr.bf16.mxu0 0
    %656 = vmatmul.mubr.bf16.gmra.mrb[0].mxu0 %v518
    %v657 = vpop.f32.mrb[0].mxu0
    %v658 = vadd.f32 0.0, %v657
    %v659 = vpop.f32.mrb[0].mxu0
    %v660 = vadd.f32 0.0, %v659
    %v661 = vpop.f32.mrb[0].mxu0
    %v662 = vadd.f32 0.0, %v661
    %v663 = vpop.f32.mrb[0].mxu0
    %v664 = vadd.f32 0.0, %v663
    %665 = vmatprep.mubr.bf16.mxu0 0
    %666 = vmatmul.mubr.bf16.gmra.mrb[0].mxu0 %v521
    %v667 = vpop.f32.mrb[0].mxu0
    %v668 = vadd.f32 0.0, %v667
    %v669 = vpop.f32.mrb[0].mxu0
    %v670 = vadd.f32 0.0, %v669
    %v671 = vpop.f32.mrb[0].mxu0
    %v672 = vadd.f32 0.0, %v671
    %v673 = vpop.f32.mrb[0].mxu0
    %v674 = vadd.f32 0.0, %v673
    %675 = vmatprep.mubr.bf16.mxu0 0
    %676 = vmatmul.mubr.bf16.gmra.mrb[0].mxu0 %v524
    %v677 = vpop.f32.mrb[0].mxu0
    %v678 = vadd.f32 0.0, %v677
    %v679 = vpop.f32.mrb[0].mxu0
    %v680 = vadd.f32 0.0, %v679
    %v681 = vpop.f32.mrb[0].mxu0
    %v682 = vadd.f32 0.0, %v681
    %v683 = vpop.f32.mrb[0].mxu0
    %v684 = vadd.f32 0.0, %v683
    %685 = vdwg.mxu0
    %v710 = vunpack.c.l.b16 %v119
    %v711 = vunpack.c.l.b16 %v120
    %v712 = vunpack.c.l.b16 %v121
    %v713 = vunpack.c.l.b16 %v123
    %v714 = vunpack.c.l.b16 %v124
    %v715 = vunpack.c.l.b16 %v125
    %v716 = vunpack.c.l.b16 %v127
    %v717 = vunpack.c.l.b16 %v128
    %v718 = vunpack.c.l.b16 %v129
    %v719 = vunpack.c.l.b16 %v131
    %v720 = vunpack.c.l.b16 %v132
    %v721 = vunpack.c.l.b16 %v133
    %v722 = vunpack.c.l.b16 %v135
    %v723 = vunpack.c.l.b16 %v136
    %v724 = vunpack.c.l.b16 %v137
    %v725 = vunpack.c.l.b16 %v139
    %v726 = vunpack.c.l.b16 %v140
    %v727 = vunpack.c.l.b16 %v141
    %v728 = vunpack.c.l.b16 %v143
    %v729 = vunpack.c.l.b16 %v144
    %v730 = vunpack.c.l.b16 %v145
    %v731 = vunpack.c.l.b16 %v147
    %v732 = vunpack.c.l.b16 %v148
    %v733 = vunpack.c.l.b16 %v149
    %v734 = vpack.c.b16 %v711, %v710
    %v735 = vpack.c.b16 %v713, %v712
    %v736 = vpack.c.b16 %v715, %v714
    %v737 = vpack.c.b16 %v717, %v716
    %v738 = vpack.c.b16 %v719, %v718
    %v739 = vpack.c.b16 %v721, %v720
    %v740 = vpack.c.b16 %v723, %v722
    %v741 = vpack.c.b16 %v725, %v724
    %v742 = vpack.c.b16 %v727, %v726
    %v743 = vpack.c.b16 %v729, %v728
    %v744 = vpack.c.b16 %v731, %v730
    %v745 = vpack.c.b16 %v733, %v732
    %v750 = vunpack.c.l.b16 %v151
    %v751 = vunpack.c.h.b16 %v151
    %v752 = vunpack.c.l.b16 %v152
    %v753 = vunpack.c.h.b16 %v152
    %v754 = vunpack.c.l.b16 %v153
    %v755 = vunpack.c.h.b16 %v153
    %v756 = vunpack.c.l.b16 %v154
    %v757 = vunpack.c.h.b16 %v154
    %v758 = vpack.c.b16 %v752, %v750
    %v759 = vpack.c.b16 %v753, %v751
    %v760 = vpack.c.b16 %v756, %v754
    %v761 = vpack.c.b16 %v757, %v755
    %v765 = vsel %vm489, %v734, 0
    %v768 = vsel %vm489, %v735, 0
    %v771 = vsel %vm489, %v736, 0
    %v774 = vsel %vm489, %v737, 0
    %v777 = vsel %vm489, %v738, 0
    %v780 = vsel %vm489, %v739, 0
    %v783 = vsel %vm489, %v740, 0
    %v786 = vsel %vm489, %v741, 0
    %v789 = vsel %vm489, %v742, 0
    %v792 = vsel %vm489, %v743, 0
    %v795 = vsel %vm489, %v744, 0
    %v798 = vsel %vm489, %v745, 0
    %v801 = vsel %vm526, %v760, 0
    %v804 = vsel %vm526, %v761, 0
    %806 = vmatprep.subr.bf16.mxu0 %v759
    %807 = vmatpush1.bf16.msra.mxu0 %v758
    %808 = vmatprep.subr.bf16.mxu0 %v804
    %809 = vmatpush1.bf16.msra.mxu0 %v801
    %810 = vmatprep.subr.bf16.mxu0 0
    %811 = vmatpush1.bf16.msra.mxu0 0
    %812 = vmatprep.subr.bf16.mxu0 0
    %813 = vmatpush1.bf16.msra.mxu0 0
    %814 = vmatprep.subr.bf16.mxu0 0
    %815 = vmatpush1.bf16.msra.mxu0 0
    %816 = vmatprep.subr.bf16.mxu0 0
    %817 = vmatpush1.bf16.msra.mxu0 0
    %818 = vmatprep.subr.bf16.mxu0 0
    %819 = vmatpush1.bf16.msra.mxu0 0
    %820 = vmatprep.subr.bf16.mxu0 0
    %821 = vmatpush1.bf16.msra.mxu0 0
    %822 = vmatprep.subr.bf16.mxu0 0
    %823 = vmatpush1.bf16.msra.mxu0 0
    %824 = vmatprep.subr.bf16.mxu0 0
    %825 = vmatpush1.bf16.msra.mxu0 0
    %826 = vmatprep.subr.bf16.mxu0 0
    %827 = vmatpush1.bf16.msra.mxu0 0
    %828 = vmatprep.subr.bf16.mxu0 0
    %829 = vmatpush1.bf16.msra.mxu0 0
    %830 = vmatprep.subr.bf16.mxu0 0
    %831 = vmatpush1.bf16.msra.mxu0 0
    %832 = vmatprep.subr.bf16.mxu0 0
    %833 = vmatpush1.bf16.msra.mxu0 0
    %834 = vmatprep.subr.bf16.mxu0 0
    %835 = vmatpush1.bf16.msra.mxu0 0
    %836 = vmatprep.subr.bf16.mxu0 0
    %837 = vmatpush1.bf16.msra.mxu0 0
    %838 = vmatprep.mubr.bf16.mxu0 0
    %839 = vmatmul.mubr.bf16.gmra.mrb[0].mxu0 %v765
    %v840 = vpop.f32.mrb[0].mxu0
    %v841 = vadd.f32 %v568, %v840
    %v842 = vpop.f32.mrb[0].mxu0
    %v843 = vadd.f32 %v570, %v842
    %v844 = vpop.f32.mrb[0].mxu0
    %v845 = vadd.f32 %v572, %v844
    %v846 = vpop.f32.mrb[0].mxu0
    %v847 = vadd.f32 %v574, %v846
    %848 = vmatprep.mubr.bf16.mxu0 0
    %849 = vmatmul.mubr.bf16.gmra.mrb[0].mxu0 %v768
    %v850 = vpop.f32.mrb[0].mxu0
    %v851 = vadd.f32 %v578, %v850
    %v852 = vpop.f32.mrb[0].mxu0
    %v853 = vadd.f32 %v580, %v852
    %v854 = vpop.f32.mrb[0].mxu0
    %v855 = vadd.f32 %v582, %v854
    %v856 = vpop.f32.mrb[0].mxu0
    %v857 = vadd.f32 %v584, %v856
    %858 = vmatprep.mubr.bf16.mxu0 0
    %859 = vmatmul.mubr.bf16.gmra.mrb[0].mxu0 %v771
    %v860 = vpop.f32.mrb[0].mxu0
    %v861 = vadd.f32 %v588, %v860
    %v862 = vpop.f32.mrb[0].mxu0
    %v863 = vadd.f32 %v590, %v862
    %v864 = vpop.f32.mrb[0].mxu0
    %v865 = vadd.f32 %v592, %v864
    %v866 = vpop.f32.mrb[0].mxu0
    %v867 = vadd.f32 %v594, %v866
    %868 = vmatprep.mubr.bf16.mxu0 0
    %869 = vmatmul.mubr.bf16.gmra.mrb[0].mxu0 %v774
    %v870 = vpop.f32.mrb[0].mxu0
    %v871 = vadd.f32 %v598, %v870
    %v872 = vpop.f32.mrb[0].mxu0
    %v873 = vadd.f32 %v600, %v872
    %v874 = vpop.f32.mrb[0].mxu0
    %v875 = vadd.f32 %v602, %v874
    %v876 = vpop.f32.mrb[0].mxu0
    %v877 = vadd.f32 %v604, %v876
    %878 = vmatprep.mubr.bf16.mxu0 0
    %879 = vmatmul.mubr.bf16.gmra.mrb[0].mxu0 %v777
    %v880 = vpop.f32.mrb[0].mxu0
    %v881 = vadd.f32 %v608, %v880
    %v882 = vpop.f32.mrb[0].mxu0
    %v883 = vadd.f32 %v610, %v882
    %v884 = vpop.f32.mrb[0].mxu0
    %v885 = vadd.f32 %v612, %v884
    %v886 = vpop.f32.mrb[0].mxu0
    %v887 = vadd.f32 %v614, %v886
    %888 = vmatprep.mubr.bf16.mxu0 0
    %889 = vmatmul.mubr.bf16.gmra.mrb[0].mxu0 %v780
    %v890 = vpop.f32.mrb[0].mxu0
    %v891 = vadd.f32 %v618, %v890
    %v892 = vpop.f32.mrb[0].mxu0
    %v893 = vadd.f32 %v620, %v892
    %v894 = vpop.f32.mrb[0].mxu0
    %v895 = vadd.f32 %v622, %v894
    %v896 = vpop.f32.mrb[0].mxu0
    %v897 = vadd.f32 %v624, %v896
    %898 = vmatprep.mubr.bf16.mxu0 0
    %899 = vmatmul.mubr.bf16.gmra.mrb[0].mxu0 %v783
    %v900 = vpop.f32.mrb[0].mxu0
    %v901 = vadd.f32 %v628, %v900
    %v902 = vpop.f32.mrb[0].mxu0
    %v903 = vadd.f32 %v630, %v902
    %v904 = vpop.f32.mrb[0].mxu0
    %v905 = vadd.f32 %v632, %v904
    %v906 = vpop.f32.mrb[0].mxu0
    %v907 = vadd.f32 %v634, %v906
    %908 = vmatprep.mubr.bf16.mxu0 0
    %909 = vmatmul.mubr.bf16.gmra.mrb[0].mxu0 %v786
    %v910 = vpop.f32.mrb[0].mxu0
    %v911 = vadd.f32 %v638, %v910
    %v912 = vpop.f32.mrb[0].mxu0
    %v913 = vadd.f32 %v640, %v912
    %v914 = vpop.f32.mrb[0].mxu0
    %v915 = vadd.f32 %v642, %v914
    %v916 = vpop.f32.mrb[0].mxu0
    %v917 = vadd.f32 %v644, %v916
    %918 = vmatprep.mubr.bf16.mxu0 0
    %919 = vmatmul.mubr.bf16.gmra.mrb[0].mxu0 %v789
    %v920 = vpop.f32.mrb[0].mxu0
    %v921 = vadd.f32 %v648, %v920
    %v922 = vpop.f32.mrb[0].mxu0
    %v923 = vadd.f32 %v650, %v922
    %v924 = vpop.f32.mrb[0].mxu0
    %v925 = vadd.f32 %v652, %v924
    %v926 = vpop.f32.mrb[0].mxu0
    %v927 = vadd.f32 %v654, %v926
    %928 = vmatprep.mubr.bf16.mxu0 0
    %929 = vmatmul.mubr.bf16.gmra.mrb[0].mxu0 %v792
    %v930 = vpop.f32.mrb[0].mxu0
    %v931 = vadd.f32 %v658, %v930
    %v932 = vpop.f32.mrb[0].mxu0
    %v933 = vadd.f32 %v660, %v932
    %v934 = vpop.f32.mrb[0].mxu0
    %v935 = vadd.f32 %v662, %v934
    %v936 = vpop.f32.mrb[0].mxu0
    %v937 = vadd.f32 %v664, %v936
    %938 = vmatprep.mubr.bf16.mxu0 0
    %939 = vmatmul.mubr.bf16.gmra.mrb[0].mxu0 %v795
    %v940 = vpop.f32.mrb[0].mxu0
    %v941 = vadd.f32 %v668, %v940
    %v942 = vpop.f32.mrb[0].mxu0
    %v943 = vadd.f32 %v670, %v942
    %v944 = vpop.f32.mrb[0].mxu0
    %v945 = vadd.f32 %v672, %v944
    %v946 = vpop.f32.mrb[0].mxu0
    %v947 = vadd.f32 %v674, %v946
    %948 = vmatprep.mubr.bf16.mxu0 0
    %949 = vmatmul.mubr.bf16.gmra.mrb[0].mxu0 %v798
    %v950 = vpop.f32.mrb[0].mxu0
    %v951 = vadd.f32 %v678, %v950
    %v952 = vpop.f32.mrb[0].mxu0
    %v953 = vadd.f32 %v680, %v952
    %v954 = vpop.f32.mrb[0].mxu0
    %v955 = vadd.f32 %v682, %v954
    %v956 = vpop.f32.mrb[0].mxu0
    %v957 = vadd.f32 %v684, %v956
    %958 = vdwg.mxu0
    %vm967 = vcmask 1042432
    %vm968 = vcmask 1046532
    %vm969 = vmor %vm967, %vm968
    %v970 = vrot.slane %v119, 5
    %v971 = vrot.slane %v970, 4
    %v972 = vrot.slane %v120, 5
    %v973 = vsel %vm969, %v971, %v972
    %v974 = vrot.slane %v972, 4
    %v975 = vrot.slane %v121, 5
    %v976 = vsel %vm969, %v974, %v975
    %v977 = vrot.slane %v975, 4
    %v978 = vrot.slane %v122, 5
    %v979 = vsel %vm969, %v977, %v978
    %v980 = vrot.slane %v123, 5
    %v981 = vrot.slane %v980, 4
    %v982 = vrot.slane %v124, 5
    %v983 = vsel %vm969, %v981, %v982
    %v984 = vrot.slane %v982, 4
    %v985 = vrot.slane %v125, 5
    %v986 = vsel %vm969, %v984, %v985
    %v987 = vrot.slane %v985, 4
    %v988 = vrot.slane %v126, 5
    %v989 = vsel %vm969, %v987, %v988
    %v990 = vrot.slane %v127, 5
    %v991 = vrot.slane %v990, 4
    %v992 = vrot.slane %v128, 5
    %v993 = vsel %vm969, %v991, %v992
    %v994 = vrot.slane %v992, 4
    %v995 = vrot.slane %v129, 5
    %v996 = vsel %vm969, %v994, %v995
    %v997 = vrot.slane %v995, 4
    %v998 = vrot.slane %v130, 5
    %v999 = vsel %vm969, %v997, %v998
    %v1000 = vrot.slane %v131, 5
    %v1001 = vrot.slane %v1000, 4
    %v1002 = vrot.slane %v132, 5
    %v1003 = vsel %vm969, %v1001, %v1002
    %v1004 = vrot.slane %v1002, 4
    %v1005 = vrot.slane %v133, 5
    %v1006 = vsel %vm969, %v1004, %v1005
    %v1007 = vrot.slane %v1005, 4
    %v1008 = vrot.slane %v134, 5
    %v1009 = vsel %vm969, %v1007, %v1008
    %v1010 = vrot.slane %v135, 5
    %v1011 = vrot.slane %v1010, 4
    %v1012 = vrot.slane %v136, 5
    %v1013 = vsel %vm969, %v1011, %v1012
    %v1014 = vrot.slane %v1012, 4
    %v1015 = vrot.slane %v137, 5
    %v1016 = vsel %vm969, %v1014, %v1015
    %v1017 = vrot.slane %v1015, 4
    %v1018 = vrot.slane %v138, 5
    %v1019 = vsel %vm969, %v1017, %v1018
    %v1020 = vrot.slane %v139, 5
    %v1021 = vrot.slane %v1020, 4
    %v1022 = vrot.slane %v140, 5
    %v1023 = vsel %vm969, %v1021, %v1022
    %v1024 = vrot.slane %v1022, 4
    %v1025 = vrot.slane %v141, 5
    %v1026 = vsel %vm969, %v1024, %v1025
    %v1027 = vrot.slane %v1025, 4
    %v1028 = vrot.slane %v142, 5
    %v1029 = vsel %vm969, %v1027, %v1028
    %v1030 = vrot.slane %v143, 5
    %v1031 = vrot.slane %v1030, 4
    %v1032 = vrot.slane %v144, 5
    %v1033 = vsel %vm969, %v1031, %v1032
    %v1034 = vrot.slane %v1032, 4
    %v1035 = vrot.slane %v145, 5
    %v1036 = vsel %vm969, %v1034, %v1035
    %v1037 = vrot.slane %v1035, 4
    %v1038 = vrot.slane %v146, 5
    %v1039 = vsel %vm969, %v1037, %v1038
    %v1040 = vrot.slane %v147, 5
    %v1041 = vrot.slane %v1040, 4
    %v1042 = vrot.slane %v148, 5
    %v1043 = vsel %vm969, %v1041, %v1042
    %v1044 = vrot.slane %v1042, 4
    %v1045 = vrot.slane %v149, 5
    %v1046 = vsel %vm969, %v1044, %v1045
    %v1047 = vrot.slane %v1045, 4
    %v1048 = vrot.slane %v150, 5
    %v1049 = vsel %vm969, %v1047, %v1048
    %s1050 = scalar_lea.vmem %s1, 64
    %v1051 = vld [vmem:[%s1050] sm:$0xff]
    %v1052 = vld [vmem:[%s1050 + $0x8] sm:$0xff]
    %v1053 = vld [vmem:[%s1050 + $0x10] sm:$0xff]
    %v1054 = vld [vmem:[%s1050 + $0x18] sm:$0x33]
    %v1055 = vunpack.c.l.b16 %v973
    %v1056 = vunpack.c.l.b16 %v976
    %v1057 = vunpack.c.l.b16 %v979
    %v1058 = vunpack.c.l.b16 %v983
    %v1059 = vunpack.c.l.b16 %v986
    %v1060 = vunpack.c.l.b16 %v989
    %v1061 = vunpack.c.l.b16 %v993
    %v1062 = vunpack.c.l.b16 %v996
    %v1063 = vunpack.c.l.b16 %v999
    %v1064 = vunpack.c.l.b16 %v1003
    %v1065 = vunpack.c.l.b16 %v1006
    %v1066 = vunpack.c.l.b16 %v1009
    %v1067 = vunpack.c.l.b16 %v1013
    %v1068 = vunpack.c.l.b16 %v1016
    %v1069 = vunpack.c.l.b16 %v1019
    %v1070 = vunpack.c.l.b16 %v1023
    %v1071 = vunpack.c.l.b16 %v1026
    %v1072 = vunpack.c.l.b16 %v1029
    %v1073 = vunpack.c.l.b16 %v1033
    %v1074 = vunpack.c.l.b16 %v1036
    %v1075 = vunpack.c.l.b16 %v1039
    %v1076 = vunpack.c.l.b16 %v1043
    %v1077 = vunpack.c.l.b16 %v1046
    %v1078 = vunpack.c.l.b16 %v1049
    %v1079 = vpack.c.b16 %v1056, %v1055
    %v1080 = vpack.c.b16 %v1058, %v1057
    %v1081 = vpack.c.b16 %v1060, %v1059
    %v1082 = vpack.c.b16 %v1062, %v1061
    %v1083 = vpack.c.b16 %v1064, %v1063
    %v1084 = vpack.c.b16 %v1066, %v1065
    %v1085 = vpack.c.b16 %v1068, %v1067
    %v1086 = vpack.c.b16 %v1070, %v1069
    %v1087 = vpack.c.b16 %v1072, %v1071
    %v1088 = vpack.c.b16 %v1074, %v1073
    %v1089 = vpack.c.b16 %v1076, %v1075
    %v1090 = vpack.c.b16 %v1078, %v1077
    %v1095 = vunpack.c.l.b16 %v1051
    %v1096 = vunpack.c.h.b16 %v1051
    %v1097 = vunpack.c.l.b16 %v1052
    %v1098 = vunpack.c.h.b16 %v1052
    %v1099 = vunpack.c.l.b16 %v1053
    %v1100 = vunpack.c.h.b16 %v1053
    %v1101 = vunpack.c.l.b16 %v1054
    %v1102 = vunpack.c.h.b16 %v1054
    %v1103 = vpack.c.b16 %v1097, %v1095
    %v1104 = vpack.c.b16 %v1098, %v1096
    %v1105 = vpack.c.b16 %v1101, %v1099
    %v1106 = vpack.c.b16 %v1102, %v1100
    %v1110 = vsel %vm489, %v1079, 0
    %v1113 = vsel %vm489, %v1080, 0
    %v1116 = vsel %vm489, %v1081, 0
    %v1119 = vsel %vm489, %v1082, 0
    %v1122 = vsel %vm489, %v1083, 0
    %v1125 = vsel %vm489, %v1084, 0
    %v1128 = vsel %vm489, %v1085, 0
    %v1131 = vsel %vm489, %v1086, 0
    %v1134 = vsel %vm489, %v1087, 0
    %v1137 = vsel %vm489, %v1088, 0
    %v1140 = vsel %vm489, %v1089, 0
    %v1143 = vsel %vm489, %v1090, 0
    %v1146 = vsel %vm526, %v1105, 0
    %v1149 = vsel %vm526, %v1106, 0
    %1151 = vmatprep.subr.bf16.mxu0 %v1104
    %1152 = vmatpush1.bf16.msra.mxu0 %v1103
    %1153 = vmatprep.subr.bf16.mxu0 %v1149
    %1154 = vmatpush1.bf16.msra.mxu0 %v1146
    %1155 = vmatprep.subr.bf16.mxu0 0
    %1156 = vmatpush1.bf16.msra.mxu0 0
    %1157 = vmatprep.subr.bf16.mxu0 0
    %1158 = vmatpush1.bf16.msra.mxu0 0
    %1159 = vmatprep.subr.bf16.mxu0 0
    %1160 = vmatpush1.bf16.msra.mxu0 0
    %1161 = vmatprep.subr.bf16.mxu0 0
    %1162 = vmatpush1.bf16.msra.mxu0 0
    %1163 = vmatprep.subr.bf16.mxu0 0
    %1164 = vmatpush1.bf16.msra.mxu0 0
    %1165 = vmatprep.subr.bf16.mxu0 0
    %1166 = vmatpush1.bf16.msra.mxu0 0
    %1167 = vmatprep.subr.bf16.mxu0 0
    %1168 = vmatpush1.bf16.msra.mxu0 0
    %1169 = vmatprep.subr.bf16.mxu0 0
    %1170 = vmatpush1.bf16.msra.mxu0 0
    %1171 = vmatprep.subr.bf16.mxu0 0
    %1172 = vmatpush1.bf16.msra.mxu0 0
    %1173 = vmatprep.subr.bf16.mxu0 0
    %1174 = vmatpush1.bf16.msra.mxu0 0
    %1175 = vmatprep.subr.bf16.mxu0 0
    %1176 = vmatpush1.bf16.msra.mxu0 0
    %1177 = vmatprep.subr.bf16.mxu0 0
    %1178 = vmatpush1.bf16.msra.mxu0 0
    %1179 = vmatprep.subr.bf16.mxu0 0
    %1180 = vmatpush1.bf16.msra.mxu0 0
    %1181 = vmatprep.subr.bf16.mxu0 0
    %1182 = vmatpush1.bf16.msra.mxu0 0
    %1183 = vmatprep.mubr.bf16.mxu0 0
    %1184 = vmatmul.mubr.bf16.gmra.mrb[0].mxu0 %v1110
    %v1185 = vpop.f32.mrb[0].mxu0
    %v1186 = vadd.f32 0.0, %v1185
    %v1187 = vpop.f32.mrb[0].mxu0
    %v1188 = vadd.f32 0.0, %v1187
    %v1189 = vpop.f32.mrb[0].mxu0
    %v1190 = vadd.f32 0.0, %v1189
    %v1191 = vpop.f32.mrb[0].mxu0
    %v1192 = vadd.f32 0.0, %v1191
    %1193 = vmatprep.mubr.bf16.mxu0 0
    %1194 = vmatmul.mubr.bf16.gmra.mrb[0].mxu0 %v1113
    %v1195 = vpop.f32.mrb[0].mxu0
    %v1196 = vadd.f32 0.0, %v1195
    %v1197 = vpop.f32.mrb[0].mxu0
    %v1198 = vadd.f32 0.0, %v1197
    %v1199 = vpop.f32.mrb[0].mxu0
    %v1200 = vadd.f32 0.0, %v1199
    %v1201 = vpop.f32.mrb[0].mxu0
    %v1202 = vadd.f32 0.0, %v1201
    %1203 = vmatprep.mubr.bf16.mxu0 0
    %1204 = vmatmul.mubr.bf16.gmra.mrb[0].mxu0 %v1116
    %v1205 = vpop.f32.mrb[0].mxu0
    %v1206 = vadd.f32 0.0, %v1205
    %v1207 = vpop.f32.mrb[0].mxu0
    %v1208 = vadd.f32 0.0, %v1207
    %v1209 = vpop.f32.mrb[0].mxu0
    %v1210 = vadd.f32 0.0, %v1209
    %v1211 = vpop.f32.mrb[0].mxu0
    %v1212 = vadd.f32 0.0, %v1211
    %1213 = vmatprep.mubr.bf16.mxu0 0
    %1214 = vmatmul.mubr.bf16.gmra.mrb[0].mxu0 %v1119
    %v1215 = vpop.f32.mrb[0].mxu0
    %v1216 = vadd.f32 0.0, %v1215
    %v1217 = vpop.f32.mrb[0].mxu0
    %v1218 = vadd.f32 0.0, %v1217
    %v1219 = vpop.f32.mrb[0].mxu0
    %v1220 = vadd.f32 0.0, %v1219
    %v1221 = vpop.f32.mrb[0].mxu0
    %v1222 = vadd.f32 0.0, %v1221
    %1223 = vmatprep.mubr.bf16.mxu0 0
    %1224 = vmatmul.mubr.bf16.gmra.mrb[0].mxu0 %v1122
    %v1225 = vpop.f32.mrb[0].mxu0
    %v1226 = vadd.f32 0.0, %v1225
    %v1227 = vpop.f32.mrb[0].mxu0
    %v1228 = vadd.f32 0.0, %v1227
    %v1229 = vpop.f32.mrb[0].mxu0
    %v1230 = vadd.f32 0.0, %v1229
    %v1231 = vpop.f32.mrb[0].mxu0
    %v1232 = vadd.f32 0.0, %v1231
    %1233 = vmatprep.mubr.bf16.mxu0 0
    %1234 = vmatmul.mubr.bf16.gmra.mrb[0].mxu0 %v1125
    %v1235 = vpop.f32.mrb[0].mxu0
    %v1236 = vadd.f32 0.0, %v1235
    %v1237 = vpop.f32.mrb[0].mxu0
    %v1238 = vadd.f32 0.0, %v1237
    %v1239 = vpop.f32.mrb[0].mxu0
    %v1240 = vadd.f32 0.0, %v1239
    %v1241 = vpop.f32.mrb[0].mxu0
    %v1242 = vadd.f32 0.0, %v1241
    %1243 = vmatprep.mubr.bf16.mxu0 0
    %1244 = vmatmul.mubr.bf16.gmra.mrb[0].mxu0 %v1128
    %v1245 = vpop.f32.mrb[0].mxu0
    %v1246 = vadd.f32 0.0, %v1245
    %v1247 = vpop.f32.mrb[0].mxu0
    %v1248 = vadd.f32 0.0, %v1247
    %v1249 = vpop.f32.mrb[0].mxu0
    %v1250 = vadd.f32 0.0, %v1249
    %v1251 = vpop.f32.mrb[0].mxu0
    %v1252 = vadd.f32 0.0, %v1251
    %1253 = vmatprep.mubr.bf16.mxu0 0
    %1254 = vmatmul.mubr.bf16.gmra.mrb[0].mxu0 %v1131
    %v1255 = vpop.f32.mrb[0].mxu0
    %v1256 = vadd.f32 0.0, %v1255
    %v1257 = vpop.f32.mrb[0].mxu0
    %v1258 = vadd.f32 0.0, %v1257
    %v1259 = vpop.f32.mrb[0].mxu0
    %v1260 = vadd.f32 0.0, %v1259
    %v1261 = vpop.f32.mrb[0].mxu0
    %v1262 = vadd.f32 0.0, %v1261
    %1263 = vmatprep.mubr.bf16.mxu0 0
    %1264 = vmatmul.mubr.bf16.gmra.mrb[0].mxu0 %v1134
    %v1265 = vpop.f32.mrb[0].mxu0
    %v1266 = vadd.f32 0.0, %v1265
    %v1267 = vpop.f32.mrb[0].mxu0
    %v1268 = vadd.f32 0.0, %v1267
    %v1269 = vpop.f32.mrb[0].mxu0
    %v1270 = vadd.f32 0.0, %v1269
    %v1271 = vpop.f32.mrb[0].mxu0
    %v1272 = vadd.f32 0.0, %v1271
    %1273 = vmatprep.mubr.bf16.mxu0 0
    %1274 = vmatmul.mubr.bf16.gmra.mrb[0].mxu0 %v1137
    %v1275 = vpop.f32.mrb[0].mxu0
    %v1276 = vadd.f32 0.0, %v1275
    %v1277 = vpop.f32.mrb[0].mxu0
    %v1278 = vadd.f32 0.0, %v1277
    %v1279 = vpop.f32.mrb[0].mxu0
    %v1280 = vadd.f32 0.0, %v1279
    %v1281 = vpop.f32.mrb[0].mxu0
    %v1282 = vadd.f32 0.0, %v1281
    %1283 = vmatprep.mubr.bf16.mxu0 0
    %1284 = vmatmul.mubr.bf16.gmra.mrb[0].mxu0 %v1140
    %v1285 = vpop.f32.mrb[0].mxu0
    %v1286 = vadd.f32 0.0, %v1285
    %v1287 = vpop.f32.mrb[0].mxu0
    %v1288 = vadd.f32 0.0, %v1287
    %v1289 = vpop.f32.mrb[0].mxu0
    %v1290 = vadd.f32 0.0, %v1289
    %v1291 = vpop.f32.mrb[0].mxu0
    %v1292 = vadd.f32 0.0, %v1291
    %1293 = vmatprep.mubr.bf16.mxu0 0
    %1294 = vmatmul.mubr.bf16.gmra.mrb[0].mxu0 %v1143
    %v1295 = vpop.f32.mrb[0].mxu0
    %v1296 = vadd.f32 0.0, %v1295
    %v1297 = vpop.f32.mrb[0].mxu0
    %v1298 = vadd.f32 0.0, %v1297
    %v1299 = vpop.f32.mrb[0].mxu0
    %v1300 = vadd.f32 0.0, %v1299
    %v1301 = vpop.f32.mrb[0].mxu0
    %v1302 = vadd.f32 0.0, %v1301
    %1303 = vdwg.mxu0
    %v1304 = vadd.f32 %v841, %v1186
    %v1305 = vadd.f32 %v843, %v1188
    %v1306 = vadd.f32 %v845, %v1190
    %v1307 = vadd.f32 %v847, %v1192
    %v1308 = vadd.f32 %v851, %v1196
    %v1309 = vadd.f32 %v853, %v1198
    %v1310 = vadd.f32 %v855, %v1200
    %v1311 = vadd.f32 %v857, %v1202
    %v1312 = vadd.f32 %v861, %v1206
    %v1313 = vadd.f32 %v863, %v1208
    %v1314 = vadd.f32 %v865, %v1210
    %v1315 = vadd.f32 %v867, %v1212
    %v1316 = vadd.f32 %v871, %v1216
    %v1317 = vadd.f32 %v873, %v1218
    %v1318 = vadd.f32 %v875, %v1220
    %v1319 = vadd.f32 %v877, %v1222
    %v1320 = vadd.f32 %v881, %v1226
    %v1321 = vadd.f32 %v883, %v1228
    %v1322 = vadd.f32 %v885, %v1230
    %v1323 = vadd.f32 %v887, %v1232
    %v1324 = vadd.f32 %v891, %v1236
    %v1325 = vadd.f32 %v893, %v1238
    %v1326 = vadd.f32 %v895, %v1240
    %v1327 = vadd.f32 %v897, %v1242
    %v1328 = vadd.f32 %v901, %v1246
    %v1329 = vadd.f32 %v903, %v1248
    %v1330 = vadd.f32 %v905, %v1250
    %v1331 = vadd.f32 %v907, %v1252
    %v1332 = vadd.f32 %v911, %v1256
    %v1333 = vadd.f32 %v913, %v1258
    %v1334 = vadd.f32 %v915, %v1260
    %v1335 = vadd.f32 %v917, %v1262
    %v1336 = vadd.f32 %v921, %v1266
    %v1337 = vadd.f32 %v923, %v1268
    %v1338 = vadd.f32 %v925, %v1270
    %v1339 = vadd.f32 %v927, %v1272
    %v1340 = vadd.f32 %v931, %v1276
    %v1341 = vadd.f32 %v933, %v1278
    %v1342 = vadd.f32 %v935, %v1280
    %v1343 = vadd.f32 %v937, %v1282
    %v1344 = vadd.f32 %v941, %v1286
    %v1345 = vadd.f32 %v943, %v1288
    %v1346 = vadd.f32 %v945, %v1290
    %v1347 = vadd.f32 %v947, %v1292
    %v1348 = vadd.f32 %v951, %v1296
    %v1349 = vadd.f32 %v953, %v1298
    %v1350 = vadd.f32 %v955, %v1300
    %v1351 = vadd.f32 %v957, %v1302
    %vm1352 = vsmask.f32 2304
    %vm1353 = vsmask.f32 6416
    %vm1354 = vmor %vm1352, %vm1353
    %v1355 = vrot.slane %v159, 5
    %v1356 = vrot.slane %v162, 6
    %v1357 = vor.u32 %v1355, %v1356
    %v1358 = vrot.slane %v1357, 4
    %v1359 = vrot.slane %v172, 5
    %v1360 = vrot.slane %v168, 6
    %v1361 = vor.u32 %v1359, %v1360
    %v1362 = vsel %vm1354, %v1358, %v1361
    %v1363 = vrot.slane %v1361, 4
    %v1364 = vrot.slane %v182, 5
    %v1365 = vrot.slane %v178, 6
    %v1366 = vor.u32 %v1364, %v1365
    %v1367 = vsel %vm1354, %v1363, %v1366
    %v1368 = vrot.slane %v1366, 4
    %v1369 = vshrl.u32 %v122, 16
    %v1371 = vrot.slane %v1369, 5
    %v1372 = vrot.slane %v188, 6
    %v1373 = vor.u32 %v1371, %v1372
    %v1374 = vsel %vm1354, %v1368, %v1373
    %v1375 = vrot.slane %v193, 5
    %v1376 = vrot.slane %v196, 6
    %v1377 = vor.u32 %v1375, %v1376
    %v1378 = vrot.slane %v1377, 4
    %v1379 = vrot.slane %v206, 5
    %v1380 = vrot.slane %v202, 6
    %v1381 = vor.u32 %v1379, %v1380
    %v1382 = vsel %vm1354, %v1378, %v1381
    %v1383 = vrot.slane %v1381, 4
    %v1384 = vrot.slane %v216, 5
    %v1385 = vrot.slane %v212, 6
    %v1386 = vor.u32 %v1384, %v1385
    %v1387 = vsel %vm1354, %v1383, %v1386
    %v1388 = vrot.slane %v1386, 4
    %v1389 = vshrl.u32 %v126, 16
    %v1391 = vrot.slane %v1389, 5
    %v1392 = vrot.slane %v222, 6
    %v1393 = vor.u32 %v1391, %v1392
    %v1394 = vsel %vm1354, %v1388, %v1393
    %v1395 = vrot.slane %v227, 5
    %v1396 = vrot.slane %v230, 6
    %v1397 = vor.u32 %v1395, %v1396
    %v1398 = vrot.slane %v1397, 4
    %v1399 = vrot.slane %v240, 5
    %v1400 = vrot.slane %v236, 6
    %v1401 = vor.u32 %v1399, %v1400
    %v1402 = vsel %vm1354, %v1398, %v1401
    %v1403 = vrot.slane %v1401, 4
    %v1404 = vrot.slane %v250, 5
    %v1405 = vrot.slane %v246, 6
    %v1406 = vor.u32 %v1404, %v1405
    %v1407 = vsel %vm1354, %v1403, %v1406
    %v1408 = vrot.slane %v1406, 4
    %v1409 = vshrl.u32 %v130, 16
    %v1411 = vrot.slane %v1409, 5
    %v1412 = vrot.slane %v256, 6
    %v1413 = vor.u32 %v1411, %v1412
    %v1414 = vsel %vm1354, %v1408, %v1413
    %v1415 = vrot.slane %v261, 5
    %v1416 = vrot.slane %v264, 6
    %v1417 = vor.u32 %v1415, %v1416
    %v1418 = vrot.slane %v1417, 4
    %v1419 = vrot.slane %v274, 5
    %v1420 = vrot.slane %v270, 6
    %v1421 = vor.u32 %v1419, %v1420
    %v1422 = vsel %vm1354, %v1418, %v1421
    %v1423 = vrot.slane %v1421, 4
    %v1424 = vrot.slane %v284, 5
    %v1425 = vrot.slane %v280, 6
    %v1426 = vor.u32 %v1424, %v1425
    %v1427 = vsel %vm1354, %v1423, %v1426
    %v1428 = vrot.slane %v1426, 4
    %v1429 = vshrl.u32 %v134, 16
    %v1431 = vrot.slane %v1429, 5
    %v1432 = vrot.slane %v290, 6
    %v1433 = vor.u32 %v1431, %v1432
    %v1434 = vsel %vm1354, %v1428, %v1433
    %v1435 = vrot.slane %v295, 5
    %v1436 = vrot.slane %v298, 6
    %v1437 = vor.u32 %v1435, %v1436
    %v1438 = vrot.slane %v1437, 4
    %v1439 = vrot.slane %v308, 5
    %v1440 = vrot.slane %v304, 6
    %v1441 = vor.u32 %v1439, %v1440
    %v1442 = vsel %vm1354, %v1438, %v1441
    %v1443 = vrot.slane %v1441, 4
    %v1444 = vrot.slane %v318, 5
    %v1445 = vrot.slane %v314, 6
    %v1446 = vor.u32 %v1444, %v1445
    %v1447 = vsel %vm1354, %v1443, %v1446
    %v1448 = vrot.slane %v1446, 4
    %v1449 = vshrl.u32 %v138, 16
    %v1451 = vrot.slane %v1449, 5
    %v1452 = vrot.slane %v324, 6
    %v1453 = vor.u32 %v1451, %v1452
    %v1454 = vsel %vm1354, %v1448, %v1453
    %v1455 = vrot.slane %v329, 5
    %v1456 = vrot.slane %v332, 6
    %v1457 = vor.u32 %v1455, %v1456
    %v1458 = vrot.slane %v1457, 4
    %v1459 = vrot.slane %v342, 5
    %v1460 = vrot.slane %v338, 6
    %v1461 = vor.u32 %v1459, %v1460
    %v1462 = vsel %vm1354, %v1458, %v1461
    %v1463 = vrot.slane %v1461, 4
    %v1464 = vrot.slane %v352, 5
    %v1465 = vrot.slane %v348, 6
    %v1466 = vor.u32 %v1464, %v1465
    %v1467 = vsel %vm1354, %v1463, %v1466
    %v1468 = vrot.slane %v1466, 4
    %v1469 = vshrl.u32 %v142, 16
    %v1471 = vrot.slane %v1469, 5
    %v1472 = vrot.slane %v358, 6
    %v1473 = vor.u32 %v1471, %v1472
    %v1474 = vsel %vm1354, %v1468, %v1473
    %v1475 = vrot.slane %v363, 5
    %v1476 = vrot.slane %v366, 6
    %v1477 = vor.u32 %v1475, %v1476
    %v1478 = vrot.slane %v1477, 4
    %v1479 = vrot.slane %v376, 5
    %v1480 = vrot.slane %v372, 6
    %v1481 = vor.u32 %v1479, %v1480
    %v1482 = vsel %vm1354, %v1478, %v1481
    %v1483 = vrot.slane %v1481, 4
    %v1484 = vrot.slane %v386, 5
    %v1485 = vrot.slane %v382, 6
    %v1486 = vor.u32 %v1484, %v1485
    %v1487 = vsel %vm1354, %v1483, %v1486
    %v1488 = vrot.slane %v1486, 4
    %v1489 = vshrl.u32 %v146, 16
    %v1491 = vrot.slane %v1489, 5
    %v1492 = vrot.slane %v392, 6
    %v1493 = vor.u32 %v1491, %v1492
    %v1494 = vsel %vm1354, %v1488, %v1493
    %v1495 = vrot.slane %v397, 5
    %v1496 = vrot.slane %v400, 6
    %v1497 = vor.u32 %v1495, %v1496
    %v1498 = vrot.slane %v1497, 4
    %v1499 = vrot.slane %v410, 5
    %v1500 = vrot.slane %v406, 6
    %v1501 = vor.u32 %v1499, %v1500
    %v1502 = vsel %vm1354, %v1498, %v1501
    %v1503 = vrot.slane %v1501, 4
    %v1504 = vrot.slane %v420, 5
    %v1505 = vrot.slane %v416, 6
    %v1506 = vor.u32 %v1504, %v1505
    %v1507 = vsel %vm1354, %v1503, %v1506
    %v1508 = vrot.slane %v1506, 4
    %v1509 = vshrl.u32 %v150, 16
    %v1511 = vrot.slane %v1509, 5
    %v1512 = vrot.slane %v426, 6
    %v1513 = vor.u32 %v1511, %v1512
    %v1514 = vsel %vm1354, %v1508, %v1513
    %s1515 = scalar_lea.vmem %s1, 96
    %v1516 = vld [vmem:[%s1515] sm:$0xff]
    %v1517 = vld [vmem:[%s1515 + $0x8] sm:$0xff]
    %v1518 = vld [vmem:[%s1515 + $0x10] sm:$0xff]
    %v1519 = vld [vmem:[%s1515 + $0x18] sm:$0x33]
    %v1520 = vunpack.c.l.b16 %v1362
    %v1521 = vunpack.c.l.b16 %v1367
    %v1522 = vunpack.c.l.b16 %v1374
    %v1523 = vunpack.c.l.b16 %v1382
    %v1524 = vunpack.c.l.b16 %v1387
    %v1525 = vunpack.c.l.b16 %v1394
    %v1526 = vunpack.c.l.b16 %v1402
    %v1527 = vunpack.c.l.b16 %v1407
    %v1528 = vunpack.c.l.b16 %v1414
    %v1529 = vunpack.c.l.b16 %v1422
    %v1530 = vunpack.c.l.b16 %v1427
    %v1531 = vunpack.c.l.b16 %v1434
    %v1532 = vunpack.c.l.b16 %v1442
    %v1533 = vunpack.c.l.b16 %v1447
    %v1534 = vunpack.c.l.b16 %v1454
    %v1535 = vunpack.c.l.b16 %v1462
    %v1536 = vunpack.c.l.b16 %v1467
    %v1537 = vunpack.c.l.b16 %v1474
    %v1538 = vunpack.c.l.b16 %v1482
    %v1539 = vunpack.c.l.b16 %v1487
    %v1540 = vunpack.c.l.b16 %v1494
    %v1541 = vunpack.c.l.b16 %v1502
    %v1542 = vunpack.c.l.b16 %v1507
    %v1543 = vunpack.c.l.b16 %v1514
    %v1544 = vpack.c.b16 %v1521, %v1520
    %v1545 = vpack.c.b16 %v1523, %v1522
    %v1546 = vpack.c.b16 %v1525, %v1524
    %v1547 = vpack.c.b16 %v1527, %v1526
    %v1548 = vpack.c.b16 %v1529, %v1528
    %v1549 = vpack.c.b16 %v1531, %v1530
    %v1550 = vpack.c.b16 %v1533, %v1532
    %v1551 = vpack.c.b16 %v1535, %v1534
    %v1552 = vpack.c.b16 %v1537, %v1536
    %v1553 = vpack.c.b16 %v1539, %v1538
    %v1554 = vpack.c.b16 %v1541, %v1540
    %v1555 = vpack.c.b16 %v1543, %v1542
    %v1560 = vunpack.c.l.b16 %v1516
    %v1561 = vunpack.c.h.b16 %v1516
    %v1562 = vunpack.c.l.b16 %v1517
    %v1563 = vunpack.c.h.b16 %v1517
    %v1564 = vunpack.c.l.b16 %v1518
    %v1565 = vunpack.c.h.b16 %v1518
    %v1566 = vunpack.c.l.b16 %v1519
    %v1567 = vunpack.c.h.b16 %v1519
    %v1568 = vpack.c.b16 %v1562, %v1560
    %v1569 = vpack.c.b16 %v1563, %v1561
    %v1570 = vpack.c.b16 %v1566, %v1564
    %v1571 = vpack.c.b16 %v1567, %v1565
    %v1575 = vsel %vm489, %v1544, 0
    %v1578 = vsel %vm489, %v1545, 0
    %v1581 = vsel %vm489, %v1546, 0
    %v1584 = vsel %vm489, %v1547, 0
    %v1587 = vsel %vm489, %v1548, 0
    %v1590 = vsel %vm489, %v1549, 0
    %v1593 = vsel %vm489, %v1550, 0
    %v1596 = vsel %vm489, %v1551, 0
    %v1599 = vsel %vm489, %v1552, 0
    %v1602 = vsel %vm489, %v1553, 0
    %v1605 = vsel %vm489, %v1554, 0
    %v1608 = vsel %vm489, %v1555, 0
    %v1611 = vsel %vm526, %v1570, 0
    %v1614 = vsel %vm526, %v1571, 0
    %1616 = vmatprep.subr.bf16.mxu0 %v1569
    %1617 = vmatpush1.bf16.msra.mxu0 %v1568
    %1618 = vmatprep.subr.bf16.mxu0 %v1614
    %1619 = vmatpush1.bf16.msra.mxu0 %v1611
    %1620 = vmatprep.subr.bf16.mxu0 0
    %1621 = vmatpush1.bf16.msra.mxu0 0
    %1622 = vmatprep.subr.bf16.mxu0 0
    %1623 = vmatpush1.bf16.msra.mxu0 0
    %1624 = vmatprep.subr.bf16.mxu0 0
    %1625 = vmatpush1.bf16.msra.mxu0 0
    %1626 = vmatprep.subr.bf16.mxu0 0
    %1627 = vmatpush1.bf16.msra.mxu0 0
    %1628 = vmatprep.subr.bf16.mxu0 0
    %1629 = vmatpush1.bf16.msra.mxu0 0
    %1630 = vmatprep.subr.bf16.mxu0 0
    %1631 = vmatpush1.bf16.msra.mxu0 0
    %1632 = vmatprep.subr.bf16.mxu0 0
    %1633 = vmatpush1.bf16.msra.mxu0 0
    %1634 = vmatprep.subr.bf16.mxu0 0
    %1635 = vmatpush1.bf16.msra.mxu0 0
    %1636 = vmatprep.subr.bf16.mxu0 0
    %1637 = vmatpush1.bf16.msra.mxu0 0
    %1638 = vmatprep.subr.bf16.mxu0 0
    %1639 = vmatpush1.bf16.msra.mxu0 0
    %1640 = vmatprep.subr.bf16.mxu0 0
    %1641 = vmatpush1.bf16.msra.mxu0 0
    %1642 = vmatprep.subr.bf16.mxu0 0
    %1643 = vmatpush1.bf16.msra.mxu0 0
    %1644 = vmatprep.subr.bf16.mxu0 0
    %1645 = vmatpush1.bf16.msra.mxu0 0
    %1646 = vmatprep.subr.bf16.mxu0 0
    %1647 = vmatpush1.bf16.msra.mxu0 0
    %1648 = vmatprep.mubr.bf16.mxu0 0
    %1649 = vmatmul.mubr.bf16.gmra.mrb[0].mxu0 %v1575
    %v1650 = vpop.f32.mrb[0].mxu0
    %v1651 = vadd.f32 0.0, %v1650
    %v1652 = vpop.f32.mrb[0].mxu0
    %v1653 = vadd.f32 0.0, %v1652
    %v1654 = vpop.f32.mrb[0].mxu0
    %v1655 = vadd.f32 0.0, %v1654
    %v1656 = vpop.f32.mrb[0].mxu0
    %v1657 = vadd.f32 0.0, %v1656
    %1658 = vmatprep.mubr.bf16.mxu0 0
    %1659 = vmatmul.mubr.bf16.gmra.mrb[0].mxu0 %v1578
    %v1660 = vpop.f32.mrb[0].mxu0
    %v1661 = vadd.f32 0.0, %v1660
    %v1662 = vpop.f32.mrb[0].mxu0
    %v1663 = vadd.f32 0.0, %v1662
    %v1664 = vpop.f32.mrb[0].mxu0
    %v1665 = vadd.f32 0.0, %v1664
    %v1666 = vpop.f32.mrb[0].mxu0
    %v1667 = vadd.f32 0.0, %v1666
    %1668 = vmatprep.mubr.bf16.mxu0 0
    %1669 = vmatmul.mubr.bf16.gmra.mrb[0].mxu0 %v1581
    %v1670 = vpop.f32.mrb[0].mxu0
    %v1671 = vadd.f32 0.0, %v1670
    %v1672 = vpop.f32.mrb[0].mxu0
    %v1673 = vadd.f32 0.0, %v1672
    %v1674 = vpop.f32.mrb[0].mxu0
    %v1675 = vadd.f32 0.0, %v1674
    %v1676 = vpop.f32.mrb[0].mxu0
    %v1677 = vadd.f32 0.0, %v1676
    %1678 = vmatprep.mubr.bf16.mxu0 0
    %1679 = vmatmul.mubr.bf16.gmra.mrb[0].mxu0 %v1584
    %v1680 = vpop.f32.mrb[0].mxu0
    %v1681 = vadd.f32 0.0, %v1680
    %v1682 = vpop.f32.mrb[0].mxu0
    %v1683 = vadd.f32 0.0, %v1682
    %v1684 = vpop.f32.mrb[0].mxu0
    %v1685 = vadd.f32 0.0, %v1684
    %v1686 = vpop.f32.mrb[0].mxu0
    %v1687 = vadd.f32 0.0, %v1686
    %1688 = vmatprep.mubr.bf16.mxu0 0
    %1689 = vmatmul.mubr.bf16.gmra.mrb[0].mxu0 %v1587
    %v1690 = vpop.f32.mrb[0].mxu0
    %v1691 = vadd.f32 0.0, %v1690
    %v1692 = vpop.f32.mrb[0].mxu0
    %v1693 = vadd.f32 0.0, %v1692
    %v1694 = vpop.f32.mrb[0].mxu0
    %v1695 = vadd.f32 0.0, %v1694
    %v1696 = vpop.f32.mrb[0].mxu0
    %v1697 = vadd.f32 0.0, %v1696
    %1698 = vmatprep.mubr.bf16.mxu0 0
    %1699 = vmatmul.mubr.bf16.gmra.mrb[0].mxu0 %v1590
    %v1700 = vpop.f32.mrb[0].mxu0
    %v1701 = vadd.f32 0.0, %v1700
    %v1702 = vpop.f32.mrb[0].mxu0
    %v1703 = vadd.f32 0.0, %v1702
    %v1704 = vpop.f32.mrb[0].mxu0
    %v1705 = vadd.f32 0.0, %v1704
    %v1706 = vpop.f32.mrb[0].mxu0
    %v1707 = vadd.f32 0.0, %v1706
    %1708 = vmatprep.mubr.bf16.mxu0 0
    %1709 = vmatmul.mubr.bf16.gmra.mrb[0].mxu0 %v1593
    %v1710 = vpop.f32.mrb[0].mxu0
    %v1711 = vadd.f32 0.0, %v1710
    %v1712 = vpop.f32.mrb[0].mxu0
    %v1713 = vadd.f32 0.0, %v1712
    %v1714 = vpop.f32.mrb[0].mxu0
    %v1715 = vadd.f32 0.0, %v1714
    %v1716 = vpop.f32.mrb[0].mxu0
    %v1717 = vadd.f32 0.0, %v1716
    %1718 = vmatprep.mubr.bf16.mxu0 0
    %1719 = vmatmul.mubr.bf16.gmra.mrb[0].mxu0 %v1596
    %v1720 = vpop.f32.mrb[0].mxu0
    %v1721 = vadd.f32 0.0, %v1720
    %v1722 = vpop.f32.mrb[0].mxu0
    %v1723 = vadd.f32 0.0, %v1722
    %v1724 = vpop.f32.mrb[0].mxu0
    %v1725 = vadd.f32 0.0, %v1724
    %v1726 = vpop.f32.mrb[0].mxu0
    %v1727 = vadd.f32 0.0, %v1726
    %1728 = vmatprep.mubr.bf16.mxu0 0
    %1729 = vmatmul.mubr.bf16.gmra.mrb[0].mxu0 %v1599
    %v1730 = vpop.f32.mrb[0].mxu0
    %v1731 = vadd.f32 0.0, %v1730
    %v1732 = vpop.f32.mrb[0].mxu0
    %v1733 = vadd.f32 0.0, %v1732
    %v1734 = vpop.f32.mrb[0].mxu0
    %v1735 = vadd.f32 0.0, %v1734
    %v1736 = vpop.f32.mrb[0].mxu0
    %v1737 = vadd.f32 0.0, %v1736
    %1738 = vmatprep.mubr.bf16.mxu0 0
    %1739 = vmatmul.mubr.bf16.gmra.mrb[0].mxu0 %v1602
    %v1740 = vpop.f32.mrb[0].mxu0
    %v1741 = vadd.f32 0.0, %v1740
    %v1742 = vpop.f32.mrb[0].mxu0
    %v1743 = vadd.f32 0.0, %v1742
    %v1744 = vpop.f32.mrb[0].mxu0
    %v1745 = vadd.f32 0.0, %v1744
    %v1746 = vpop.f32.mrb[0].mxu0
    %v1747 = vadd.f32 0.0, %v1746
    %1748 = vmatprep.mubr.bf16.mxu0 0
    %1749 = vmatmul.mubr.bf16.gmra.mrb[0].mxu0 %v1605
    %v1750 = vpop.f32.mrb[0].mxu0
    %v1751 = vadd.f32 0.0, %v1750
    %v1752 = vpop.f32.mrb[0].mxu0
    %v1753 = vadd.f32 0.0, %v1752
    %v1754 = vpop.f32.mrb[0].mxu0
    %v1755 = vadd.f32 0.0, %v1754
    %v1756 = vpop.f32.mrb[0].mxu0
    %v1757 = vadd.f32 0.0, %v1756
    %1758 = vmatprep.mubr.bf16.mxu0 0
    %1759 = vmatmul.mubr.bf16.gmra.mrb[0].mxu0 %v1608
    %v1760 = vpop.f32.mrb[0].mxu0
    %v1761 = vadd.f32 0.0, %v1760
    %v1762 = vpop.f32.mrb[0].mxu0
    %v1763 = vadd.f32 0.0, %v1762
    %v1764 = vpop.f32.mrb[0].mxu0
    %v1765 = vadd.f32 0.0, %v1764
    %v1766 = vpop.f32.mrb[0].mxu0
    %v1767 = vadd.f32 0.0, %v1766
    %1768 = vdwg.mxu0
    %v1769 = vadd.f32 %v1304, %v1651
    %v1770 = vadd.f32 %v1305, %v1653
    %v1771 = vadd.f32 %v1306, %v1655
    %v1772 = vadd.f32 %v1307, %v1657
    %v1773 = vadd.f32 %v1308, %v1661
    %v1774 = vadd.f32 %v1309, %v1663
    %v1775 = vadd.f32 %v1310, %v1665
    %v1776 = vadd.f32 %v1311, %v1667
    %v1777 = vadd.f32 %v1312, %v1671
    %v1778 = vadd.f32 %v1313, %v1673
    %v1779 = vadd.f32 %v1314, %v1675
    %v1780 = vadd.f32 %v1315, %v1677
    %v1781 = vadd.f32 %v1316, %v1681
    %v1782 = vadd.f32 %v1317, %v1683
    %v1783 = vadd.f32 %v1318, %v1685
    %v1784 = vadd.f32 %v1319, %v1687
    %v1785 = vadd.f32 %v1320, %v1691
    %v1786 = vadd.f32 %v1321, %v1693
    %v1787 = vadd.f32 %v1322, %v1695
    %v1788 = vadd.f32 %v1323, %v1697
    %v1789 = vadd.f32 %v1324, %v1701
    %v1790 = vadd.f32 %v1325, %v1703
    %v1791 = vadd.f32 %v1326, %v1705
    %v1792 = vadd.f32 %v1327, %v1707
    %v1793 = vadd.f32 %v1328, %v1711
    %v1794 = vadd.f32 %v1329, %v1713
    %v1795 = vadd.f32 %v1330, %v1715
    %v1796 = vadd.f32 %v1331, %v1717
    %v1797 = vadd.f32 %v1332, %v1721
    %v1798 = vadd.f32 %v1333, %v1723
    %v1799 = vadd.f32 %v1334, %v1725
    %v1800 = vadd.f32 %v1335, %v1727
    %v1801 = vadd.f32 %v1336, %v1731
    %v1802 = vadd.f32 %v1337, %v1733
    %v1803 = vadd.f32 %v1338, %v1735
    %v1804 = vadd.f32 %v1339, %v1737
    %v1805 = vadd.f32 %v1340, %v1741
    %v1806 = vadd.f32 %v1341, %v1743
    %v1807 = vadd.f32 %v1342, %v1745
    %v1808 = vadd.f32 %v1343, %v1747
    %v1809 = vadd.f32 %v1344, %v1751
    %v1810 = vadd.f32 %v1345, %v1753
    %v1811 = vadd.f32 %v1346, %v1755
    %v1812 = vadd.f32 %v1347, %v1757
    %v1813 = vadd.f32 %v1348, %v1761
    %v1814 = vadd.f32 %v1349, %v1763
    %v1815 = vadd.f32 %v1350, %v1765
    %v1816 = vadd.f32 %v1351, %v1767
    %vm1817 = vcmask 1041408
    %vm1818 = vcmask 1045508
    %vm1819 = vmor %vm1817, %vm1818
    %v1820 = vrot.slane %v119, 6
    %v1821 = vrot.slane %v1820, 4
    %v1822 = vrot.slane %v120, 6
    %v1823 = vsel %vm1819, %v1821, %v1822
    %v1824 = vrot.slane %v1822, 4
    %v1825 = vrot.slane %v121, 6
    %v1826 = vsel %vm1819, %v1824, %v1825
    %v1827 = vrot.slane %v1825, 4
    %v1828 = vrot.slane %v122, 6
    %v1829 = vsel %vm1819, %v1827, %v1828
    %v1830 = vrot.slane %v123, 6
    %v1831 = vrot.slane %v1830, 4
    %v1832 = vrot.slane %v124, 6
    %v1833 = vsel %vm1819, %v1831, %v1832
    %v1834 = vrot.slane %v1832, 4
    %v1835 = vrot.slane %v125, 6
    %v1836 = vsel %vm1819, %v1834, %v1835
    %v1837 = vrot.slane %v1835, 4
    %v1838 = vrot.slane %v126, 6
    %v1839 = vsel %vm1819, %v1837, %v1838
    %v1840 = vrot.slane %v127, 6
    %v1841 = vrot.slane %v1840, 4
    %v1842 = vrot.slane %v128, 6
    %v1843 = vsel %vm1819, %v1841, %v1842
    %v1844 = vrot.slane %v1842, 4
    %v1845 = vrot.slane %v129, 6
    %v1846 = vsel %vm1819, %v1844, %v1845
    %v1847 = vrot.slane %v1845, 4
    %v1848 = vrot.slane %v130, 6
    %v1849 = vsel %vm1819, %v1847, %v1848
    %v1850 = vrot.slane %v131, 6
    %v1851 = vrot.slane %v1850, 4
    %v1852 = vrot.slane %v132, 6
    %v1853 = vsel %vm1819, %v1851, %v1852
    %v1854 = vrot.slane %v1852, 4
    %v1855 = vrot.slane %v133, 6
    %v1856 = vsel %vm1819, %v1854, %v1855
    %v1857 = vrot.slane %v1855, 4
    %v1858 = vrot.slane %v134, 6
    %v1859 = vsel %vm1819, %v1857, %v1858
    %v1860 = vrot.slane %v135, 6
    %v1861 = vrot.slane %v1860, 4
    %v1862 = vrot.slane %v136, 6
    %v1863 = vsel %vm1819, %v1861, %v1862
    %v1864 = vrot.slane %v1862, 4
    %v1865 = vrot.slane %v137, 6
    %v1866 = vsel %vm1819, %v1864, %v1865
    %v1867 = vrot.slane %v1865, 4
    %v1868 = vrot.slane %v138, 6
    %v1869 = vsel %vm1819, %v1867, %v1868
    %v1870 = vrot.slane %v139, 6
    %v1871 = vrot.slane %v1870, 4
    %v1872 = vrot.slane %v140, 6
    %v1873 = vsel %vm1819, %v1871, %v1872
    %v1874 = vrot.slane %v1872, 4
    %v1875 = vrot.slane %v141, 6
    %v1876 = vsel %vm1819, %v1874, %v1875
    %v1877 = vrot.slane %v1875, 4
    %v1878 = vrot.slane %v142, 6
    %v1879 = vsel %vm1819, %v1877, %v1878
    %v1880 = vrot.slane %v143, 6
    %v1881 = vrot.slane %v1880, 4
    %v1882 = vrot.slane %v144, 6
    %v1883 = vsel %vm1819, %v1881, %v1882
    %v1884 = vrot.slane %v1882, 4
    %v1885 = vrot.slane %v145, 6
    %v1886 = vsel %vm1819, %v1884, %v1885
    %v1887 = vrot.slane %v1885, 4
    %v1888 = vrot.slane %v146, 6
    %v1889 = vsel %vm1819, %v1887, %v1888
    %v1890 = vrot.slane %v147, 6
    %v1891 = vrot.slane %v1890, 4
    %v1892 = vrot.slane %v148, 6
    %v1893 = vsel %vm1819, %v1891, %v1892
    %v1894 = vrot.slane %v1892, 4
    %v1895 = vrot.slane %v149, 6
    %v1896 = vsel %vm1819, %v1894, %v1895
    %v1897 = vrot.slane %v1895, 4
    %v1898 = vrot.slane %v150, 6
    %v1899 = vsel %vm1819, %v1897, %v1898
    %s1900 = scalar_lea.vmem %s1, 128
    %v1901 = vld [vmem:[%s1900] sm:$0xff]
    %v1902 = vld [vmem:[%s1900 + $0x8] sm:$0xff]
    %v1903 = vld [vmem:[%s1900 + $0x10] sm:$0xff]
    %v1904 = vld [vmem:[%s1900 + $0x18] sm:$0x33]
    %v1905 = vunpack.c.l.b16 %v1823
    %v1906 = vunpack.c.l.b16 %v1826
    %v1907 = vunpack.c.l.b16 %v1829
    %v1908 = vunpack.c.l.b16 %v1833
    %v1909 = vunpack.c.l.b16 %v1836
    %v1910 = vunpack.c.l.b16 %v1839
    %v1911 = vunpack.c.l.b16 %v1843
    %v1912 = vunpack.c.l.b16 %v1846
    %v1913 = vunpack.c.l.b16 %v1849
    %v1914 = vunpack.c.l.b16 %v1853
    %v1915 = vunpack.c.l.b16 %v1856
    %v1916 = vunpack.c.l.b16 %v1859
    %v1917 = vunpack.c.l.b16 %v1863
    %v1918 = vunpack.c.l.b16 %v1866
    %v1919 = vunpack.c.l.b16 %v1869
    %v1920 = vunpack.c.l.b16 %v1873
    %v1921 = vunpack.c.l.b16 %v1876
    %v1922 = vunpack.c.l.b16 %v1879
    %v1923 = vunpack.c.l.b16 %v1883
    %v1924 = vunpack.c.l.b16 %v1886
    %v1925 = vunpack.c.l.b16 %v1889
    %v1926 = vunpack.c.l.b16 %v1893
    %v1927 = vunpack.c.l.b16 %v1896
    %v1928 = vunpack.c.l.b16 %v1899
    %v1929 = vpack.c.b16 %v1906, %v1905
    %v1930 = vpack.c.b16 %v1908, %v1907
    %v1931 = vpack.c.b16 %v1910, %v1909
    %v1932 = vpack.c.b16 %v1912, %v1911
    %v1933 = vpack.c.b16 %v1914, %v1913
    %v1934 = vpack.c.b16 %v1916, %v1915
    %v1935 = vpack.c.b16 %v1918, %v1917
    %v1936 = vpack.c.b16 %v1920, %v1919
    %v1937 = vpack.c.b16 %v1922, %v1921
    %v1938 = vpack.c.b16 %v1924, %v1923
    %v1939 = vpack.c.b16 %v1926, %v1925
    %v1940 = vpack.c.b16 %v1928, %v1927
    %v1945 = vunpack.c.l.b16 %v1901
    %v1946 = vunpack.c.h.b16 %v1901
    %v1947 = vunpack.c.l.b16 %v1902
    %v1948 = vunpack.c.h.b16 %v1902
    %v1949 = vunpack.c.l.b16 %v1903
    %v1950 = vunpack.c.h.b16 %v1903
    %v1951 = vunpack.c.l.b16 %v1904
    %v1952 = vunpack.c.h.b16 %v1904
    %v1953 = vpack.c.b16 %v1947, %v1945
    %v1954 = vpack.c.b16 %v1948, %v1946
    %v1955 = vpack.c.b16 %v1951, %v1949
    %v1956 = vpack.c.b16 %v1952, %v1950
    %v1960 = vsel %vm489, %v1929, 0
    %v1963 = vsel %vm489, %v1930, 0
    %v1966 = vsel %vm489, %v1931, 0
    %v1969 = vsel %vm489, %v1932, 0
    %v1972 = vsel %vm489, %v1933, 0
    %v1975 = vsel %vm489, %v1934, 0
    %v1978 = vsel %vm489, %v1935, 0
    %v1981 = vsel %vm489, %v1936, 0
    %v1984 = vsel %vm489, %v1937, 0
    %v1987 = vsel %vm489, %v1938, 0
    %v1990 = vsel %vm489, %v1939, 0
    %v1993 = vsel %vm489, %v1940, 0
    %v1996 = vsel %vm526, %v1955, 0
    %v1999 = vsel %vm526, %v1956, 0
    %2001 = vmatprep.subr.bf16.mxu0 %v1954
    %2002 = vmatpush1.bf16.msra.mxu0 %v1953
    %2003 = vmatprep.subr.bf16.mxu0 %v1999
    %2004 = vmatpush1.bf16.msra.mxu0 %v1996
    %2005 = vmatprep.subr.bf16.mxu0 0
    %2006 = vmatpush1.bf16.msra.mxu0 0
    %2007 = vmatprep.subr.bf16.mxu0 0
    %2008 = vmatpush1.bf16.msra.mxu0 0
    %2009 = vmatprep.subr.bf16.mxu0 0
    %2010 = vmatpush1.bf16.msra.mxu0 0
    %2011 = vmatprep.subr.bf16.mxu0 0
    %2012 = vmatpush1.bf16.msra.mxu0 0
    %2013 = vmatprep.subr.bf16.mxu0 0
    %2014 = vmatpush1.bf16.msra.mxu0 0
    %2015 = vmatprep.subr.bf16.mxu0 0
    %2016 = vmatpush1.bf16.msra.mxu0 0
    %2017 = vmatprep.subr.bf16.mxu0 0
    %2018 = vmatpush1.bf16.msra.mxu0 0
    %2019 = vmatprep.subr.bf16.mxu0 0
    %2020 = vmatpush1.bf16.msra.mxu0 0
    %2021 = vmatprep.subr.bf16.mxu0 0
    %2022 = vmatpush1.bf16.msra.mxu0 0
    %2023 = vmatprep.subr.bf16.mxu0 0
    %2024 = vmatpush1.bf16.msra.mxu0 0
    %2025 = vmatprep.subr.bf16.mxu0 0
    %2026 = vmatpush1.bf16.msra.mxu0 0
    %2027 = vmatprep.subr.bf16.mxu0 0
    %2028 = vmatpush1.bf16.msra.mxu0 0
    %2029 = vmatprep.subr.bf16.mxu0 0
    %2030 = vmatpush1.bf16.msra.mxu0 0
    %2031 = vmatprep.subr.bf16.mxu0 0
    %2032 = vmatpush1.bf16.msra.mxu0 0
    %2033 = vmatprep.mubr.bf16.mxu0 0
    %2034 = vmatmul.mubr.bf16.gmra.mrb[0].mxu0 %v1960
    %v2035 = vpop.f32.mrb[0].mxu0
    %v2036 = vadd.f32 0.0, %v2035
    %v2037 = vpop.f32.mrb[0].mxu0
    %v2038 = vadd.f32 0.0, %v2037
    %v2039 = vpop.f32.mrb[0].mxu0
    %v2040 = vadd.f32 0.0, %v2039
    %v2041 = vpop.f32.mrb[0].mxu0
    %v2042 = vadd.f32 0.0, %v2041
    %2043 = vmatprep.mubr.bf16.mxu0 0
    %2044 = vmatmul.mubr.bf16.gmra.mrb[0].mxu0 %v1963
    %v2045 = vpop.f32.mrb[0].mxu0
    %v2046 = vadd.f32 0.0, %v2045
    %v2047 = vpop.f32.mrb[0].mxu0
    %v2048 = vadd.f32 0.0, %v2047
    %v2049 = vpop.f32.mrb[0].mxu0
    %v2050 = vadd.f32 0.0, %v2049
    %v2051 = vpop.f32.mrb[0].mxu0
    %v2052 = vadd.f32 0.0, %v2051
    %2053 = vmatprep.mubr.bf16.mxu0 0
    %2054 = vmatmul.mubr.bf16.gmra.mrb[0].mxu0 %v1966
    %v2055 = vpop.f32.mrb[0].mxu0
    %v2056 = vadd.f32 0.0, %v2055
    %v2057 = vpop.f32.mrb[0].mxu0
    %v2058 = vadd.f32 0.0, %v2057
    %v2059 = vpop.f32.mrb[0].mxu0
    %v2060 = vadd.f32 0.0, %v2059
    %v2061 = vpop.f32.mrb[0].mxu0
    %v2062 = vadd.f32 0.0, %v2061
    %2063 = vmatprep.mubr.bf16.mxu0 0
    %2064 = vmatmul.mubr.bf16.gmra.mrb[0].mxu0 %v1969
    %v2065 = vpop.f32.mrb[0].mxu0
    %v2066 = vadd.f32 0.0, %v2065
    %v2067 = vpop.f32.mrb[0].mxu0
    %v2068 = vadd.f32 0.0, %v2067
    %v2069 = vpop.f32.mrb[0].mxu0
    %v2070 = vadd.f32 0.0, %v2069
    %v2071 = vpop.f32.mrb[0].mxu0
    %v2072 = vadd.f32 0.0, %v2071
    %2073 = vmatprep.mubr.bf16.mxu0 0
    %2074 = vmatmul.mubr.bf16.gmra.mrb[0].mxu0 %v1972
    %v2075 = vpop.f32.mrb[0].mxu0
    %v2076 = vadd.f32 0.0, %v2075
    %v2077 = vpop.f32.mrb[0].mxu0
    %v2078 = vadd.f32 0.0, %v2077
    %v2079 = vpop.f32.mrb[0].mxu0
    %v2080 = vadd.f32 0.0, %v2079
    %v2081 = vpop.f32.mrb[0].mxu0
    %v2082 = vadd.f32 0.0, %v2081
    %2083 = vmatprep.mubr.bf16.mxu0 0
    %2084 = vmatmul.mubr.bf16.gmra.mrb[0].mxu0 %v1975
    %v2085 = vpop.f32.mrb[0].mxu0
    %v2086 = vadd.f32 0.0, %v2085
    %v2087 = vpop.f32.mrb[0].mxu0
    %v2088 = vadd.f32 0.0, %v2087
    %v2089 = vpop.f32.mrb[0].mxu0
    %v2090 = vadd.f32 0.0, %v2089
    %v2091 = vpop.f32.mrb[0].mxu0
    %v2092 = vadd.f32 0.0, %v2091
    %2093 = vmatprep.mubr.bf16.mxu0 0
    %2094 = vmatmul.mubr.bf16.gmra.mrb[0].mxu0 %v1978
    %v2095 = vpop.f32.mrb[0].mxu0
    %v2096 = vadd.f32 0.0, %v2095
    %v2097 = vpop.f32.mrb[0].mxu0
    %v2098 = vadd.f32 0.0, %v2097
    %v2099 = vpop.f32.mrb[0].mxu0
    %v2100 = vadd.f32 0.0, %v2099
    %v2101 = vpop.f32.mrb[0].mxu0
    %v2102 = vadd.f32 0.0, %v2101
    %2103 = vmatprep.mubr.bf16.mxu0 0
    %2104 = vmatmul.mubr.bf16.gmra.mrb[0].mxu0 %v1981
    %v2105 = vpop.f32.mrb[0].mxu0
    %v2106 = vadd.f32 0.0, %v2105
    %v2107 = vpop.f32.mrb[0].mxu0
    %v2108 = vadd.f32 0.0, %v2107
    %v2109 = vpop.f32.mrb[0].mxu0
    %v2110 = vadd.f32 0.0, %v2109
    %v2111 = vpop.f32.mrb[0].mxu0
    %v2112 = vadd.f32 0.0, %v2111
    %2113 = vmatprep.mubr.bf16.mxu0 0
    %2114 = vmatmul.mubr.bf16.gmra.mrb[0].mxu0 %v1984
    %v2115 = vpop.f32.mrb[0].mxu0
    %v2116 = vadd.f32 0.0, %v2115
    %v2117 = vpop.f32.mrb[0].mxu0
    %v2118 = vadd.f32 0.0, %v2117
    %v2119 = vpop.f32.mrb[0].mxu0
    %v2120 = vadd.f32 0.0, %v2119
    %v2121 = vpop.f32.mrb[0].mxu0
    %v2122 = vadd.f32 0.0, %v2121
    %2123 = vmatprep.mubr.bf16.mxu0 0
    %2124 = vmatmul.mubr.bf16.gmra.mrb[0].mxu0 %v1987
    %v2125 = vpop.f32.mrb[0].mxu0
    %v2126 = vadd.f32 0.0, %v2125
    %v2127 = vpop.f32.mrb[0].mxu0
    %v2128 = vadd.f32 0.0, %v2127
    %v2129 = vpop.f32.mrb[0].mxu0
    %v2130 = vadd.f32 0.0, %v2129
    %v2131 = vpop.f32.mrb[0].mxu0
    %v2132 = vadd.f32 0.0, %v2131
    %2133 = vmatprep.mubr.bf16.mxu0 0
    %2134 = vmatmul.mubr.bf16.gmra.mrb[0].mxu0 %v1990
    %v2135 = vpop.f32.mrb[0].mxu0
    %v2136 = vadd.f32 0.0, %v2135
    %v2137 = vpop.f32.mrb[0].mxu0
    %v2138 = vadd.f32 0.0, %v2137
    %v2139 = vpop.f32.mrb[0].mxu0
    %v2140 = vadd.f32 0.0, %v2139
    %v2141 = vpop.f32.mrb[0].mxu0
    %v2142 = vadd.f32 0.0, %v2141
    %2143 = vmatprep.mubr.bf16.mxu0 0
    %2144 = vmatmul.mubr.bf16.gmra.mrb[0].mxu0 %v1993
    %v2145 = vpop.f32.mrb[0].mxu0
    %v2146 = vadd.f32 0.0, %v2145
    %v2147 = vpop.f32.mrb[0].mxu0
    %v2148 = vadd.f32 0.0, %v2147
    %v2149 = vpop.f32.mrb[0].mxu0
    %v2150 = vadd.f32 0.0, %v2149
    %v2151 = vpop.f32.mrb[0].mxu0
    %v2152 = vadd.f32 0.0, %v2151
    %2153 = vdwg.mxu0
    %v2154 = vadd.f32 %v1769, %v2036
    %v2155 = vadd.f32 %v1770, %v2038
    %v2156 = vadd.f32 %v1771, %v2040
    %v2157 = vadd.f32 %v1772, %v2042
    %v2158 = vadd.f32 %v1773, %v2046
    %v2159 = vadd.f32 %v1774, %v2048
    %v2160 = vadd.f32 %v1775, %v2050
    %v2161 = vadd.f32 %v1776, %v2052
    %v2162 = vadd.f32 %v1777, %v2056
    %v2163 = vadd.f32 %v1778, %v2058
    %v2164 = vadd.f32 %v1779, %v2060
    %v2165 = vadd.f32 %v1780, %v2062
    %v2166 = vadd.f32 %v1781, %v2066
    %v2167 = vadd.f32 %v1782, %v2068
    %v2168 = vadd.f32 %v1783, %v2070
    %v2169 = vadd.f32 %v1784, %v2072
    %v2170 = vadd.f32 %v1785, %v2076
    %v2171 = vadd.f32 %v1786, %v2078
    %v2172 = vadd.f32 %v1787, %v2080
    %v2173 = vadd.f32 %v1788, %v2082
    %v2174 = vadd.f32 %v1789, %v2086
    %v2175 = vadd.f32 %v1790, %v2088
    %v2176 = vadd.f32 %v1791, %v2090
    %v2177 = vadd.f32 %v1792, %v2092
    %v2178 = vadd.f32 %v1793, %v2096
    %v2179 = vadd.f32 %v1794, %v2098
    %v2180 = vadd.f32 %v1795, %v2100
    %v2181 = vadd.f32 %v1796, %v2102
    %v2182 = vadd.f32 %v1797, %v2106
    %v2183 = vadd.f32 %v1798, %v2108
    %v2184 = vadd.f32 %v1799, %v2110
    %v2185 = vadd.f32 %v1800, %v2112
    %v2186 = vadd.f32 %v1801, %v2116
    %v2187 = vadd.f32 %v1802, %v2118
    %v2188 = vadd.f32 %v1803, %v2120
    %v2189 = vadd.f32 %v1804, %v2122
    %v2190 = vadd.f32 %v1805, %v2126
    %v2191 = vadd.f32 %v1806, %v2128
    %v2192 = vadd.f32 %v1807, %v2130
    %v2193 = vadd.f32 %v1808, %v2132
    %v2194 = vadd.f32 %v1809, %v2136
    %v2195 = vadd.f32 %v1810, %v2138
    %v2196 = vadd.f32 %v1811, %v2140
    %v2197 = vadd.f32 %v1812, %v2142
    %v2198 = vadd.f32 %v1813, %v2146
    %v2199 = vadd.f32 %v1814, %v2148
    %v2200 = vadd.f32 %v1815, %v2150
    %v2201 = vadd.f32 %v1816, %v2152
    %v2202 = vld [vmem:[%s2] sm:$0x3]
    %v2204 = vlaneseq
    %v2205 = vshrl.u32 %v2204, 7
    %v2206 = vsub.s32 0, %v2205
    %v2207 = vrot.slane %v2202, %v2206
    %v2208 = vlaneseq
    %v2209 = vshrl.u32 %v2208, 7
    %v2210 = vsub.s32 1, %v2209
    %v2211 = vrot.slane %v2202, %v2210
    %v2214 = vadd.f32 %v2154, %v2207
    %v2215 = vadd.f32 %v2155, %v2211
    %v2216 = vadd.f32 %v2156, %v2207
    %v2217 = vadd.f32 %v2157, %v2211
    %v2218 = vadd.f32 %v2158, %v2207
    %v2219 = vadd.f32 %v2159, %v2211
    %v2220 = vadd.f32 %v2160, %v2207
    %v2221 = vadd.f32 %v2161, %v2211
    %v2222 = vadd.f32 %v2162, %v2207
    %v2223 = vadd.f32 %v2163, %v2211
    %v2224 = vadd.f32 %v2164, %v2207
    %v2225 = vadd.f32 %v2165, %v2211
    %v2226 = vadd.f32 %v2166, %v2207
    %v2227 = vadd.f32 %v2167, %v2211
    %v2228 = vadd.f32 %v2168, %v2207
    %v2229 = vadd.f32 %v2169, %v2211
    %v2230 = vadd.f32 %v2170, %v2207
    %v2231 = vadd.f32 %v2171, %v2211
    %v2232 = vadd.f32 %v2172, %v2207
    %v2233 = vadd.f32 %v2173, %v2211
    %v2234 = vadd.f32 %v2174, %v2207
    %v2235 = vadd.f32 %v2175, %v2211
    %v2236 = vadd.f32 %v2176, %v2207
    %v2237 = vadd.f32 %v2177, %v2211
    %v2238 = vadd.f32 %v2178, %v2207
    %v2239 = vadd.f32 %v2179, %v2211
    %v2240 = vadd.f32 %v2180, %v2207
    %v2241 = vadd.f32 %v2181, %v2211
    %v2242 = vadd.f32 %v2182, %v2207
    %v2243 = vadd.f32 %v2183, %v2211
    %v2244 = vadd.f32 %v2184, %v2207
    %v2245 = vadd.f32 %v2185, %v2211
    %v2246 = vadd.f32 %v2186, %v2207
    %v2247 = vadd.f32 %v2187, %v2211
    %v2248 = vadd.f32 %v2188, %v2207
    %v2249 = vadd.f32 %v2189, %v2211
    %v2250 = vadd.f32 %v2190, %v2207
    %v2251 = vadd.f32 %v2191, %v2211
    %v2252 = vadd.f32 %v2192, %v2207
    %v2253 = vadd.f32 %v2193, %v2211
    %v2254 = vadd.f32 %v2194, %v2207
    %v2255 = vadd.f32 %v2195, %v2211
    %v2256 = vadd.f32 %v2196, %v2207
    %v2257 = vadd.f32 %v2197, %v2211
    %v2258 = vadd.f32 %v2198, %v2207
    %v2259 = vadd.f32 %v2199, %v2211
    %v2260 = vadd.f32 %v2200, %v2207
    %v2261 = vadd.f32 %v2201, %v2211
    %v2262 = vmax.f32 %v2214, 0.0
    %v2263 = vmax.f32 %v2215, 0.0
    %v2264 = vmax.f32 %v2216, 0.0
    %v2265 = vmax.f32 %v2217, 0.0
    %v2266 = vmax.f32 %v2218, 0.0
    %v2267 = vmax.f32 %v2219, 0.0
    %v2268 = vmax.f32 %v2220, 0.0
    %v2269 = vmax.f32 %v2221, 0.0
    %v2270 = vmax.f32 %v2222, 0.0
    %v2271 = vmax.f32 %v2223, 0.0
    %v2272 = vmax.f32 %v2224, 0.0
    %v2273 = vmax.f32 %v2225, 0.0
    %v2274 = vmax.f32 %v2226, 0.0
    %v2275 = vmax.f32 %v2227, 0.0
    %v2276 = vmax.f32 %v2228, 0.0
    %v2277 = vmax.f32 %v2229, 0.0
    %v2278 = vmax.f32 %v2230, 0.0
    %v2279 = vmax.f32 %v2231, 0.0
    %v2280 = vmax.f32 %v2232, 0.0
    %v2281 = vmax.f32 %v2233, 0.0
    %v2282 = vmax.f32 %v2234, 0.0
    %v2283 = vmax.f32 %v2235, 0.0
    %v2284 = vmax.f32 %v2236, 0.0
    %v2285 = vmax.f32 %v2237, 0.0
    %v2286 = vmax.f32 %v2238, 0.0
    %v2287 = vmax.f32 %v2239, 0.0
    %v2288 = vmax.f32 %v2240, 0.0
    %v2289 = vmax.f32 %v2241, 0.0
    %v2290 = vmax.f32 %v2242, 0.0
    %v2291 = vmax.f32 %v2243, 0.0
    %v2292 = vmax.f32 %v2244, 0.0
    %v2293 = vmax.f32 %v2245, 0.0
    %v2294 = vmax.f32 %v2246, 0.0
    %v2295 = vmax.f32 %v2247, 0.0
    %v2296 = vmax.f32 %v2248, 0.0
    %v2297 = vmax.f32 %v2249, 0.0
    %v2298 = vmax.f32 %v2250, 0.0
    %v2299 = vmax.f32 %v2251, 0.0
    %v2300 = vmax.f32 %v2252, 0.0
    %v2301 = vmax.f32 %v2253, 0.0
    %v2302 = vmax.f32 %v2254, 0.0
    %v2303 = vmax.f32 %v2255, 0.0
    %v2304 = vmax.f32 %v2256, 0.0
    %v2305 = vmax.f32 %v2257, 0.0
    %v2306 = vmax.f32 %v2258, 0.0
    %v2307 = vmax.f32 %v2259, 0.0
    %v2308 = vmax.f32 %v2260, 0.0
    %v2309 = vmax.f32 %v2261, 0.0
    %v2310 = vpack.c.bf16 %v2264, %v2262
    %v2311 = vpack.c.bf16 %v2265, %v2263
    %v2312 = vpack.c.bf16 %v2268, %v2266
    %v2313 = vpack.c.bf16 %v2269, %v2267
    %v2314 = vpack.c.bf16 %v2272, %v2270
    %v2315 = vpack.c.bf16 %v2273, %v2271
    %v2316 = vpack.c.bf16 %v2276, %v2274
    %v2317 = vpack.c.bf16 %v2277, %v2275
    %v2318 = vpack.c.bf16 %v2280, %v2278
    %v2319 = vpack.c.bf16 %v2281, %v2279
    %v2320 = vpack.c.bf16 %v2284, %v2282
    %v2321 = vpack.c.bf16 %v2285, %v2283
    %v2322 = vpack.c.bf16 %v2288, %v2286
    %v2323 = vpack.c.bf16 %v2289, %v2287
    %v2324 = vpack.c.bf16 %v2292, %v2290
    %v2325 = vpack.c.bf16 %v2293, %v2291
    %v2326 = vpack.c.bf16 %v2296, %v2294
    %v2327 = vpack.c.bf16 %v2297, %v2295
    %v2328 = vpack.c.bf16 %v2300, %v2298
    %v2329 = vpack.c.bf16 %v2301, %v2299
    %v2330 = vpack.c.bf16 %v2304, %v2302
    %v2331 = vpack.c.bf16 %v2305, %v2303
    %v2332 = vpack.c.bf16 %v2308, %v2306
    %v2333 = vpack.c.bf16 %v2309, %v2307
    %v2334 = vld [vmem:[%s3] sm:$0xf]
    %v2335 = vld [vmem:[%s3 + $0x4] sm:$0xf]
    %v2336 = vld [vmem:[%s3 + $0x8] sm:$0xf]
    %v2337 = vld [vmem:[%s3 + $0xc] sm:$0xf]
    %v2338 = vld [vmem:[%s3 + $0x10] sm:$0xf]
    %v2339 = vld [vmem:[%s3 + $0x14] sm:$0xf]
    %v2340 = vld [vmem:[%s3 + $0x18] sm:$0xf]
    %v2341 = vld [vmem:[%s3 + $0x1c] sm:$0xf]
    %v2342 = vld [vmem:[%s3 + $0x20] sm:$0xf]
    %v2343 = vld [vmem:[%s3 + $0x24] sm:$0xf]
    %v2344 = vld [vmem:[%s3 + $0x28] sm:$0xf]
    %v2345 = vld [vmem:[%s3 + $0x2c] sm:$0xf]
    %v2346 = vld [vmem:[%s3 + $0x30] sm:$0xf]
    %v2347 = vld [vmem:[%s3 + $0x34] sm:$0xf]
    %v2348 = vld [vmem:[%s3 + $0x38] sm:$0xf]
    %v2349 = vld [vmem:[%s3 + $0x3c] sm:$0xf]
    %v2350 = vld [vmem:[%s3 + $0x40] sm:$0xf]
    %v2351 = vld [vmem:[%s3 + $0x44] sm:$0xf]
    %v2370 = vunpack.c.l.b16 %v2334
    %v2371 = vunpack.c.l.b16 %v2335
    %v2372 = vunpack.c.l.b16 %v2336
    %v2373 = vunpack.c.l.b16 %v2337
    %v2374 = vunpack.c.l.b16 %v2338
    %v2375 = vunpack.c.l.b16 %v2339
    %v2376 = vunpack.c.l.b16 %v2340
    %v2377 = vunpack.c.l.b16 %v2341
    %v2378 = vunpack.c.l.b16 %v2342
    %v2379 = vunpack.c.l.b16 %v2343
    %v2380 = vunpack.c.l.b16 %v2344
    %v2381 = vunpack.c.l.b16 %v2345
    %v2382 = vunpack.c.l.b16 %v2346
    %v2383 = vunpack.c.l.b16 %v2347
    %v2384 = vunpack.c.l.b16 %v2348
    %v2385 = vunpack.c.l.b16 %v2349
    %v2386 = vunpack.c.l.b16 %v2350
    %v2387 = vunpack.c.l.b16 %v2351
    %v2388 = vpack.c.b16 %v2371, %v2370
    %v2389 = vpack.c.b16 %v2373, %v2372
    %v2390 = vpack.c.b16 %v2375, %v2374
    %v2391 = vpack.c.b16 %v2377, %v2376
    %v2392 = vpack.c.b16 %v2379, %v2378
    %v2393 = vpack.c.b16 %v2381, %v2380
    %v2394 = vpack.c.b16 %v2383, %v2382
    %v2395 = vpack.c.b16 %v2385, %v2384
    %v2396 = vpack.c.b16 %v2387, %v2386
    %vm2406 = vcmask 130048
    %v2408 = vsel %vm2406, %v2311, 0
    %v2411 = vsel %vm2406, %v2313, 0
    %v2414 = vsel %vm2406, %v2315, 0
    %v2417 = vsel %vm2406, %v2317, 0
    %v2420 = vsel %vm2406, %v2319, 0
    %v2423 = vsel %vm2406, %v2321, 0
    %v2426 = vsel %vm2406, %v2323, 0
    %v2429 = vsel %vm2406, %v2325, 0
    %v2432 = vsel %vm2406, %v2327, 0
    %v2435 = vsel %vm2406, %v2329, 0
    %v2438 = vsel %vm2406, %v2331, 0
    %v2441 = vsel %vm2406, %v2333, 0
    %2443 = vmatprep.subr.bf16.mxu0 0
    %2444 = vmatpush1.bf16.msra.mxu0 %v2388
    %2445 = vmatprep.subr.bf16.mxu0 0
    %2446 = vmatpush1.bf16.msra.mxu0 %v2389
    %2447 = vmatprep.subr.bf16.mxu0 0
    %2448 = vmatpush1.bf16.msra.mxu0 %v2390
    %2449 = vmatprep.subr.bf16.mxu0 0
    %2450 = vmatpush1.bf16.msra.mxu0 %v2391
    %2451 = vmatprep.subr.bf16.mxu0 0
    %2452 = vmatpush1.bf16.msra.mxu0 %v2392
    %2453 = vmatprep.subr.bf16.mxu0 0
    %2454 = vmatpush1.bf16.msra.mxu0 %v2393
    %2455 = vmatprep.subr.bf16.mxu0 0
    %2456 = vmatpush1.bf16.msra.mxu0 %v2394
    %2457 = vmatprep.subr.bf16.mxu0 0
    %2458 = vmatpush1.bf16.msra.mxu0 %v2395
    %2459 = vmatprep.subr.bf16.mxu0 0
    %2460 = vmatpush1.bf16.msra.mxu0 %v2396
    %2461 = vmatprep.subr.bf16.mxu0 0
    %2462 = vmatpush1.bf16.msra.mxu0 0
    %2463 = vmatprep.subr.bf16.mxu0 0
    %2464 = vmatpush1.bf16.msra.mxu0 0
    %2465 = vmatprep.subr.bf16.mxu0 0
    %2466 = vmatpush1.bf16.msra.mxu0 0
    %2467 = vmatprep.subr.bf16.mxu0 0
    %2468 = vmatpush1.bf16.msra.mxu0 0
    %2469 = vmatprep.subr.bf16.mxu0 0
    %2470 = vmatpush1.bf16.msra.mxu0 0
    %2471 = vmatprep.subr.bf16.mxu0 0
    %2472 = vmatpush1.bf16.msra.mxu0 0
    %2473 = vmatprep.subr.bf16.mxu0 0
    %2474 = vmatpush1.bf16.msra.mxu0 0
    %2475 = vmatprep.mubr.bf16.mxu0 %v2408
    %2476 = vmatmul.mubr.bf16.gmra.mrb[0].mxu0 %v2310
    %v2477 = vpop.f32.mrb[0].mxu0
    %v2478 = vadd.f32 0.0, %v2477
    %v2479 = vpop.f32.mrb[0].mxu0
    %v2480 = vpop.f32.mrb[0].mxu0
    %v2481 = vadd.f32 0.0, %v2480
    %v2482 = vpop.f32.mrb[0].mxu0
    %2483 = vmatprep.mubr.bf16.mxu0 %v2411
    %2484 = vmatmul.mubr.bf16.gmra.mrb[0].mxu0 %v2312
    %v2485 = vpop.f32.mrb[0].mxu0
    %v2486 = vadd.f32 0.0, %v2485
    %v2487 = vpop.f32.mrb[0].mxu0
    %v2488 = vpop.f32.mrb[0].mxu0
    %v2489 = vadd.f32 0.0, %v2488
    %v2490 = vpop.f32.mrb[0].mxu0
    %2491 = vmatprep.mubr.bf16.mxu0 %v2414
    %2492 = vmatmul.mubr.bf16.gmra.mrb[0].mxu0 %v2314
    %v2493 = vpop.f32.mrb[0].mxu0
    %v2494 = vadd.f32 0.0, %v2493
    %v2495 = vpop.f32.mrb[0].mxu0
    %v2496 = vpop.f32.mrb[0].mxu0
    %v2497 = vadd.f32 0.0, %v2496
    %v2498 = vpop.f32.mrb[0].mxu0
    %2499 = vmatprep.mubr.bf16.mxu0 %v2417
    %2500 = vmatmul.mubr.bf16.gmra.mrb[0].mxu0 %v2316
    %v2501 = vpop.f32.mrb[0].mxu0
    %v2502 = vadd.f32 0.0, %v2501
    %v2503 = vpop.f32.mrb[0].mxu0
    %v2504 = vpop.f32.mrb[0].mxu0
    %v2505 = vadd.f32 0.0, %v2504
    %v2506 = vpop.f32.mrb[0].mxu0
    %2507 = vmatprep.mubr.bf16.mxu0 %v2420
    %2508 = vmatmul.mubr.bf16.gmra.mrb[0].mxu0 %v2318
    %v2509 = vpop.f32.mrb[0].mxu0
    %v2510 = vadd.f32 0.0, %v2509
    %v2511 = vpop.f32.mrb[0].mxu0
    %v2512 = vpop.f32.mrb[0].mxu0
    %v2513 = vadd.f32 0.0, %v2512
    %v2514 = vpop.f32.mrb[0].mxu0
    %2515 = vmatprep.mubr.bf16.mxu0 %v2423
    %2516 = vmatmul.mubr.bf16.gmra.mrb[0].mxu0 %v2320
    %v2517 = vpop.f32.mrb[0].mxu0
    %v2518 = vadd.f32 0.0, %v2517
    %v2519 = vpop.f32.mrb[0].mxu0
    %v2520 = vpop.f32.mrb[0].mxu0
    %v2521 = vadd.f32 0.0, %v2520
    %v2522 = vpop.f32.mrb[0].mxu0
    %2523 = vmatprep.mubr.bf16.mxu0 %v2426
    %2524 = vmatmul.mubr.bf16.gmra.mrb[0].mxu0 %v2322
    %v2525 = vpop.f32.mrb[0].mxu0
    %v2526 = vadd.f32 0.0, %v2525
    %v2527 = vpop.f32.mrb[0].mxu0
    %v2528 = vpop.f32.mrb[0].mxu0
    %v2529 = vadd.f32 0.0, %v2528
    %v2530 = vpop.f32.mrb[0].mxu0
    %2531 = vmatprep.mubr.bf16.mxu0 %v2429
    %2532 = vmatmul.mubr.bf16.gmra.mrb[0].mxu0 %v2324
    %v2533 = vpop.f32.mrb[0].mxu0
    %v2534 = vadd.f32 0.0, %v2533
    %v2535 = vpop.f32.mrb[0].mxu0
    %v2536 = vpop.f32.mrb[0].mxu0
    %v2537 = vadd.f32 0.0, %v2536
    %v2538 = vpop.f32.mrb[0].mxu0
    %2539 = vmatprep.mubr.bf16.mxu0 %v2432
    %2540 = vmatmul.mubr.bf16.gmra.mrb[0].mxu0 %v2326
    %v2541 = vpop.f32.mrb[0].mxu0
    %v2542 = vadd.f32 0.0, %v2541
    %v2543 = vpop.f32.mrb[0].mxu0
    %v2544 = vpop.f32.mrb[0].mxu0
    %v2545 = vadd.f32 0.0, %v2544
    %v2546 = vpop.f32.mrb[0].mxu0
    %2547 = vmatprep.mubr.bf16.mxu0 %v2435
    %2548 = vmatmul.mubr.bf16.gmra.mrb[0].mxu0 %v2328
    %v2549 = vpop.f32.mrb[0].mxu0
    %v2550 = vadd.f32 0.0, %v2549
    %v2551 = vpop.f32.mrb[0].mxu0
    %v2552 = vpop.f32.mrb[0].mxu0
    %v2553 = vadd.f32 0.0, %v2552
    %v2554 = vpop.f32.mrb[0].mxu0
    %2555 = vmatprep.mubr.bf16.mxu0 %v2438
    %2556 = vmatmul.mubr.bf16.gmra.mrb[0].mxu0 %v2330
    %v2557 = vpop.f32.mrb[0].mxu0
    %v2558 = vadd.f32 0.0, %v2557
    %v2559 = vpop.f32.mrb[0].mxu0
    %v2560 = vpop.f32.mrb[0].mxu0
    %v2561 = vadd.f32 0.0, %v2560
    %v2562 = vpop.f32.mrb[0].mxu0
    %2563 = vmatprep.mubr.bf16.mxu0 %v2441
    %2564 = vmatmul.mubr.bf16.gmra.mrb[0].mxu0 %v2332
    %v2565 = vpop.f32.mrb[0].mxu0
    %v2566 = vadd.f32 0.0, %v2565
    %v2567 = vpop.f32.mrb[0].mxu0
    %v2568 = vpop.f32.mrb[0].mxu0
    %v2569 = vadd.f32 0.0, %v2568
    %v2570 = vpop.f32.mrb[0].mxu0
    %2571 = vdwg.mxu0
    %v2572 = vpack.c.bf16 %v2481, %v2478
    %v2573 = vpack.c.bf16 %v2489, %v2486
    %v2574 = vpack.c.bf16 %v2497, %v2494
    %v2575 = vpack.c.bf16 %v2505, %v2502
    %v2576 = vpack.c.bf16 %v2513, %v2510
    %v2577 = vpack.c.bf16 %v2521, %v2518
    %v2578 = vpack.c.bf16 %v2529, %v2526
    %v2579 = vpack.c.bf16 %v2537, %v2534
    %v2580 = vpack.c.bf16 %v2545, %v2542
    %v2581 = vpack.c.bf16 %v2553, %v2550
    %v2582 = vpack.c.bf16 %v2561, %v2558
    %v2583 = vpack.c.bf16 %v2569, %v2566
    %v2596 = vunpack.c.l.b16 %v2572
    %v2597 = vunpack.c.h.b16 %v2572
    %v2598 = vunpack.c.l.b16 %v2573
    %v2599 = vunpack.c.h.b16 %v2573
    %v2600 = vunpack.c.l.b16 %v2574
    %v2601 = vunpack.c.h.b16 %v2574
    %v2602 = vunpack.c.l.b16 %v2575
    %v2603 = vunpack.c.h.b16 %v2575
    %v2604 = vunpack.c.l.b16 %v2576
    %v2605 = vunpack.c.h.b16 %v2576
    %v2606 = vunpack.c.l.b16 %v2577
    %v2607 = vunpack.c.h.b16 %v2577
    %v2608 = vunpack.c.l.b16 %v2578
    %v2609 = vunpack.c.h.b16 %v2578
    %v2610 = vunpack.c.l.b16 %v2579
    %v2611 = vunpack.c.h.b16 %v2579
    %v2612 = vunpack.c.l.b16 %v2580
    %v2613 = vunpack.c.h.b16 %v2580
    %v2614 = vunpack.c.l.b16 %v2581
    %v2615 = vunpack.c.h.b16 %v2581
    %v2616 = vunpack.c.l.b16 %v2582
    %v2617 = vunpack.c.h.b16 %v2582
    %v2618 = vunpack.c.l.b16 %v2583
    %v2619 = vunpack.c.h.b16 %v2583
    %v2620 = vpack.c.b16 %v2596, %v2596
    %v2621 = vpack.c.b16 %v2597, %v2597
    %v2622 = vpack.c.b16 %v2598, %v2598
    %v2623 = vpack.c.b16 %v2599, %v2599
    %v2624 = vpack.c.b16 %v2600, %v2600
    %v2625 = vpack.c.b16 %v2601, %v2601
    %v2626 = vpack.c.b16 %v2602, %v2602
    %v2627 = vpack.c.b16 %v2603, %v2603
    %v2628 = vpack.c.b16 %v2604, %v2604
    %v2629 = vpack.c.b16 %v2605, %v2605
    %v2630 = vpack.c.b16 %v2606, %v2606
    %v2631 = vpack.c.b16 %v2607, %v2607
    %v2632 = vpack.c.b16 %v2608, %v2608
    %v2633 = vpack.c.b16 %v2609, %v2609
    %v2634 = vpack.c.b16 %v2610, %v2610
    %v2635 = vpack.c.b16 %v2611, %v2611
    %v2636 = vpack.c.b16 %v2612, %v2612
    %v2637 = vpack.c.b16 %v2613, %v2613
    %v2638 = vpack.c.b16 %v2614, %v2614
    %v2639 = vpack.c.b16 %v2615, %v2615
    %v2640 = vpack.c.b16 %v2616, %v2616
    %v2641 = vpack.c.b16 %v2617, %v2617
    %v2642 = vpack.c.b16 %v2618, %v2618
    %v2643 = vpack.c.b16 %v2619, %v2619
    %v2645 = vunpack.c.l.s4 1966171168
    %v2646 = vunpack.c.0.s8 %v2645
    %v2647 = vlaneseq
    %v2648 = vshrl.u32 %v2647, 7
    %v2649 = vsub.s32 %v2646, %v2648
    %v2650 = vrot.slane %v2620, %v2649
    %v2651 = vcombine.high %v2650, %v2650
    %v2653 = vunpack.c.l.s4 1966171168
    %v2654 = vunpack.c.0.s8 %v2653
    %v2655 = vlaneseq
    %v2656 = vshrl.u32 %v2655, 7
    %v2657 = vsub.s32 %v2654, %v2656
    %v2658 = vrot.slane %v2650, %v2657
    %v2660 = vunpack.c.l.s4 1966171168
    %v2661 = vunpack.c.0.s8 %v2660
    %v2662 = vlaneseq
    %v2663 = vshrl.u32 %v2662, 7
    %v2664 = vsub.s32 %v2661, %v2663
    %v2665 = vrot.slane %v2651, %v2664
    %v2666 = vcombine.high %v2658, %v2658
    %v2667 = vcombine.high %v2665, %v2665
    %v2669 = vunpack.c.l.s4 1966171168
    %v2670 = vunpack.c.0.s8 %v2669
    %v2671 = vlaneseq
    %v2672 = vshrl.u32 %v2671, 7
    %v2673 = vsub.s32 %v2670, %v2672
    %v2674 = vrot.slane %v2621, %v2673
    %v2675 = vcombine.high %v2674, %v2674
    %v2677 = vunpack.c.l.s4 1966171168
    %v2678 = vunpack.c.0.s8 %v2677
    %v2679 = vlaneseq
    %v2680 = vshrl.u32 %v2679, 7
    %v2681 = vsub.s32 %v2678, %v2680
    %v2682 = vrot.slane %v2674, %v2681
    %v2684 = vunpack.c.l.s4 1966171168
    %v2685 = vunpack.c.0.s8 %v2684
    %v2686 = vlaneseq
    %v2687 = vshrl.u32 %v2686, 7
    %v2688 = vsub.s32 %v2685, %v2687
    %v2689 = vrot.slane %v2675, %v2688
    %v2690 = vcombine.high %v2682, %v2682
    %v2691 = vcombine.high %v2689, %v2689
    %v2693 = vunpack.c.l.s4 1966171168
    %v2694 = vunpack.c.0.s8 %v2693
    %v2695 = vlaneseq
    %v2696 = vshrl.u32 %v2695, 7
    %v2697 = vsub.s32 %v2694, %v2696
    %v2698 = vrot.slane %v2623, %v2697
    %v2699 = vcombine.high %v2698, %v2698
    %v2701 = vunpack.c.l.s4 1966171168
    %v2702 = vunpack.c.0.s8 %v2701
    %v2703 = vlaneseq
    %v2704 = vshrl.u32 %v2703, 7
    %v2705 = vsub.s32 %v2702, %v2704
    %v2706 = vrot.slane %v2698, %v2705
    %v2708 = vunpack.c.l.s4 1966171168
    %v2709 = vunpack.c.0.s8 %v2708
    %v2710 = vlaneseq
    %v2711 = vshrl.u32 %v2710, 7
    %v2712 = vsub.s32 %v2709, %v2711
    %v2713 = vrot.slane %v2699, %v2712
    %v2714 = vcombine.high %v2706, %v2706
    %v2715 = vcombine.high %v2713, %v2713
    %v2717 = vunpack.c.l.s4 1966171168
    %v2718 = vunpack.c.0.s8 %v2717
    %v2719 = vlaneseq
    %v2720 = vshrl.u32 %v2719, 7
    %v2721 = vsub.s32 %v2718, %v2720
    %v2722 = vrot.slane %v2624, %v2721
    %v2723 = vcombine.high %v2722, %v2722
    %v2725 = vunpack.c.l.s4 1966171168
    %v2726 = vunpack.c.0.s8 %v2725
    %v2727 = vlaneseq
    %v2728 = vshrl.u32 %v2727, 7
    %v2729 = vsub.s32 %v2726, %v2728
    %v2730 = vrot.slane %v2722, %v2729
    %v2732 = vunpack.c.l.s4 1966171168
    %v2733 = vunpack.c.0.s8 %v2732
    %v2734 = vlaneseq
    %v2735 = vshrl.u32 %v2734, 7
    %v2736 = vsub.s32 %v2733, %v2735
    %v2737 = vrot.slane %v2723, %v2736
    %v2738 = vcombine.high %v2730, %v2730
    %v2739 = vcombine.high %v2737, %v2737
    %v2741 = vunpack.c.l.s4 1966171168
    %v2742 = vunpack.c.0.s8 %v2741
    %v2743 = vlaneseq
    %v2744 = vshrl.u32 %v2743, 7
    %v2745 = vsub.s32 %v2742, %v2744
    %v2746 = vrot.slane %v2626, %v2745
    %v2747 = vcombine.high %v2746, %v2746
    %v2749 = vunpack.c.l.s4 1966171168
    %v2750 = vunpack.c.0.s8 %v2749
    %v2751 = vlaneseq
    %v2752 = vshrl.u32 %v2751, 7
    %v2753 = vsub.s32 %v2750, %v2752
    %v2754 = vrot.slane %v2746, %v2753
    %v2756 = vunpack.c.l.s4 1966171168
    %v2757 = vunpack.c.0.s8 %v2756
    %v2758 = vlaneseq
    %v2759 = vshrl.u32 %v2758, 7
    %v2760 = vsub.s32 %v2757, %v2759
    %v2761 = vrot.slane %v2747, %v2760
    %v2762 = vcombine.high %v2754, %v2754
    %v2763 = vcombine.high %v2761, %v2761
    %v2765 = vunpack.c.l.s4 1966171168
    %v2766 = vunpack.c.0.s8 %v2765
    %v2767 = vlaneseq
    %v2768 = vshrl.u32 %v2767, 7
    %v2769 = vsub.s32 %v2766, %v2768
    %v2770 = vrot.slane %v2627, %v2769
    %v2771 = vcombine.high %v2770, %v2770
    %v2773 = vunpack.c.l.s4 1966171168
    %v2774 = vunpack.c.0.s8 %v2773
    %v2775 = vlaneseq
    %v2776 = vshrl.u32 %v2775, 7
    %v2777 = vsub.s32 %v2774, %v2776
    %v2778 = vrot.slane %v2770, %v2777
    %v2780 = vunpack.c.l.s4 1966171168
    %v2781 = vunpack.c.0.s8 %v2780
    %v2782 = vlaneseq
    %v2783 = vshrl.u32 %v2782, 7
    %v2784 = vsub.s32 %v2781, %v2783
    %v2785 = vrot.slane %v2771, %v2784
    %v2786 = vcombine.high %v2778, %v2778
    %v2787 = vcombine.high %v2785, %v2785
    %v2789 = vunpack.c.l.s4 1966171168
    %v2790 = vunpack.c.0.s8 %v2789
    %v2791 = vlaneseq
    %v2792 = vshrl.u32 %v2791, 7
    %v2793 = vsub.s32 %v2790, %v2792
    %v2794 = vrot.slane %v2629, %v2793
    %v2795 = vcombine.high %v2794, %v2794
    %v2797 = vunpack.c.l.s4 1966171168
    %v2798 = vunpack.c.0.s8 %v2797
    %v2799 = vlaneseq
    %v2800 = vshrl.u32 %v2799, 7
    %v2801 = vsub.s32 %v2798, %v2800
    %v2802 = vrot.slane %v2794, %v2801
    %v2804 = vunpack.c.l.s4 1966171168
    %v2805 = vunpack.c.0.s8 %v2804
    %v2806 = vlaneseq
    %v2807 = vshrl.u32 %v2806, 7
    %v2808 = vsub.s32 %v2805, %v2807
    %v2809 = vrot.slane %v2795, %v2808
    %v2810 = vcombine.high %v2802, %v2802
    %v2811 = vcombine.high %v2809, %v2809
    %v2813 = vunpack.c.l.s4 1966171168
    %v2814 = vunpack.c.0.s8 %v2813
    %v2815 = vlaneseq
    %v2816 = vshrl.u32 %v2815, 7
    %v2817 = vsub.s32 %v2814, %v2816
    %v2818 = vrot.slane %v2630, %v2817
    %v2819 = vcombine.high %v2818, %v2818
    %v2821 = vunpack.c.l.s4 1966171168
    %v2822 = vunpack.c.0.s8 %v2821
    %v2823 = vlaneseq
    %v2824 = vshrl.u32 %v2823, 7
    %v2825 = vsub.s32 %v2822, %v2824
    %v2826 = vrot.slane %v2818, %v2825
    %v2828 = vunpack.c.l.s4 1966171168
    %v2829 = vunpack.c.0.s8 %v2828
    %v2830 = vlaneseq
    %v2831 = vshrl.u32 %v2830, 7
    %v2832 = vsub.s32 %v2829, %v2831
    %v2833 = vrot.slane %v2819, %v2832
    %v2834 = vcombine.high %v2826, %v2826
    %v2835 = vcombine.high %v2833, %v2833
    %v2837 = vunpack.c.l.s4 1966171168
    %v2838 = vunpack.c.0.s8 %v2837
    %v2839 = vlaneseq
    %v2840 = vshrl.u32 %v2839, 7
    %v2841 = vsub.s32 %v2838, %v2840
    %v2842 = vrot.slane %v2632, %v2841
    %v2843 = vcombine.high %v2842, %v2842
    %v2845 = vunpack.c.l.s4 1966171168
    %v2846 = vunpack.c.0.s8 %v2845
    %v2847 = vlaneseq
    %v2848 = vshrl.u32 %v2847, 7
    %v2849 = vsub.s32 %v2846, %v2848
    %v2850 = vrot.slane %v2842, %v2849
    %v2852 = vunpack.c.l.s4 1966171168
    %v2853 = vunpack.c.0.s8 %v2852
    %v2854 = vlaneseq
    %v2855 = vshrl.u32 %v2854, 7
    %v2856 = vsub.s32 %v2853, %v2855
    %v2857 = vrot.slane %v2843, %v2856
    %v2858 = vcombine.high %v2850, %v2850
    %v2859 = vcombine.high %v2857, %v2857
    %v2861 = vunpack.c.l.s4 1966171168
    %v2862 = vunpack.c.0.s8 %v2861
    %v2863 = vlaneseq
    %v2864 = vshrl.u32 %v2863, 7
    %v2865 = vsub.s32 %v2862, %v2864
    %v2866 = vrot.slane %v2633, %v2865
    %v2867 = vcombine.high %v2866, %v2866
    %v2869 = vunpack.c.l.s4 1966171168
    %v2870 = vunpack.c.0.s8 %v2869
    %v2871 = vlaneseq
    %v2872 = vshrl.u32 %v2871, 7
    %v2873 = vsub.s32 %v2870, %v2872
    %v2874 = vrot.slane %v2866, %v2873
    %v2876 = vunpack.c.l.s4 1966171168
    %v2877 = vunpack.c.0.s8 %v2876
    %v2878 = vlaneseq
    %v2879 = vshrl.u32 %v2878, 7
    %v2880 = vsub.s32 %v2877, %v2879
    %v2881 = vrot.slane %v2867, %v2880
    %v2882 = vcombine.high %v2874, %v2874
    %v2883 = vcombine.high %v2881, %v2881
    %v2885 = vunpack.c.l.s4 1966171168
    %v2886 = vunpack.c.0.s8 %v2885
    %v2887 = vlaneseq
    %v2888 = vshrl.u32 %v2887, 7
    %v2889 = vsub.s32 %v2886, %v2888
    %v2890 = vrot.slane %v2635, %v2889
    %v2891 = vcombine.high %v2890, %v2890
    %v2893 = vunpack.c.l.s4 1966171168
    %v2894 = vunpack.c.0.s8 %v2893
    %v2895 = vlaneseq
    %v2896 = vshrl.u32 %v2895, 7
    %v2897 = vsub.s32 %v2894, %v2896
    %v2898 = vrot.slane %v2890, %v2897
    %v2900 = vunpack.c.l.s4 1966171168
    %v2901 = vunpack.c.0.s8 %v2900
    %v2902 = vlaneseq
    %v2903 = vshrl.u32 %v2902, 7
    %v2904 = vsub.s32 %v2901, %v2903
    %v2905 = vrot.slane %v2891, %v2904
    %v2906 = vcombine.high %v2898, %v2898
    %v2907 = vcombine.high %v2905, %v2905
    %v2909 = vunpack.c.l.s4 1966171168
    %v2910 = vunpack.c.0.s8 %v2909
    %v2911 = vlaneseq
    %v2912 = vshrl.u32 %v2911, 7
    %v2913 = vsub.s32 %v2910, %v2912
    %v2914 = vrot.slane %v2636, %v2913
    %v2915 = vcombine.high %v2914, %v2914
    %v2917 = vunpack.c.l.s4 1966171168
    %v2918 = vunpack.c.0.s8 %v2917
    %v2919 = vlaneseq
    %v2920 = vshrl.u32 %v2919, 7
    %v2921 = vsub.s32 %v2918, %v2920
    %v2922 = vrot.slane %v2914, %v2921
    %v2924 = vunpack.c.l.s4 1966171168
    %v2925 = vunpack.c.0.s8 %v2924
    %v2926 = vlaneseq
    %v2927 = vshrl.u32 %v2926, 7
    %v2928 = vsub.s32 %v2925, %v2927
    %v2929 = vrot.slane %v2915, %v2928
    %v2930 = vcombine.high %v2922, %v2922
    %v2931 = vcombine.high %v2929, %v2929
    %v2933 = vunpack.c.l.s4 1966171168
    %v2934 = vunpack.c.0.s8 %v2933
    %v2935 = vlaneseq
    %v2936 = vshrl.u32 %v2935, 7
    %v2937 = vsub.s32 %v2934, %v2936
    %v2938 = vrot.slane %v2638, %v2937
    %v2939 = vcombine.high %v2938, %v2938
    %v2941 = vunpack.c.l.s4 1966171168
    %v2942 = vunpack.c.0.s8 %v2941
    %v2943 = vlaneseq
    %v2944 = vshrl.u32 %v2943, 7
    %v2945 = vsub.s32 %v2942, %v2944
    %v2946 = vrot.slane %v2938, %v2945
    %v2948 = vunpack.c.l.s4 1966171168
    %v2949 = vunpack.c.0.s8 %v2948
    %v2950 = vlaneseq
    %v2951 = vshrl.u32 %v2950, 7
    %v2952 = vsub.s32 %v2949, %v2951
    %v2953 = vrot.slane %v2939, %v2952
    %v2954 = vcombine.high %v2946, %v2946
    %v2955 = vcombine.high %v2953, %v2953
    %v2957 = vunpack.c.l.s4 1966171168
    %v2958 = vunpack.c.0.s8 %v2957
    %v2959 = vlaneseq
    %v2960 = vshrl.u32 %v2959, 7
    %v2961 = vsub.s32 %v2958, %v2960
    %v2962 = vrot.slane %v2639, %v2961
    %v2963 = vcombine.high %v2962, %v2962
    %v2965 = vunpack.c.l.s4 1966171168
    %v2966 = vunpack.c.0.s8 %v2965
    %v2967 = vlaneseq
    %v2968 = vshrl.u32 %v2967, 7
    %v2969 = vsub.s32 %v2966, %v2968
    %v2970 = vrot.slane %v2962, %v2969
    %v2972 = vunpack.c.l.s4 1966171168
    %v2973 = vunpack.c.0.s8 %v2972
    %v2974 = vlaneseq
    %v2975 = vshrl.u32 %v2974, 7
    %v2976 = vsub.s32 %v2973, %v2975
    %v2977 = vrot.slane %v2963, %v2976
    %v2978 = vcombine.high %v2970, %v2970
    %v2979 = vcombine.high %v2977, %v2977
    %v2981 = vunpack.c.l.s4 1966171168
    %v2982 = vunpack.c.0.s8 %v2981
    %v2983 = vlaneseq
    %v2984 = vshrl.u32 %v2983, 7
    %v2985 = vsub.s32 %v2982, %v2984
    %v2986 = vrot.slane %v2641, %v2985
    %v2987 = vcombine.high %v2986, %v2986
    %v2989 = vunpack.c.l.s4 1966171168
    %v2990 = vunpack.c.0.s8 %v2989
    %v2991 = vlaneseq
    %v2992 = vshrl.u32 %v2991, 7
    %v2993 = vsub.s32 %v2990, %v2992
    %v2994 = vrot.slane %v2986, %v2993
    %v2996 = vunpack.c.l.s4 1966171168
    %v2997 = vunpack.c.0.s8 %v2996
    %v2998 = vlaneseq
    %v2999 = vshrl.u32 %v2998, 7
    %v3000 = vsub.s32 %v2997, %v2999
    %v3001 = vrot.slane %v2987, %v3000
    %v3002 = vcombine.high %v2994, %v2994
    %v3003 = vcombine.high %v3001, %v3001
    %v3005 = vunpack.c.l.s4 1966171168
    %v3006 = vunpack.c.0.s8 %v3005
    %v3007 = vlaneseq
    %v3008 = vshrl.u32 %v3007, 7
    %v3009 = vsub.s32 %v3006, %v3008
    %v3010 = vrot.slane %v2642, %v3009
    %v3011 = vcombine.high %v3010, %v3010
    %v3013 = vunpack.c.l.s4 1966171168
    %v3014 = vunpack.c.0.s8 %v3013
    %v3015 = vlaneseq
    %v3016 = vshrl.u32 %v3015, 7
    %v3017 = vsub.s32 %v3014, %v3016
    %v3018 = vrot.slane %v3010, %v3017
    %v3020 = vunpack.c.l.s4 1966171168
    %v3021 = vunpack.c.0.s8 %v3020
    %v3022 = vlaneseq
    %v3023 = vshrl.u32 %v3022, 7
    %v3024 = vsub.s32 %v3021, %v3023
    %v3025 = vrot.slane %v3011, %v3024
    %v3026 = vcombine.high %v3018, %v3018
    %v3027 = vcombine.high %v3025, %v3025
    %v3028 = vunpack.i.l.s16 %v2658
    %v3029 = vunpack.i.h.s16 %v2658
    %v3030 = vunpack.i.l.s16 %v2665
    %v3031 = vunpack.i.h.s16 %v2665
    %v3032 = vunpack.i.l.s16 %v2666
    %v3033 = vunpack.i.h.s16 %v2666
    %v3034 = vunpack.i.l.s16 %v2667
    %v3035 = vunpack.i.h.s16 %v2667
    %v3036 = vunpack.i.l.s16 %v2682
    %v3037 = vunpack.i.h.s16 %v2682
    %v3038 = vunpack.i.l.s16 %v2689
    %v3039 = vunpack.i.h.s16 %v2689
    %v3040 = vunpack.i.l.s16 %v2690
    %v3041 = vunpack.i.h.s16 %v2690
    %v3042 = vunpack.i.l.s16 %v2691
    %v3043 = vunpack.i.l.s16 %v2706
    %v3044 = vunpack.i.h.s16 %v2706
    %v3045 = vunpack.i.l.s16 %v2713
    %v3046 = vunpack.i.h.s16 %v2713
    %v3047 = vunpack.i.l.s16 %v2714
    %v3048 = vunpack.i.h.s16 %v2714
    %v3049 = vunpack.i.l.s16 %v2715
    %v3050 = vunpack.i.h.s16 %v2715
    %v3051 = vunpack.i.l.s16 %v2730
    %v3052 = vunpack.i.h.s16 %v2730
    %v3053 = vunpack.i.l.s16 %v2737
    %v3054 = vunpack.i.h.s16 %v2737
    %v3055 = vunpack.i.l.s16 %v2738
    %v3056 = vunpack.i.h.s16 %v2738
    %v3057 = vunpack.i.l.s16 %v2739
    %v3058 = vunpack.i.l.s16 %v2754
    %v3059 = vunpack.i.h.s16 %v2754
    %v3060 = vunpack.i.l.s16 %v2761
    %v3061 = vunpack.i.h.s16 %v2761
    %v3062 = vunpack.i.l.s16 %v2762
    %v3063 = vunpack.i.h.s16 %v2762
    %v3064 = vunpack.i.l.s16 %v2763
    %v3065 = vunpack.i.h.s16 %v2763
    %v3066 = vunpack.i.l.s16 %v2778
    %v3067 = vunpack.i.h.s16 %v2778
    %v3068 = vunpack.i.l.s16 %v2785
    %v3069 = vunpack.i.h.s16 %v2785
    %v3070 = vunpack.i.l.s16 %v2786
    %v3071 = vunpack.i.h.s16 %v2786
    %v3072 = vunpack.i.l.s16 %v2787
    %v3073 = vunpack.i.l.s16 %v2802
    %v3074 = vunpack.i.h.s16 %v2802
    %v3075 = vunpack.i.l.s16 %v2809
    %v3076 = vunpack.i.h.s16 %v2809
    %v3077 = vunpack.i.l.s16 %v2810
    %v3078 = vunpack.i.h.s16 %v2810
    %v3079 = vunpack.i.l.s16 %v2811
    %v3080 = vunpack.i.h.s16 %v2811
    %v3081 = vunpack.i.l.s16 %v2826
    %v3082 = vunpack.i.h.s16 %v2826
    %v3083 = vunpack.i.l.s16 %v2833
    %v3084 = vunpack.i.h.s16 %v2833
    %v3085 = vunpack.i.l.s16 %v2834
    %v3086 = vunpack.i.h.s16 %v2834
    %v3087 = vunpack.i.l.s16 %v2835
    %v3088 = vunpack.i.l.s16 %v2850
    %v3089 = vunpack.i.h.s16 %v2850
    %v3090 = vunpack.i.l.s16 %v2857
    %v3091 = vunpack.i.h.s16 %v2857
    %v3092 = vunpack.i.l.s16 %v2858
    %v3093 = vunpack.i.h.s16 %v2858
    %v3094 = vunpack.i.l.s16 %v2859
    %v3095 = vunpack.i.h.s16 %v2859
    %v3096 = vunpack.i.l.s16 %v2874
    %v3097 = vunpack.i.h.s16 %v2874
    %v3098 = vunpack.i.l.s16 %v2881
    %v3099 = vunpack.i.h.s16 %v2881
    %v3100 = vunpack.i.l.s16 %v2882
    %v3101 = vunpack.i.h.s16 %v2882
    %v3102 = vunpack.i.l.s16 %v2883
    %v3103 = vunpack.i.l.s16 %v2898
    %v3104 = vunpack.i.h.s16 %v2898
    %v3105 = vunpack.i.l.s16 %v2905
    %v3106 = vunpack.i.h.s16 %v2905
    %v3107 = vunpack.i.l.s16 %v2906
    %v3108 = vunpack.i.h.s16 %v2906
    %v3109 = vunpack.i.l.s16 %v2907
    %v3110 = vunpack.i.h.s16 %v2907
    %v3111 = vunpack.i.l.s16 %v2922
    %v3112 = vunpack.i.h.s16 %v2922
    %v3113 = vunpack.i.l.s16 %v2929
    %v3114 = vunpack.i.h.s16 %v2929
    %v3115 = vunpack.i.l.s16 %v2930
    %v3116 = vunpack.i.h.s16 %v2930
    %v3117 = vunpack.i.l.s16 %v2931
    %v3118 = vunpack.i.l.s16 %v2946
    %v3119 = vunpack.i.h.s16 %v2946
    %v3120 = vunpack.i.l.s16 %v2953
    %v3121 = vunpack.i.h.s16 %v2953
    %v3122 = vunpack.i.l.s16 %v2954
    %v3123 = vunpack.i.h.s16 %v2954
    %v3124 = vunpack.i.l.s16 %v2955
    %v3125 = vunpack.i.h.s16 %v2955
    %v3126 = vunpack.i.l.s16 %v2970
    %v3127 = vunpack.i.h.s16 %v2970
    %v3128 = vunpack.i.l.s16 %v2977
    %v3129 = vunpack.i.h.s16 %v2977
    %v3130 = vunpack.i.l.s16 %v2978
    %v3131 = vunpack.i.h.s16 %v2978
    %v3132 = vunpack.i.l.s16 %v2979
    %v3133 = vunpack.i.l.s16 %v2994
    %v3134 = vunpack.i.h.s16 %v2994
    %v3135 = vunpack.i.l.s16 %v3001
    %v3136 = vunpack.i.h.s16 %v3001
    %v3137 = vunpack.i.l.s16 %v3002
    %v3138 = vunpack.i.h.s16 %v3002
    %v3139 = vunpack.i.l.s16 %v3003
    %v3140 = vunpack.i.h.s16 %v3003
    %v3141 = vunpack.i.l.s16 %v3018
    %v3142 = vunpack.i.h.s16 %v3018
    %v3143 = vunpack.i.l.s16 %v3025
    %v3144 = vunpack.i.h.s16 %v3025
    %v3145 = vunpack.i.l.s16 %v3026
    %v3146 = vunpack.i.h.s16 %v3026
    %v3147 = vunpack.i.l.s16 %v3027
    %v3148 = vld [vmem:[%s4] sm:$0xf]
    %v3149 = vld [vmem:[%s4 + $0x4] sm:$0xf]
    %v3150 = vld [vmem:[%s4 + $0x8] sm:$0xf]
    %v3151 = vld [vmem:[%s4 + $0xc] sm:$0xf]
    %v3152 = vld [vmem:[%s4 + $0x10] sm:$0xf]
    %v3153 = vld [vmem:[%s4 + $0x14] sm:$0xf]
    %v3154 = vld [vmem:[%s4 + $0x18] sm:$0xf]
    %v3155 = vld [vmem:[%s4 + $0x1c] sm:$0xf]
    %v3156 = vld [vmem:[%s4 + $0x20] sm:$0xf]
    %v3157 = vunpack.i.h.s16 %v2691
    %v3158 = vunpack.i.h.s16 %v2739
    %v3159 = vunpack.i.h.s16 %v2787
    %v3160 = vunpack.i.h.s16 %v2835
    %v3161 = vunpack.i.h.s16 %v2883
    %v3162 = vunpack.i.h.s16 %v2931
    %v3163 = vunpack.i.h.s16 %v2979
    %v3164 = vunpack.i.h.s16 %v3027
    %v3165 = vpack.i.b16 %v3030, %v3029
    %v3166 = vpack.i.b16 %v3032, %v3031
    %v3167 = vpack.i.b16 %v3034, %v3033
    %v3168 = vpack.i.b16 %v3036, %v3035
    %v3169 = vpack.i.b16 %v3038, %v3037
    %v3170 = vpack.i.b16 %v3040, %v3039
    %v3171 = vpack.i.b16 %v3042, %v3041
    %v3172 = vpack.i.b16 %v3044, %v3157
    %v3173 = vpack.i.b16 %v3046, %v3045
    %v3174 = vpack.i.b16 %v3048, %v3047
    %v3175 = vpack.i.b16 %v3050, %v3049
    %v3176 = vpack.i.b16 %v3052, %v3051
    %v3177 = vpack.i.b16 %v3054, %v3053
    %v3178 = vpack.i.b16 %v3056, %v3055
    %v3179 = vpack.i.b16 %v3158, %v3057
    %v3180 = vpack.i.b16 %v3060, %v3059
    %v3181 = vpack.i.b16 %v3062, %v3061
    %v3182 = vpack.i.b16 %v3064, %v3063
    %v3183 = vpack.i.b16 %v3066, %v3065
    %v3184 = vpack.i.b16 %v3068, %v3067
    %v3185 = vpack.i.b16 %v3070, %v3069
    %v3186 = vpack.i.b16 %v3072, %v3071
    %v3187 = vpack.i.b16 %v3074, %v3159
    %v3188 = vpack.i.b16 %v3076, %v3075
    %v3189 = vpack.i.b16 %v3078, %v3077
    %v3190 = vpack.i.b16 %v3080, %v3079
    %v3191 = vpack.i.b16 %v3082, %v3081
    %v3192 = vpack.i.b16 %v3084, %v3083
    %v3193 = vpack.i.b16 %v3086, %v3085
    %v3194 = vpack.i.b16 %v3160, %v3087
    %v3195 = vpack.i.b16 %v3090, %v3089
    %v3196 = vpack.i.b16 %v3092, %v3091
    %v3197 = vpack.i.b16 %v3094, %v3093
    %v3198 = vpack.i.b16 %v3096, %v3095
    %v3199 = vpack.i.b16 %v3098, %v3097
    %v3200 = vpack.i.b16 %v3100, %v3099
    %v3201 = vpack.i.b16 %v3102, %v3101
    %v3202 = vpack.i.b16 %v3104, %v3161
    %v3203 = vpack.i.b16 %v3106, %v3105
    %v3204 = vpack.i.b16 %v3108, %v3107
    %v3205 = vpack.i.b16 %v3110, %v3109
    %v3206 = vpack.i.b16 %v3112, %v3111
    %v3207 = vpack.i.b16 %v3114, %v3113
    %v3208 = vpack.i.b16 %v3116, %v3115
    %v3209 = vpack.i.b16 %v3162, %v3117
    %v3210 = vpack.i.b16 %v3120, %v3119
    %v3211 = vpack.i.b16 %v3122, %v3121
    %v3212 = vpack.i.b16 %v3124, %v3123
    %v3213 = vpack.i.b16 %v3126, %v3125
    %v3214 = vpack.i.b16 %v3128, %v3127
    %v3215 = vpack.i.b16 %v3130, %v3129
    %v3216 = vpack.i.b16 %v3132, %v3131
    %v3217 = vpack.i.b16 %v3134, %v3163
    %v3218 = vpack.i.b16 %v3136, %v3135
    %v3219 = vpack.i.b16 %v3138, %v3137
    %v3220 = vpack.i.b16 %v3140, %v3139
    %v3221 = vpack.i.b16 %v3142, %v3141
    %v3222 = vpack.i.b16 %v3144, %v3143
    %v3223 = vpack.i.b16 %v3146, %v3145
    %v3224 = vpack.i.b16 %v3164, %v3147
    %v3225 = vcombine.low %v3165, %v3166
    %v3226 = vcombine.low %v3167, %v3168
    %v3227 = vcombine.low %v3169, %v3170
    %v3228 = vcombine.low %v3171, %v3172
    %v3230 = vunpack.c.l.s4 1966171168
    %v3231 = vunpack.c.0.s8 %v3230
    %v3232 = vlaneseq
    %v3233 = vshrl.u32 %v3232, 7
    %v3234 = vsub.s32 %v3231, %v3233
    %v3235 = vrot.slane %v3225, %v3234
    %v3237 = vunpack.c.l.s4 1966171168
    %v3238 = vunpack.c.0.s8 %v3237
    %v3239 = vlaneseq
    %v3240 = vshrl.u32 %v3239, 7
    %v3241 = vsub.s32 %v3238, %v3240
    %v3242 = vrot.slane %v3226, %v3241
    %v3244 = vunpack.c.l.s4 1966171168
    %v3245 = vunpack.c.0.s8 %v3244
    %v3246 = vlaneseq
    %v3247 = vshrl.u32 %v3246, 7
    %v3248 = vsub.s32 %v3245, %v3247
    %v3249 = vrot.slane %v3227, %v3248
    %v3251 = vunpack.c.l.s4 1966171168
    %v3252 = vunpack.c.0.s8 %v3251
    %v3253 = vlaneseq
    %v3254 = vshrl.u32 %v3253, 7
    %v3255 = vsub.s32 %v3252, %v3254
    %v3256 = vrot.slane %v3228, %v3255
    %v3257 = vcombine.low %v3235, %v3242
    %v3258 = vcombine.low %v3249, %v3256
    %v3260 = vunpack.c.l.s4 1966171168
    %v3261 = vunpack.c.0.s8 %v3260
    %v3262 = vlaneseq
    %v3263 = vshrl.u32 %v3262, 7
    %v3264 = vsub.s32 %v3261, %v3263
    %v3265 = vrot.slane %v3257, %v3264
    %v3267 = vunpack.c.l.s4 1966171168
    %v3268 = vunpack.c.0.s8 %v3267
    %v3269 = vlaneseq
    %v3270 = vshrl.u32 %v3269, 7
    %v3271 = vsub.s32 %v3268, %v3270
    %v3272 = vrot.slane %v3258, %v3271
    %v3273 = vcombine.low %v3265, %v3272
    %v3274 = vcombine.low %v3173, %v3174
    %v3275 = vcombine.low %v3175, %v3176
    %v3276 = vcombine.low %v3177, %v3178
    %v3277 = vcombine.low %v3179, %v3180
    %v3279 = vunpack.c.l.s4 1966171168
    %v3280 = vunpack.c.0.s8 %v3279
    %v3281 = vlaneseq
    %v3282 = vshrl.u32 %v3281, 7
    %v3283 = vsub.s32 %v3280, %v3282
    %v3284 = vrot.slane %v3274, %v3283
    %v3286 = vunpack.c.l.s4 1966171168
    %v3287 = vunpack.c.0.s8 %v3286
    %v3288 = vlaneseq
    %v3289 = vshrl.u32 %v3288, 7
    %v3290 = vsub.s32 %v3287, %v3289
    %v3291 = vrot.slane %v3275, %v3290
    %v3293 = vunpack.c.l.s4 1966171168
    %v3294 = vunpack.c.0.s8 %v3293
    %v3295 = vlaneseq
    %v3296 = vshrl.u32 %v3295, 7
    %v3297 = vsub.s32 %v3294, %v3296
    %v3298 = vrot.slane %v3276, %v3297
    %v3300 = vunpack.c.l.s4 1966171168
    %v3301 = vunpack.c.0.s8 %v3300
    %v3302 = vlaneseq
    %v3303 = vshrl.u32 %v3302, 7
    %v3304 = vsub.s32 %v3301, %v3303
    %v3305 = vrot.slane %v3277, %v3304
    %v3306 = vcombine.low %v3284, %v3291
    %v3307 = vcombine.low %v3298, %v3305
    %v3309 = vunpack.c.l.s4 1966171168
    %v3310 = vunpack.c.0.s8 %v3309
    %v3311 = vlaneseq
    %v3312 = vshrl.u32 %v3311, 7
    %v3313 = vsub.s32 %v3310, %v3312
    %v3314 = vrot.slane %v3306, %v3313
    %v3316 = vunpack.c.l.s4 1966171168
    %v3317 = vunpack.c.0.s8 %v3316
    %v3318 = vlaneseq
    %v3319 = vshrl.u32 %v3318, 7
    %v3320 = vsub.s32 %v3317, %v3319
    %v3321 = vrot.slane %v3307, %v3320
    %v3322 = vcombine.low %v3314, %v3321
    %v3323 = vcombine.low %v3181, %v3182
    %v3324 = vcombine.low %v3183, %v3184
    %v3325 = vcombine.low %v3185, %v3186
    %v3326 = vcombine.low %v3187, %v3188
    %v3328 = vunpack.c.l.s4 1966171168
    %v3329 = vunpack.c.0.s8 %v3328
    %v3330 = vlaneseq
    %v3331 = vshrl.u32 %v3330, 7
    %v3332 = vsub.s32 %v3329, %v3331
    %v3333 = vrot.slane %v3323, %v3332
    %v3335 = vunpack.c.l.s4 1966171168
    %v3336 = vunpack.c.0.s8 %v3335
    %v3337 = vlaneseq
    %v3338 = vshrl.u32 %v3337, 7
    %v3339 = vsub.s32 %v3336, %v3338
    %v3340 = vrot.slane %v3324, %v3339
    %v3342 = vunpack.c.l.s4 1966171168
    %v3343 = vunpack.c.0.s8 %v3342
    %v3344 = vlaneseq
    %v3345 = vshrl.u32 %v3344, 7
    %v3346 = vsub.s32 %v3343, %v3345
    %v3347 = vrot.slane %v3325, %v3346
    %v3349 = vunpack.c.l.s4 1966171168
    %v3350 = vunpack.c.0.s8 %v3349
    %v3351 = vlaneseq
    %v3352 = vshrl.u32 %v3351, 7
    %v3353 = vsub.s32 %v3350, %v3352
    %v3354 = vrot.slane %v3326, %v3353
    %v3355 = vcombine.low %v3333, %v3340
    %v3356 = vcombine.low %v3347, %v3354
    %v3358 = vunpack.c.l.s4 1966171168
    %v3359 = vunpack.c.0.s8 %v3358
    %v3360 = vlaneseq
    %v3361 = vshrl.u32 %v3360, 7
    %v3362 = vsub.s32 %v3359, %v3361
    %v3363 = vrot.slane %v3355, %v3362
    %v3365 = vunpack.c.l.s4 1966171168
    %v3366 = vunpack.c.0.s8 %v3365
    %v3367 = vlaneseq
    %v3368 = vshrl.u32 %v3367, 7
    %v3369 = vsub.s32 %v3366, %v3368
    %v3370 = vrot.slane %v3356, %v3369
    %v3371 = vcombine.low %v3363, %v3370
    %v3372 = vcombine.low %v3189, %v3190
    %v3373 = vcombine.low %v3191, %v3192
    %v3374 = vcombine.low %v3193, %v3194
    %v3375 = vcombine.low %v3195, %v3196
    %v3377 = vunpack.c.l.s4 1966171168
    %v3378 = vunpack.c.0.s8 %v3377
    %v3379 = vlaneseq
    %v3380 = vshrl.u32 %v3379, 7
    %v3381 = vsub.s32 %v3378, %v3380
    %v3382 = vrot.slane %v3372, %v3381
    %v3384 = vunpack.c.l.s4 1966171168
    %v3385 = vunpack.c.0.s8 %v3384
    %v3386 = vlaneseq
    %v3387 = vshrl.u32 %v3386, 7
    %v3388 = vsub.s32 %v3385, %v3387
    %v3389 = vrot.slane %v3373, %v3388
    %v3391 = vunpack.c.l.s4 1966171168
    %v3392 = vunpack.c.0.s8 %v3391
    %v3393 = vlaneseq
    %v3394 = vshrl.u32 %v3393, 7
    %v3395 = vsub.s32 %v3392, %v3394
    %v3396 = vrot.slane %v3374, %v3395
    %v3398 = vunpack.c.l.s4 1966171168
    %v3399 = vunpack.c.0.s8 %v3398
    %v3400 = vlaneseq
    %v3401 = vshrl.u32 %v3400, 7
    %v3402 = vsub.s32 %v3399, %v3401
    %v3403 = vrot.slane %v3375, %v3402
    %v3404 = vcombine.low %v3382, %v3389
    %v3405 = vcombine.low %v3396, %v3403
    %v3407 = vunpack.c.l.s4 1966171168
    %v3408 = vunpack.c.0.s8 %v3407
    %v3409 = vlaneseq
    %v3410 = vshrl.u32 %v3409, 7
    %v3411 = vsub.s32 %v3408, %v3410
    %v3412 = vrot.slane %v3404, %v3411
    %v3414 = vunpack.c.l.s4 1966171168
    %v3415 = vunpack.c.0.s8 %v3414
    %v3416 = vlaneseq
    %v3417 = vshrl.u32 %v3416, 7
    %v3418 = vsub.s32 %v3415, %v3417
    %v3419 = vrot.slane %v3405, %v3418
    %v3420 = vcombine.low %v3412, %v3419
    %v3421 = vcombine.low %v3197, %v3198
    %v3422 = vcombine.low %v3199, %v3200
    %v3423 = vcombine.low %v3201, %v3202
    %v3424 = vcombine.low %v3203, %v3204
    %v3426 = vunpack.c.l.s4 1966171168
    %v3427 = vunpack.c.0.s8 %v3426
    %v3428 = vlaneseq
    %v3429 = vshrl.u32 %v3428, 7
    %v3430 = vsub.s32 %v3427, %v3429
    %v3431 = vrot.slane %v3421, %v3430
    %v3433 = vunpack.c.l.s4 1966171168
    %v3434 = vunpack.c.0.s8 %v3433
    %v3435 = vlaneseq
    %v3436 = vshrl.u32 %v3435, 7
    %v3437 = vsub.s32 %v3434, %v3436
    %v3438 = vrot.slane %v3422, %v3437
    %v3440 = vunpack.c.l.s4 1966171168
    %v3441 = vunpack.c.0.s8 %v3440
    %v3442 = vlaneseq
    %v3443 = vshrl.u32 %v3442, 7
    %v3444 = vsub.s32 %v3441, %v3443
    %v3445 = vrot.slane %v3423, %v3444
    %v3447 = vunpack.c.l.s4 1966171168
    %v3448 = vunpack.c.0.s8 %v3447
    %v3449 = vlaneseq
    %v3450 = vshrl.u32 %v3449, 7
    %v3451 = vsub.s32 %v3448, %v3450
    %v3452 = vrot.slane %v3424, %v3451
    %v3453 = vcombine.low %v3431, %v3438
    %v3454 = vcombine.low %v3445, %v3452
    %v3456 = vunpack.c.l.s4 1966171168
    %v3457 = vunpack.c.0.s8 %v3456
    %v3458 = vlaneseq
    %v3459 = vshrl.u32 %v3458, 7
    %v3460 = vsub.s32 %v3457, %v3459
    %v3461 = vrot.slane %v3453, %v3460
    %v3463 = vunpack.c.l.s4 1966171168
    %v3464 = vunpack.c.0.s8 %v3463
    %v3465 = vlaneseq
    %v3466 = vshrl.u32 %v3465, 7
    %v3467 = vsub.s32 %v3464, %v3466
    %v3468 = vrot.slane %v3454, %v3467
    %v3469 = vcombine.low %v3461, %v3468
    %v3470 = vcombine.low %v3205, %v3206
    %v3471 = vcombine.low %v3207, %v3208
    %v3472 = vcombine.low %v3209, %v3210
    %v3473 = vcombine.low %v3211, %v3212
    %v3475 = vunpack.c.l.s4 1966171168
    %v3476 = vunpack.c.0.s8 %v3475
    %v3477 = vlaneseq
    %v3478 = vshrl.u32 %v3477, 7
    %v3479 = vsub.s32 %v3476, %v3478
    %v3480 = vrot.slane %v3470, %v3479
    %v3482 = vunpack.c.l.s4 1966171168
    %v3483 = vunpack.c.0.s8 %v3482
    %v3484 = vlaneseq
    %v3485 = vshrl.u32 %v3484, 7
    %v3486 = vsub.s32 %v3483, %v3485
    %v3487 = vrot.slane %v3471, %v3486
    %v3489 = vunpack.c.l.s4 1966171168
    %v3490 = vunpack.c.0.s8 %v3489
    %v3491 = vlaneseq
    %v3492 = vshrl.u32 %v3491, 7
    %v3493 = vsub.s32 %v3490, %v3492
    %v3494 = vrot.slane %v3472, %v3493
    %v3496 = vunpack.c.l.s4 1966171168
    %v3497 = vunpack.c.0.s8 %v3496
    %v3498 = vlaneseq
    %v3499 = vshrl.u32 %v3498, 7
    %v3500 = vsub.s32 %v3497, %v3499
    %v3501 = vrot.slane %v3473, %v3500
    %v3502 = vcombine.low %v3480, %v3487
    %v3503 = vcombine.low %v3494, %v3501
    %v3505 = vunpack.c.l.s4 1966171168
    %v3506 = vunpack.c.0.s8 %v3505
    %v3507 = vlaneseq
    %v3508 = vshrl.u32 %v3507, 7
    %v3509 = vsub.s32 %v3506, %v3508
    %v3510 = vrot.slane %v3502, %v3509
    %v3512 = vunpack.c.l.s4 1966171168
    %v3513 = vunpack.c.0.s8 %v3512
    %v3514 = vlaneseq
    %v3515 = vshrl.u32 %v3514, 7
    %v3516 = vsub.s32 %v3513, %v3515
    %v3517 = vrot.slane %v3503, %v3516
    %v3518 = vcombine.low %v3510, %v3517
    %v3519 = vcombine.low %v3213, %v3214
    %v3520 = vcombine.low %v3215, %v3216
    %v3521 = vcombine.low %v3217, %v3218
    %v3522 = vcombine.low %v3219, %v3220
    %v3524 = vunpack.c.l.s4 1966171168
    %v3525 = vunpack.c.0.s8 %v3524
    %v3526 = vlaneseq
    %v3527 = vshrl.u32 %v3526, 7
    %v3528 = vsub.s32 %v3525, %v3527
    %v3529 = vrot.slane %v3519, %v3528
    %v3531 = vunpack.c.l.s4 1966171168
    %v3532 = vunpack.c.0.s8 %v3531
    %v3533 = vlaneseq
    %v3534 = vshrl.u32 %v3533, 7
    %v3535 = vsub.s32 %v3532, %v3534
    %v3536 = vrot.slane %v3520, %v3535
    %v3538 = vunpack.c.l.s4 1966171168
    %v3539 = vunpack.c.0.s8 %v3538
    %v3540 = vlaneseq
    %v3541 = vshrl.u32 %v3540, 7
    %v3542 = vsub.s32 %v3539, %v3541
    %v3543 = vrot.slane %v3521, %v3542
    %v3545 = vunpack.c.l.s4 1966171168
    %v3546 = vunpack.c.0.s8 %v3545
    %v3547 = vlaneseq
    %v3548 = vshrl.u32 %v3547, 7
    %v3549 = vsub.s32 %v3546, %v3548
    %v3550 = vrot.slane %v3522, %v3549
    %v3551 = vcombine.low %v3529, %v3536
    %v3552 = vcombine.low %v3543, %v3550
    %v3554 = vunpack.c.l.s4 1966171168
    %v3555 = vunpack.c.0.s8 %v3554
    %v3556 = vlaneseq
    %v3557 = vshrl.u32 %v3556, 7
    %v3558 = vsub.s32 %v3555, %v3557
    %v3559 = vrot.slane %v3551, %v3558
    %v3561 = vunpack.c.l.s4 1966171168
    %v3562 = vunpack.c.0.s8 %v3561
    %v3563 = vlaneseq
    %v3564 = vshrl.u32 %v3563, 7
    %v3565 = vsub.s32 %v3562, %v3564
    %v3566 = vrot.slane %v3552, %v3565
    %v3567 = vcombine.low %v3559, %v3566
    %v3568 = vcombine.low %v3221, %v3222
    %v3569 = vcombine.low %v3223, %v3224
    %v3571 = vunpack.c.l.s4 1966171168
    %v3572 = vunpack.c.0.s8 %v3571
    %v3573 = vlaneseq
    %v3574 = vshrl.u32 %v3573, 7
    %v3575 = vsub.s32 %v3572, %v3574
    %v3576 = vrot.slane %v3568, %v3575
    %v3578 = vunpack.c.l.s4 1966171168
    %v3579 = vunpack.c.0.s8 %v3578
    %v3580 = vlaneseq
    %v3581 = vshrl.u32 %v3580, 7
    %v3582 = vsub.s32 %v3579, %v3581
    %v3583 = vrot.slane %v3569, %v3582
    %v3584 = vcombine.low %v3576, %v3583
    %v3586 = vunpack.c.l.s4 1966171168
    %v3587 = vunpack.c.0.s8 %v3586
    %v3588 = vlaneseq
    %v3589 = vshrl.u32 %v3588, 7
    %v3590 = vsub.s32 %v3587, %v3589
    %v3591 = vrot.slane %v3584, %v3590
    %v3601 = vunpack.c.l.b16 %v3148
    %v3602 = vunpack.c.l.b16 %v3149
    %v3603 = vunpack.c.l.b16 %v3150
    %v3604 = vunpack.c.l.b16 %v3151
    %v3605 = vunpack.c.l.b16 %v3152
    %v3606 = vunpack.c.l.b16 %v3153
    %v3607 = vunpack.c.l.b16 %v3154
    %v3608 = vunpack.c.l.b16 %v3155
    %v3609 = vunpack.c.l.b16 %v3156
    %v3610 = vpack.c.b16 %v3602, %v3601
    %v3611 = vpack.c.b16 %v3604, %v3603
    %v3612 = vpack.c.b16 %v3606, %v3605
    %v3613 = vpack.c.b16 %v3608, %v3607
    %v3614 = vpack.c.b16 %v3609, %v3609
    %vm3619 = vcmask 588800
    %v3621 = vsel %vm3619, %v3273, 0
    %v3624 = vsel %vm3619, %v3322, 0
    %v3627 = vsel %vm3619, %v3371, 0
    %v3630 = vsel %vm3619, %v3420, 0
    %v3633 = vsel %vm3619, %v3469, 0
    %v3636 = vsel %vm3619, %v3518, 0
    %v3639 = vsel %vm3619, %v3567, 0
    %v3642 = vsel %vm3619, %v3591, 0
    %vm3644 = vcmask 1043456
    %v3646 = vsel %vm3644, %v3614, 0
    %3648 = vmatprep.subr.bf16.mxu0 0
    %3649 = vmatpush1.bf16.msra.mxu0 %v3610
    %3650 = vmatprep.subr.bf16.mxu0 0
    %3651 = vmatpush1.bf16.msra.mxu0 %v3611
    %3652 = vmatprep.subr.bf16.mxu0 0
    %3653 = vmatpush1.bf16.msra.mxu0 %v3612
    %3654 = vmatprep.subr.bf16.mxu0 0
    %3655 = vmatpush1.bf16.msra.mxu0 %v3613
    %3656 = vmatprep.subr.bf16.mxu0 0
    %3657 = vmatpush1.bf16.msra.mxu0 %v3646
    %3658 = vmatprep.subr.bf16.mxu0 0
    %3659 = vmatpush1.bf16.msra.mxu0 0
    %3660 = vmatprep.subr.bf16.mxu0 0
    %3661 = vmatpush1.bf16.msra.mxu0 0
    %3662 = vmatprep.subr.bf16.mxu0 0
    %3663 = vmatpush1.bf16.msra.mxu0 0
    %3664 = vmatprep.subr.bf16.mxu0 0
    %3665 = vmatpush1.bf16.msra.mxu0 0
    %3666 = vmatprep.subr.bf16.mxu0 0
    %3667 = vmatpush1.bf16.msra.mxu0 0
    %3668 = vmatprep.subr.bf16.mxu0 0
    %3669 = vmatpush1.bf16.msra.mxu0 0
    %3670 = vmatprep.subr.bf16.mxu0 0
    %3671 = vmatpush1.bf16.msra.mxu0 0
    %3672 = vmatprep.subr.bf16.mxu0 0
    %3673 = vmatpush1.bf16.msra.mxu0 0
    %3674 = vmatprep.subr.bf16.mxu0 0
    %3675 = vmatpush1.bf16.msra.mxu0 0
    %3676 = vmatprep.subr.bf16.mxu0 0
    %3677 = vmatpush1.bf16.msra.mxu0 0
    %3678 = vmatprep.subr.bf16.mxu0 0
    %3679 = vmatpush1.bf16.msra.mxu0 0
    %3680 = vmatprep.mubr.bf16.mxu0 0
    %3681 = vmatmul.mubr.bf16.gmra.mrb[0].mxu0 %v3621
    %v3682 = vpop.f32.mrb[0].mxu0
    %v3683 = vadd.f32 0.0, %v3682
    %v3684 = vpop.f32.mrb[0].mxu0
    %v3685 = vpop.f32.mrb[0].mxu0
    %v3686 = vadd.f32 0.0, %v3685
    %v3687 = vpop.f32.mrb[0].mxu0
    %3688 = vmatprep.mubr.bf16.mxu0 0
    %3689 = vmatmul.mubr.bf16.gmra.mrb[0].mxu0 %v3624
    %v3690 = vpop.f32.mrb[0].mxu0
    %v3691 = vadd.f32 0.0, %v3690
    %v3692 = vpop.f32.mrb[0].mxu0
    %v3693 = vpop.f32.mrb[0].mxu0
    %v3694 = vadd.f32 0.0, %v3693
    %v3695 = vpop.f32.mrb[0].mxu0
    %3696 = vmatprep.mubr.bf16.mxu0 0
    %3697 = vmatmul.mubr.bf16.gmra.mrb[0].mxu0 %v3627
    %v3698 = vpop.f32.mrb[0].mxu0
    %v3699 = vadd.f32 0.0, %v3698
    %v3700 = vpop.f32.mrb[0].mxu0
    %v3701 = vpop.f32.mrb[0].mxu0
    %v3702 = vadd.f32 0.0, %v3701
    %v3703 = vpop.f32.mrb[0].mxu0
    %3704 = vmatprep.mubr.bf16.mxu0 0
    %3705 = vmatmul.mubr.bf16.gmra.mrb[0].mxu0 %v3630
    %v3706 = vpop.f32.mrb[0].mxu0
    %v3707 = vadd.f32 0.0, %v3706
    %v3708 = vpop.f32.mrb[0].mxu0
    %v3709 = vpop.f32.mrb[0].mxu0
    %v3710 = vadd.f32 0.0, %v3709
    %v3711 = vpop.f32.mrb[0].mxu0
    %3712 = vmatprep.mubr.bf16.mxu0 0
    %3713 = vmatmul.mubr.bf16.gmra.mrb[0].mxu0 %v3633
    %v3714 = vpop.f32.mrb[0].mxu0
    %v3715 = vadd.f32 0.0, %v3714
    %v3716 = vpop.f32.mrb[0].mxu0
    %v3717 = vpop.f32.mrb[0].mxu0
    %v3718 = vadd.f32 0.0, %v3717
    %v3719 = vpop.f32.mrb[0].mxu0
    %3720 = vmatprep.mubr.bf16.mxu0 0
    %3721 = vmatmul.mubr.bf16.gmra.mrb[0].mxu0 %v3636
    %v3722 = vpop.f32.mrb[0].mxu0
    %v3723 = vadd.f32 0.0, %v3722
    %v3724 = vpop.f32.mrb[0].mxu0
    %v3725 = vpop.f32.mrb[0].mxu0
    %v3726 = vadd.f32 0.0, %v3725
    %v3727 = vpop.f32.mrb[0].mxu0
    %3728 = vmatprep.mubr.bf16.mxu0 0
    %3729 = vmatmul.mubr.bf16.gmra.mrb[0].mxu0 %v3639
    %v3730 = vpop.f32.mrb[0].mxu0
    %v3731 = vadd.f32 0.0, %v3730
    %v3732 = vpop.f32.mrb[0].mxu0
    %v3733 = vpop.f32.mrb[0].mxu0
    %v3734 = vadd.f32 0.0, %v3733
    %v3735 = vpop.f32.mrb[0].mxu0
    %3736 = vmatprep.mubr.bf16.mxu0 0
    %3737 = vmatmul.mubr.bf16.gmra.mrb[0].mxu0 %v3642
    %v3738 = vpop.f32.mrb[0].mxu0
    %v3739 = vadd.f32 0.0, %v3738
    %v3740 = vpop.f32.mrb[0].mxu0
    %v3741 = vpop.f32.mrb[0].mxu0
    %v3742 = vpop.f32.mrb[0].mxu0
    %3743 = vdwg.mxu0
    %v3744 = vpack.i.b16 %v3029, %v3028
    %v3745 = vpack.i.b16 %v3031, %v3030
    %v3746 = vpack.i.b16 %v3033, %v3032
    %v3747 = vpack.i.b16 %v3035, %v3034
    %v3748 = vpack.i.b16 %v3037, %v3036
    %v3749 = vpack.i.b16 %v3039, %v3038
    %v3750 = vpack.i.b16 %v3041, %v3040
    %v3751 = vpack.i.b16 %v3043, %v3042
    %v3752 = vpack.i.b16 %v3045, %v3044
    %v3753 = vpack.i.b16 %v3047, %v3046
    %v3754 = vpack.i.b16 %v3049, %v3048
    %v3755 = vpack.i.b16 %v3051, %v3050
    %v3756 = vpack.i.b16 %v3053, %v3052
    %v3757 = vpack.i.b16 %v3055, %v3054
    %v3758 = vpack.i.b16 %v3057, %v3056
    %v3759 = vpack.i.b16 %v3059, %v3058
    %v3760 = vpack.i.b16 %v3061, %v3060
    %v3761 = vpack.i.b16 %v3063, %v3062
    %v3762 = vpack.i.b16 %v3065, %v3064
    %v3763 = vpack.i.b16 %v3067, %v3066
    %v3764 = vpack.i.b16 %v3069, %v3068
    %v3765 = vpack.i.b16 %v3071, %v3070
    %v3766 = vpack.i.b16 %v3073, %v3072
    %v3767 = vpack.i.b16 %v3075, %v3074
    %v3768 = vpack.i.b16 %v3077, %v3076
    %v3769 = vpack.i.b16 %v3079, %v3078
    %v3770 = vpack.i.b16 %v3081, %v3080
    %v3771 = vpack.i.b16 %v3083, %v3082
    %v3772 = vpack.i.b16 %v3085, %v3084
    %v3773 = vpack.i.b16 %v3087, %v3086
    %v3774 = vpack.i.b16 %v3089, %v3088
    %v3775 = vpack.i.b16 %v3091, %v3090
    %v3776 = vpack.i.b16 %v3093, %v3092
    %v3777 = vpack.i.b16 %v3095, %v3094
    %v3778 = vpack.i.b16 %v3097, %v3096
    %v3779 = vpack.i.b16 %v3099, %v3098
    %v3780 = vpack.i.b16 %v3101, %v3100
    %v3781 = vpack.i.b16 %v3103, %v3102
    %v3782 = vpack.i.b16 %v3105, %v3104
    %v3783 = vpack.i.b16 %v3107, %v3106
    %v3784 = vpack.i.b16 %v3109, %v3108
    %v3785 = vpack.i.b16 %v3111, %v3110
    %v3786 = vpack.i.b16 %v3113, %v3112
    %v3787 = vpack.i.b16 %v3115, %v3114
    %v3788 = vpack.i.b16 %v3117, %v3116
    %v3789 = vpack.i.b16 %v3119, %v3118
    %v3790 = vpack.i.b16 %v3121, %v3120
    %v3791 = vpack.i.b16 %v3123, %v3122
    %v3792 = vpack.i.b16 %v3125, %v3124
    %v3793 = vpack.i.b16 %v3127, %v3126
    %v3794 = vpack.i.b16 %v3129, %v3128
    %v3795 = vpack.i.b16 %v3131, %v3130
    %v3796 = vpack.i.b16 %v3133, %v3132
    %v3797 = vpack.i.b16 %v3135, %v3134
    %v3798 = vpack.i.b16 %v3137, %v3136
    %v3799 = vpack.i.b16 %v3139, %v3138
    %v3800 = vpack.i.b16 %v3141, %v3140
    %v3801 = vpack.i.b16 %v3143, %v3142
    %v3802 = vpack.i.b16 %v3145, %v3144
    %v3803 = vpack.i.b16 %v3147, %v3146
    %v3804 = vcombine.low %v3744, %v3745
    %v3805 = vcombine.low %v3746, %v3747
    %v3806 = vcombine.low %v3748, %v3749
    %v3807 = vcombine.low %v3750, %v3751
    %v3809 = vunpack.c.l.s4 1966171168
    %v3810 = vunpack.c.0.s8 %v3809
    %v3811 = vlaneseq
    %v3812 = vshrl.u32 %v3811, 7
    %v3813 = vsub.s32 %v3810, %v3812
    %v3814 = vrot.slane %v3804, %v3813
    %v3816 = vunpack.c.l.s4 1966171168
    %v3817 = vunpack.c.0.s8 %v3816
    %v3818 = vlaneseq
    %v3819 = vshrl.u32 %v3818, 7
    %v3820 = vsub.s32 %v3817, %v3819
    %v3821 = vrot.slane %v3805, %v3820
    %v3823 = vunpack.c.l.s4 1966171168
    %v3824 = vunpack.c.0.s8 %v3823
    %v3825 = vlaneseq
    %v3826 = vshrl.u32 %v3825, 7
    %v3827 = vsub.s32 %v3824, %v3826
    %v3828 = vrot.slane %v3806, %v3827
    %v3830 = vunpack.c.l.s4 1966171168
    %v3831 = vunpack.c.0.s8 %v3830
    %v3832 = vlaneseq
    %v3833 = vshrl.u32 %v3832, 7
    %v3834 = vsub.s32 %v3831, %v3833
    %v3835 = vrot.slane %v3807, %v3834
    %v3836 = vcombine.low %v3814, %v3821
    %v3837 = vcombine.low %v3828, %v3835
    %v3839 = vunpack.c.l.s4 1966171168
    %v3840 = vunpack.c.0.s8 %v3839
    %v3841 = vlaneseq
    %v3842 = vshrl.u32 %v3841, 7
    %v3843 = vsub.s32 %v3840, %v3842
    %v3844 = vrot.slane %v3836, %v3843
    %v3846 = vunpack.c.l.s4 1966171168
    %v3847 = vunpack.c.0.s8 %v3846
    %v3848 = vlaneseq
    %v3849 = vshrl.u32 %v3848, 7
    %v3850 = vsub.s32 %v3847, %v3849
    %v3851 = vrot.slane %v3837, %v3850
    %v3852 = vcombine.low %v3844, %v3851
    %v3853 = vcombine.low %v3752, %v3753
    %v3854 = vcombine.low %v3754, %v3755
    %v3855 = vcombine.low %v3756, %v3757
    %v3856 = vcombine.low %v3758, %v3759
    %v3858 = vunpack.c.l.s4 1966171168
    %v3859 = vunpack.c.0.s8 %v3858
    %v3860 = vlaneseq
    %v3861 = vshrl.u32 %v3860, 7
    %v3862 = vsub.s32 %v3859, %v3861
    %v3863 = vrot.slane %v3853, %v3862
    %v3865 = vunpack.c.l.s4 1966171168
    %v3866 = vunpack.c.0.s8 %v3865
    %v3867 = vlaneseq
    %v3868 = vshrl.u32 %v3867, 7
    %v3869 = vsub.s32 %v3866, %v3868
    %v3870 = vrot.slane %v3854, %v3869
    %v3872 = vunpack.c.l.s4 1966171168
    %v3873 = vunpack.c.0.s8 %v3872
    %v3874 = vlaneseq
    %v3875 = vshrl.u32 %v3874, 7
    %v3876 = vsub.s32 %v3873, %v3875
    %v3877 = vrot.slane %v3855, %v3876
    %v3879 = vunpack.c.l.s4 1966171168
    %v3880 = vunpack.c.0.s8 %v3879
    %v3881 = vlaneseq
    %v3882 = vshrl.u32 %v3881, 7
    %v3883 = vsub.s32 %v3880, %v3882
    %v3884 = vrot.slane %v3856, %v3883
    %v3885 = vcombine.low %v3863, %v3870
    %v3886 = vcombine.low %v3877, %v3884
    %v3888 = vunpack.c.l.s4 1966171168
    %v3889 = vunpack.c.0.s8 %v3888
    %v3890 = vlaneseq
    %v3891 = vshrl.u32 %v3890, 7
    %v3892 = vsub.s32 %v3889, %v3891
    %v3893 = vrot.slane %v3885, %v3892
    %v3895 = vunpack.c.l.s4 1966171168
    %v3896 = vunpack.c.0.s8 %v3895
    %v3897 = vlaneseq
    %v3898 = vshrl.u32 %v3897, 7
    %v3899 = vsub.s32 %v3896, %v3898
    %v3900 = vrot.slane %v3886, %v3899
    %v3901 = vcombine.low %v3893, %v3900
    %v3902 = vcombine.low %v3760, %v3761
    %v3903 = vcombine.low %v3762, %v3763
    %v3904 = vcombine.low %v3764, %v3765
    %v3905 = vcombine.low %v3766, %v3767
    %v3907 = vunpack.c.l.s4 1966171168
    %v3908 = vunpack.c.0.s8 %v3907
    %v3909 = vlaneseq
    %v3910 = vshrl.u32 %v3909, 7
    %v3911 = vsub.s32 %v3908, %v3910
    %v3912 = vrot.slane %v3902, %v3911
    %v3914 = vunpack.c.l.s4 1966171168
    %v3915 = vunpack.c.0.s8 %v3914
    %v3916 = vlaneseq
    %v3917 = vshrl.u32 %v3916, 7
    %v3918 = vsub.s32 %v3915, %v3917
    %v3919 = vrot.slane %v3903, %v3918
    %v3921 = vunpack.c.l.s4 1966171168
    %v3922 = vunpack.c.0.s8 %v3921
    %v3923 = vlaneseq
    %v3924 = vshrl.u32 %v3923, 7
    %v3925 = vsub.s32 %v3922, %v3924
    %v3926 = vrot.slane %v3904, %v3925
    %v3928 = vunpack.c.l.s4 1966171168
    %v3929 = vunpack.c.0.s8 %v3928
    %v3930 = vlaneseq
    %v3931 = vshrl.u32 %v3930, 7
    %v3932 = vsub.s32 %v3929, %v3931
    %v3933 = vrot.slane %v3905, %v3932
    %v3934 = vcombine.low %v3912, %v3919
    %v3935 = vcombine.low %v3926, %v3933
    %v3937 = vunpack.c.l.s4 1966171168
    %v3938 = vunpack.c.0.s8 %v3937
    %v3939 = vlaneseq
    %v3940 = vshrl.u32 %v3939, 7
    %v3941 = vsub.s32 %v3938, %v3940
    %v3942 = vrot.slane %v3934, %v3941
    %v3944 = vunpack.c.l.s4 1966171168
    %v3945 = vunpack.c.0.s8 %v3944
    %v3946 = vlaneseq
    %v3947 = vshrl.u32 %v3946, 7
    %v3948 = vsub.s32 %v3945, %v3947
    %v3949 = vrot.slane %v3935, %v3948
    %v3950 = vcombine.low %v3942, %v3949
    %v3951 = vcombine.low %v3768, %v3769
    %v3952 = vcombine.low %v3770, %v3771
    %v3953 = vcombine.low %v3772, %v3773
    %v3954 = vcombine.low %v3774, %v3775
    %v3956 = vunpack.c.l.s4 1966171168
    %v3957 = vunpack.c.0.s8 %v3956
    %v3958 = vlaneseq
    %v3959 = vshrl.u32 %v3958, 7
    %v3960 = vsub.s32 %v3957, %v3959
    %v3961 = vrot.slane %v3951, %v3960
    %v3963 = vunpack.c.l.s4 1966171168
    %v3964 = vunpack.c.0.s8 %v3963
    %v3965 = vlaneseq
    %v3966 = vshrl.u32 %v3965, 7
    %v3967 = vsub.s32 %v3964, %v3966
    %v3968 = vrot.slane %v3952, %v3967
    %v3970 = vunpack.c.l.s4 1966171168
    %v3971 = vunpack.c.0.s8 %v3970
    %v3972 = vlaneseq
    %v3973 = vshrl.u32 %v3972, 7
    %v3974 = vsub.s32 %v3971, %v3973
    %v3975 = vrot.slane %v3953, %v3974
    %v3977 = vunpack.c.l.s4 1966171168
    %v3978 = vunpack.c.0.s8 %v3977
    %v3979 = vlaneseq
    %v3980 = vshrl.u32 %v3979, 7
    %v3981 = vsub.s32 %v3978, %v3980
    %v3982 = vrot.slane %v3954, %v3981
    %v3983 = vcombine.low %v3961, %v3968
    %v3984 = vcombine.low %v3975, %v3982
    %v3986 = vunpack.c.l.s4 1966171168
    %v3987 = vunpack.c.0.s8 %v3986
    %v3988 = vlaneseq
    %v3989 = vshrl.u32 %v3988, 7
    %v3990 = vsub.s32 %v3987, %v3989
    %v3991 = vrot.slane %v3983, %v3990
    %v3993 = vunpack.c.l.s4 1966171168
    %v3994 = vunpack.c.0.s8 %v3993
    %v3995 = vlaneseq
    %v3996 = vshrl.u32 %v3995, 7
    %v3997 = vsub.s32 %v3994, %v3996
    %v3998 = vrot.slane %v3984, %v3997
    %v3999 = vcombine.low %v3991, %v3998
    %v4000 = vcombine.low %v3776, %v3777
    %v4001 = vcombine.low %v3778, %v3779
    %v4002 = vcombine.low %v3780, %v3781
    %v4003 = vcombine.low %v3782, %v3783
    %v4005 = vunpack.c.l.s4 1966171168
    %v4006 = vunpack.c.0.s8 %v4005
    %v4007 = vlaneseq
    %v4008 = vshrl.u32 %v4007, 7
    %v4009 = vsub.s32 %v4006, %v4008
    %v4010 = vrot.slane %v4000, %v4009
    %v4012 = vunpack.c.l.s4 1966171168
    %v4013 = vunpack.c.0.s8 %v4012
    %v4014 = vlaneseq
    %v4015 = vshrl.u32 %v4014, 7
    %v4016 = vsub.s32 %v4013, %v4015
    %v4017 = vrot.slane %v4001, %v4016
    %v4019 = vunpack.c.l.s4 1966171168
    %v4020 = vunpack.c.0.s8 %v4019
    %v4021 = vlaneseq
    %v4022 = vshrl.u32 %v4021, 7
    %v4023 = vsub.s32 %v4020, %v4022
    %v4024 = vrot.slane %v4002, %v4023
    %v4026 = vunpack.c.l.s4 1966171168
    %v4027 = vunpack.c.0.s8 %v4026
    %v4028 = vlaneseq
    %v4029 = vshrl.u32 %v4028, 7
    %v4030 = vsub.s32 %v4027, %v4029
    %v4031 = vrot.slane %v4003, %v4030
    %v4032 = vcombine.low %v4010, %v4017
    %v4033 = vcombine.low %v4024, %v4031
    %v4035 = vunpack.c.l.s4 1966171168
    %v4036 = vunpack.c.0.s8 %v4035
    %v4037 = vlaneseq
    %v4038 = vshrl.u32 %v4037, 7
    %v4039 = vsub.s32 %v4036, %v4038
    %v4040 = vrot.slane %v4032, %v4039
    %v4042 = vunpack.c.l.s4 1966171168
    %v4043 = vunpack.c.0.s8 %v4042
    %v4044 = vlaneseq
    %v4045 = vshrl.u32 %v4044, 7
    %v4046 = vsub.s32 %v4043, %v4045
    %v4047 = vrot.slane %v4033, %v4046
    %v4048 = vcombine.low %v4040, %v4047
    %v4049 = vcombine.low %v3784, %v3785
    %v4050 = vcombine.low %v3786, %v3787
    %v4051 = vcombine.low %v3788, %v3789
    %v4052 = vcombine.low %v3790, %v3791
    %v4054 = vunpack.c.l.s4 1966171168
    %v4055 = vunpack.c.0.s8 %v4054
    %v4056 = vlaneseq
    %v4057 = vshrl.u32 %v4056, 7
    %v4058 = vsub.s32 %v4055, %v4057
    %v4059 = vrot.slane %v4049, %v4058
    %v4061 = vunpack.c.l.s4 1966171168
    %v4062 = vunpack.c.0.s8 %v4061
    %v4063 = vlaneseq
    %v4064 = vshrl.u32 %v4063, 7
    %v4065 = vsub.s32 %v4062, %v4064
    %v4066 = vrot.slane %v4050, %v4065
    %v4068 = vunpack.c.l.s4 1966171168
    %v4069 = vunpack.c.0.s8 %v4068
    %v4070 = vlaneseq
    %v4071 = vshrl.u32 %v4070, 7
    %v4072 = vsub.s32 %v4069, %v4071
    %v4073 = vrot.slane %v4051, %v4072
    %v4075 = vunpack.c.l.s4 1966171168
    %v4076 = vunpack.c.0.s8 %v4075
    %v4077 = vlaneseq
    %v4078 = vshrl.u32 %v4077, 7
    %v4079 = vsub.s32 %v4076, %v4078
    %v4080 = vrot.slane %v4052, %v4079
    %v4081 = vcombine.low %v4059, %v4066
    %v4082 = vcombine.low %v4073, %v4080
    %v4084 = vunpack.c.l.s4 1966171168
    %v4085 = vunpack.c.0.s8 %v4084
    %v4086 = vlaneseq
    %v4087 = vshrl.u32 %v4086, 7
    %v4088 = vsub.s32 %v4085, %v4087
    %v4089 = vrot.slane %v4081, %v4088
    %v4091 = vunpack.c.l.s4 1966171168
    %v4092 = vunpack.c.0.s8 %v4091
    %v4093 = vlaneseq
    %v4094 = vshrl.u32 %v4093, 7
    %v4095 = vsub.s32 %v4092, %v4094
    %v4096 = vrot.slane %v4082, %v4095
    %v4097 = vcombine.low %v4089, %v4096
    %v4098 = vcombine.low %v3792, %v3793
    %v4099 = vcombine.low %v3794, %v3795
    %v4100 = vcombine.low %v3796, %v3797
    %v4101 = vcombine.low %v3798, %v3799
    %v4103 = vunpack.c.l.s4 1966171168
    %v4104 = vunpack.c.0.s8 %v4103
    %v4105 = vlaneseq
    %v4106 = vshrl.u32 %v4105, 7
    %v4107 = vsub.s32 %v4104, %v4106
    %v4108 = vrot.slane %v4098, %v4107
    %v4110 = vunpack.c.l.s4 1966171168
    %v4111 = vunpack.c.0.s8 %v4110
    %v4112 = vlaneseq
    %v4113 = vshrl.u32 %v4112, 7
    %v4114 = vsub.s32 %v4111, %v4113
    %v4115 = vrot.slane %v4099, %v4114
    %v4117 = vunpack.c.l.s4 1966171168
    %v4118 = vunpack.c.0.s8 %v4117
    %v4119 = vlaneseq
    %v4120 = vshrl.u32 %v4119, 7
    %v4121 = vsub.s32 %v4118, %v4120
    %v4122 = vrot.slane %v4100, %v4121
    %v4124 = vunpack.c.l.s4 1966171168
    %v4125 = vunpack.c.0.s8 %v4124
    %v4126 = vlaneseq
    %v4127 = vshrl.u32 %v4126, 7
    %v4128 = vsub.s32 %v4125, %v4127
    %v4129 = vrot.slane %v4101, %v4128
    %v4130 = vcombine.low %v4108, %v4115
    %v4131 = vcombine.low %v4122, %v4129
    %v4133 = vunpack.c.l.s4 1966171168
    %v4134 = vunpack.c.0.s8 %v4133
    %v4135 = vlaneseq
    %v4136 = vshrl.u32 %v4135, 7
    %v4137 = vsub.s32 %v4134, %v4136
    %v4138 = vrot.slane %v4130, %v4137
    %v4140 = vunpack.c.l.s4 1966171168
    %v4141 = vunpack.c.0.s8 %v4140
    %v4142 = vlaneseq
    %v4143 = vshrl.u32 %v4142, 7
    %v4144 = vsub.s32 %v4141, %v4143
    %v4145 = vrot.slane %v4131, %v4144
    %v4146 = vcombine.low %v4138, %v4145
    %v4147 = vcombine.low %v3800, %v3801
    %v4148 = vcombine.low %v3802, %v3803
    %v4150 = vunpack.c.l.s4 1966171168
    %v4151 = vunpack.c.0.s8 %v4150
    %v4152 = vlaneseq
    %v4153 = vshrl.u32 %v4152, 7
    %v4154 = vsub.s32 %v4151, %v4153
    %v4155 = vrot.slane %v4147, %v4154
    %v4157 = vunpack.c.l.s4 1966171168
    %v4158 = vunpack.c.0.s8 %v4157
    %v4159 = vlaneseq
    %v4160 = vshrl.u32 %v4159, 7
    %v4161 = vsub.s32 %v4158, %v4160
    %v4162 = vrot.slane %v4148, %v4161
    %v4163 = vcombine.low %v4155, %v4162
    %v4165 = vunpack.c.l.s4 1966171168
    %v4166 = vunpack.c.0.s8 %v4165
    %v4167 = vlaneseq
    %v4168 = vshrl.u32 %v4167, 7
    %v4169 = vsub.s32 %v4166, %v4168
    %v4170 = vrot.slane %v4163, %v4169
    %v4172 = vsel %vm3619, %v3852, 0
    %v4175 = vsel %vm3619, %v3901, 0
    %v4178 = vsel %vm3619, %v3950, 0
    %v4181 = vsel %vm3619, %v3999, 0
    %v4184 = vsel %vm3619, %v4048, 0
    %v4187 = vsel %vm3619, %v4097, 0
    %v4190 = vsel %vm3619, %v4146, 0
    %v4193 = vsel %vm3619, %v4170, 0
    %4195 = vmatprep.subr.bf16.mxu0 0
    %4196 = vmatpush1.bf16.msra.mxu0 %v3610
    %4197 = vmatprep.subr.bf16.mxu0 0
    %4198 = vmatpush1.bf16.msra.mxu0 %v3611
    %4199 = vmatprep.subr.bf16.mxu0 0
    %4200 = vmatpush1.bf16.msra.mxu0 %v3612
    %4201 = vmatprep.subr.bf16.mxu0 0
    %4202 = vmatpush1.bf16.msra.mxu0 %v3613
    %4203 = vmatprep.subr.bf16.mxu0 0
    %4204 = vmatpush1.bf16.msra.mxu0 %v3646
    %4205 = vmatprep.subr.bf16.mxu0 0
    %4206 = vmatpush1.bf16.msra.mxu0 0
    %4207 = vmatprep.subr.bf16.mxu0 0
    %4208 = vmatpush1.bf16.msra.mxu0 0
    %4209 = vmatprep.subr.bf16.mxu0 0
    %4210 = vmatpush1.bf16.msra.mxu0 0
    %4211 = vmatprep.subr.bf16.mxu0 0
    %4212 = vmatpush1.bf16.msra.mxu0 0
    %4213 = vmatprep.subr.bf16.mxu0 0
    %4214 = vmatpush1.bf16.msra.mxu0 0
    %4215 = vmatprep.subr.bf16.mxu0 0
    %4216 = vmatpush1.bf16.msra.mxu0 0
    %4217 = vmatprep.subr.bf16.mxu0 0
    %4218 = vmatpush1.bf16.msra.mxu0 0
    %4219 = vmatprep.subr.bf16.mxu0 0
    %4220 = vmatpush1.bf16.msra.mxu0 0
    %4221 = vmatprep.subr.bf16.mxu0 0
    %4222 = vmatpush1.bf16.msra.mxu0 0
    %4223 = vmatprep.subr.bf16.mxu0 0
    %4224 = vmatpush1.bf16.msra.mxu0 0
    %4225 = vmatprep.subr.bf16.mxu0 0
    %4226 = vmatpush1.bf16.msra.mxu0 0
    %4227 = vmatprep.mubr.bf16.mxu0 0
    %4228 = vmatmul.mubr.bf16.gmra.mrb[0].mxu0 %v4172
    %v4229 = vpop.f32.mrb[0].mxu0
    %v4230 = vadd.f32 %v3683, %v4229
    %v4231 = vpop.f32.mrb[0].mxu0
    %v4232 = vpop.f32.mrb[0].mxu0
    %v4233 = vadd.f32 %v3686, %v4232
    %v4234 = vpop.f32.mrb[0].mxu0
    %4235 = vmatprep.mubr.bf16.mxu0 0
    %4236 = vmatmul.mubr.bf16.gmra.mrb[0].mxu0 %v4175
    %v4237 = vpop.f32.mrb[0].mxu0
    %v4238 = vadd.f32 %v3691, %v4237
    %v4239 = vpop.f32.mrb[0].mxu0
    %v4240 = vpop.f32.mrb[0].mxu0
    %v4241 = vadd.f32 %v3694, %v4240
    %v4242 = vpop.f32.mrb[0].mxu0
    %4243 = vmatprep.mubr.bf16.mxu0 0
    %4244 = vmatmul.mubr.bf16.gmra.mrb[0].mxu0 %v4178
    %v4245 = vpop.f32.mrb[0].mxu0
    %v4246 = vadd.f32 %v3699, %v4245
    %v4247 = vpop.f32.mrb[0].mxu0
    %v4248 = vpop.f32.mrb[0].mxu0
    %v4249 = vadd.f32 %v3702, %v4248
    %v4250 = vpop.f32.mrb[0].mxu0
    %4251 = vmatprep.mubr.bf16.mxu0 0
    %4252 = vmatmul.mubr.bf16.gmra.mrb[0].mxu0 %v4181
    %v4253 = vpop.f32.mrb[0].mxu0
    %v4254 = vadd.f32 %v3707, %v4253
    %v4255 = vpop.f32.mrb[0].mxu0
    %v4256 = vpop.f32.mrb[0].mxu0
    %v4257 = vadd.f32 %v3710, %v4256
    %v4258 = vpop.f32.mrb[0].mxu0
    %4259 = vmatprep.mubr.bf16.mxu0 0
    %4260 = vmatmul.mubr.bf16.gmra.mrb[0].mxu0 %v4184
    %v4261 = vpop.f32.mrb[0].mxu0
    %v4262 = vadd.f32 %v3715, %v4261
    %v4263 = vpop.f32.mrb[0].mxu0
    %v4264 = vpop.f32.mrb[0].mxu0
    %v4265 = vadd.f32 %v3718, %v4264
    %v4266 = vpop.f32.mrb[0].mxu0
    %4267 = vmatprep.mubr.bf16.mxu0 0
    %4268 = vmatmul.mubr.bf16.gmra.mrb[0].mxu0 %v4187
    %v4269 = vpop.f32.mrb[0].mxu0
    %v4270 = vadd.f32 %v3723, %v4269
    %v4271 = vpop.f32.mrb[0].mxu0
    %v4272 = vpop.f32.mrb[0].mxu0
    %v4273 = vadd.f32 %v3726, %v4272
    %v4274 = vpop.f32.mrb[0].mxu0
    %4275 = vmatprep.mubr.bf16.mxu0 0
    %4276 = vmatmul.mubr.bf16.gmra.mrb[0].mxu0 %v4190
    %v4277 = vpop.f32.mrb[0].mxu0
    %v4278 = vadd.f32 %v3731, %v4277
    %v4279 = vpop.f32.mrb[0].mxu0
    %v4280 = vpop.f32.mrb[0].mxu0
    %v4281 = vadd.f32 %v3734, %v4280
    %v4282 = vpop.f32.mrb[0].mxu0
    %4283 = vmatprep.mubr.bf16.mxu0 0
    %4284 = vmatmul.mubr.bf16.gmra.mrb[0].mxu0 %v4193
    %v4285 = vpop.f32.mrb[0].mxu0
    %v4286 = vadd.f32 %v3739, %v4285
    %v4287 = vpop.f32.mrb[0].mxu0
    %v4288 = vpop.f32.mrb[0].mxu0
    %v4289 = vpop.f32.mrb[0].mxu0
    %4290 = vdwg.mxu0
    %v4292 = vunpack.c.l.s4 1966171168
    %v4293 = vunpack.c.0.s8 %v4292
    %v4294 = vlaneseq
    %v4295 = vshrl.u32 %v4294, 7
    %v4296 = vsub.s32 %v4293, %v4295
    %v4297 = vrot.slane %v2622, %v4296
    %v4299 = vunpack.c.l.s4 1966171168
    %v4300 = vunpack.c.0.s8 %v4299
    %v4301 = vlaneseq
    %v4302 = vshrl.u32 %v4301, 7
    %v4303 = vsub.s32 %v4300, %v4302
    %v4304 = vrot.slane %v4297, %v4303
    %v4306 = vunpack.c.l.s4 1966171168
    %v4307 = vunpack.c.0.s8 %v4306
    %v4308 = vlaneseq
    %v4309 = vshrl.u32 %v4308, 7
    %v4310 = vsub.s32 %v4307, %v4309
    %v4311 = vrot.slane %v2625, %v4310
    %v4313 = vunpack.c.l.s4 1966171168
    %v4314 = vunpack.c.0.s8 %v4313
    %v4315 = vlaneseq
    %v4316 = vshrl.u32 %v4315, 7
    %v4317 = vsub.s32 %v4314, %v4316
    %v4318 = vrot.slane %v4311, %v4317
    %v4320 = vunpack.c.l.s4 1966171168
    %v4321 = vunpack.c.0.s8 %v4320
    %v4322 = vlaneseq
    %v4323 = vshrl.u32 %v4322, 7
    %v4324 = vsub.s32 %v4321, %v4323
    %v4325 = vrot.slane %v2628, %v4324
    %v4327 = vunpack.c.l.s4 1966171168
    %v4328 = vunpack.c.0.s8 %v4327
    %v4329 = vlaneseq
    %v4330 = vshrl.u32 %v4329, 7
    %v4331 = vsub.s32 %v4328, %v4330
    %v4332 = vrot.slane %v4325, %v4331
    %v4334 = vunpack.c.l.s4 1966171168
    %v4335 = vunpack.c.0.s8 %v4334
    %v4336 = vlaneseq
    %v4337 = vshrl.u32 %v4336, 7
    %v4338 = vsub.s32 %v4335, %v4337
    %v4339 = vrot.slane %v2631, %v4338
    %v4341 = vunpack.c.l.s4 1966171168
    %v4342 = vunpack.c.0.s8 %v4341
    %v4343 = vlaneseq
    %v4344 = vshrl.u32 %v4343, 7
    %v4345 = vsub.s32 %v4342, %v4344
    %v4346 = vrot.slane %v4339, %v4345
    %v4348 = vunpack.c.l.s4 1966171168
    %v4349 = vunpack.c.0.s8 %v4348
    %v4350 = vlaneseq
    %v4351 = vshrl.u32 %v4350, 7
    %v4352 = vsub.s32 %v4349, %v4351
    %v4353 = vrot.slane %v2634, %v4352
    %v4355 = vunpack.c.l.s4 1966171168
    %v4356 = vunpack.c.0.s8 %v4355
    %v4357 = vlaneseq
    %v4358 = vshrl.u32 %v4357, 7
    %v4359 = vsub.s32 %v4356, %v4358
    %v4360 = vrot.slane %v4353, %v4359
    %v4362 = vunpack.c.l.s4 1966171168
    %v4363 = vunpack.c.0.s8 %v4362
    %v4364 = vlaneseq
    %v4365 = vshrl.u32 %v4364, 7
    %v4366 = vsub.s32 %v4363, %v4365
    %v4367 = vrot.slane %v2637, %v4366
    %v4369 = vunpack.c.l.s4 1966171168
    %v4370 = vunpack.c.0.s8 %v4369
    %v4371 = vlaneseq
    %v4372 = vshrl.u32 %v4371, 7
    %v4373 = vsub.s32 %v4370, %v4372
    %v4374 = vrot.slane %v4367, %v4373
    %v4376 = vunpack.c.l.s4 1966171168
    %v4377 = vunpack.c.0.s8 %v4376
    %v4378 = vlaneseq
    %v4379 = vshrl.u32 %v4378, 7
    %v4380 = vsub.s32 %v4377, %v4379
    %v4381 = vrot.slane %v2640, %v4380
    %v4383 = vunpack.c.l.s4 1966171168
    %v4384 = vunpack.c.0.s8 %v4383
    %v4385 = vlaneseq
    %v4386 = vshrl.u32 %v4385, 7
    %v4387 = vsub.s32 %v4384, %v4386
    %v4388 = vrot.slane %v4381, %v4387
    %v4390 = vunpack.c.l.s4 1966171168
    %v4391 = vunpack.c.0.s8 %v4390
    %v4392 = vlaneseq
    %v4393 = vshrl.u32 %v4392, 7
    %v4394 = vsub.s32 %v4391, %v4393
    %v4395 = vrot.slane %v2643, %v4394
    %v4397 = vunpack.c.l.s4 1966171168
    %v4398 = vunpack.c.0.s8 %v4397
    %v4399 = vlaneseq
    %v4400 = vshrl.u32 %v4399, 7
    %v4401 = vsub.s32 %v4398, %v4400
    %v4402 = vrot.slane %v4395, %v4401
    %v4403 = vunpack.i.l.s16 %v4304
    %v4404 = vunpack.i.l.s16 %v4318
    %v4405 = vunpack.i.l.s16 %v4332
    %v4406 = vunpack.i.l.s16 %v4346
    %v4407 = vunpack.i.l.s16 %v4360
    %v4408 = vunpack.i.l.s16 %v4374
    %v4409 = vunpack.i.l.s16 %v4388
    %v4410 = vunpack.i.l.s16 %v4402
    %s4411 = scalar_lea.vmem %s4, 36
    %v4412 = vld [vmem:[%s4411] sm:$0xf]
    %v4413 = vld [vmem:[%s4411 + $0x4] sm:$0xf]
    %v4414 = vld [vmem:[%s4411 + $0x8] sm:$0xf]
    %v4415 = vld [vmem:[%s4411 + $0xc] sm:$0xf]
    %v4416 = vld [vmem:[%s4411 + $0x10] sm:$0xf]
    %v4417 = vld [vmem:[%s4411 + $0x14] sm:$0xf]
    %v4418 = vld [vmem:[%s4411 + $0x18] sm:$0xf]
    %v4419 = vld [vmem:[%s4411 + $0x1c] sm:$0xf]
    %v4420 = vld [vmem:[%s4411 + $0x20] sm:$0xf]
    %v4421 = vpack.i.b16 %v3157, %v3042
    %v4422 = vpack.i.b16 %v3045, %v4403
    %v4423 = vpack.i.b16 %v4404, %v3158
    %v4424 = vpack.i.b16 %v3159, %v3072
    %v4425 = vpack.i.b16 %v3075, %v4405
    %v4426 = vpack.i.b16 %v4406, %v3160
    %v4427 = vpack.i.b16 %v3161, %v3102
    %v4428 = vpack.i.b16 %v3105, %v4407
    %v4429 = vpack.i.b16 %v4408, %v3162
    %v4430 = vpack.i.b16 %v3163, %v3132
    %v4431 = vpack.i.b16 %v3135, %v4409
    %v4432 = vpack.i.b16 %v4410, %v3164
    %v4433 = vcombine.low %v3745, %v3746
    %v4434 = vcombine.low %v3747, %v3748
    %v4435 = vcombine.low %v3749, %v3750
    %v4436 = vcombine.low %v4421, %v4422
    %v4438 = vunpack.c.l.s4 1966171168
    %v4439 = vunpack.c.0.s8 %v4438
    %v4440 = vlaneseq
    %v4441 = vshrl.u32 %v4440, 7
    %v4442 = vsub.s32 %v4439, %v4441
    %v4443 = vrot.slane %v4433, %v4442
    %v4445 = vunpack.c.l.s4 1966171168
    %v4446 = vunpack.c.0.s8 %v4445
    %v4447 = vlaneseq
    %v4448 = vshrl.u32 %v4447, 7
    %v4449 = vsub.s32 %v4446, %v4448
    %v4450 = vrot.slane %v4434, %v4449
    %v4452 = vunpack.c.l.s4 1966171168
    %v4453 = vunpack.c.0.s8 %v4452
    %v4454 = vlaneseq
    %v4455 = vshrl.u32 %v4454, 7
    %v4456 = vsub.s32 %v4453, %v4455
    %v4457 = vrot.slane %v4435, %v4456
    %v4459 = vunpack.c.l.s4 1966171168
    %v4460 = vunpack.c.0.s8 %v4459
    %v4461 = vlaneseq
    %v4462 = vshrl.u32 %v4461, 7
    %v4463 = vsub.s32 %v4460, %v4462
    %v4464 = vrot.slane %v4436, %v4463
    %v4465 = vcombine.low %v4443, %v4450
    %v4466 = vcombine.low %v4457, %v4464
    %v4468 = vunpack.c.l.s4 1966171168
    %v4469 = vunpack.c.0.s8 %v4468
    %v4470 = vlaneseq
    %v4471 = vshrl.u32 %v4470, 7
    %v4472 = vsub.s32 %v4469, %v4471
    %v4473 = vrot.slane %v4465, %v4472
    %v4475 = vunpack.c.l.s4 1966171168
    %v4476 = vunpack.c.0.s8 %v4475
    %v4477 = vlaneseq
    %v4478 = vshrl.u32 %v4477, 7
    %v4479 = vsub.s32 %v4476, %v4478
    %v4480 = vrot.slane %v4466, %v4479
    %v4481 = vcombine.low %v4473, %v4480
    %v4482 = vcombine.low %v3753, %v3754
    %v4483 = vcombine.low %v3755, %v3756
    %v4484 = vcombine.low %v3757, %v3758
    %v4485 = vcombine.low %v4423, %v3760
    %v4487 = vunpack.c.l.s4 1966171168
    %v4488 = vunpack.c.0.s8 %v4487
    %v4489 = vlaneseq
    %v4490 = vshrl.u32 %v4489, 7
    %v4491 = vsub.s32 %v4488, %v4490
    %v4492 = vrot.slane %v4482, %v4491
    %v4494 = vunpack.c.l.s4 1966171168
    %v4495 = vunpack.c.0.s8 %v4494
    %v4496 = vlaneseq
    %v4497 = vshrl.u32 %v4496, 7
    %v4498 = vsub.s32 %v4495, %v4497
    %v4499 = vrot.slane %v4483, %v4498
    %v4501 = vunpack.c.l.s4 1966171168
    %v4502 = vunpack.c.0.s8 %v4501
    %v4503 = vlaneseq
    %v4504 = vshrl.u32 %v4503, 7
    %v4505 = vsub.s32 %v4502, %v4504
    %v4506 = vrot.slane %v4484, %v4505
    %v4508 = vunpack.c.l.s4 1966171168
    %v4509 = vunpack.c.0.s8 %v4508
    %v4510 = vlaneseq
    %v4511 = vshrl.u32 %v4510, 7
    %v4512 = vsub.s32 %v4509, %v4511
    %v4513 = vrot.slane %v4485, %v4512
    %v4514 = vcombine.low %v4492, %v4499
    %v4515 = vcombine.low %v4506, %v4513
    %v4517 = vunpack.c.l.s4 1966171168
    %v4518 = vunpack.c.0.s8 %v4517
    %v4519 = vlaneseq
    %v4520 = vshrl.u32 %v4519, 7
    %v4521 = vsub.s32 %v4518, %v4520
    %v4522 = vrot.slane %v4514, %v4521
    %v4524 = vunpack.c.l.s4 1966171168
    %v4525 = vunpack.c.0.s8 %v4524
    %v4526 = vlaneseq
    %v4527 = vshrl.u32 %v4526, 7
    %v4528 = vsub.s32 %v4525, %v4527
    %v4529 = vrot.slane %v4515, %v4528
    %v4530 = vcombine.low %v4522, %v4529
    %v4531 = vcombine.low %v3761, %v3762
    %v4532 = vcombine.low %v3763, %v3764
    %v4533 = vcombine.low %v3765, %v4424
    %v4534 = vcombine.low %v4425, %v3768
    %v4536 = vunpack.c.l.s4 1966171168
    %v4537 = vunpack.c.0.s8 %v4536
    %v4538 = vlaneseq
    %v4539 = vshrl.u32 %v4538, 7
    %v4540 = vsub.s32 %v4537, %v4539
    %v4541 = vrot.slane %v4531, %v4540
    %v4543 = vunpack.c.l.s4 1966171168
    %v4544 = vunpack.c.0.s8 %v4543
    %v4545 = vlaneseq
    %v4546 = vshrl.u32 %v4545, 7
    %v4547 = vsub.s32 %v4544, %v4546
    %v4548 = vrot.slane %v4532, %v4547
    %v4550 = vunpack.c.l.s4 1966171168
    %v4551 = vunpack.c.0.s8 %v4550
    %v4552 = vlaneseq
    %v4553 = vshrl.u32 %v4552, 7
    %v4554 = vsub.s32 %v4551, %v4553
    %v4555 = vrot.slane %v4533, %v4554
    %v4557 = vunpack.c.l.s4 1966171168
    %v4558 = vunpack.c.0.s8 %v4557
    %v4559 = vlaneseq
    %v4560 = vshrl.u32 %v4559, 7
    %v4561 = vsub.s32 %v4558, %v4560
    %v4562 = vrot.slane %v4534, %v4561
    %v4563 = vcombine.low %v4541, %v4548
    %v4564 = vcombine.low %v4555, %v4562
    %v4566 = vunpack.c.l.s4 1966171168
    %v4567 = vunpack.c.0.s8 %v4566
    %v4568 = vlaneseq
    %v4569 = vshrl.u32 %v4568, 7
    %v4570 = vsub.s32 %v4567, %v4569
    %v4571 = vrot.slane %v4563, %v4570
    %v4573 = vunpack.c.l.s4 1966171168
    %v4574 = vunpack.c.0.s8 %v4573
    %v4575 = vlaneseq
    %v4576 = vshrl.u32 %v4575, 7
    %v4577 = vsub.s32 %v4574, %v4576
    %v4578 = vrot.slane %v4564, %v4577
    %v4579 = vcombine.low %v4571, %v4578
    %v4580 = vcombine.low %v3769, %v3770
    %v4581 = vcombine.low %v3771, %v3772
    %v4582 = vcombine.low %v3773, %v4426
    %v4583 = vcombine.low %v3775, %v3776
    %v4585 = vunpack.c.l.s4 1966171168
    %v4586 = vunpack.c.0.s8 %v4585
    %v4587 = vlaneseq
    %v4588 = vshrl.u32 %v4587, 7
    %v4589 = vsub.s32 %v4586, %v4588
    %v4590 = vrot.slane %v4580, %v4589
    %v4592 = vunpack.c.l.s4 1966171168
    %v4593 = vunpack.c.0.s8 %v4592
    %v4594 = vlaneseq
    %v4595 = vshrl.u32 %v4594, 7
    %v4596 = vsub.s32 %v4593, %v4595
    %v4597 = vrot.slane %v4581, %v4596
    %v4599 = vunpack.c.l.s4 1966171168
    %v4600 = vunpack.c.0.s8 %v4599
    %v4601 = vlaneseq
    %v4602 = vshrl.u32 %v4601, 7
    %v4603 = vsub.s32 %v4600, %v4602
    %v4604 = vrot.slane %v4582, %v4603
    %v4606 = vunpack.c.l.s4 1966171168
    %v4607 = vunpack.c.0.s8 %v4606
    %v4608 = vlaneseq
    %v4609 = vshrl.u32 %v4608, 7
    %v4610 = vsub.s32 %v4607, %v4609
    %v4611 = vrot.slane %v4583, %v4610
    %v4612 = vcombine.low %v4590, %v4597
    %v4613 = vcombine.low %v4604, %v4611
    %v4615 = vunpack.c.l.s4 1966171168
    %v4616 = vunpack.c.0.s8 %v4615
    %v4617 = vlaneseq
    %v4618 = vshrl.u32 %v4617, 7
    %v4619 = vsub.s32 %v4616, %v4618
    %v4620 = vrot.slane %v4612, %v4619
    %v4622 = vunpack.c.l.s4 1966171168
    %v4623 = vunpack.c.0.s8 %v4622
    %v4624 = vlaneseq
    %v4625 = vshrl.u32 %v4624, 7
    %v4626 = vsub.s32 %v4623, %v4625
    %v4627 = vrot.slane %v4613, %v4626
    %v4628 = vcombine.low %v4620, %v4627
    %v4629 = vcombine.low %v3777, %v3778
    %v4630 = vcombine.low %v3779, %v3780
    %v4631 = vcombine.low %v4427, %v4428
    %v4632 = vcombine.low %v3783, %v3784
    %v4634 = vunpack.c.l.s4 1966171168
    %v4635 = vunpack.c.0.s8 %v4634
    %v4636 = vlaneseq
    %v4637 = vshrl.u32 %v4636, 7
    %v4638 = vsub.s32 %v4635, %v4637
    %v4639 = vrot.slane %v4629, %v4638
    %v4641 = vunpack.c.l.s4 1966171168
    %v4642 = vunpack.c.0.s8 %v4641
    %v4643 = vlaneseq
    %v4644 = vshrl.u32 %v4643, 7
    %v4645 = vsub.s32 %v4642, %v4644
    %v4646 = vrot.slane %v4630, %v4645
    %v4648 = vunpack.c.l.s4 1966171168
    %v4649 = vunpack.c.0.s8 %v4648
    %v4650 = vlaneseq
    %v4651 = vshrl.u32 %v4650, 7
    %v4652 = vsub.s32 %v4649, %v4651
    %v4653 = vrot.slane %v4631, %v4652
    %v4655 = vunpack.c.l.s4 1966171168
    %v4656 = vunpack.c.0.s8 %v4655
    %v4657 = vlaneseq
    %v4658 = vshrl.u32 %v4657, 7
    %v4659 = vsub.s32 %v4656, %v4658
    %v4660 = vrot.slane %v4632, %v4659
    %v4661 = vcombine.low %v4639, %v4646
    %v4662 = vcombine.low %v4653, %v4660
    %v4664 = vunpack.c.l.s4 1966171168
    %v4665 = vunpack.c.0.s8 %v4664
    %v4666 = vlaneseq
    %v4667 = vshrl.u32 %v4666, 7
    %v4668 = vsub.s32 %v4665, %v4667
    %v4669 = vrot.slane %v4661, %v4668
    %v4671 = vunpack.c.l.s4 1966171168
    %v4672 = vunpack.c.0.s8 %v4671
    %v4673 = vlaneseq
    %v4674 = vshrl.u32 %v4673, 7
    %v4675 = vsub.s32 %v4672, %v4674
    %v4676 = vrot.slane %v4662, %v4675
    %v4677 = vcombine.low %v4669, %v4676
    %v4678 = vcombine.low %v3785, %v3786
    %v4679 = vcombine.low %v3787, %v3788
    %v4680 = vcombine.low %v4429, %v3790
    %v4681 = vcombine.low %v3791, %v3792
    %v4683 = vunpack.c.l.s4 1966171168
    %v4684 = vunpack.c.0.s8 %v4683
    %v4685 = vlaneseq
    %v4686 = vshrl.u32 %v4685, 7
    %v4687 = vsub.s32 %v4684, %v4686
    %v4688 = vrot.slane %v4678, %v4687
    %v4690 = vunpack.c.l.s4 1966171168
    %v4691 = vunpack.c.0.s8 %v4690
    %v4692 = vlaneseq
    %v4693 = vshrl.u32 %v4692, 7
    %v4694 = vsub.s32 %v4691, %v4693
    %v4695 = vrot.slane %v4679, %v4694
    %v4697 = vunpack.c.l.s4 1966171168
    %v4698 = vunpack.c.0.s8 %v4697
    %v4699 = vlaneseq
    %v4700 = vshrl.u32 %v4699, 7
    %v4701 = vsub.s32 %v4698, %v4700
    %v4702 = vrot.slane %v4680, %v4701
    %v4704 = vunpack.c.l.s4 1966171168
    %v4705 = vunpack.c.0.s8 %v4704
    %v4706 = vlaneseq
    %v4707 = vshrl.u32 %v4706, 7
    %v4708 = vsub.s32 %v4705, %v4707
    %v4709 = vrot.slane %v4681, %v4708
    %v4710 = vcombine.low %v4688, %v4695
    %v4711 = vcombine.low %v4702, %v4709
    %v4713 = vunpack.c.l.s4 1966171168
    %v4714 = vunpack.c.0.s8 %v4713
    %v4715 = vlaneseq
    %v4716 = vshrl.u32 %v4715, 7
    %v4717 = vsub.s32 %v4714, %v4716
    %v4718 = vrot.slane %v4710, %v4717
    %v4720 = vunpack.c.l.s4 1966171168
    %v4721 = vunpack.c.0.s8 %v4720
    %v4722 = vlaneseq
    %v4723 = vshrl.u32 %v4722, 7
    %v4724 = vsub.s32 %v4721, %v4723
    %v4725 = vrot.slane %v4711, %v4724
    %v4726 = vcombine.low %v4718, %v4725
    %v4727 = vcombine.low %v3793, %v3794
    %v4728 = vcombine.low %v3795, %v4430
    %v4729 = vcombine.low %v4431, %v3798
    %v4730 = vcombine.low %v3799, %v3800
    %v4732 = vunpack.c.l.s4 1966171168
    %v4733 = vunpack.c.0.s8 %v4732
    %v4734 = vlaneseq
    %v4735 = vshrl.u32 %v4734, 7
    %v4736 = vsub.s32 %v4733, %v4735
    %v4737 = vrot.slane %v4727, %v4736
    %v4739 = vunpack.c.l.s4 1966171168
    %v4740 = vunpack.c.0.s8 %v4739
    %v4741 = vlaneseq
    %v4742 = vshrl.u32 %v4741, 7
    %v4743 = vsub.s32 %v4740, %v4742
    %v4744 = vrot.slane %v4728, %v4743
    %v4746 = vunpack.c.l.s4 1966171168
    %v4747 = vunpack.c.0.s8 %v4746
    %v4748 = vlaneseq
    %v4749 = vshrl.u32 %v4748, 7
    %v4750 = vsub.s32 %v4747, %v4749
    %v4751 = vrot.slane %v4729, %v4750
    %v4753 = vunpack.c.l.s4 1966171168
    %v4754 = vunpack.c.0.s8 %v4753
    %v4755 = vlaneseq
    %v4756 = vshrl.u32 %v4755, 7
    %v4757 = vsub.s32 %v4754, %v4756
    %v4758 = vrot.slane %v4730, %v4757
    %v4759 = vcombine.low %v4737, %v4744
    %v4760 = vcombine.low %v4751, %v4758
    %v4762 = vunpack.c.l.s4 1966171168
    %v4763 = vunpack.c.0.s8 %v4762
    %v4764 = vlaneseq
    %v4765 = vshrl.u32 %v4764, 7
    %v4766 = vsub.s32 %v4763, %v4765
    %v4767 = vrot.slane %v4759, %v4766
    %v4769 = vunpack.c.l.s4 1966171168
    %v4770 = vunpack.c.0.s8 %v4769
    %v4771 = vlaneseq
    %v4772 = vshrl.u32 %v4771, 7
    %v4773 = vsub.s32 %v4770, %v4772
    %v4774 = vrot.slane %v4760, %v4773
    %v4775 = vcombine.low %v4767, %v4774
    %v4776 = vcombine.low %v3801, %v3802
    %v4777 = vcombine.low %v3803, %v4432
    %v4779 = vunpack.c.l.s4 1966171168
    %v4780 = vunpack.c.0.s8 %v4779
    %v4781 = vlaneseq
    %v4782 = vshrl.u32 %v4781, 7
    %v4783 = vsub.s32 %v4780, %v4782
    %v4784 = vrot.slane %v4776, %v4783
    %v4786 = vunpack.c.l.s4 1966171168
    %v4787 = vunpack.c.0.s8 %v4786
    %v4788 = vlaneseq
    %v4789 = vshrl.u32 %v4788, 7
    %v4790 = vsub.s32 %v4787, %v4789
    %v4791 = vrot.slane %v4777, %v4790
    %v4792 = vcombine.low %v4784, %v4791
    %v4794 = vunpack.c.l.s4 1966171168
    %v4795 = vunpack.c.0.s8 %v4794
    %v4796 = vlaneseq
    %v4797 = vshrl.u32 %v4796, 7
    %v4798 = vsub.s32 %v4795, %v4797
    %v4799 = vrot.slane %v4792, %v4798
    %v4809 = vunpack.c.l.b16 %v4412
    %v4810 = vunpack.c.l.b16 %v4413
    %v4811 = vunpack.c.l.b16 %v4414
    %v4812 = vunpack.c.l.b16 %v4415
    %v4813 = vunpack.c.l.b16 %v4416
    %v4814 = vunpack.c.l.b16 %v4417
    %v4815 = vunpack.c.l.b16 %v4418
    %v4816 = vunpack.c.l.b16 %v4419
    %v4817 = vunpack.c.l.b16 %v4420
    %v4818 = vpack.c.b16 %v4810, %v4809
    %v4819 = vpack.c.b16 %v4812, %v4811
    %v4820 = vpack.c.b16 %v4814, %v4813
    %v4821 = vpack.c.b16 %v4816, %v4815
    %v4822 = vpack.c.b16 %v4817, %v4817
    %v4828 = vsel %vm3619, %v4481, 0
    %v4831 = vsel %vm3619, %v4530, 0
    %v4834 = vsel %vm3619, %v4579, 0
    %v4837 = vsel %vm3619, %v4628, 0
    %v4840 = vsel %vm3619, %v4677, 0
    %v4843 = vsel %vm3619, %v4726, 0
    %v4846 = vsel %vm3619, %v4775, 0
    %v4849 = vsel %vm3619, %v4799, 0
    %v4852 = vsel %vm3644, %v4822, 0
    %4854 = vmatprep.subr.bf16.mxu0 0
    %4855 = vmatpush1.bf16.msra.mxu0 %v4818
    %4856 = vmatprep.subr.bf16.mxu0 0
    %4857 = vmatpush1.bf16.msra.mxu0 %v4819
    %4858 = vmatprep.subr.bf16.mxu0 0
    %4859 = vmatpush1.bf16.msra.mxu0 %v4820
    %4860 = vmatprep.subr.bf16.mxu0 0
    %4861 = vmatpush1.bf16.msra.mxu0 %v4821
    %4862 = vmatprep.subr.bf16.mxu0 0
    %4863 = vmatpush1.bf16.msra.mxu0 %v4852
    %4864 = vmatprep.subr.bf16.mxu0 0
    %4865 = vmatpush1.bf16.msra.mxu0 0
    %4866 = vmatprep.subr.bf16.mxu0 0
    %4867 = vmatpush1.bf16.msra.mxu0 0
    %4868 = vmatprep.subr.bf16.mxu0 0
    %4869 = vmatpush1.bf16.msra.mxu0 0
    %4870 = vmatprep.subr.bf16.mxu0 0
    %4871 = vmatpush1.bf16.msra.mxu0 0
    %4872 = vmatprep.subr.bf16.mxu0 0
    %4873 = vmatpush1.bf16.msra.mxu0 0
    %4874 = vmatprep.subr.bf16.mxu0 0
    %4875 = vmatpush1.bf16.msra.mxu0 0
    %4876 = vmatprep.subr.bf16.mxu0 0
    %4877 = vmatpush1.bf16.msra.mxu0 0
    %4878 = vmatprep.subr.bf16.mxu0 0
    %4879 = vmatpush1.bf16.msra.mxu0 0
    %4880 = vmatprep.subr.bf16.mxu0 0
    %4881 = vmatpush1.bf16.msra.mxu0 0
    %4882 = vmatprep.subr.bf16.mxu0 0
    %4883 = vmatpush1.bf16.msra.mxu0 0
    %4884 = vmatprep.subr.bf16.mxu0 0
    %4885 = vmatpush1.bf16.msra.mxu0 0
    %4886 = vmatprep.mubr.bf16.mxu0 0
    %4887 = vmatmul.mubr.bf16.gmra.mrb[0].mxu0 %v4828
    %v4888 = vpop.f32.mrb[0].mxu0
    %v4889 = vadd.f32 0.0, %v4888
    %v4890 = vpop.f32.mrb[0].mxu0
    %v4891 = vpop.f32.mrb[0].mxu0
    %v4892 = vadd.f32 0.0, %v4891
    %v4893 = vpop.f32.mrb[0].mxu0
    %4894 = vmatprep.mubr.bf16.mxu0 0
    %4895 = vmatmul.mubr.bf16.gmra.mrb[0].mxu0 %v4831
    %v4896 = vpop.f32.mrb[0].mxu0
    %v4897 = vadd.f32 0.0, %v4896
    %v4898 = vpop.f32.mrb[0].mxu0
    %v4899 = vpop.f32.mrb[0].mxu0
    %v4900 = vadd.f32 0.0, %v4899
    %v4901 = vpop.f32.mrb[0].mxu0
    %4902 = vmatprep.mubr.bf16.mxu0 0
    %4903 = vmatmul.mubr.bf16.gmra.mrb[0].mxu0 %v4834
    %v4904 = vpop.f32.mrb[0].mxu0
    %v4905 = vadd.f32 0.0, %v4904
    %v4906 = vpop.f32.mrb[0].mxu0
    %v4907 = vpop.f32.mrb[0].mxu0
    %v4908 = vadd.f32 0.0, %v4907
    %v4909 = vpop.f32.mrb[0].mxu0
    %4910 = vmatprep.mubr.bf16.mxu0 0
    %4911 = vmatmul.mubr.bf16.gmra.mrb[0].mxu0 %v4837
    %v4912 = vpop.f32.mrb[0].mxu0
    %v4913 = vadd.f32 0.0, %v4912
    %v4914 = vpop.f32.mrb[0].mxu0
    %v4915 = vpop.f32.mrb[0].mxu0
    %v4916 = vadd.f32 0.0, %v4915
    %v4917 = vpop.f32.mrb[0].mxu0
    %4918 = vmatprep.mubr.bf16.mxu0 0
    %4919 = vmatmul.mubr.bf16.gmra.mrb[0].mxu0 %v4840
    %v4920 = vpop.f32.mrb[0].mxu0
    %v4921 = vadd.f32 0.0, %v4920
    %v4922 = vpop.f32.mrb[0].mxu0
    %v4923 = vpop.f32.mrb[0].mxu0
    %v4924 = vadd.f32 0.0, %v4923
    %v4925 = vpop.f32.mrb[0].mxu0
    %4926 = vmatprep.mubr.bf16.mxu0 0
    %4927 = vmatmul.mubr.bf16.gmra.mrb[0].mxu0 %v4843
    %v4928 = vpop.f32.mrb[0].mxu0
    %v4929 = vadd.f32 0.0, %v4928
    %v4930 = vpop.f32.mrb[0].mxu0
    %v4931 = vpop.f32.mrb[0].mxu0
    %v4932 = vadd.f32 0.0, %v4931
    %v4933 = vpop.f32.mrb[0].mxu0
    %4934 = vmatprep.mubr.bf16.mxu0 0
    %4935 = vmatmul.mubr.bf16.gmra.mrb[0].mxu0 %v4846
    %v4936 = vpop.f32.mrb[0].mxu0
    %v4937 = vadd.f32 0.0, %v4936
    %v4938 = vpop.f32.mrb[0].mxu0
    %v4939 = vpop.f32.mrb[0].mxu0
    %v4940 = vadd.f32 0.0, %v4939
    %v4941 = vpop.f32.mrb[0].mxu0
    %4942 = vmatprep.mubr.bf16.mxu0 0
    %4943 = vmatmul.mubr.bf16.gmra.mrb[0].mxu0 %v4849
    %v4944 = vpop.f32.mrb[0].mxu0
    %v4945 = vadd.f32 0.0, %v4944
    %v4946 = vpop.f32.mrb[0].mxu0
    %v4947 = vpop.f32.mrb[0].mxu0
    %v4948 = vpop.f32.mrb[0].mxu0
    %4949 = vdwg.mxu0
    %v4950 = vadd.f32 %v4230, %v4889
    %v4951 = vadd.f32 %v4233, %v4892
    %v4952 = vadd.f32 %v4238, %v4897
    %v4953 = vadd.f32 %v4241, %v4900
    %v4954 = vadd.f32 %v4246, %v4905
    %v4955 = vadd.f32 %v4249, %v4908
    %v4956 = vadd.f32 %v4254, %v4913
    %v4957 = vadd.f32 %v4257, %v4916
    %v4958 = vadd.f32 %v4262, %v4921
    %v4959 = vadd.f32 %v4265, %v4924
    %v4960 = vadd.f32 %v4270, %v4929
    %v4961 = vadd.f32 %v4273, %v4932
    %v4962 = vadd.f32 %v4278, %v4937
    %v4963 = vadd.f32 %v4281, %v4940
    %v4964 = vadd.f32 %v4286, %v4945
    %v4965 = vunpack.i.h.s16 %v4304
    %v4966 = vunpack.i.h.s16 %v4318
    %v4967 = vunpack.i.h.s16 %v4332
    %v4968 = vunpack.i.h.s16 %v4346
    %v4969 = vunpack.i.h.s16 %v4360
    %v4970 = vunpack.i.h.s16 %v4374
    %v4971 = vunpack.i.h.s16 %v4388
    %v4972 = vunpack.i.h.s16 %v4402
    %v4973 = vpack.i.b16 %v4403, %v3157
    %v4974 = vpack.i.b16 %v3046, %v4965
    %v4975 = vpack.i.b16 %v4966, %v4404
    %v4976 = vpack.i.b16 %v4405, %v3159
    %v4977 = vpack.i.b16 %v3076, %v4967
    %v4978 = vpack.i.b16 %v4968, %v4406
    %v4979 = vpack.i.b16 %v4407, %v3161
    %v4980 = vpack.i.b16 %v3106, %v4969
    %v4981 = vpack.i.b16 %v4970, %v4408
    %v4982 = vpack.i.b16 %v4409, %v3163
    %v4983 = vpack.i.b16 %v3136, %v4971
    %v4984 = vpack.i.b16 %v4972, %v4410
    %v4985 = vcombine.low %v3166, %v3167
    %v4986 = vcombine.low %v3168, %v3169
    %v4987 = vcombine.low %v3170, %v3171
    %v4988 = vcombine.low %v4973, %v4974
    %v4990 = vunpack.c.l.s4 1966171168
    %v4991 = vunpack.c.0.s8 %v4990
    %v4992 = vlaneseq
    %v4993 = vshrl.u32 %v4992, 7
    %v4994 = vsub.s32 %v4991, %v4993
    %v4995 = vrot.slane %v4985, %v4994
    %v4997 = vunpack.c.l.s4 1966171168
    %v4998 = vunpack.c.0.s8 %v4997
    %v4999 = vlaneseq
    %v5000 = vshrl.u32 %v4999, 7
    %v5001 = vsub.s32 %v4998, %v5000
    %v5002 = vrot.slane %v4986, %v5001
    %v5004 = vunpack.c.l.s4 1966171168
    %v5005 = vunpack.c.0.s8 %v5004
    %v5006 = vlaneseq
    %v5007 = vshrl.u32 %v5006, 7
    %v5008 = vsub.s32 %v5005, %v5007
    %v5009 = vrot.slane %v4987, %v5008
    %v5011 = vunpack.c.l.s4 1966171168
    %v5012 = vunpack.c.0.s8 %v5011
    %v5013 = vlaneseq
    %v5014 = vshrl.u32 %v5013, 7
    %v5015 = vsub.s32 %v5012, %v5014
    %v5016 = vrot.slane %v4988, %v5015
    %v5017 = vcombine.low %v4995, %v5002
    %v5018 = vcombine.low %v5009, %v5016
    %v5020 = vunpack.c.l.s4 1966171168
    %v5021 = vunpack.c.0.s8 %v5020
    %v5022 = vlaneseq
    %v5023 = vshrl.u32 %v5022, 7
    %v5024 = vsub.s32 %v5021, %v5023
    %v5025 = vrot.slane %v5017, %v5024
    %v5027 = vunpack.c.l.s4 1966171168
    %v5028 = vunpack.c.0.s8 %v5027
    %v5029 = vlaneseq
    %v5030 = vshrl.u32 %v5029, 7
    %v5031 = vsub.s32 %v5028, %v5030
    %v5032 = vrot.slane %v5018, %v5031
    %v5033 = vcombine.low %v5025, %v5032
    %v5034 = vcombine.low %v3174, %v3175
    %v5035 = vcombine.low %v3176, %v3177
    %v5036 = vcombine.low %v3178, %v3179
    %v5037 = vcombine.low %v4975, %v3181
    %v5039 = vunpack.c.l.s4 1966171168
    %v5040 = vunpack.c.0.s8 %v5039
    %v5041 = vlaneseq
    %v5042 = vshrl.u32 %v5041, 7
    %v5043 = vsub.s32 %v5040, %v5042
    %v5044 = vrot.slane %v5034, %v5043
    %v5046 = vunpack.c.l.s4 1966171168
    %v5047 = vunpack.c.0.s8 %v5046
    %v5048 = vlaneseq
    %v5049 = vshrl.u32 %v5048, 7
    %v5050 = vsub.s32 %v5047, %v5049
    %v5051 = vrot.slane %v5035, %v5050
    %v5053 = vunpack.c.l.s4 1966171168
    %v5054 = vunpack.c.0.s8 %v5053
    %v5055 = vlaneseq
    %v5056 = vshrl.u32 %v5055, 7
    %v5057 = vsub.s32 %v5054, %v5056
    %v5058 = vrot.slane %v5036, %v5057
    %v5060 = vunpack.c.l.s4 1966171168
    %v5061 = vunpack.c.0.s8 %v5060
    %v5062 = vlaneseq
    %v5063 = vshrl.u32 %v5062, 7
    %v5064 = vsub.s32 %v5061, %v5063
    %v5065 = vrot.slane %v5037, %v5064
    %v5066 = vcombine.low %v5044, %v5051
    %v5067 = vcombine.low %v5058, %v5065
    %v5069 = vunpack.c.l.s4 1966171168
    %v5070 = vunpack.c.0.s8 %v5069
    %v5071 = vlaneseq
    %v5072 = vshrl.u32 %v5071, 7
    %v5073 = vsub.s32 %v5070, %v5072
    %v5074 = vrot.slane %v5066, %v5073
    %v5076 = vunpack.c.l.s4 1966171168
    %v5077 = vunpack.c.0.s8 %v5076
    %v5078 = vlaneseq
    %v5079 = vshrl.u32 %v5078, 7
    %v5080 = vsub.s32 %v5077, %v5079
    %v5081 = vrot.slane %v5067, %v5080
    %v5082 = vcombine.low %v5074, %v5081
    %v5083 = vcombine.low %v3182, %v3183
    %v5084 = vcombine.low %v3184, %v3185
    %v5085 = vcombine.low %v3186, %v4976
    %v5086 = vcombine.low %v4977, %v3189
    %v5088 = vunpack.c.l.s4 1966171168
    %v5089 = vunpack.c.0.s8 %v5088
    %v5090 = vlaneseq
    %v5091 = vshrl.u32 %v5090, 7
    %v5092 = vsub.s32 %v5089, %v5091
    %v5093 = vrot.slane %v5083, %v5092
    %v5095 = vunpack.c.l.s4 1966171168
    %v5096 = vunpack.c.0.s8 %v5095
    %v5097 = vlaneseq
    %v5098 = vshrl.u32 %v5097, 7
    %v5099 = vsub.s32 %v5096, %v5098
    %v5100 = vrot.slane %v5084, %v5099
    %v5102 = vunpack.c.l.s4 1966171168
    %v5103 = vunpack.c.0.s8 %v5102
    %v5104 = vlaneseq
    %v5105 = vshrl.u32 %v5104, 7
    %v5106 = vsub.s32 %v5103, %v5105
    %v5107 = vrot.slane %v5085, %v5106
    %v5109 = vunpack.c.l.s4 1966171168
    %v5110 = vunpack.c.0.s8 %v5109
    %v5111 = vlaneseq
    %v5112 = vshrl.u32 %v5111, 7
    %v5113 = vsub.s32 %v5110, %v5112
    %v5114 = vrot.slane %v5086, %v5113
    %v5115 = vcombine.low %v5093, %v5100
    %v5116 = vcombine.low %v5107, %v5114
    %v5118 = vunpack.c.l.s4 1966171168
    %v5119 = vunpack.c.0.s8 %v5118
    %v5120 = vlaneseq
    %v5121 = vshrl.u32 %v5120, 7
    %v5122 = vsub.s32 %v5119, %v5121
    %v5123 = vrot.slane %v5115, %v5122
    %v5125 = vunpack.c.l.s4 1966171168
    %v5126 = vunpack.c.0.s8 %v5125
    %v5127 = vlaneseq
    %v5128 = vshrl.u32 %v5127, 7
    %v5129 = vsub.s32 %v5126, %v5128
    %v5130 = vrot.slane %v5116, %v5129
    %v5131 = vcombine.low %v5123, %v5130
    %v5132 = vcombine.low %v3190, %v3191
    %v5133 = vcombine.low %v3192, %v3193
    %v5134 = vcombine.low %v3194, %v4978
    %v5135 = vcombine.low %v3196, %v3197
    %v5137 = vunpack.c.l.s4 1966171168
    %v5138 = vunpack.c.0.s8 %v5137
    %v5139 = vlaneseq
    %v5140 = vshrl.u32 %v5139, 7
    %v5141 = vsub.s32 %v5138, %v5140
    %v5142 = vrot.slane %v5132, %v5141
    %v5144 = vunpack.c.l.s4 1966171168
    %v5145 = vunpack.c.0.s8 %v5144
    %v5146 = vlaneseq
    %v5147 = vshrl.u32 %v5146, 7
    %v5148 = vsub.s32 %v5145, %v5147
    %v5149 = vrot.slane %v5133, %v5148
    %v5151 = vunpack.c.l.s4 1966171168
    %v5152 = vunpack.c.0.s8 %v5151
    %v5153 = vlaneseq
    %v5154 = vshrl.u32 %v5153, 7
    %v5155 = vsub.s32 %v5152, %v5154
    %v5156 = vrot.slane %v5134, %v5155
    %v5158 = vunpack.c.l.s4 1966171168
    %v5159 = vunpack.c.0.s8 %v5158
    %v5160 = vlaneseq
    %v5161 = vshrl.u32 %v5160, 7
    %v5162 = vsub.s32 %v5159, %v5161
    %v5163 = vrot.slane %v5135, %v5162
    %v5164 = vcombine.low %v5142, %v5149
    %v5165 = vcombine.low %v5156, %v5163
    %v5167 = vunpack.c.l.s4 1966171168
    %v5168 = vunpack.c.0.s8 %v5167
    %v5169 = vlaneseq
    %v5170 = vshrl.u32 %v5169, 7
    %v5171 = vsub.s32 %v5168, %v5170
    %v5172 = vrot.slane %v5164, %v5171
    %v5174 = vunpack.c.l.s4 1966171168
    %v5175 = vunpack.c.0.s8 %v5174
    %v5176 = vlaneseq
    %v5177 = vshrl.u32 %v5176, 7
    %v5178 = vsub.s32 %v5175, %v5177
    %v5179 = vrot.slane %v5165, %v5178
    %v5180 = vcombine.low %v5172, %v5179
    %v5181 = vcombine.low %v3198, %v3199
    %v5182 = vcombine.low %v3200, %v3201
    %v5183 = vcombine.low %v4979, %v4980
    %v5184 = vcombine.low %v3204, %v3205
    %v5186 = vunpack.c.l.s4 1966171168
    %v5187 = vunpack.c.0.s8 %v5186
    %v5188 = vlaneseq
    %v5189 = vshrl.u32 %v5188, 7
    %v5190 = vsub.s32 %v5187, %v5189
    %v5191 = vrot.slane %v5181, %v5190
    %v5193 = vunpack.c.l.s4 1966171168
    %v5194 = vunpack.c.0.s8 %v5193
    %v5195 = vlaneseq
    %v5196 = vshrl.u32 %v5195, 7
    %v5197 = vsub.s32 %v5194, %v5196
    %v5198 = vrot.slane %v5182, %v5197
    %v5200 = vunpack.c.l.s4 1966171168
    %v5201 = vunpack.c.0.s8 %v5200
    %v5202 = vlaneseq
    %v5203 = vshrl.u32 %v5202, 7
    %v5204 = vsub.s32 %v5201, %v5203
    %v5205 = vrot.slane %v5183, %v5204
    %v5207 = vunpack.c.l.s4 1966171168
    %v5208 = vunpack.c.0.s8 %v5207
    %v5209 = vlaneseq
    %v5210 = vshrl.u32 %v5209, 7
    %v5211 = vsub.s32 %v5208, %v5210
    %v5212 = vrot.slane %v5184, %v5211
    %v5213 = vcombine.low %v5191, %v5198
    %v5214 = vcombine.low %v5205, %v5212
    %v5216 = vunpack.c.l.s4 1966171168
    %v5217 = vunpack.c.0.s8 %v5216
    %v5218 = vlaneseq
    %v5219 = vshrl.u32 %v5218, 7
    %v5220 = vsub.s32 %v5217, %v5219
    %v5221 = vrot.slane %v5213, %v5220
    %v5223 = vunpack.c.l.s4 1966171168
    %v5224 = vunpack.c.0.s8 %v5223
    %v5225 = vlaneseq
    %v5226 = vshrl.u32 %v5225, 7
    %v5227 = vsub.s32 %v5224, %v5226
    %v5228 = vrot.slane %v5214, %v5227
    %v5229 = vcombine.low %v5221, %v5228
    %v5230 = vcombine.low %v3206, %v3207
    %v5231 = vcombine.low %v3208, %v3209
    %v5232 = vcombine.low %v4981, %v3211
    %v5233 = vcombine.low %v3212, %v3213
    %v5235 = vunpack.c.l.s4 1966171168
    %v5236 = vunpack.c.0.s8 %v5235
    %v5237 = vlaneseq
    %v5238 = vshrl.u32 %v5237, 7
    %v5239 = vsub.s32 %v5236, %v5238
    %v5240 = vrot.slane %v5230, %v5239
    %v5242 = vunpack.c.l.s4 1966171168
    %v5243 = vunpack.c.0.s8 %v5242
    %v5244 = vlaneseq
    %v5245 = vshrl.u32 %v5244, 7
    %v5246 = vsub.s32 %v5243, %v5245
    %v5247 = vrot.slane %v5231, %v5246
    %v5249 = vunpack.c.l.s4 1966171168
    %v5250 = vunpack.c.0.s8 %v5249
    %v5251 = vlaneseq
    %v5252 = vshrl.u32 %v5251, 7
    %v5253 = vsub.s32 %v5250, %v5252
    %v5254 = vrot.slane %v5232, %v5253
    %v5256 = vunpack.c.l.s4 1966171168
    %v5257 = vunpack.c.0.s8 %v5256
    %v5258 = vlaneseq
    %v5259 = vshrl.u32 %v5258, 7
    %v5260 = vsub.s32 %v5257, %v5259
    %v5261 = vrot.slane %v5233, %v5260
    %v5262 = vcombine.low %v5240, %v5247
    %v5263 = vcombine.low %v5254, %v5261
    %v5265 = vunpack.c.l.s4 1966171168
    %v5266 = vunpack.c.0.s8 %v5265
    %v5267 = vlaneseq
    %v5268 = vshrl.u32 %v5267, 7
    %v5269 = vsub.s32 %v5266, %v5268
    %v5270 = vrot.slane %v5262, %v5269
    %v5272 = vunpack.c.l.s4 1966171168
    %v5273 = vunpack.c.0.s8 %v5272
    %v5274 = vlaneseq
    %v5275 = vshrl.u32 %v5274, 7
    %v5276 = vsub.s32 %v5273, %v5275
    %v5277 = vrot.slane %v5263, %v5276
    %v5278 = vcombine.low %v5270, %v5277
    %v5279 = vcombine.low %v3214, %v3215
    %v5280 = vcombine.low %v3216, %v4982
    %v5281 = vcombine.low %v4983, %v3219
    %v5282 = vcombine.low %v3220, %v3221
    %v5284 = vunpack.c.l.s4 1966171168
    %v5285 = vunpack.c.0.s8 %v5284
    %v5286 = vlaneseq
    %v5287 = vshrl.u32 %v5286, 7
    %v5288 = vsub.s32 %v5285, %v5287
    %v5289 = vrot.slane %v5279, %v5288
    %v5291 = vunpack.c.l.s4 1966171168
    %v5292 = vunpack.c.0.s8 %v5291
    %v5293 = vlaneseq
    %v5294 = vshrl.u32 %v5293, 7
    %v5295 = vsub.s32 %v5292, %v5294
    %v5296 = vrot.slane %v5280, %v5295
    %v5298 = vunpack.c.l.s4 1966171168
    %v5299 = vunpack.c.0.s8 %v5298
    %v5300 = vlaneseq
    %v5301 = vshrl.u32 %v5300, 7
    %v5302 = vsub.s32 %v5299, %v5301
    %v5303 = vrot.slane %v5281, %v5302
    %v5305 = vunpack.c.l.s4 1966171168
    %v5306 = vunpack.c.0.s8 %v5305
    %v5307 = vlaneseq
    %v5308 = vshrl.u32 %v5307, 7
    %v5309 = vsub.s32 %v5306, %v5308
    %v5310 = vrot.slane %v5282, %v5309
    %v5311 = vcombine.low %v5289, %v5296
    %v5312 = vcombine.low %v5303, %v5310
    %v5314 = vunpack.c.l.s4 1966171168
    %v5315 = vunpack.c.0.s8 %v5314
    %v5316 = vlaneseq
    %v5317 = vshrl.u32 %v5316, 7
    %v5318 = vsub.s32 %v5315, %v5317
    %v5319 = vrot.slane %v5311, %v5318
    %v5321 = vunpack.c.l.s4 1966171168
    %v5322 = vunpack.c.0.s8 %v5321
    %v5323 = vlaneseq
    %v5324 = vshrl.u32 %v5323, 7
    %v5325 = vsub.s32 %v5322, %v5324
    %v5326 = vrot.slane %v5312, %v5325
    %v5327 = vcombine.low %v5319, %v5326
    %v5328 = vcombine.low %v3222, %v3223
    %v5329 = vcombine.low %v3224, %v4984
    %v5331 = vunpack.c.l.s4 1966171168
    %v5332 = vunpack.c.0.s8 %v5331
    %v5333 = vlaneseq
    %v5334 = vshrl.u32 %v5333, 7
    %v5335 = vsub.s32 %v5332, %v5334
    %v5336 = vrot.slane %v5328, %v5335
    %v5338 = vunpack.c.l.s4 1966171168
    %v5339 = vunpack.c.0.s8 %v5338
    %v5340 = vlaneseq
    %v5341 = vshrl.u32 %v5340, 7
    %v5342 = vsub.s32 %v5339, %v5341
    %v5343 = vrot.slane %v5329, %v5342
    %v5344 = vcombine.low %v5336, %v5343
    %v5346 = vunpack.c.l.s4 1966171168
    %v5347 = vunpack.c.0.s8 %v5346
    %v5348 = vlaneseq
    %v5349 = vshrl.u32 %v5348, 7
    %v5350 = vsub.s32 %v5347, %v5349
    %v5351 = vrot.slane %v5344, %v5350
    %v5353 = vsel %vm3619, %v5033, 0
    %v5356 = vsel %vm3619, %v5082, 0
    %v5359 = vsel %vm3619, %v5131, 0
    %v5362 = vsel %vm3619, %v5180, 0
    %v5365 = vsel %vm3619, %v5229, 0
    %v5368 = vsel %vm3619, %v5278, 0
    %v5371 = vsel %vm3619, %v5327, 0
    %v5374 = vsel %vm3619, %v5351, 0
    %5376 = vmatprep.subr.bf16.mxu0 0
    %5377 = vmatpush1.bf16.msra.mxu0 %v4818
    %5378 = vmatprep.subr.bf16.mxu0 0
    %5379 = vmatpush1.bf16.msra.mxu0 %v4819
    %5380 = vmatprep.subr.bf16.mxu0 0
    %5381 = vmatpush1.bf16.msra.mxu0 %v4820
    %5382 = vmatprep.subr.bf16.mxu0 0
    %5383 = vmatpush1.bf16.msra.mxu0 %v4821
    %5384 = vmatprep.subr.bf16.mxu0 0
    %5385 = vmatpush1.bf16.msra.mxu0 %v4852
    %5386 = vmatprep.subr.bf16.mxu0 0
    %5387 = vmatpush1.bf16.msra.mxu0 0
    %5388 = vmatprep.subr.bf16.mxu0 0
    %5389 = vmatpush1.bf16.msra.mxu0 0
    %5390 = vmatprep.subr.bf16.mxu0 0
    %5391 = vmatpush1.bf16.msra.mxu0 0
    %5392 = vmatprep.subr.bf16.mxu0 0
    %5393 = vmatpush1.bf16.msra.mxu0 0
    %5394 = vmatprep.subr.bf16.mxu0 0
    %5395 = vmatpush1.bf16.msra.mxu0 0
    %5396 = vmatprep.subr.bf16.mxu0 0
    %5397 = vmatpush1.bf16.msra.mxu0 0
    %5398 = vmatprep.subr.bf16.mxu0 0
    %5399 = vmatpush1.bf16.msra.mxu0 0
    %5400 = vmatprep.subr.bf16.mxu0 0
    %5401 = vmatpush1.bf16.msra.mxu0 0
    %5402 = vmatprep.subr.bf16.mxu0 0
    %5403 = vmatpush1.bf16.msra.mxu0 0
    %5404 = vmatprep.subr.bf16.mxu0 0
    %5405 = vmatpush1.bf16.msra.mxu0 0
    %5406 = vmatprep.subr.bf16.mxu0 0
    %5407 = vmatpush1.bf16.msra.mxu0 0
    %5408 = vmatprep.mubr.bf16.mxu0 0
    %5409 = vmatmul.mubr.bf16.gmra.mrb[0].mxu0 %v5353
    %v5410 = vpop.f32.mrb[0].mxu0
    %v5411 = vadd.f32 0.0, %v5410
    %v5412 = vpop.f32.mrb[0].mxu0
    %v5413 = vpop.f32.mrb[0].mxu0
    %v5414 = vadd.f32 0.0, %v5413
    %v5415 = vpop.f32.mrb[0].mxu0
    %5416 = vmatprep.mubr.bf16.mxu0 0
    %5417 = vmatmul.mubr.bf16.gmra.mrb[0].mxu0 %v5356
    %v5418 = vpop.f32.mrb[0].mxu0
    %v5419 = vadd.f32 0.0, %v5418
    %v5420 = vpop.f32.mrb[0].mxu0
    %v5421 = vpop.f32.mrb[0].mxu0
    %v5422 = vadd.f32 0.0, %v5421
    %v5423 = vpop.f32.mrb[0].mxu0
    %5424 = vmatprep.mubr.bf16.mxu0 0
    %5425 = vmatmul.mubr.bf16.gmra.mrb[0].mxu0 %v5359
    %v5426 = vpop.f32.mrb[0].mxu0
    %v5427 = vadd.f32 0.0, %v5426
    %v5428 = vpop.f32.mrb[0].mxu0
    %v5429 = vpop.f32.mrb[0].mxu0
    %v5430 = vadd.f32 0.0, %v5429
    %v5431 = vpop.f32.mrb[0].mxu0
    %5432 = vmatprep.mubr.bf16.mxu0 0
    %5433 = vmatmul.mubr.bf16.gmra.mrb[0].mxu0 %v5362
    %v5434 = vpop.f32.mrb[0].mxu0
    %v5435 = vadd.f32 0.0, %v5434
    %v5436 = vpop.f32.mrb[0].mxu0
    %v5437 = vpop.f32.mrb[0].mxu0
    %v5438 = vadd.f32 0.0, %v5437
    %v5439 = vpop.f32.mrb[0].mxu0
    %5440 = vmatprep.mubr.bf16.mxu0 0
    %5441 = vmatmul.mubr.bf16.gmra.mrb[0].mxu0 %v5365
    %v5442 = vpop.f32.mrb[0].mxu0
    %v5443 = vadd.f32 0.0, %v5442
    %v5444 = vpop.f32.mrb[0].mxu0
    %v5445 = vpop.f32.mrb[0].mxu0
    %v5446 = vadd.f32 0.0, %v5445
    %v5447 = vpop.f32.mrb[0].mxu0
    %5448 = vmatprep.mubr.bf16.mxu0 0
    %5449 = vmatmul.mubr.bf16.gmra.mrb[0].mxu0 %v5368
    %v5450 = vpop.f32.mrb[0].mxu0
    %v5451 = vadd.f32 0.0, %v5450
    %v5452 = vpop.f32.mrb[0].mxu0
    %v5453 = vpop.f32.mrb[0].mxu0
    %v5454 = vadd.f32 0.0, %v5453
    %v5455 = vpop.f32.mrb[0].mxu0
    %5456 = vmatprep.mubr.bf16.mxu0 0
    %5457 = vmatmul.mubr.bf16.gmra.mrb[0].mxu0 %v5371
    %v5458 = vpop.f32.mrb[0].mxu0
    %v5459 = vadd.f32 0.0, %v5458
    %v5460 = vpop.f32.mrb[0].mxu0
    %v5461 = vpop.f32.mrb[0].mxu0
    %v5462 = vadd.f32 0.0, %v5461
    %v5463 = vpop.f32.mrb[0].mxu0
    %5464 = vmatprep.mubr.bf16.mxu0 0
    %5465 = vmatmul.mubr.bf16.gmra.mrb[0].mxu0 %v5374
    %v5466 = vpop.f32.mrb[0].mxu0
    %v5467 = vadd.f32 0.0, %v5466
    %v5468 = vpop.f32.mrb[0].mxu0
    %v5469 = vpop.f32.mrb[0].mxu0
    %v5470 = vpop.f32.mrb[0].mxu0
    %5471 = vdwg.mxu0
    %v5472 = vadd.f32 %v4950, %v5411
    %v5473 = vadd.f32 %v4951, %v5414
    %v5474 = vadd.f32 %v4952, %v5419
    %v5475 = vadd.f32 %v4953, %v5422
    %v5476 = vadd.f32 %v4954, %v5427
    %v5477 = vadd.f32 %v4955, %v5430
    %v5478 = vadd.f32 %v4956, %v5435
    %v5479 = vadd.f32 %v4957, %v5438
    %v5480 = vadd.f32 %v4958, %v5443
    %v5481 = vadd.f32 %v4959, %v5446
    %v5482 = vadd.f32 %v4960, %v5451
    %v5483 = vadd.f32 %v4961, %v5454
    %v5484 = vadd.f32 %v4962, %v5459
    %v5485 = vadd.f32 %v4963, %v5462
    %v5486 = vadd.f32 %v4964, %v5467
    %v5487 = vcombine.high %v4297, %v4297
    %v5489 = vunpack.c.l.s4 1966171168
    %v5490 = vunpack.c.0.s8 %v5489
    %v5491 = vlaneseq
    %v5492 = vshrl.u32 %v5491, 7
    %v5493 = vsub.s32 %v5490, %v5492
    %v5494 = vrot.slane %v5487, %v5493
    %v5495 = vcombine.high %v4311, %v4311
    %v5497 = vunpack.c.l.s4 1966171168
    %v5498 = vunpack.c.0.s8 %v5497
    %v5499 = vlaneseq
    %v5500 = vshrl.u32 %v5499, 7
    %v5501 = vsub.s32 %v5498, %v5500
    %v5502 = vrot.slane %v5495, %v5501
    %v5503 = vcombine.high %v4325, %v4325
    %v5505 = vunpack.c.l.s4 1966171168
    %v5506 = vunpack.c.0.s8 %v5505
    %v5507 = vlaneseq
    %v5508 = vshrl.u32 %v5507, 7
    %v5509 = vsub.s32 %v5506, %v5508
    %v5510 = vrot.slane %v5503, %v5509
    %v5511 = vcombine.high %v4339, %v4339
    %v5513 = vunpack.c.l.s4 1966171168
    %v5514 = vunpack.c.0.s8 %v5513
    %v5515 = vlaneseq
    %v5516 = vshrl.u32 %v5515, 7
    %v5517 = vsub.s32 %v5514, %v5516
    %v5518 = vrot.slane %v5511, %v5517
    %v5519 = vcombine.high %v4353, %v4353
    %v5521 = vunpack.c.l.s4 1966171168
    %v5522 = vunpack.c.0.s8 %v5521
    %v5523 = vlaneseq
    %v5524 = vshrl.u32 %v5523, 7
    %v5525 = vsub.s32 %v5522, %v5524
    %v5526 = vrot.slane %v5519, %v5525
    %v5527 = vcombine.high %v4367, %v4367
    %v5529 = vunpack.c.l.s4 1966171168
    %v5530 = vunpack.c.0.s8 %v5529
    %v5531 = vlaneseq
    %v5532 = vshrl.u32 %v5531, 7
    %v5533 = vsub.s32 %v5530, %v5532
    %v5534 = vrot.slane %v5527, %v5533
    %v5535 = vcombine.high %v4381, %v4381
    %v5537 = vunpack.c.l.s4 1966171168
    %v5538 = vunpack.c.0.s8 %v5537
    %v5539 = vlaneseq
    %v5540 = vshrl.u32 %v5539, 7
    %v5541 = vsub.s32 %v5538, %v5540
    %v5542 = vrot.slane %v5535, %v5541
    %v5543 = vcombine.high %v4395, %v4395
    %v5545 = vunpack.c.l.s4 1966171168
    %v5546 = vunpack.c.0.s8 %v5545
    %v5547 = vlaneseq
    %v5548 = vshrl.u32 %v5547, 7
    %v5549 = vsub.s32 %v5546, %v5548
    %v5550 = vrot.slane %v5543, %v5549
    %v5551 = vunpack.i.l.s16 %v5494
    %v5552 = vunpack.i.l.s16 %v5502
    %v5553 = vunpack.i.l.s16 %v5510
    %v5554 = vunpack.i.l.s16 %v5518
    %v5555 = vunpack.i.l.s16 %v5526
    %v5556 = vunpack.i.l.s16 %v5534
    %v5557 = vunpack.i.l.s16 %v5542
    %v5558 = vunpack.i.l.s16 %v5550
    %s5559 = scalar_lea.vmem %s4, 72
    %v5560 = vld [vmem:[%s5559] sm:$0xf]
    %v5561 = vld [vmem:[%s5559 + $0x4] sm:$0xf]
    %v5562 = vld [vmem:[%s5559 + $0x8] sm:$0xf]
    %v5563 = vld [vmem:[%s5559 + $0xc] sm:$0xf]
    %v5564 = vld [vmem:[%s5559 + $0x10] sm:$0xf]
    %v5565 = vld [vmem:[%s5559 + $0x14] sm:$0xf]
    %v5566 = vld [vmem:[%s5559 + $0x18] sm:$0xf]
    %v5567 = vld [vmem:[%s5559 + $0x1c] sm:$0xf]
    %v5568 = vld [vmem:[%s5559 + $0x20] sm:$0xf]
    %v5569 = vpack.i.b16 %v4965, %v4403
    %v5570 = vpack.i.b16 %v3047, %v5551
    %v5571 = vpack.i.b16 %v5552, %v4966
    %v5572 = vpack.i.b16 %v4967, %v4405
    %v5573 = vpack.i.b16 %v3077, %v5553
    %v5574 = vpack.i.b16 %v5554, %v4968
    %v5575 = vpack.i.b16 %v4969, %v4407
    %v5576 = vpack.i.b16 %v3107, %v5555
    %v5577 = vpack.i.b16 %v5556, %v4970
    %v5578 = vpack.i.b16 %v4971, %v4409
    %v5579 = vpack.i.b16 %v3137, %v5557
    %v5580 = vpack.i.b16 %v5558, %v4972
    %v5581 = vcombine.low %v3750, %v4421
    %v5582 = vcombine.low %v5569, %v5570
    %v5584 = vunpack.c.l.s4 1966171168
    %v5585 = vunpack.c.0.s8 %v5584
    %v5586 = vlaneseq
    %v5587 = vshrl.u32 %v5586, 7
    %v5588 = vsub.s32 %v5585, %v5587
    %v5589 = vrot.slane %v5581, %v5588
    %v5591 = vunpack.c.l.s4 1966171168
    %v5592 = vunpack.c.0.s8 %v5591
    %v5593 = vlaneseq
    %v5594 = vshrl.u32 %v5593, 7
    %v5595 = vsub.s32 %v5592, %v5594
    %v5596 = vrot.slane %v5582, %v5595
    %v5597 = vcombine.low %v3821, %v3828
    %v5598 = vcombine.low %v5589, %v5596
    %v5600 = vunpack.c.l.s4 1966171168
    %v5601 = vunpack.c.0.s8 %v5600
    %v5602 = vlaneseq
    %v5603 = vshrl.u32 %v5602, 7
    %v5604 = vsub.s32 %v5601, %v5603
    %v5605 = vrot.slane %v5597, %v5604
    %v5607 = vunpack.c.l.s4 1966171168
    %v5608 = vunpack.c.0.s8 %v5607
    %v5609 = vlaneseq
    %v5610 = vshrl.u32 %v5609, 7
    %v5611 = vsub.s32 %v5608, %v5610
    %v5612 = vrot.slane %v5598, %v5611
    %v5613 = vcombine.low %v5605, %v5612
    %v5614 = vcombine.low %v3758, %v4423
    %v5615 = vcombine.low %v5571, %v3761
    %v5617 = vunpack.c.l.s4 1966171168
    %v5618 = vunpack.c.0.s8 %v5617
    %v5619 = vlaneseq
    %v5620 = vshrl.u32 %v5619, 7
    %v5621 = vsub.s32 %v5618, %v5620
    %v5622 = vrot.slane %v5614, %v5621
    %v5624 = vunpack.c.l.s4 1966171168
    %v5625 = vunpack.c.0.s8 %v5624
    %v5626 = vlaneseq
    %v5627 = vshrl.u32 %v5626, 7
    %v5628 = vsub.s32 %v5625, %v5627
    %v5629 = vrot.slane %v5615, %v5628
    %v5630 = vcombine.low %v3870, %v3877
    %v5631 = vcombine.low %v5622, %v5629
    %v5633 = vunpack.c.l.s4 1966171168
    %v5634 = vunpack.c.0.s8 %v5633
    %v5635 = vlaneseq
    %v5636 = vshrl.u32 %v5635, 7
    %v5637 = vsub.s32 %v5634, %v5636
    %v5638 = vrot.slane %v5630, %v5637
    %v5640 = vunpack.c.l.s4 1966171168
    %v5641 = vunpack.c.0.s8 %v5640
    %v5642 = vlaneseq
    %v5643 = vshrl.u32 %v5642, 7
    %v5644 = vsub.s32 %v5641, %v5643
    %v5645 = vrot.slane %v5631, %v5644
    %v5646 = vcombine.low %v5638, %v5645
    %v5647 = vcombine.low %v4424, %v5572
    %v5648 = vcombine.low %v5573, %v3769
    %v5650 = vunpack.c.l.s4 1966171168
    %v5651 = vunpack.c.0.s8 %v5650
    %v5652 = vlaneseq
    %v5653 = vshrl.u32 %v5652, 7
    %v5654 = vsub.s32 %v5651, %v5653
    %v5655 = vrot.slane %v5647, %v5654
    %v5657 = vunpack.c.l.s4 1966171168
    %v5658 = vunpack.c.0.s8 %v5657
    %v5659 = vlaneseq
    %v5660 = vshrl.u32 %v5659, 7
    %v5661 = vsub.s32 %v5658, %v5660
    %v5662 = vrot.slane %v5648, %v5661
    %v5663 = vcombine.low %v3919, %v3926
    %v5664 = vcombine.low %v5655, %v5662
    %v5666 = vunpack.c.l.s4 1966171168
    %v5667 = vunpack.c.0.s8 %v5666
    %v5668 = vlaneseq
    %v5669 = vshrl.u32 %v5668, 7
    %v5670 = vsub.s32 %v5667, %v5669
    %v5671 = vrot.slane %v5663, %v5670
    %v5673 = vunpack.c.l.s4 1966171168
    %v5674 = vunpack.c.0.s8 %v5673
    %v5675 = vlaneseq
    %v5676 = vshrl.u32 %v5675, 7
    %v5677 = vsub.s32 %v5674, %v5676
    %v5678 = vrot.slane %v5664, %v5677
    %v5679 = vcombine.low %v5671, %v5678
    %v5680 = vcombine.low %v4426, %v5574
    %v5682 = vunpack.c.l.s4 1966171168
    %v5683 = vunpack.c.0.s8 %v5682
    %v5684 = vlaneseq
    %v5685 = vshrl.u32 %v5684, 7
    %v5686 = vsub.s32 %v5683, %v5685
    %v5687 = vrot.slane %v5680, %v5686
    %v5688 = vcombine.low %v3968, %v3975
    %v5689 = vcombine.low %v5687, %v4010
    %v5691 = vunpack.c.l.s4 1966171168
    %v5692 = vunpack.c.0.s8 %v5691
    %v5693 = vlaneseq
    %v5694 = vshrl.u32 %v5693, 7
    %v5695 = vsub.s32 %v5692, %v5694
    %v5696 = vrot.slane %v5688, %v5695
    %v5698 = vunpack.c.l.s4 1966171168
    %v5699 = vunpack.c.0.s8 %v5698
    %v5700 = vlaneseq
    %v5701 = vshrl.u32 %v5700, 7
    %v5702 = vsub.s32 %v5699, %v5701
    %v5703 = vrot.slane %v5689, %v5702
    %v5704 = vcombine.low %v5696, %v5703
    %v5705 = vcombine.low %v3780, %v4427
    %v5706 = vcombine.low %v5575, %v5576
    %v5708 = vunpack.c.l.s4 1966171168
    %v5709 = vunpack.c.0.s8 %v5708
    %v5710 = vlaneseq
    %v5711 = vshrl.u32 %v5710, 7
    %v5712 = vsub.s32 %v5709, %v5711
    %v5713 = vrot.slane %v5705, %v5712
    %v5715 = vunpack.c.l.s4 1966171168
    %v5716 = vunpack.c.0.s8 %v5715
    %v5717 = vlaneseq
    %v5718 = vshrl.u32 %v5717, 7
    %v5719 = vsub.s32 %v5716, %v5718
    %v5720 = vrot.slane %v5706, %v5719
    %v5721 = vcombine.low %v4017, %v5713
    %v5722 = vcombine.low %v5720, %v4059
    %v5724 = vunpack.c.l.s4 1966171168
    %v5725 = vunpack.c.0.s8 %v5724
    %v5726 = vlaneseq
    %v5727 = vshrl.u32 %v5726, 7
    %v5728 = vsub.s32 %v5725, %v5727
    %v5729 = vrot.slane %v5721, %v5728
    %v5731 = vunpack.c.l.s4 1966171168
    %v5732 = vunpack.c.0.s8 %v5731
    %v5733 = vlaneseq
    %v5734 = vshrl.u32 %v5733, 7
    %v5735 = vsub.s32 %v5732, %v5734
    %v5736 = vrot.slane %v5722, %v5735
    %v5737 = vcombine.low %v5729, %v5736
    %v5738 = vcombine.low %v3788, %v4429
    %v5739 = vcombine.low %v5577, %v3791
    %v5741 = vunpack.c.l.s4 1966171168
    %v5742 = vunpack.c.0.s8 %v5741
    %v5743 = vlaneseq
    %v5744 = vshrl.u32 %v5743, 7
    %v5745 = vsub.s32 %v5742, %v5744
    %v5746 = vrot.slane %v5738, %v5745
    %v5748 = vunpack.c.l.s4 1966171168
    %v5749 = vunpack.c.0.s8 %v5748
    %v5750 = vlaneseq
    %v5751 = vshrl.u32 %v5750, 7
    %v5752 = vsub.s32 %v5749, %v5751
    %v5753 = vrot.slane %v5739, %v5752
    %v5754 = vcombine.low %v4066, %v5746
    %v5755 = vcombine.low %v5753, %v4108
    %v5757 = vunpack.c.l.s4 1966171168
    %v5758 = vunpack.c.0.s8 %v5757
    %v5759 = vlaneseq
    %v5760 = vshrl.u32 %v5759, 7
    %v5761 = vsub.s32 %v5758, %v5760
    %v5762 = vrot.slane %v5754, %v5761
    %v5764 = vunpack.c.l.s4 1966171168
    %v5765 = vunpack.c.0.s8 %v5764
    %v5766 = vlaneseq
    %v5767 = vshrl.u32 %v5766, 7
    %v5768 = vsub.s32 %v5765, %v5767
    %v5769 = vrot.slane %v5755, %v5768
    %v5770 = vcombine.low %v5762, %v5769
    %v5771 = vcombine.low %v4430, %v5578
    %v5772 = vcombine.low %v5579, %v3799
    %v5774 = vunpack.c.l.s4 1966171168
    %v5775 = vunpack.c.0.s8 %v5774
    %v5776 = vlaneseq
    %v5777 = vshrl.u32 %v5776, 7
    %v5778 = vsub.s32 %v5775, %v5777
    %v5779 = vrot.slane %v5771, %v5778
    %v5781 = vunpack.c.l.s4 1966171168
    %v5782 = vunpack.c.0.s8 %v5781
    %v5783 = vlaneseq
    %v5784 = vshrl.u32 %v5783, 7
    %v5785 = vsub.s32 %v5782, %v5784
    %v5786 = vrot.slane %v5772, %v5785
    %v5787 = vcombine.low %v4115, %v5779
    %v5788 = vcombine.low %v5786, %v4155
    %v5790 = vunpack.c.l.s4 1966171168
    %v5791 = vunpack.c.0.s8 %v5790
    %v5792 = vlaneseq
    %v5793 = vshrl.u32 %v5792, 7
    %v5794 = vsub.s32 %v5791, %v5793
    %v5795 = vrot.slane %v5787, %v5794
    %v5797 = vunpack.c.l.s4 1966171168
    %v5798 = vunpack.c.0.s8 %v5797
    %v5799 = vlaneseq
    %v5800 = vshrl.u32 %v5799, 7
    %v5801 = vsub.s32 %v5798, %v5800
    %v5802 = vrot.slane %v5788, %v5801
    %v5803 = vcombine.low %v5795, %v5802
    %v5804 = vcombine.low %v4432, %v5580
    %v5806 = vunpack.c.l.s4 1966171168
    %v5807 = vunpack.c.0.s8 %v5806
    %v5808 = vlaneseq
    %v5809 = vshrl.u32 %v5808, 7
    %v5810 = vsub.s32 %v5807, %v5809
    %v5811 = vrot.slane %v5804, %v5810
    %v5812 = vcombine.low %v4162, %v5811
    %v5814 = vunpack.c.l.s4 1966171168
    %v5815 = vunpack.c.0.s8 %v5814
    %v5816 = vlaneseq
    %v5817 = vshrl.u32 %v5816, 7
    %v5818 = vsub.s32 %v5815, %v5817
    %v5819 = vrot.slane %v5812, %v5818
    %v5829 = vunpack.c.l.b16 %v5560
    %v5830 = vunpack.c.l.b16 %v5561
    %v5831 = vunpack.c.l.b16 %v5562
    %v5832 = vunpack.c.l.b16 %v5563
    %v5833 = vunpack.c.l.b16 %v5564
    %v5834 = vunpack.c.l.b16 %v5565
    %v5835 = vunpack.c.l.b16 %v5566
    %v5836 = vunpack.c.l.b16 %v5567
    %v5837 = vunpack.c.l.b16 %v5568
    %v5838 = vpack.c.b16 %v5830, %v5829
    %v5839 = vpack.c.b16 %v5832, %v5831
    %v5840 = vpack.c.b16 %v5834, %v5833
    %v5841 = vpack.c.b16 %v5836, %v5835
    %v5842 = vpack.c.b16 %v5837, %v5837
    %v5848 = vsel %vm3619, %v5613, 0
    %v5851 = vsel %vm3619, %v5646, 0
    %v5854 = vsel %vm3619, %v5679, 0
    %v5857 = vsel %vm3619, %v5704, 0
    %v5860 = vsel %vm3619, %v5737, 0
    %v5863 = vsel %vm3619, %v5770, 0
    %v5866 = vsel %vm3619, %v5803, 0
    %v5869 = vsel %vm3619, %v5819, 0
    %v5872 = vsel %vm3644, %v5842, 0
    %5874 = vmatprep.subr.bf16.mxu0 0
    %5875 = vmatpush1.bf16.msra.mxu0 %v5838
    %5876 = vmatprep.subr.bf16.mxu0 0
    %5877 = vmatpush1.bf16.msra.mxu0 %v5839
    %5878 = vmatprep.subr.bf16.mxu0 0
    %5879 = vmatpush1.bf16.msra.mxu0 %v5840
    %5880 = vmatprep.subr.bf16.mxu0 0
    %5881 = vmatpush1.bf16.msra.mxu0 %v5841
    %5882 = vmatprep.subr.bf16.mxu0 0
    %5883 = vmatpush1.bf16.msra.mxu0 %v5872
    %5884 = vmatprep.subr.bf16.mxu0 0
    %5885 = vmatpush1.bf16.msra.mxu0 0
    %5886 = vmatprep.subr.bf16.mxu0 0
    %5887 = vmatpush1.bf16.msra.mxu0 0
    %5888 = vmatprep.subr.bf16.mxu0 0
    %5889 = vmatpush1.bf16.msra.mxu0 0
    %5890 = vmatprep.subr.bf16.mxu0 0
    %5891 = vmatpush1.bf16.msra.mxu0 0
    %5892 = vmatprep.subr.bf16.mxu0 0
    %5893 = vmatpush1.bf16.msra.mxu0 0
    %5894 = vmatprep.subr.bf16.mxu0 0
    %5895 = vmatpush1.bf16.msra.mxu0 0
    %5896 = vmatprep.subr.bf16.mxu0 0
    %5897 = vmatpush1.bf16.msra.mxu0 0
    %5898 = vmatprep.subr.bf16.mxu0 0
    %5899 = vmatpush1.bf16.msra.mxu0 0
    %5900 = vmatprep.subr.bf16.mxu0 0
    %5901 = vmatpush1.bf16.msra.mxu0 0
    %5902 = vmatprep.subr.bf16.mxu0 0
    %5903 = vmatpush1.bf16.msra.mxu0 0
    %5904 = vmatprep.subr.bf16.mxu0 0
    %5905 = vmatpush1.bf16.msra.mxu0 0
    %5906 = vmatprep.mubr.bf16.mxu0 0
    %5907 = vmatmul.mubr.bf16.gmra.mrb[0].mxu0 %v5848
    %v5908 = vpop.f32.mrb[0].mxu0
    %v5909 = vadd.f32 0.0, %v5908
    %v5910 = vpop.f32.mrb[0].mxu0
    %v5911 = vpop.f32.mrb[0].mxu0
    %v5912 = vadd.f32 0.0, %v5911
    %v5913 = vpop.f32.mrb[0].mxu0
    %5914 = vmatprep.mubr.bf16.mxu0 0
    %5915 = vmatmul.mubr.bf16.gmra.mrb[0].mxu0 %v5851
    %v5916 = vpop.f32.mrb[0].mxu0
    %v5917 = vadd.f32 0.0, %v5916
    %v5918 = vpop.f32.mrb[0].mxu0
    %v5919 = vpop.f32.mrb[0].mxu0
    %v5920 = vadd.f32 0.0, %v5919
    %v5921 = vpop.f32.mrb[0].mxu0
    %5922 = vmatprep.mubr.bf16.mxu0 0
    %5923 = vmatmul.mubr.bf16.gmra.mrb[0].mxu0 %v5854
    %v5924 = vpop.f32.mrb[0].mxu0
    %v5925 = vadd.f32 0.0, %v5924
    %v5926 = vpop.f32.mrb[0].mxu0
    %v5927 = vpop.f32.mrb[0].mxu0
    %v5928 = vadd.f32 0.0, %v5927
    %v5929 = vpop.f32.mrb[0].mxu0
    %5930 = vmatprep.mubr.bf16.mxu0 0
    %5931 = vmatmul.mubr.bf16.gmra.mrb[0].mxu0 %v5857
    %v5932 = vpop.f32.mrb[0].mxu0
    %v5933 = vadd.f32 0.0, %v5932
    %v5934 = vpop.f32.mrb[0].mxu0
    %v5935 = vpop.f32.mrb[0].mxu0
    %v5936 = vadd.f32 0.0, %v5935
    %v5937 = vpop.f32.mrb[0].mxu0
    %5938 = vmatprep.mubr.bf16.mxu0 0
    %5939 = vmatmul.mubr.bf16.gmra.mrb[0].mxu0 %v5860
    %v5940 = vpop.f32.mrb[0].mxu0
    %v5941 = vadd.f32 0.0, %v5940
    %v5942 = vpop.f32.mrb[0].mxu0
    %v5943 = vpop.f32.mrb[0].mxu0
    %v5944 = vadd.f32 0.0, %v5943
    %v5945 = vpop.f32.mrb[0].mxu0
    %5946 = vmatprep.mubr.bf16.mxu0 0
    %5947 = vmatmul.mubr.bf16.gmra.mrb[0].mxu0 %v5863
    %v5948 = vpop.f32.mrb[0].mxu0
    %v5949 = vadd.f32 0.0, %v5948
    %v5950 = vpop.f32.mrb[0].mxu0
    %v5951 = vpop.f32.mrb[0].mxu0
    %v5952 = vadd.f32 0.0, %v5951
    %v5953 = vpop.f32.mrb[0].mxu0
    %5954 = vmatprep.mubr.bf16.mxu0 0
    %5955 = vmatmul.mubr.bf16.gmra.mrb[0].mxu0 %v5866
    %v5956 = vpop.f32.mrb[0].mxu0
    %v5957 = vadd.f32 0.0, %v5956
    %v5958 = vpop.f32.mrb[0].mxu0
    %v5959 = vpop.f32.mrb[0].mxu0
    %v5960 = vadd.f32 0.0, %v5959
    %v5961 = vpop.f32.mrb[0].mxu0
    %5962 = vmatprep.mubr.bf16.mxu0 0
    %5963 = vmatmul.mubr.bf16.gmra.mrb[0].mxu0 %v5869
    %v5964 = vpop.f32.mrb[0].mxu0
    %v5965 = vadd.f32 0.0, %v5964
    %v5966 = vpop.f32.mrb[0].mxu0
    %v5967 = vpop.f32.mrb[0].mxu0
    %v5968 = vpop.f32.mrb[0].mxu0
    %5969 = vdwg.mxu0
    %v5970 = vadd.f32 %v5472, %v5909
    %v5971 = vadd.f32 %v5473, %v5912
    %v5972 = vadd.f32 %v5474, %v5917
    %v5973 = vadd.f32 %v5475, %v5920
    %v5974 = vadd.f32 %v5476, %v5925
    %v5975 = vadd.f32 %v5477, %v5928
    %v5976 = vadd.f32 %v5478, %v5933
    %v5977 = vadd.f32 %v5479, %v5936
    %v5978 = vadd.f32 %v5480, %v5941
    %v5979 = vadd.f32 %v5481, %v5944
    %v5980 = vadd.f32 %v5482, %v5949
    %v5981 = vadd.f32 %v5483, %v5952
    %v5982 = vadd.f32 %v5484, %v5957
    %v5983 = vadd.f32 %v5485, %v5960
    %v5984 = vadd.f32 %v5486, %v5965
    %v5985 = vunpack.i.h.s16 %v5494
    %v5986 = vunpack.i.h.s16 %v5502
    %v5987 = vunpack.i.h.s16 %v5510
    %v5988 = vunpack.i.h.s16 %v5518
    %v5989 = vunpack.i.h.s16 %v5526
    %v5990 = vunpack.i.h.s16 %v5534
    %v5991 = vunpack.i.h.s16 %v5542
    %v5992 = vunpack.i.h.s16 %v5550
    %v5993 = vpack.i.b16 %v5551, %v4965
    %v5994 = vpack.i.b16 %v3048, %v5985
    %v5995 = vpack.i.b16 %v5986, %v5552
    %v5996 = vpack.i.b16 %v5553, %v4967
    %v5997 = vpack.i.b16 %v3078, %v5987
    %v5998 = vpack.i.b16 %v5988, %v5554
    %v5999 = vpack.i.b16 %v5555, %v4969
    %v6000 = vpack.i.b16 %v3108, %v5989
    %v6001 = vpack.i.b16 %v5990, %v5556
    %v6002 = vpack.i.b16 %v5557, %v4971
    %v6003 = vpack.i.b16 %v3138, %v5991
    %v6004 = vpack.i.b16 %v5992, %v5558
    %v6005 = vcombine.low %v3171, %v4973
    %v6006 = vcombine.low %v5993, %v5994
    %v6008 = vunpack.c.l.s4 1966171168
    %v6009 = vunpack.c.0.s8 %v6008
    %v6010 = vlaneseq
    %v6011 = vshrl.u32 %v6010, 7
    %v6012 = vsub.s32 %v6009, %v6011
    %v6013 = vrot.slane %v6005, %v6012
    %v6015 = vunpack.c.l.s4 1966171168
    %v6016 = vunpack.c.0.s8 %v6015
    %v6017 = vlaneseq
    %v6018 = vshrl.u32 %v6017, 7
    %v6019 = vsub.s32 %v6016, %v6018
    %v6020 = vrot.slane %v6006, %v6019
    %v6021 = vcombine.low %v3242, %v3249
    %v6022 = vcombine.low %v6013, %v6020
    %v6024 = vunpack.c.l.s4 1966171168
    %v6025 = vunpack.c.0.s8 %v6024
    %v6026 = vlaneseq
    %v6027 = vshrl.u32 %v6026, 7
    %v6028 = vsub.s32 %v6025, %v6027
    %v6029 = vrot.slane %v6021, %v6028
    %v6031 = vunpack.c.l.s4 1966171168
    %v6032 = vunpack.c.0.s8 %v6031
    %v6033 = vlaneseq
    %v6034 = vshrl.u32 %v6033, 7
    %v6035 = vsub.s32 %v6032, %v6034
    %v6036 = vrot.slane %v6022, %v6035
    %v6037 = vcombine.low %v6029, %v6036
    %v6038 = vcombine.low %v3179, %v4975
    %v6039 = vcombine.low %v5995, %v3182
    %v6041 = vunpack.c.l.s4 1966171168
    %v6042 = vunpack.c.0.s8 %v6041
    %v6043 = vlaneseq
    %v6044 = vshrl.u32 %v6043, 7
    %v6045 = vsub.s32 %v6042, %v6044
    %v6046 = vrot.slane %v6038, %v6045
    %v6048 = vunpack.c.l.s4 1966171168
    %v6049 = vunpack.c.0.s8 %v6048
    %v6050 = vlaneseq
    %v6051 = vshrl.u32 %v6050, 7
    %v6052 = vsub.s32 %v6049, %v6051
    %v6053 = vrot.slane %v6039, %v6052
    %v6054 = vcombine.low %v3291, %v3298
    %v6055 = vcombine.low %v6046, %v6053
    %v6057 = vunpack.c.l.s4 1966171168
    %v6058 = vunpack.c.0.s8 %v6057
    %v6059 = vlaneseq
    %v6060 = vshrl.u32 %v6059, 7
    %v6061 = vsub.s32 %v6058, %v6060
    %v6062 = vrot.slane %v6054, %v6061
    %v6064 = vunpack.c.l.s4 1966171168
    %v6065 = vunpack.c.0.s8 %v6064
    %v6066 = vlaneseq
    %v6067 = vshrl.u32 %v6066, 7
    %v6068 = vsub.s32 %v6065, %v6067
    %v6069 = vrot.slane %v6055, %v6068
    %v6070 = vcombine.low %v6062, %v6069
    %v6071 = vcombine.low %v4976, %v5996
    %v6072 = vcombine.low %v5997, %v3190
    %v6074 = vunpack.c.l.s4 1966171168
    %v6075 = vunpack.c.0.s8 %v6074
    %v6076 = vlaneseq
    %v6077 = vshrl.u32 %v6076, 7
    %v6078 = vsub.s32 %v6075, %v6077
    %v6079 = vrot.slane %v6071, %v6078
    %v6081 = vunpack.c.l.s4 1966171168
    %v6082 = vunpack.c.0.s8 %v6081
    %v6083 = vlaneseq
    %v6084 = vshrl.u32 %v6083, 7
    %v6085 = vsub.s32 %v6082, %v6084
    %v6086 = vrot.slane %v6072, %v6085
    %v6087 = vcombine.low %v3340, %v3347
    %v6088 = vcombine.low %v6079, %v6086
    %v6090 = vunpack.c.l.s4 1966171168
    %v6091 = vunpack.c.0.s8 %v6090
    %v6092 = vlaneseq
    %v6093 = vshrl.u32 %v6092, 7
    %v6094 = vsub.s32 %v6091, %v6093
    %v6095 = vrot.slane %v6087, %v6094
    %v6097 = vunpack.c.l.s4 1966171168
    %v6098 = vunpack.c.0.s8 %v6097
    %v6099 = vlaneseq
    %v6100 = vshrl.u32 %v6099, 7
    %v6101 = vsub.s32 %v6098, %v6100
    %v6102 = vrot.slane %v6088, %v6101
    %v6103 = vcombine.low %v6095, %v6102
    %v6104 = vcombine.low %v4978, %v5998
    %v6106 = vunpack.c.l.s4 1966171168
    %v6107 = vunpack.c.0.s8 %v6106
    %v6108 = vlaneseq
    %v6109 = vshrl.u32 %v6108, 7
    %v6110 = vsub.s32 %v6107, %v6109
    %v6111 = vrot.slane %v6104, %v6110
    %v6112 = vcombine.low %v3389, %v3396
    %v6113 = vcombine.low %v6111, %v3431
    %v6115 = vunpack.c.l.s4 1966171168
    %v6116 = vunpack.c.0.s8 %v6115
    %v6117 = vlaneseq
    %v6118 = vshrl.u32 %v6117, 7
    %v6119 = vsub.s32 %v6116, %v6118
    %v6120 = vrot.slane %v6112, %v6119
    %v6122 = vunpack.c.l.s4 1966171168
    %v6123 = vunpack.c.0.s8 %v6122
    %v6124 = vlaneseq
    %v6125 = vshrl.u32 %v6124, 7
    %v6126 = vsub.s32 %v6123, %v6125
    %v6127 = vrot.slane %v6113, %v6126
    %v6128 = vcombine.low %v6120, %v6127
    %v6129 = vcombine.low %v3201, %v4979
    %v6130 = vcombine.low %v5999, %v6000
    %v6132 = vunpack.c.l.s4 1966171168
    %v6133 = vunpack.c.0.s8 %v6132
    %v6134 = vlaneseq
    %v6135 = vshrl.u32 %v6134, 7
    %v6136 = vsub.s32 %v6133, %v6135
    %v6137 = vrot.slane %v6129, %v6136
    %v6139 = vunpack.c.l.s4 1966171168
    %v6140 = vunpack.c.0.s8 %v6139
    %v6141 = vlaneseq
    %v6142 = vshrl.u32 %v6141, 7
    %v6143 = vsub.s32 %v6140, %v6142
    %v6144 = vrot.slane %v6130, %v6143
    %v6145 = vcombine.low %v3438, %v6137
    %v6146 = vcombine.low %v6144, %v3480
    %v6148 = vunpack.c.l.s4 1966171168
    %v6149 = vunpack.c.0.s8 %v6148
    %v6150 = vlaneseq
    %v6151 = vshrl.u32 %v6150, 7
    %v6152 = vsub.s32 %v6149, %v6151
    %v6153 = vrot.slane %v6145, %v6152
    %v6155 = vunpack.c.l.s4 1966171168
    %v6156 = vunpack.c.0.s8 %v6155
    %v6157 = vlaneseq
    %v6158 = vshrl.u32 %v6157, 7
    %v6159 = vsub.s32 %v6156, %v6158
    %v6160 = vrot.slane %v6146, %v6159
    %v6161 = vcombine.low %v6153, %v6160
    %v6162 = vcombine.low %v3209, %v4981
    %v6163 = vcombine.low %v6001, %v3212
    %v6165 = vunpack.c.l.s4 1966171168
    %v6166 = vunpack.c.0.s8 %v6165
    %v6167 = vlaneseq
    %v6168 = vshrl.u32 %v6167, 7
    %v6169 = vsub.s32 %v6166, %v6168
    %v6170 = vrot.slane %v6162, %v6169
    %v6172 = vunpack.c.l.s4 1966171168
    %v6173 = vunpack.c.0.s8 %v6172
    %v6174 = vlaneseq
    %v6175 = vshrl.u32 %v6174, 7
    %v6176 = vsub.s32 %v6173, %v6175
    %v6177 = vrot.slane %v6163, %v6176
    %v6178 = vcombine.low %v3487, %v6170
    %v6179 = vcombine.low %v6177, %v3529
    %v6181 = vunpack.c.l.s4 1966171168
    %v6182 = vunpack.c.0.s8 %v6181
    %v6183 = vlaneseq
    %v6184 = vshrl.u32 %v6183, 7
    %v6185 = vsub.s32 %v6182, %v6184
    %v6186 = vrot.slane %v6178, %v6185
    %v6188 = vunpack.c.l.s4 1966171168
    %v6189 = vunpack.c.0.s8 %v6188
    %v6190 = vlaneseq
    %v6191 = vshrl.u32 %v6190, 7
    %v6192 = vsub.s32 %v6189, %v6191
    %v6193 = vrot.slane %v6179, %v6192
    %v6194 = vcombine.low %v6186, %v6193
    %v6195 = vcombine.low %v4982, %v6002
    %v6196 = vcombine.low %v6003, %v3220
    %v6198 = vunpack.c.l.s4 1966171168
    %v6199 = vunpack.c.0.s8 %v6198
    %v6200 = vlaneseq
    %v6201 = vshrl.u32 %v6200, 7
    %v6202 = vsub.s32 %v6199, %v6201
    %v6203 = vrot.slane %v6195, %v6202
    %v6205 = vunpack.c.l.s4 1966171168
    %v6206 = vunpack.c.0.s8 %v6205
    %v6207 = vlaneseq
    %v6208 = vshrl.u32 %v6207, 7
    %v6209 = vsub.s32 %v6206, %v6208
    %v6210 = vrot.slane %v6196, %v6209
    %v6211 = vcombine.low %v3536, %v6203
    %v6212 = vcombine.low %v6210, %v3576
    %v6214 = vunpack.c.l.s4 1966171168
    %v6215 = vunpack.c.0.s8 %v6214
    %v6216 = vlaneseq
    %v6217 = vshrl.u32 %v6216, 7
    %v6218 = vsub.s32 %v6215, %v6217
    %v6219 = vrot.slane %v6211, %v6218
    %v6221 = vunpack.c.l.s4 1966171168
    %v6222 = vunpack.c.0.s8 %v6221
    %v6223 = vlaneseq
    %v6224 = vshrl.u32 %v6223, 7
    %v6225 = vsub.s32 %v6222, %v6224
    %v6226 = vrot.slane %v6212, %v6225
    %v6227 = vcombine.low %v6219, %v6226
    %v6228 = vcombine.low %v4984, %v6004
    %v6230 = vunpack.c.l.s4 1966171168
    %v6231 = vunpack.c.0.s8 %v6230
    %v6232 = vlaneseq
    %v6233 = vshrl.u32 %v6232, 7
    %v6234 = vsub.s32 %v6231, %v6233
    %v6235 = vrot.slane %v6228, %v6234
    %v6236 = vcombine.low %v3583, %v6235
    %v6238 = vunpack.c.l.s4 1966171168
    %v6239 = vunpack.c.0.s8 %v6238
    %v6240 = vlaneseq
    %v6241 = vshrl.u32 %v6240, 7
    %v6242 = vsub.s32 %v6239, %v6241
    %v6243 = vrot.slane %v6236, %v6242
    %v6245 = vsel %vm3619, %v6037, 0
    %v6248 = vsel %vm3619, %v6070, 0
    %v6251 = vsel %vm3619, %v6103, 0
    %v6254 = vsel %vm3619, %v6128, 0
    %v6257 = vsel %vm3619, %v6161, 0
    %v6260 = vsel %vm3619, %v6194, 0
    %v6263 = vsel %vm3619, %v6227, 0
    %v6266 = vsel %vm3619, %v6243, 0
    %6268 = vmatprep.subr.bf16.mxu0 0
    %6269 = vmatpush1.bf16.msra.mxu0 %v5838
    %6270 = vmatprep.subr.bf16.mxu0 0
    %6271 = vmatpush1.bf16.msra.mxu0 %v5839
    %6272 = vmatprep.subr.bf16.mxu0 0
    %6273 = vmatpush1.bf16.msra.mxu0 %v5840
    %6274 = vmatprep.subr.bf16.mxu0 0
    %6275 = vmatpush1.bf16.msra.mxu0 %v5841
    %6276 = vmatprep.subr.bf16.mxu0 0
    %6277 = vmatpush1.bf16.msra.mxu0 %v5872
    %6278 = vmatprep.subr.bf16.mxu0 0
    %6279 = vmatpush1.bf16.msra.mxu0 0
    %6280 = vmatprep.subr.bf16.mxu0 0
    %6281 = vmatpush1.bf16.msra.mxu0 0
    %6282 = vmatprep.subr.bf16.mxu0 0
    %6283 = vmatpush1.bf16.msra.mxu0 0
    %6284 = vmatprep.subr.bf16.mxu0 0
    %6285 = vmatpush1.bf16.msra.mxu0 0
    %6286 = vmatprep.subr.bf16.mxu0 0
    %6287 = vmatpush1.bf16.msra.mxu0 0
    %6288 = vmatprep.subr.bf16.mxu0 0
    %6289 = vmatpush1.bf16.msra.mxu0 0
    %6290 = vmatprep.subr.bf16.mxu0 0
    %6291 = vmatpush1.bf16.msra.mxu0 0
    %6292 = vmatprep.subr.bf16.mxu0 0
    %6293 = vmatpush1.bf16.msra.mxu0 0
    %6294 = vmatprep.subr.bf16.mxu0 0
    %6295 = vmatpush1.bf16.msra.mxu0 0
    %6296 = vmatprep.subr.bf16.mxu0 0
    %6297 = vmatpush1.bf16.msra.mxu0 0
    %6298 = vmatprep.subr.bf16.mxu0 0
    %6299 = vmatpush1.bf16.msra.mxu0 0
    %6300 = vmatprep.mubr.bf16.mxu0 0
    %6301 = vmatmul.mubr.bf16.gmra.mrb[0].mxu0 %v6245
    %v6302 = vpop.f32.mrb[0].mxu0
    %v6303 = vadd.f32 0.0, %v6302
    %v6304 = vpop.f32.mrb[0].mxu0
    %v6305 = vpop.f32.mrb[0].mxu0
    %v6306 = vadd.f32 0.0, %v6305
    %v6307 = vpop.f32.mrb[0].mxu0
    %6308 = vmatprep.mubr.bf16.mxu0 0
    %6309 = vmatmul.mubr.bf16.gmra.mrb[0].mxu0 %v6248
    %v6310 = vpop.f32.mrb[0].mxu0
    %v6311 = vadd.f32 0.0, %v6310
    %v6312 = vpop.f32.mrb[0].mxu0
    %v6313 = vpop.f32.mrb[0].mxu0
    %v6314 = vadd.f32 0.0, %v6313
    %v6315 = vpop.f32.mrb[0].mxu0
    %6316 = vmatprep.mubr.bf16.mxu0 0
    %6317 = vmatmul.mubr.bf16.gmra.mrb[0].mxu0 %v6251
    %v6318 = vpop.f32.mrb[0].mxu0
    %v6319 = vadd.f32 0.0, %v6318
    %v6320 = vpop.f32.mrb[0].mxu0
    %v6321 = vpop.f32.mrb[0].mxu0
    %v6322 = vadd.f32 0.0, %v6321
    %v6323 = vpop.f32.mrb[0].mxu0
    %6324 = vmatprep.mubr.bf16.mxu0 0
    %6325 = vmatmul.mubr.bf16.gmra.mrb[0].mxu0 %v6254
    %v6326 = vpop.f32.mrb[0].mxu0
    %v6327 = vadd.f32 0.0, %v6326
    %v6328 = vpop.f32.mrb[0].mxu0
    %v6329 = vpop.f32.mrb[0].mxu0
    %v6330 = vadd.f32 0.0, %v6329
    %v6331 = vpop.f32.mrb[0].mxu0
    %6332 = vmatprep.mubr.bf16.mxu0 0
    %6333 = vmatmul.mubr.bf16.gmra.mrb[0].mxu0 %v6257
    %v6334 = vpop.f32.mrb[0].mxu0
    %v6335 = vadd.f32 0.0, %v6334
    %v6336 = vpop.f32.mrb[0].mxu0
    %v6337 = vpop.f32.mrb[0].mxu0
    %v6338 = vadd.f32 0.0, %v6337
    %v6339 = vpop.f32.mrb[0].mxu0
    %6340 = vmatprep.mubr.bf16.mxu0 0
    %6341 = vmatmul.mubr.bf16.gmra.mrb[0].mxu0 %v6260
    %v6342 = vpop.f32.mrb[0].mxu0
    %v6343 = vadd.f32 0.0, %v6342
    %v6344 = vpop.f32.mrb[0].mxu0
    %v6345 = vpop.f32.mrb[0].mxu0
    %v6346 = vadd.f32 0.0, %v6345
    %v6347 = vpop.f32.mrb[0].mxu0
    %6348 = vmatprep.mubr.bf16.mxu0 0
    %6349 = vmatmul.mubr.bf16.gmra.mrb[0].mxu0 %v6263
    %v6350 = vpop.f32.mrb[0].mxu0
    %v6351 = vadd.f32 0.0, %v6350
    %v6352 = vpop.f32.mrb[0].mxu0
    %v6353 = vpop.f32.mrb[0].mxu0
    %v6354 = vadd.f32 0.0, %v6353
    %v6355 = vpop.f32.mrb[0].mxu0
    %6356 = vmatprep.mubr.bf16.mxu0 0
    %6357 = vmatmul.mubr.bf16.gmra.mrb[0].mxu0 %v6266
    %v6358 = vpop.f32.mrb[0].mxu0
    %v6359 = vadd.f32 0.0, %v6358
    %v6360 = vpop.f32.mrb[0].mxu0
    %v6361 = vpop.f32.mrb[0].mxu0
    %v6362 = vpop.f32.mrb[0].mxu0
    %6363 = vdwg.mxu0
    %v6364 = vadd.f32 %v5970, %v6303
    %v6365 = vadd.f32 %v5971, %v6306
    %v6366 = vadd.f32 %v5972, %v6311
    %v6367 = vadd.f32 %v5973, %v6314
    %v6368 = vadd.f32 %v5974, %v6319
    %v6369 = vadd.f32 %v5975, %v6322
    %v6370 = vadd.f32 %v5976, %v6327
    %v6371 = vadd.f32 %v5977, %v6330
    %v6372 = vadd.f32 %v5978, %v6335
    %v6373 = vadd.f32 %v5979, %v6338
    %v6374 = vadd.f32 %v5980, %v6343
    %v6375 = vadd.f32 %v5981, %v6346
    %v6376 = vadd.f32 %v5982, %v6351
    %v6377 = vadd.f32 %v5983, %v6354
    %v6378 = vadd.f32 %v5984, %v6359
    %v6379 = vcombine.high %v4304, %v4304
    %v6380 = vcombine.high %v4318, %v4318
    %v6381 = vcombine.high %v4332, %v4332
    %v6382 = vcombine.high %v4346, %v4346
    %v6383 = vcombine.high %v4360, %v4360
    %v6384 = vcombine.high %v4374, %v4374
    %v6385 = vcombine.high %v4388, %v4388
    %v6386 = vcombine.high %v4402, %v4402
    %v6387 = vunpack.i.l.s16 %v6379
    %v6388 = vunpack.i.l.s16 %v6380
    %v6389 = vunpack.i.l.s16 %v6381
    %v6390 = vunpack.i.l.s16 %v6382
    %v6391 = vunpack.i.l.s16 %v6383
    %v6392 = vunpack.i.l.s16 %v6384
    %v6393 = vunpack.i.l.s16 %v6385
    %v6394 = vunpack.i.l.s16 %v6386
    %s6395 = scalar_lea.vmem %s4, 108
    %v6396 = vld [vmem:[%s6395] sm:$0xf]
    %v6397 = vld [vmem:[%s6395 + $0x4] sm:$0xf]
    %v6398 = vld [vmem:[%s6395 + $0x8] sm:$0xf]
    %v6399 = vld [vmem:[%s6395 + $0xc] sm:$0xf]
    %v6400 = vld [vmem:[%s6395 + $0x10] sm:$0xf]
    %v6401 = vld [vmem:[%s6395 + $0x14] sm:$0xf]
    %v6402 = vld [vmem:[%s6395 + $0x18] sm:$0xf]
    %v6403 = vld [vmem:[%s6395 + $0x1c] sm:$0xf]
    %v6404 = vld [vmem:[%s6395 + $0x20] sm:$0xf]
    %v6405 = vpack.i.b16 %v5985, %v5551
    %v6406 = vpack.i.b16 %v3049, %v6387
    %v6407 = vpack.i.b16 %v6388, %v5986
    %v6408 = vpack.i.b16 %v5987, %v5553
    %v6409 = vpack.i.b16 %v3079, %v6389
    %v6410 = vpack.i.b16 %v6390, %v5988
    %v6411 = vpack.i.b16 %v5989, %v5555
    %v6412 = vpack.i.b16 %v3109, %v6391
    %v6413 = vpack.i.b16 %v6392, %v5990
    %v6414 = vpack.i.b16 %v5991, %v5557
    %v6415 = vpack.i.b16 %v3139, %v6393
    %v6416 = vpack.i.b16 %v6394, %v5992
    %v6417 = vcombine.low %v4421, %v5569
    %v6418 = vcombine.low %v6405, %v6406
    %v6420 = vunpack.c.l.s4 1966171168
    %v6421 = vunpack.c.0.s8 %v6420
    %v6422 = vlaneseq
    %v6423 = vshrl.u32 %v6422, 7
    %v6424 = vsub.s32 %v6421, %v6423
    %v6425 = vrot.slane %v6417, %v6424
    %v6427 = vunpack.c.l.s4 1966171168
    %v6428 = vunpack.c.0.s8 %v6427
    %v6429 = vlaneseq
    %v6430 = vshrl.u32 %v6429, 7
    %v6431 = vsub.s32 %v6428, %v6430
    %v6432 = vrot.slane %v6418, %v6431
    %v6433 = vcombine.low %v4450, %v4457
    %v6434 = vcombine.low %v6425, %v6432
    %v6436 = vunpack.c.l.s4 1966171168
    %v6437 = vunpack.c.0.s8 %v6436
    %v6438 = vlaneseq
    %v6439 = vshrl.u32 %v6438, 7
    %v6440 = vsub.s32 %v6437, %v6439
    %v6441 = vrot.slane %v6433, %v6440
    %v6443 = vunpack.c.l.s4 1966171168
    %v6444 = vunpack.c.0.s8 %v6443
    %v6445 = vlaneseq
    %v6446 = vshrl.u32 %v6445, 7
    %v6447 = vsub.s32 %v6444, %v6446
    %v6448 = vrot.slane %v6434, %v6447
    %v6449 = vcombine.low %v6441, %v6448
    %v6450 = vcombine.low %v4423, %v5571
    %v6451 = vcombine.low %v6407, %v3762
    %v6453 = vunpack.c.l.s4 1966171168
    %v6454 = vunpack.c.0.s8 %v6453
    %v6455 = vlaneseq
    %v6456 = vshrl.u32 %v6455, 7
    %v6457 = vsub.s32 %v6454, %v6456
    %v6458 = vrot.slane %v6450, %v6457
    %v6460 = vunpack.c.l.s4 1966171168
    %v6461 = vunpack.c.0.s8 %v6460
    %v6462 = vlaneseq
    %v6463 = vshrl.u32 %v6462, 7
    %v6464 = vsub.s32 %v6461, %v6463
    %v6465 = vrot.slane %v6451, %v6464
    %v6466 = vcombine.low %v4499, %v4506
    %v6467 = vcombine.low %v6458, %v6465
    %v6469 = vunpack.c.l.s4 1966171168
    %v6470 = vunpack.c.0.s8 %v6469
    %v6471 = vlaneseq
    %v6472 = vshrl.u32 %v6471, 7
    %v6473 = vsub.s32 %v6470, %v6472
    %v6474 = vrot.slane %v6466, %v6473
    %v6476 = vunpack.c.l.s4 1966171168
    %v6477 = vunpack.c.0.s8 %v6476
    %v6478 = vlaneseq
    %v6479 = vshrl.u32 %v6478, 7
    %v6480 = vsub.s32 %v6477, %v6479
    %v6481 = vrot.slane %v6467, %v6480
    %v6482 = vcombine.low %v6474, %v6481
    %v6483 = vcombine.low %v5572, %v6408
    %v6484 = vcombine.low %v6409, %v3770
    %v6486 = vunpack.c.l.s4 1966171168
    %v6487 = vunpack.c.0.s8 %v6486
    %v6488 = vlaneseq
    %v6489 = vshrl.u32 %v6488, 7
    %v6490 = vsub.s32 %v6487, %v6489
    %v6491 = vrot.slane %v6483, %v6490
    %v6493 = vunpack.c.l.s4 1966171168
    %v6494 = vunpack.c.0.s8 %v6493
    %v6495 = vlaneseq
    %v6496 = vshrl.u32 %v6495, 7
    %v6497 = vsub.s32 %v6494, %v6496
    %v6498 = vrot.slane %v6484, %v6497
    %v6499 = vcombine.low %v4548, %v4555
    %v6500 = vcombine.low %v6491, %v6498
    %v6502 = vunpack.c.l.s4 1966171168
    %v6503 = vunpack.c.0.s8 %v6502
    %v6504 = vlaneseq
    %v6505 = vshrl.u32 %v6504, 7
    %v6506 = vsub.s32 %v6503, %v6505
    %v6507 = vrot.slane %v6499, %v6506
    %v6509 = vunpack.c.l.s4 1966171168
    %v6510 = vunpack.c.0.s8 %v6509
    %v6511 = vlaneseq
    %v6512 = vshrl.u32 %v6511, 7
    %v6513 = vsub.s32 %v6510, %v6512
    %v6514 = vrot.slane %v6500, %v6513
    %v6515 = vcombine.low %v6507, %v6514
    %v6516 = vcombine.low %v5574, %v6410
    %v6518 = vunpack.c.l.s4 1966171168
    %v6519 = vunpack.c.0.s8 %v6518
    %v6520 = vlaneseq
    %v6521 = vshrl.u32 %v6520, 7
    %v6522 = vsub.s32 %v6519, %v6521
    %v6523 = vrot.slane %v6516, %v6522
    %v6524 = vcombine.low %v4597, %v4604
    %v6525 = vcombine.low %v6523, %v4639
    %v6527 = vunpack.c.l.s4 1966171168
    %v6528 = vunpack.c.0.s8 %v6527
    %v6529 = vlaneseq
    %v6530 = vshrl.u32 %v6529, 7
    %v6531 = vsub.s32 %v6528, %v6530
    %v6532 = vrot.slane %v6524, %v6531
    %v6534 = vunpack.c.l.s4 1966171168
    %v6535 = vunpack.c.0.s8 %v6534
    %v6536 = vlaneseq
    %v6537 = vshrl.u32 %v6536, 7
    %v6538 = vsub.s32 %v6535, %v6537
    %v6539 = vrot.slane %v6525, %v6538
    %v6540 = vcombine.low %v6532, %v6539
    %v6541 = vcombine.low %v4427, %v5575
    %v6542 = vcombine.low %v6411, %v6412
    %v6544 = vunpack.c.l.s4 1966171168
    %v6545 = vunpack.c.0.s8 %v6544
    %v6546 = vlaneseq
    %v6547 = vshrl.u32 %v6546, 7
    %v6548 = vsub.s32 %v6545, %v6547
    %v6549 = vrot.slane %v6541, %v6548
    %v6551 = vunpack.c.l.s4 1966171168
    %v6552 = vunpack.c.0.s8 %v6551
    %v6553 = vlaneseq
    %v6554 = vshrl.u32 %v6553, 7
    %v6555 = vsub.s32 %v6552, %v6554
    %v6556 = vrot.slane %v6542, %v6555
    %v6557 = vcombine.low %v4646, %v6549
    %v6558 = vcombine.low %v6556, %v4688
    %v6560 = vunpack.c.l.s4 1966171168
    %v6561 = vunpack.c.0.s8 %v6560
    %v6562 = vlaneseq
    %v6563 = vshrl.u32 %v6562, 7
    %v6564 = vsub.s32 %v6561, %v6563
    %v6565 = vrot.slane %v6557, %v6564
    %v6567 = vunpack.c.l.s4 1966171168
    %v6568 = vunpack.c.0.s8 %v6567
    %v6569 = vlaneseq
    %v6570 = vshrl.u32 %v6569, 7
    %v6571 = vsub.s32 %v6568, %v6570
    %v6572 = vrot.slane %v6558, %v6571
    %v6573 = vcombine.low %v6565, %v6572
    %v6574 = vcombine.low %v4429, %v5577
    %v6575 = vcombine.low %v6413, %v3792
    %v6577 = vunpack.c.l.s4 1966171168
    %v6578 = vunpack.c.0.s8 %v6577
    %v6579 = vlaneseq
    %v6580 = vshrl.u32 %v6579, 7
    %v6581 = vsub.s32 %v6578, %v6580
    %v6582 = vrot.slane %v6574, %v6581
    %v6584 = vunpack.c.l.s4 1966171168
    %v6585 = vunpack.c.0.s8 %v6584
    %v6586 = vlaneseq
    %v6587 = vshrl.u32 %v6586, 7
    %v6588 = vsub.s32 %v6585, %v6587
    %v6589 = vrot.slane %v6575, %v6588
    %v6590 = vcombine.low %v4695, %v6582
    %v6591 = vcombine.low %v6589, %v4737
    %v6593 = vunpack.c.l.s4 1966171168
    %v6594 = vunpack.c.0.s8 %v6593
    %v6595 = vlaneseq
    %v6596 = vshrl.u32 %v6595, 7
    %v6597 = vsub.s32 %v6594, %v6596
    %v6598 = vrot.slane %v6590, %v6597
    %v6600 = vunpack.c.l.s4 1966171168
    %v6601 = vunpack.c.0.s8 %v6600
    %v6602 = vlaneseq
    %v6603 = vshrl.u32 %v6602, 7
    %v6604 = vsub.s32 %v6601, %v6603
    %v6605 = vrot.slane %v6591, %v6604
    %v6606 = vcombine.low %v6598, %v6605
    %v6607 = vcombine.low %v5578, %v6414
    %v6608 = vcombine.low %v6415, %v3800
    %v6610 = vunpack.c.l.s4 1966171168
    %v6611 = vunpack.c.0.s8 %v6610
    %v6612 = vlaneseq
    %v6613 = vshrl.u32 %v6612, 7
    %v6614 = vsub.s32 %v6611, %v6613
    %v6615 = vrot.slane %v6607, %v6614
    %v6617 = vunpack.c.l.s4 1966171168
    %v6618 = vunpack.c.0.s8 %v6617
    %v6619 = vlaneseq
    %v6620 = vshrl.u32 %v6619, 7
    %v6621 = vsub.s32 %v6618, %v6620
    %v6622 = vrot.slane %v6608, %v6621
    %v6623 = vcombine.low %v4744, %v6615
    %v6624 = vcombine.low %v6622, %v4784
    %v6626 = vunpack.c.l.s4 1966171168
    %v6627 = vunpack.c.0.s8 %v6626
    %v6628 = vlaneseq
    %v6629 = vshrl.u32 %v6628, 7
    %v6630 = vsub.s32 %v6627, %v6629
    %v6631 = vrot.slane %v6623, %v6630
    %v6633 = vunpack.c.l.s4 1966171168
    %v6634 = vunpack.c.0.s8 %v6633
    %v6635 = vlaneseq
    %v6636 = vshrl.u32 %v6635, 7
    %v6637 = vsub.s32 %v6634, %v6636
    %v6638 = vrot.slane %v6624, %v6637
    %v6639 = vcombine.low %v6631, %v6638
    %v6640 = vcombine.low %v5580, %v6416
    %v6642 = vunpack.c.l.s4 1966171168
    %v6643 = vunpack.c.0.s8 %v6642
    %v6644 = vlaneseq
    %v6645 = vshrl.u32 %v6644, 7
    %v6646 = vsub.s32 %v6643, %v6645
    %v6647 = vrot.slane %v6640, %v6646
    %v6648 = vcombine.low %v4791, %v6647
    %v6650 = vunpack.c.l.s4 1966171168
    %v6651 = vunpack.c.0.s8 %v6650
    %v6652 = vlaneseq
    %v6653 = vshrl.u32 %v6652, 7
    %v6654 = vsub.s32 %v6651, %v6653
    %v6655 = vrot.slane %v6648, %v6654
    %v6665 = vunpack.c.l.b16 %v6396
    %v6666 = vunpack.c.l.b16 %v6397
    %v6667 = vunpack.c.l.b16 %v6398
    %v6668 = vunpack.c.l.b16 %v6399
    %v6669 = vunpack.c.l.b16 %v6400
    %v6670 = vunpack.c.l.b16 %v6401
    %v6671 = vunpack.c.l.b16 %v6402
    %v6672 = vunpack.c.l.b16 %v6403
    %v6673 = vunpack.c.l.b16 %v6404
    %v6674 = vpack.c.b16 %v6666, %v6665
    %v6675 = vpack.c.b16 %v6668, %v6667
    %v6676 = vpack.c.b16 %v6670, %v6669
    %v6677 = vpack.c.b16 %v6672, %v6671
    %v6678 = vpack.c.b16 %v6673, %v6673
    %v6684 = vsel %vm3619, %v6449, 0
    %v6687 = vsel %vm3619, %v6482, 0
    %v6690 = vsel %vm3619, %v6515, 0
    %v6693 = vsel %vm3619, %v6540, 0
    %v6696 = vsel %vm3619, %v6573, 0
    %v6699 = vsel %vm3619, %v6606, 0
    %v6702 = vsel %vm3619, %v6639, 0
    %v6705 = vsel %vm3619, %v6655, 0
    %v6708 = vsel %vm3644, %v6678, 0
    %6710 = vmatprep.subr.bf16.mxu0 0
    %6711 = vmatpush1.bf16.msra.mxu0 %v6674
    %6712 = vmatprep.subr.bf16.mxu0 0
    %6713 = vmatpush1.bf16.msra.mxu0 %v6675
    %6714 = vmatprep.subr.bf16.mxu0 0
    %6715 = vmatpush1.bf16.msra.mxu0 %v6676
    %6716 = vmatprep.subr.bf16.mxu0 0
    %6717 = vmatpush1.bf16.msra.mxu0 %v6677
    %6718 = vmatprep.subr.bf16.mxu0 0
    %6719 = vmatpush1.bf16.msra.mxu0 %v6708
    %6720 = vmatprep.subr.bf16.mxu0 0
    %6721 = vmatpush1.bf16.msra.mxu0 0
    %6722 = vmatprep.subr.bf16.mxu0 0
    %6723 = vmatpush1.bf16.msra.mxu0 0
    %6724 = vmatprep.subr.bf16.mxu0 0
    %6725 = vmatpush1.bf16.msra.mxu0 0
    %6726 = vmatprep.subr.bf16.mxu0 0
    %6727 = vmatpush1.bf16.msra.mxu0 0
    %6728 = vmatprep.subr.bf16.mxu0 0
    %6729 = vmatpush1.bf16.msra.mxu0 0
    %6730 = vmatprep.subr.bf16.mxu0 0
    %6731 = vmatpush1.bf16.msra.mxu0 0
    %6732 = vmatprep.subr.bf16.mxu0 0
    %6733 = vmatpush1.bf16.msra.mxu0 0
    %6734 = vmatprep.subr.bf16.mxu0 0
    %6735 = vmatpush1.bf16.msra.mxu0 0
    %6736 = vmatprep.subr.bf16.mxu0 0
    %6737 = vmatpush1.bf16.msra.mxu0 0
    %6738 = vmatprep.subr.bf16.mxu0 0
    %6739 = vmatpush1.bf16.msra.mxu0 0
    %6740 = vmatprep.subr.bf16.mxu0 0
    %6741 = vmatpush1.bf16.msra.mxu0 0
    %6742 = vmatprep.mubr.bf16.mxu0 0
    %6743 = vmatmul.mubr.bf16.gmra.mrb[0].mxu0 %v6684
    %v6744 = vpop.f32.mrb[0].mxu0
    %v6745 = vadd.f32 0.0, %v6744
    %v6746 = vpop.f32.mrb[0].mxu0
    %v6747 = vpop.f32.mrb[0].mxu0
    %v6748 = vadd.f32 0.0, %v6747
    %v6749 = vpop.f32.mrb[0].mxu0
    %6750 = vmatprep.mubr.bf16.mxu0 0
    %6751 = vmatmul.mubr.bf16.gmra.mrb[0].mxu0 %v6687
    %v6752 = vpop.f32.mrb[0].mxu0
    %v6753 = vadd.f32 0.0, %v6752
    %v6754 = vpop.f32.mrb[0].mxu0
    %v6755 = vpop.f32.mrb[0].mxu0
    %v6756 = vadd.f32 0.0, %v6755
    %v6757 = vpop.f32.mrb[0].mxu0
    %6758 = vmatprep.mubr.bf16.mxu0 0
    %6759 = vmatmul.mubr.bf16.gmra.mrb[0].mxu0 %v6690
    %v6760 = vpop.f32.mrb[0].mxu0
    %v6761 = vadd.f32 0.0, %v6760
    %v6762 = vpop.f32.mrb[0].mxu0
    %v6763 = vpop.f32.mrb[0].mxu0
    %v6764 = vadd.f32 0.0, %v6763
    %v6765 = vpop.f32.mrb[0].mxu0
    %6766 = vmatprep.mubr.bf16.mxu0 0
    %6767 = vmatmul.mubr.bf16.gmra.mrb[0].mxu0 %v6693
    %v6768 = vpop.f32.mrb[0].mxu0
    %v6769 = vadd.f32 0.0, %v6768
    %v6770 = vpop.f32.mrb[0].mxu0
    %v6771 = vpop.f32.mrb[0].mxu0
    %v6772 = vadd.f32 0.0, %v6771
    %v6773 = vpop.f32.mrb[0].mxu0
    %6774 = vmatprep.mubr.bf16.mxu0 0
    %6775 = vmatmul.mubr.bf16.gmra.mrb[0].mxu0 %v6696
    %v6776 = vpop.f32.mrb[0].mxu0
    %v6777 = vadd.f32 0.0, %v6776
    %v6778 = vpop.f32.mrb[0].mxu0
    %v6779 = vpop.f32.mrb[0].mxu0
    %v6780 = vadd.f32 0.0, %v6779
    %v6781 = vpop.f32.mrb[0].mxu0
    %6782 = vmatprep.mubr.bf16.mxu0 0
    %6783 = vmatmul.mubr.bf16.gmra.mrb[0].mxu0 %v6699
    %v6784 = vpop.f32.mrb[0].mxu0
    %v6785 = vadd.f32 0.0, %v6784
    %v6786 = vpop.f32.mrb[0].mxu0
    %v6787 = vpop.f32.mrb[0].mxu0
    %v6788 = vadd.f32 0.0, %v6787
    %v6789 = vpop.f32.mrb[0].mxu0
    %6790 = vmatprep.mubr.bf16.mxu0 0
    %6791 = vmatmul.mubr.bf16.gmra.mrb[0].mxu0 %v6702
    %v6792 = vpop.f32.mrb[0].mxu0
    %v6793 = vadd.f32 0.0, %v6792
    %v6794 = vpop.f32.mrb[0].mxu0
    %v6795 = vpop.f32.mrb[0].mxu0
    %v6796 = vadd.f32 0.0, %v6795
    %v6797 = vpop.f32.mrb[0].mxu0
    %6798 = vmatprep.mubr.bf16.mxu0 0
    %6799 = vmatmul.mubr.bf16.gmra.mrb[0].mxu0 %v6705
    %v6800 = vpop.f32.mrb[0].mxu0
    %v6801 = vadd.f32 0.0, %v6800
    %v6802 = vpop.f32.mrb[0].mxu0
    %v6803 = vpop.f32.mrb[0].mxu0
    %v6804 = vpop.f32.mrb[0].mxu0
    %6805 = vdwg.mxu0
    %v6806 = vadd.f32 %v6364, %v6745
    %v6807 = vadd.f32 %v6365, %v6748
    %v6808 = vadd.f32 %v6366, %v6753
    %v6809 = vadd.f32 %v6367, %v6756
    %v6810 = vadd.f32 %v6368, %v6761
    %v6811 = vadd.f32 %v6369, %v6764
    %v6812 = vadd.f32 %v6370, %v6769
    %v6813 = vadd.f32 %v6371, %v6772
    %v6814 = vadd.f32 %v6372, %v6777
    %v6815 = vadd.f32 %v6373, %v6780
    %v6816 = vadd.f32 %v6374, %v6785
    %v6817 = vadd.f32 %v6375, %v6788
    %v6818 = vadd.f32 %v6376, %v6793
    %v6819 = vadd.f32 %v6377, %v6796
    %v6820 = vadd.f32 %v6378, %v6801
    %v6821 = vunpack.i.h.s16 %v6379
    %v6822 = vunpack.i.h.s16 %v6380
    %v6823 = vunpack.i.h.s16 %v6381
    %v6824 = vunpack.i.h.s16 %v6382
    %v6825 = vunpack.i.h.s16 %v6383
    %v6826 = vunpack.i.h.s16 %v6384
    %v6827 = vunpack.i.h.s16 %v6385
    %v6828 = vunpack.i.h.s16 %v6386
    %v6829 = vpack.i.b16 %v6387, %v5985
    %v6830 = vpack.i.b16 %v3050, %v6821
    %v6831 = vpack.i.b16 %v6822, %v6388
    %v6832 = vpack.i.b16 %v6389, %v5987
    %v6833 = vpack.i.b16 %v3080, %v6823
    %v6834 = vpack.i.b16 %v6824, %v6390
    %v6835 = vpack.i.b16 %v6391, %v5989
    %v6836 = vpack.i.b16 %v3110, %v6825
    %v6837 = vpack.i.b16 %v6826, %v6392
    %v6838 = vpack.i.b16 %v6393, %v5991
    %v6839 = vpack.i.b16 %v3140, %v6827
    %v6840 = vpack.i.b16 %v6828, %v6394
    %v6841 = vcombine.low %v4973, %v5993
    %v6842 = vcombine.low %v6829, %v6830
    %v6844 = vunpack.c.l.s4 1966171168
    %v6845 = vunpack.c.0.s8 %v6844
    %v6846 = vlaneseq
    %v6847 = vshrl.u32 %v6846, 7
    %v6848 = vsub.s32 %v6845, %v6847
    %v6849 = vrot.slane %v6841, %v6848
    %v6851 = vunpack.c.l.s4 1966171168
    %v6852 = vunpack.c.0.s8 %v6851
    %v6853 = vlaneseq
    %v6854 = vshrl.u32 %v6853, 7
    %v6855 = vsub.s32 %v6852, %v6854
    %v6856 = vrot.slane %v6842, %v6855
    %v6857 = vcombine.low %v5002, %v5009
    %v6858 = vcombine.low %v6849, %v6856
    %v6860 = vunpack.c.l.s4 1966171168
    %v6861 = vunpack.c.0.s8 %v6860
    %v6862 = vlaneseq
    %v6863 = vshrl.u32 %v6862, 7
    %v6864 = vsub.s32 %v6861, %v6863
    %v6865 = vrot.slane %v6857, %v6864
    %v6867 = vunpack.c.l.s4 1966171168
    %v6868 = vunpack.c.0.s8 %v6867
    %v6869 = vlaneseq
    %v6870 = vshrl.u32 %v6869, 7
    %v6871 = vsub.s32 %v6868, %v6870
    %v6872 = vrot.slane %v6858, %v6871
    %v6873 = vcombine.low %v6865, %v6872
    %v6874 = vcombine.low %v4975, %v5995
    %v6875 = vcombine.low %v6831, %v3183
    %v6877 = vunpack.c.l.s4 1966171168
    %v6878 = vunpack.c.0.s8 %v6877
    %v6879 = vlaneseq
    %v6880 = vshrl.u32 %v6879, 7
    %v6881 = vsub.s32 %v6878, %v6880
    %v6882 = vrot.slane %v6874, %v6881
    %v6884 = vunpack.c.l.s4 1966171168
    %v6885 = vunpack.c.0.s8 %v6884
    %v6886 = vlaneseq
    %v6887 = vshrl.u32 %v6886, 7
    %v6888 = vsub.s32 %v6885, %v6887
    %v6889 = vrot.slane %v6875, %v6888
    %v6890 = vcombine.low %v5051, %v5058
    %v6891 = vcombine.low %v6882, %v6889
    %v6893 = vunpack.c.l.s4 1966171168
    %v6894 = vunpack.c.0.s8 %v6893
    %v6895 = vlaneseq
    %v6896 = vshrl.u32 %v6895, 7
    %v6897 = vsub.s32 %v6894, %v6896
    %v6898 = vrot.slane %v6890, %v6897
    %v6900 = vunpack.c.l.s4 1966171168
    %v6901 = vunpack.c.0.s8 %v6900
    %v6902 = vlaneseq
    %v6903 = vshrl.u32 %v6902, 7
    %v6904 = vsub.s32 %v6901, %v6903
    %v6905 = vrot.slane %v6891, %v6904
    %v6906 = vcombine.low %v6898, %v6905
    %v6907 = vcombine.low %v5996, %v6832
    %v6908 = vcombine.low %v6833, %v3191
    %v6910 = vunpack.c.l.s4 1966171168
    %v6911 = vunpack.c.0.s8 %v6910
    %v6912 = vlaneseq
    %v6913 = vshrl.u32 %v6912, 7
    %v6914 = vsub.s32 %v6911, %v6913
    %v6915 = vrot.slane %v6907, %v6914
    %v6917 = vunpack.c.l.s4 1966171168
    %v6918 = vunpack.c.0.s8 %v6917
    %v6919 = vlaneseq
    %v6920 = vshrl.u32 %v6919, 7
    %v6921 = vsub.s32 %v6918, %v6920
    %v6922 = vrot.slane %v6908, %v6921
    %v6923 = vcombine.low %v5100, %v5107
    %v6924 = vcombine.low %v6915, %v6922
    %v6926 = vunpack.c.l.s4 1966171168
    %v6927 = vunpack.c.0.s8 %v6926
    %v6928 = vlaneseq
    %v6929 = vshrl.u32 %v6928, 7
    %v6930 = vsub.s32 %v6927, %v6929
    %v6931 = vrot.slane %v6923, %v6930
    %v6933 = vunpack.c.l.s4 1966171168
    %v6934 = vunpack.c.0.s8 %v6933
    %v6935 = vlaneseq
    %v6936 = vshrl.u32 %v6935, 7
    %v6937 = vsub.s32 %v6934, %v6936
    %v6938 = vrot.slane %v6924, %v6937
    %v6939 = vcombine.low %v6931, %v6938
    %v6940 = vcombine.low %v5998, %v6834
    %v6942 = vunpack.c.l.s4 1966171168
    %v6943 = vunpack.c.0.s8 %v6942
    %v6944 = vlaneseq
    %v6945 = vshrl.u32 %v6944, 7
    %v6946 = vsub.s32 %v6943, %v6945
    %v6947 = vrot.slane %v6940, %v6946
    %v6948 = vcombine.low %v5149, %v5156
    %v6949 = vcombine.low %v6947, %v5191
    %v6951 = vunpack.c.l.s4 1966171168
    %v6952 = vunpack.c.0.s8 %v6951
    %v6953 = vlaneseq
    %v6954 = vshrl.u32 %v6953, 7
    %v6955 = vsub.s32 %v6952, %v6954
    %v6956 = vrot.slane %v6948, %v6955
    %v6958 = vunpack.c.l.s4 1966171168
    %v6959 = vunpack.c.0.s8 %v6958
    %v6960 = vlaneseq
    %v6961 = vshrl.u32 %v6960, 7
    %v6962 = vsub.s32 %v6959, %v6961
    %v6963 = vrot.slane %v6949, %v6962
    %v6964 = vcombine.low %v6956, %v6963
    %v6965 = vcombine.low %v4979, %v5999
    %v6966 = vcombine.low %v6835, %v6836
    %v6968 = vunpack.c.l.s4 1966171168
    %v6969 = vunpack.c.0.s8 %v6968
    %v6970 = vlaneseq
    %v6971 = vshrl.u32 %v6970, 7
    %v6972 = vsub.s32 %v6969, %v6971
    %v6973 = vrot.slane %v6965, %v6972
    %v6975 = vunpack.c.l.s4 1966171168
    %v6976 = vunpack.c.0.s8 %v6975
    %v6977 = vlaneseq
    %v6978 = vshrl.u32 %v6977, 7
    %v6979 = vsub.s32 %v6976, %v6978
    %v6980 = vrot.slane %v6966, %v6979
    %v6981 = vcombine.low %v5198, %v6973
    %v6982 = vcombine.low %v6980, %v5240
    %v6984 = vunpack.c.l.s4 1966171168
    %v6985 = vunpack.c.0.s8 %v6984
    %v6986 = vlaneseq
    %v6987 = vshrl.u32 %v6986, 7
    %v6988 = vsub.s32 %v6985, %v6987
    %v6989 = vrot.slane %v6981, %v6988
    %v6991 = vunpack.c.l.s4 1966171168
    %v6992 = vunpack.c.0.s8 %v6991
    %v6993 = vlaneseq
    %v6994 = vshrl.u32 %v6993, 7
    %v6995 = vsub.s32 %v6992, %v6994
    %v6996 = vrot.slane %v6982, %v6995
    %v6997 = vcombine.low %v6989, %v6996
    %v6998 = vcombine.low %v4981, %v6001
    %v6999 = vcombine.low %v6837, %v3213
    %v7001 = vunpack.c.l.s4 1966171168
    %v7002 = vunpack.c.0.s8 %v7001
    %v7003 = vlaneseq
    %v7004 = vshrl.u32 %v7003, 7
    %v7005 = vsub.s32 %v7002, %v7004
    %v7006 = vrot.slane %v6998, %v7005
    %v7008 = vunpack.c.l.s4 1966171168
    %v7009 = vunpack.c.0.s8 %v7008
    %v7010 = vlaneseq
    %v7011 = vshrl.u32 %v7010, 7
    %v7012 = vsub.s32 %v7009, %v7011
    %v7013 = vrot.slane %v6999, %v7012
    %v7014 = vcombine.low %v5247, %v7006
    %v7015 = vcombine.low %v7013, %v5289
    %v7017 = vunpack.c.l.s4 1966171168
    %v7018 = vunpack.c.0.s8 %v7017
    %v7019 = vlaneseq
    %v7020 = vshrl.u32 %v7019, 7
    %v7021 = vsub.s32 %v7018, %v7020
    %v7022 = vrot.slane %v7014, %v7021
    %v7024 = vunpack.c.l.s4 1966171168
    %v7025 = vunpack.c.0.s8 %v7024
    %v7026 = vlaneseq
    %v7027 = vshrl.u32 %v7026, 7
    %v7028 = vsub.s32 %v7025, %v7027
    %v7029 = vrot.slane %v7015, %v7028
    %v7030 = vcombine.low %v7022, %v7029
    %v7031 = vcombine.low %v6002, %v6838
    %v7032 = vcombine.low %v6839, %v3221
    %v7034 = vunpack.c.l.s4 1966171168
    %v7035 = vunpack.c.0.s8 %v7034
    %v7036 = vlaneseq
    %v7037 = vshrl.u32 %v7036, 7
    %v7038 = vsub.s32 %v7035, %v7037
    %v7039 = vrot.slane %v7031, %v7038
    %v7041 = vunpack.c.l.s4 1966171168
    %v7042 = vunpack.c.0.s8 %v7041
    %v7043 = vlaneseq
    %v7044 = vshrl.u32 %v7043, 7
    %v7045 = vsub.s32 %v7042, %v7044
    %v7046 = vrot.slane %v7032, %v7045
    %v7047 = vcombine.low %v5296, %v7039
    %v7048 = vcombine.low %v7046, %v5336
    %v7050 = vunpack.c.l.s4 1966171168
    %v7051 = vunpack.c.0.s8 %v7050
    %v7052 = vlaneseq
    %v7053 = vshrl.u32 %v7052, 7
    %v7054 = vsub.s32 %v7051, %v7053
    %v7055 = vrot.slane %v7047, %v7054
    %v7057 = vunpack.c.l.s4 1966171168
    %v7058 = vunpack.c.0.s8 %v7057
    %v7059 = vlaneseq
    %v7060 = vshrl.u32 %v7059, 7
    %v7061 = vsub.s32 %v7058, %v7060
    %v7062 = vrot.slane %v7048, %v7061
    %v7063 = vcombine.low %v7055, %v7062
    %v7064 = vcombine.low %v6004, %v6840
    %v7066 = vunpack.c.l.s4 1966171168
    %v7067 = vunpack.c.0.s8 %v7066
    %v7068 = vlaneseq
    %v7069 = vshrl.u32 %v7068, 7
    %v7070 = vsub.s32 %v7067, %v7069
    %v7071 = vrot.slane %v7064, %v7070
    %v7072 = vcombine.low %v5343, %v7071
    %v7074 = vunpack.c.l.s4 1966171168
    %v7075 = vunpack.c.0.s8 %v7074
    %v7076 = vlaneseq
    %v7077 = vshrl.u32 %v7076, 7
    %v7078 = vsub.s32 %v7075, %v7077
    %v7079 = vrot.slane %v7072, %v7078
    %v7081 = vsel %vm3619, %v6873, 0
    %v7084 = vsel %vm3619, %v6906, 0
    %v7087 = vsel %vm3619, %v6939, 0
    %v7090 = vsel %vm3619, %v6964, 0
    %v7093 = vsel %vm3619, %v6997, 0
    %v7096 = vsel %vm3619, %v7030, 0
    %v7099 = vsel %vm3619, %v7063, 0
    %v7102 = vsel %vm3619, %v7079, 0
    %7104 = vmatprep.subr.bf16.mxu0 0
    %7105 = vmatpush1.bf16.msra.mxu0 %v6674
    %7106 = vmatprep.subr.bf16.mxu0 0
    %7107 = vmatpush1.bf16.msra.mxu0 %v6675
    %7108 = vmatprep.subr.bf16.mxu0 0
    %7109 = vmatpush1.bf16.msra.mxu0 %v6676
    %7110 = vmatprep.subr.bf16.mxu0 0
    %7111 = vmatpush1.bf16.msra.mxu0 %v6677
    %7112 = vmatprep.subr.bf16.mxu0 0
    %7113 = vmatpush1.bf16.msra.mxu0 %v6708
    %7114 = vmatprep.subr.bf16.mxu0 0
    %7115 = vmatpush1.bf16.msra.mxu0 0
    %7116 = vmatprep.subr.bf16.mxu0 0
    %7117 = vmatpush1.bf16.msra.mxu0 0
    %7118 = vmatprep.subr.bf16.mxu0 0
    %7119 = vmatpush1.bf16.msra.mxu0 0
    %7120 = vmatprep.subr.bf16.mxu0 0
    %7121 = vmatpush1.bf16.msra.mxu0 0
    %7122 = vmatprep.subr.bf16.mxu0 0
    %7123 = vmatpush1.bf16.msra.mxu0 0
    %7124 = vmatprep.subr.bf16.mxu0 0
    %7125 = vmatpush1.bf16.msra.mxu0 0
    %7126 = vmatprep.subr.bf16.mxu0 0
    %7127 = vmatpush1.bf16.msra.mxu0 0
    %7128 = vmatprep.subr.bf16.mxu0 0
    %7129 = vmatpush1.bf16.msra.mxu0 0
    %7130 = vmatprep.subr.bf16.mxu0 0
    %7131 = vmatpush1.bf16.msra.mxu0 0
    %7132 = vmatprep.subr.bf16.mxu0 0
    %7133 = vmatpush1.bf16.msra.mxu0 0
    %7134 = vmatprep.subr.bf16.mxu0 0
    %7135 = vmatpush1.bf16.msra.mxu0 0
    %7136 = vmatprep.mubr.bf16.mxu0 0
    %7137 = vmatmul.mubr.bf16.gmra.mrb[0].mxu0 %v7081
    %v7138 = vpop.f32.mrb[0].mxu0
    %v7139 = vadd.f32 0.0, %v7138
    %v7140 = vpop.f32.mrb[0].mxu0
    %v7141 = vpop.f32.mrb[0].mxu0
    %v7142 = vadd.f32 0.0, %v7141
    %v7143 = vpop.f32.mrb[0].mxu0
    %7144 = vmatprep.mubr.bf16.mxu0 0
    %7145 = vmatmul.mubr.bf16.gmra.mrb[0].mxu0 %v7084
    %v7146 = vpop.f32.mrb[0].mxu0
    %v7147 = vadd.f32 0.0, %v7146
    %v7148 = vpop.f32.mrb[0].mxu0
    %v7149 = vpop.f32.mrb[0].mxu0
    %v7150 = vadd.f32 0.0, %v7149
    %v7151 = vpop.f32.mrb[0].mxu0
    %7152 = vmatprep.mubr.bf16.mxu0 0
    %7153 = vmatmul.mubr.bf16.gmra.mrb[0].mxu0 %v7087
    %v7154 = vpop.f32.mrb[0].mxu0
    %v7155 = vadd.f32 0.0, %v7154
    %v7156 = vpop.f32.mrb[0].mxu0
    %v7157 = vpop.f32.mrb[0].mxu0
    %v7158 = vadd.f32 0.0, %v7157
    %v7159 = vpop.f32.mrb[0].mxu0
    %7160 = vmatprep.mubr.bf16.mxu0 0
    %7161 = vmatmul.mubr.bf16.gmra.mrb[0].mxu0 %v7090
    %v7162 = vpop.f32.mrb[0].mxu0
    %v7163 = vadd.f32 0.0, %v7162
    %v7164 = vpop.f32.mrb[0].mxu0
    %v7165 = vpop.f32.mrb[0].mxu0
    %v7166 = vadd.f32 0.0, %v7165
    %v7167 = vpop.f32.mrb[0].mxu0
    %7168 = vmatprep.mubr.bf16.mxu0 0
    %7169 = vmatmul.mubr.bf16.gmra.mrb[0].mxu0 %v7093
    %v7170 = vpop.f32.mrb[0].mxu0
    %v7171 = vadd.f32 0.0, %v7170
    %v7172 = vpop.f32.mrb[0].mxu0
    %v7173 = vpop.f32.mrb[0].mxu0
    %v7174 = vadd.f32 0.0, %v7173
    %v7175 = vpop.f32.mrb[0].mxu0
    %7176 = vmatprep.mubr.bf16.mxu0 0
    %7177 = vmatmul.mubr.bf16.gmra.mrb[0].mxu0 %v7096
    %v7178 = vpop.f32.mrb[0].mxu0
    %v7179 = vadd.f32 0.0, %v7178
    %v7180 = vpop.f32.mrb[0].mxu0
    %v7181 = vpop.f32.mrb[0].mxu0
    %v7182 = vadd.f32 0.0, %v7181
    %v7183 = vpop.f32.mrb[0].mxu0
    %7184 = vmatprep.mubr.bf16.mxu0 0
    %7185 = vmatmul.mubr.bf16.gmra.mrb[0].mxu0 %v7099
    %v7186 = vpop.f32.mrb[0].mxu0
    %v7187 = vadd.f32 0.0, %v7186
    %v7188 = vpop.f32.mrb[0].mxu0
    %v7189 = vpop.f32.mrb[0].mxu0
    %v7190 = vadd.f32 0.0, %v7189
    %v7191 = vpop.f32.mrb[0].mxu0
    %7192 = vmatprep.mubr.bf16.mxu0 0
    %7193 = vmatmul.mubr.bf16.gmra.mrb[0].mxu0 %v7102
    %v7194 = vpop.f32.mrb[0].mxu0
    %v7195 = vadd.f32 0.0, %v7194
    %v7196 = vpop.f32.mrb[0].mxu0
    %v7197 = vpop.f32.mrb[0].mxu0
    %v7198 = vpop.f32.mrb[0].mxu0
    %7199 = vdwg.mxu0
    %v7200 = vadd.f32 %v6806, %v7139
    %v7201 = vadd.f32 %v6807, %v7142
    %v7202 = vadd.f32 %v6808, %v7147
    %v7203 = vadd.f32 %v6809, %v7150
    %v7204 = vadd.f32 %v6810, %v7155
    %v7205 = vadd.f32 %v6811, %v7158
    %v7206 = vadd.f32 %v6812, %v7163
    %v7207 = vadd.f32 %v6813, %v7166
    %v7208 = vadd.f32 %v6814, %v7171
    %v7209 = vadd.f32 %v6815, %v7174
    %v7210 = vadd.f32 %v6816, %v7179
    %v7211 = vadd.f32 %v6817, %v7182
    %v7212 = vadd.f32 %v6818, %v7187
    %v7213 = vadd.f32 %v6819, %v7190
    %v7214 = vadd.f32 %v6820, %v7195
    %v7215 = vcombine.high %v5494, %v5494
    %v7216 = vcombine.high %v5502, %v5502
    %v7217 = vcombine.high %v5510, %v5510
    %v7218 = vcombine.high %v5518, %v5518
    %v7219 = vcombine.high %v5526, %v5526
    %v7220 = vcombine.high %v5534, %v5534
    %v7221 = vcombine.high %v5542, %v5542
    %v7222 = vcombine.high %v5550, %v5550
    %v7223 = vunpack.i.l.s16 %v7215
    %v7224 = vunpack.i.l.s16 %v7216
    %v7225 = vunpack.i.l.s16 %v7217
    %v7226 = vunpack.i.l.s16 %v7218
    %v7227 = vunpack.i.l.s16 %v7219
    %v7228 = vunpack.i.l.s16 %v7220
    %v7229 = vunpack.i.l.s16 %v7221
    %v7230 = vunpack.i.l.s16 %v7222
    %s7231 = scalar_lea.vmem %s4, 144
    %v7232 = vld [vmem:[%s7231] sm:$0xf]
    %v7233 = vld [vmem:[%s7231 + $0x4] sm:$0xf]
    %v7234 = vld [vmem:[%s7231 + $0x8] sm:$0xf]
    %v7235 = vld [vmem:[%s7231 + $0xc] sm:$0xf]
    %v7236 = vld [vmem:[%s7231 + $0x10] sm:$0xf]
    %v7237 = vld [vmem:[%s7231 + $0x14] sm:$0xf]
    %v7238 = vld [vmem:[%s7231 + $0x18] sm:$0xf]
    %v7239 = vld [vmem:[%s7231 + $0x1c] sm:$0xf]
    %v7240 = vld [vmem:[%s7231 + $0x20] sm:$0xf]
    %v7241 = vpack.i.b16 %v6821, %v6387
    %v7242 = vpack.i.b16 %v3051, %v7223
    %v7243 = vpack.i.b16 %v7224, %v6822
    %v7244 = vpack.i.b16 %v6823, %v6389
    %v7245 = vpack.i.b16 %v3081, %v7225
    %v7246 = vpack.i.b16 %v7226, %v6824
    %v7247 = vpack.i.b16 %v6825, %v6391
    %v7248 = vpack.i.b16 %v3111, %v7227
    %v7249 = vpack.i.b16 %v7228, %v6826
    %v7250 = vpack.i.b16 %v6827, %v6393
    %v7251 = vpack.i.b16 %v3141, %v7229
    %v7252 = vpack.i.b16 %v7230, %v6828
    %v7253 = vcombine.low %v5569, %v6405
    %v7254 = vcombine.low %v7241, %v7242
    %v7256 = vunpack.c.l.s4 1966171168
    %v7257 = vunpack.c.0.s8 %v7256
    %v7258 = vlaneseq
    %v7259 = vshrl.u32 %v7258, 7
    %v7260 = vsub.s32 %v7257, %v7259
    %v7261 = vrot.slane %v7253, %v7260
    %v7263 = vunpack.c.l.s4 1966171168
    %v7264 = vunpack.c.0.s8 %v7263
    %v7265 = vlaneseq
    %v7266 = vshrl.u32 %v7265, 7
    %v7267 = vsub.s32 %v7264, %v7266
    %v7268 = vrot.slane %v7254, %v7267
    %v7269 = vcombine.low %v3828, %v5589
    %v7270 = vcombine.low %v7261, %v7268
    %v7272 = vunpack.c.l.s4 1966171168
    %v7273 = vunpack.c.0.s8 %v7272
    %v7274 = vlaneseq
    %v7275 = vshrl.u32 %v7274, 7
    %v7276 = vsub.s32 %v7273, %v7275
    %v7277 = vrot.slane %v7269, %v7276
    %v7279 = vunpack.c.l.s4 1966171168
    %v7280 = vunpack.c.0.s8 %v7279
    %v7281 = vlaneseq
    %v7282 = vshrl.u32 %v7281, 7
    %v7283 = vsub.s32 %v7280, %v7282
    %v7284 = vrot.slane %v7270, %v7283
    %v7285 = vcombine.low %v7277, %v7284
    %v7286 = vcombine.low %v5571, %v6407
    %v7287 = vcombine.low %v7243, %v3763
    %v7289 = vunpack.c.l.s4 1966171168
    %v7290 = vunpack.c.0.s8 %v7289
    %v7291 = vlaneseq
    %v7292 = vshrl.u32 %v7291, 7
    %v7293 = vsub.s32 %v7290, %v7292
    %v7294 = vrot.slane %v7286, %v7293
    %v7296 = vunpack.c.l.s4 1966171168
    %v7297 = vunpack.c.0.s8 %v7296
    %v7298 = vlaneseq
    %v7299 = vshrl.u32 %v7298, 7
    %v7300 = vsub.s32 %v7297, %v7299
    %v7301 = vrot.slane %v7287, %v7300
    %v7302 = vcombine.low %v3877, %v5622
    %v7303 = vcombine.low %v7294, %v7301
    %v7305 = vunpack.c.l.s4 1966171168
    %v7306 = vunpack.c.0.s8 %v7305
    %v7307 = vlaneseq
    %v7308 = vshrl.u32 %v7307, 7
    %v7309 = vsub.s32 %v7306, %v7308
    %v7310 = vrot.slane %v7302, %v7309
    %v7312 = vunpack.c.l.s4 1966171168
    %v7313 = vunpack.c.0.s8 %v7312
    %v7314 = vlaneseq
    %v7315 = vshrl.u32 %v7314, 7
    %v7316 = vsub.s32 %v7313, %v7315
    %v7317 = vrot.slane %v7303, %v7316
    %v7318 = vcombine.low %v7310, %v7317
    %v7319 = vcombine.low %v6408, %v7244
    %v7320 = vcombine.low %v7245, %v3771
    %v7322 = vunpack.c.l.s4 1966171168
    %v7323 = vunpack.c.0.s8 %v7322
    %v7324 = vlaneseq
    %v7325 = vshrl.u32 %v7324, 7
    %v7326 = vsub.s32 %v7323, %v7325
    %v7327 = vrot.slane %v7319, %v7326
    %v7329 = vunpack.c.l.s4 1966171168
    %v7330 = vunpack.c.0.s8 %v7329
    %v7331 = vlaneseq
    %v7332 = vshrl.u32 %v7331, 7
    %v7333 = vsub.s32 %v7330, %v7332
    %v7334 = vrot.slane %v7320, %v7333
    %v7335 = vcombine.low %v3926, %v5655
    %v7336 = vcombine.low %v7327, %v7334
    %v7338 = vunpack.c.l.s4 1966171168
    %v7339 = vunpack.c.0.s8 %v7338
    %v7340 = vlaneseq
    %v7341 = vshrl.u32 %v7340, 7
    %v7342 = vsub.s32 %v7339, %v7341
    %v7343 = vrot.slane %v7335, %v7342
    %v7345 = vunpack.c.l.s4 1966171168
    %v7346 = vunpack.c.0.s8 %v7345
    %v7347 = vlaneseq
    %v7348 = vshrl.u32 %v7347, 7
    %v7349 = vsub.s32 %v7346, %v7348
    %v7350 = vrot.slane %v7336, %v7349
    %v7351 = vcombine.low %v7343, %v7350
    %v7352 = vcombine.low %v6410, %v7246
    %v7354 = vunpack.c.l.s4 1966171168
    %v7355 = vunpack.c.0.s8 %v7354
    %v7356 = vlaneseq
    %v7357 = vshrl.u32 %v7356, 7
    %v7358 = vsub.s32 %v7355, %v7357
    %v7359 = vrot.slane %v7352, %v7358
    %v7360 = vcombine.low %v3975, %v5687
    %v7361 = vcombine.low %v7359, %v4017
    %v7363 = vunpack.c.l.s4 1966171168
    %v7364 = vunpack.c.0.s8 %v7363
    %v7365 = vlaneseq
    %v7366 = vshrl.u32 %v7365, 7
    %v7367 = vsub.s32 %v7364, %v7366
    %v7368 = vrot.slane %v7360, %v7367
    %v7370 = vunpack.c.l.s4 1966171168
    %v7371 = vunpack.c.0.s8 %v7370
    %v7372 = vlaneseq
    %v7373 = vshrl.u32 %v7372, 7
    %v7374 = vsub.s32 %v7371, %v7373
    %v7375 = vrot.slane %v7361, %v7374
    %v7376 = vcombine.low %v7368, %v7375
    %v7377 = vcombine.low %v5575, %v6411
    %v7378 = vcombine.low %v7247, %v7248
    %v7380 = vunpack.c.l.s4 1966171168
    %v7381 = vunpack.c.0.s8 %v7380
    %v7382 = vlaneseq
    %v7383 = vshrl.u32 %v7382, 7
    %v7384 = vsub.s32 %v7381, %v7383
    %v7385 = vrot.slane %v7377, %v7384
    %v7387 = vunpack.c.l.s4 1966171168
    %v7388 = vunpack.c.0.s8 %v7387
    %v7389 = vlaneseq
    %v7390 = vshrl.u32 %v7389, 7
    %v7391 = vsub.s32 %v7388, %v7390
    %v7392 = vrot.slane %v7378, %v7391
    %v7393 = vcombine.low %v5713, %v7385
    %v7394 = vcombine.low %v7392, %v4066
    %v7396 = vunpack.c.l.s4 1966171168
    %v7397 = vunpack.c.0.s8 %v7396
    %v7398 = vlaneseq
    %v7399 = vshrl.u32 %v7398, 7
    %v7400 = vsub.s32 %v7397, %v7399
    %v7401 = vrot.slane %v7393, %v7400
    %v7403 = vunpack.c.l.s4 1966171168
    %v7404 = vunpack.c.0.s8 %v7403
    %v7405 = vlaneseq
    %v7406 = vshrl.u32 %v7405, 7
    %v7407 = vsub.s32 %v7404, %v7406
    %v7408 = vrot.slane %v7394, %v7407
    %v7409 = vcombine.low %v7401, %v7408
    %v7410 = vcombine.low %v5577, %v6413
    %v7411 = vcombine.low %v7249, %v3793
    %v7413 = vunpack.c.l.s4 1966171168
    %v7414 = vunpack.c.0.s8 %v7413
    %v7415 = vlaneseq
    %v7416 = vshrl.u32 %v7415, 7
    %v7417 = vsub.s32 %v7414, %v7416
    %v7418 = vrot.slane %v7410, %v7417
    %v7420 = vunpack.c.l.s4 1966171168
    %v7421 = vunpack.c.0.s8 %v7420
    %v7422 = vlaneseq
    %v7423 = vshrl.u32 %v7422, 7
    %v7424 = vsub.s32 %v7421, %v7423
    %v7425 = vrot.slane %v7411, %v7424
    %v7426 = vcombine.low %v5746, %v7418
    %v7427 = vcombine.low %v7425, %v4115
    %v7429 = vunpack.c.l.s4 1966171168
    %v7430 = vunpack.c.0.s8 %v7429
    %v7431 = vlaneseq
    %v7432 = vshrl.u32 %v7431, 7
    %v7433 = vsub.s32 %v7430, %v7432
    %v7434 = vrot.slane %v7426, %v7433
    %v7436 = vunpack.c.l.s4 1966171168
    %v7437 = vunpack.c.0.s8 %v7436
    %v7438 = vlaneseq
    %v7439 = vshrl.u32 %v7438, 7
    %v7440 = vsub.s32 %v7437, %v7439
    %v7441 = vrot.slane %v7427, %v7440
    %v7442 = vcombine.low %v7434, %v7441
    %v7443 = vcombine.low %v6414, %v7250
    %v7444 = vcombine.low %v7251, %v3801
    %v7446 = vunpack.c.l.s4 1966171168
    %v7447 = vunpack.c.0.s8 %v7446
    %v7448 = vlaneseq
    %v7449 = vshrl.u32 %v7448, 7
    %v7450 = vsub.s32 %v7447, %v7449
    %v7451 = vrot.slane %v7443, %v7450
    %v7453 = vunpack.c.l.s4 1966171168
    %v7454 = vunpack.c.0.s8 %v7453
    %v7455 = vlaneseq
    %v7456 = vshrl.u32 %v7455, 7
    %v7457 = vsub.s32 %v7454, %v7456
    %v7458 = vrot.slane %v7444, %v7457
    %v7459 = vcombine.low %v5779, %v7451
    %v7460 = vcombine.low %v7458, %v4162
    %v7462 = vunpack.c.l.s4 1966171168
    %v7463 = vunpack.c.0.s8 %v7462
    %v7464 = vlaneseq
    %v7465 = vshrl.u32 %v7464, 7
    %v7466 = vsub.s32 %v7463, %v7465
    %v7467 = vrot.slane %v7459, %v7466
    %v7469 = vunpack.c.l.s4 1966171168
    %v7470 = vunpack.c.0.s8 %v7469
    %v7471 = vlaneseq
    %v7472 = vshrl.u32 %v7471, 7
    %v7473 = vsub.s32 %v7470, %v7472
    %v7474 = vrot.slane %v7460, %v7473
    %v7475 = vcombine.low %v7467, %v7474
    %v7476 = vcombine.low %v6416, %v7252
    %v7478 = vunpack.c.l.s4 1966171168
    %v7479 = vunpack.c.0.s8 %v7478
    %v7480 = vlaneseq
    %v7481 = vshrl.u32 %v7480, 7
    %v7482 = vsub.s32 %v7479, %v7481
    %v7483 = vrot.slane %v7476, %v7482
    %v7484 = vcombine.low %v5811, %v7483
    %v7486 = vunpack.c.l.s4 1966171168
    %v7487 = vunpack.c.0.s8 %v7486
    %v7488 = vlaneseq
    %v7489 = vshrl.u32 %v7488, 7
    %v7490 = vsub.s32 %v7487, %v7489
    %v7491 = vrot.slane %v7484, %v7490
    %v7501 = vunpack.c.l.b16 %v7232
    %v7502 = vunpack.c.l.b16 %v7233
    %v7503 = vunpack.c.l.b16 %v7234
    %v7504 = vunpack.c.l.b16 %v7235
    %v7505 = vunpack.c.l.b16 %v7236
    %v7506 = vunpack.c.l.b16 %v7237
    %v7507 = vunpack.c.l.b16 %v7238
    %v7508 = vunpack.c.l.b16 %v7239
    %v7509 = vunpack.c.l.b16 %v7240
    %v7510 = vpack.c.b16 %v7502, %v7501
    %v7511 = vpack.c.b16 %v7504, %v7503
    %v7512 = vpack.c.b16 %v7506, %v7505
    %v7513 = vpack.c.b16 %v7508, %v7507
    %v7514 = vpack.c.b16 %v7509, %v7509
    %v7520 = vsel %vm3619, %v7285, 0
    %v7523 = vsel %vm3619, %v7318, 0
    %v7526 = vsel %vm3619, %v7351, 0
    %v7529 = vsel %vm3619, %v7376, 0
    %v7532 = vsel %vm3619, %v7409, 0
    %v7535 = vsel %vm3619, %v7442, 0
    %v7538 = vsel %vm3619, %v7475, 0
    %v7541 = vsel %vm3619, %v7491, 0
    %v7544 = vsel %vm3644, %v7514, 0
    %7546 = vmatprep.subr.bf16.mxu0 0
    %7547 = vmatpush1.bf16.msra.mxu0 %v7510
    %7548 = vmatprep.subr.bf16.mxu0 0
    %7549 = vmatpush1.bf16.msra.mxu0 %v7511
    %7550 = vmatprep.subr.bf16.mxu0 0
    %7551 = vmatpush1.bf16.msra.mxu0 %v7512
    %7552 = vmatprep.subr.bf16.mxu0 0
    %7553 = vmatpush1.bf16.msra.mxu0 %v7513
    %7554 = vmatprep.subr.bf16.mxu0 0
    %7555 = vmatpush1.bf16.msra.mxu0 %v7544
    %7556 = vmatprep.subr.bf16.mxu0 0
    %7557 = vmatpush1.bf16.msra.mxu0 0
    %7558 = vmatprep.subr.bf16.mxu0 0
    %7559 = vmatpush1.bf16.msra.mxu0 0
    %7560 = vmatprep.subr.bf16.mxu0 0
    %7561 = vmatpush1.bf16.msra.mxu0 0
    %7562 = vmatprep.subr.bf16.mxu0 0
    %7563 = vmatpush1.bf16.msra.mxu0 0
    %7564 = vmatprep.subr.bf16.mxu0 0
    %7565 = vmatpush1.bf16.msra.mxu0 0
    %7566 = vmatprep.subr.bf16.mxu0 0
    %7567 = vmatpush1.bf16.msra.mxu0 0
    %7568 = vmatprep.subr.bf16.mxu0 0
    %7569 = vmatpush1.bf16.msra.mxu0 0
    %7570 = vmatprep.subr.bf16.mxu0 0
    %7571 = vmatpush1.bf16.msra.mxu0 0
    %7572 = vmatprep.subr.bf16.mxu0 0
    %7573 = vmatpush1.bf16.msra.mxu0 0
    %7574 = vmatprep.subr.bf16.mxu0 0
    %7575 = vmatpush1.bf16.msra.mxu0 0
    %7576 = vmatprep.subr.bf16.mxu0 0
    %7577 = vmatpush1.bf16.msra.mxu0 0
    %7578 = vmatprep.mubr.bf16.mxu0 0
    %7579 = vmatmul.mubr.bf16.gmra.mrb[0].mxu0 %v7520
    %v7580 = vpop.f32.mrb[0].mxu0
    %v7581 = vadd.f32 0.0, %v7580
    %v7582 = vpop.f32.mrb[0].mxu0
    %v7583 = vpop.f32.mrb[0].mxu0
    %v7584 = vadd.f32 0.0, %v7583
    %v7585 = vpop.f32.mrb[0].mxu0
    %7586 = vmatprep.mubr.bf16.mxu0 0
    %7587 = vmatmul.mubr.bf16.gmra.mrb[0].mxu0 %v7523
    %v7588 = vpop.f32.mrb[0].mxu0
    %v7589 = vadd.f32 0.0, %v7588
    %v7590 = vpop.f32.mrb[0].mxu0
    %v7591 = vpop.f32.mrb[0].mxu0
    %v7592 = vadd.f32 0.0, %v7591
    %v7593 = vpop.f32.mrb[0].mxu0
    %7594 = vmatprep.mubr.bf16.mxu0 0
    %7595 = vmatmul.mubr.bf16.gmra.mrb[0].mxu0 %v7526
    %v7596 = vpop.f32.mrb[0].mxu0
    %v7597 = vadd.f32 0.0, %v7596
    %v7598 = vpop.f32.mrb[0].mxu0
    %v7599 = vpop.f32.mrb[0].mxu0
    %v7600 = vadd.f32 0.0, %v7599
    %v7601 = vpop.f32.mrb[0].mxu0
    %7602 = vmatprep.mubr.bf16.mxu0 0
    %7603 = vmatmul.mubr.bf16.gmra.mrb[0].mxu0 %v7529
    %v7604 = vpop.f32.mrb[0].mxu0
    %v7605 = vadd.f32 0.0, %v7604
    %v7606 = vpop.f32.mrb[0].mxu0
    %v7607 = vpop.f32.mrb[0].mxu0
    %v7608 = vadd.f32 0.0, %v7607
    %v7609 = vpop.f32.mrb[0].mxu0
    %7610 = vmatprep.mubr.bf16.mxu0 0
    %7611 = vmatmul.mubr.bf16.gmra.mrb[0].mxu0 %v7532
    %v7612 = vpop.f32.mrb[0].mxu0
    %v7613 = vadd.f32 0.0, %v7612
    %v7614 = vpop.f32.mrb[0].mxu0
    %v7615 = vpop.f32.mrb[0].mxu0
    %v7616 = vadd.f32 0.0, %v7615
    %v7617 = vpop.f32.mrb[0].mxu0
    %7618 = vmatprep.mubr.bf16.mxu0 0
    %7619 = vmatmul.mubr.bf16.gmra.mrb[0].mxu0 %v7535
    %v7620 = vpop.f32.mrb[0].mxu0
    %v7621 = vadd.f32 0.0, %v7620
    %v7622 = vpop.f32.mrb[0].mxu0
    %v7623 = vpop.f32.mrb[0].mxu0
    %v7624 = vadd.f32 0.0, %v7623
    %v7625 = vpop.f32.mrb[0].mxu0
    %7626 = vmatprep.mubr.bf16.mxu0 0
    %7627 = vmatmul.mubr.bf16.gmra.mrb[0].mxu0 %v7538
    %v7628 = vpop.f32.mrb[0].mxu0
    %v7629 = vadd.f32 0.0, %v7628
    %v7630 = vpop.f32.mrb[0].mxu0
    %v7631 = vpop.f32.mrb[0].mxu0
    %v7632 = vadd.f32 0.0, %v7631
    %v7633 = vpop.f32.mrb[0].mxu0
    %7634 = vmatprep.mubr.bf16.mxu0 0
    %7635 = vmatmul.mubr.bf16.gmra.mrb[0].mxu0 %v7541
    %v7636 = vpop.f32.mrb[0].mxu0
    %v7637 = vadd.f32 0.0, %v7636
    %v7638 = vpop.f32.mrb[0].mxu0
    %v7639 = vpop.f32.mrb[0].mxu0
    %v7640 = vpop.f32.mrb[0].mxu0
    %7641 = vdwg.mxu0
    %v7642 = vadd.f32 %v7200, %v7581
    %v7643 = vadd.f32 %v7201, %v7584
    %v7644 = vadd.f32 %v7202, %v7589
    %v7645 = vadd.f32 %v7203, %v7592
    %v7646 = vadd.f32 %v7204, %v7597
    %v7647 = vadd.f32 %v7205, %v7600
    %v7648 = vadd.f32 %v7206, %v7605
    %v7649 = vadd.f32 %v7207, %v7608
    %v7650 = vadd.f32 %v7208, %v7613
    %v7651 = vadd.f32 %v7209, %v7616
    %v7652 = vadd.f32 %v7210, %v7621
    %v7653 = vadd.f32 %v7211, %v7624
    %v7654 = vadd.f32 %v7212, %v7629
    %v7655 = vadd.f32 %v7213, %v7632
    %v7656 = vadd.f32 %v7214, %v7637
    %v7657 = vunpack.i.h.s16 %v7215
    %v7658 = vunpack.i.h.s16 %v7216
    %v7659 = vunpack.i.h.s16 %v7217
    %v7660 = vunpack.i.h.s16 %v7218
    %v7661 = vunpack.i.h.s16 %v7219
    %v7662 = vunpack.i.h.s16 %v7220
    %v7663 = vunpack.i.h.s16 %v7221
    %v7664 = vunpack.i.h.s16 %v7222
    %v7665 = vpack.i.b16 %v7223, %v6821
    %v7666 = vpack.i.b16 %v3052, %v7657
    %v7667 = vpack.i.b16 %v7658, %v7224
    %v7668 = vpack.i.b16 %v7225, %v6823
    %v7669 = vpack.i.b16 %v3082, %v7659
    %v7670 = vpack.i.b16 %v7660, %v7226
    %v7671 = vpack.i.b16 %v7227, %v6825
    %v7672 = vpack.i.b16 %v3112, %v7661
    %v7673 = vpack.i.b16 %v7662, %v7228
    %v7674 = vpack.i.b16 %v7229, %v6827
    %v7675 = vpack.i.b16 %v3142, %v7663
    %v7676 = vpack.i.b16 %v7664, %v7230
    %v7677 = vcombine.low %v5993, %v6829
    %v7678 = vcombine.low %v7665, %v7666
    %v7680 = vunpack.c.l.s4 1966171168
    %v7681 = vunpack.c.0.s8 %v7680
    %v7682 = vlaneseq
    %v7683 = vshrl.u32 %v7682, 7
    %v7684 = vsub.s32 %v7681, %v7683
    %v7685 = vrot.slane %v7677, %v7684
    %v7687 = vunpack.c.l.s4 1966171168
    %v7688 = vunpack.c.0.s8 %v7687
    %v7689 = vlaneseq
    %v7690 = vshrl.u32 %v7689, 7
    %v7691 = vsub.s32 %v7688, %v7690
    %v7692 = vrot.slane %v7678, %v7691
    %v7693 = vcombine.low %v3249, %v6013
    %v7694 = vcombine.low %v7685, %v7692
    %v7696 = vunpack.c.l.s4 1966171168
    %v7697 = vunpack.c.0.s8 %v7696
    %v7698 = vlaneseq
    %v7699 = vshrl.u32 %v7698, 7
    %v7700 = vsub.s32 %v7697, %v7699
    %v7701 = vrot.slane %v7693, %v7700
    %v7703 = vunpack.c.l.s4 1966171168
    %v7704 = vunpack.c.0.s8 %v7703
    %v7705 = vlaneseq
    %v7706 = vshrl.u32 %v7705, 7
    %v7707 = vsub.s32 %v7704, %v7706
    %v7708 = vrot.slane %v7694, %v7707
    %v7709 = vcombine.low %v7701, %v7708
    %v7710 = vcombine.low %v5995, %v6831
    %v7711 = vcombine.low %v7667, %v3184
    %v7713 = vunpack.c.l.s4 1966171168
    %v7714 = vunpack.c.0.s8 %v7713
    %v7715 = vlaneseq
    %v7716 = vshrl.u32 %v7715, 7
    %v7717 = vsub.s32 %v7714, %v7716
    %v7718 = vrot.slane %v7710, %v7717
    %v7720 = vunpack.c.l.s4 1966171168
    %v7721 = vunpack.c.0.s8 %v7720
    %v7722 = vlaneseq
    %v7723 = vshrl.u32 %v7722, 7
    %v7724 = vsub.s32 %v7721, %v7723
    %v7725 = vrot.slane %v7711, %v7724
    %v7726 = vcombine.low %v3298, %v6046
    %v7727 = vcombine.low %v7718, %v7725
    %v7729 = vunpack.c.l.s4 1966171168
    %v7730 = vunpack.c.0.s8 %v7729
    %v7731 = vlaneseq
    %v7732 = vshrl.u32 %v7731, 7
    %v7733 = vsub.s32 %v7730, %v7732
    %v7734 = vrot.slane %v7726, %v7733
    %v7736 = vunpack.c.l.s4 1966171168
    %v7737 = vunpack.c.0.s8 %v7736
    %v7738 = vlaneseq
    %v7739 = vshrl.u32 %v7738, 7
    %v7740 = vsub.s32 %v7737, %v7739
    %v7741 = vrot.slane %v7727, %v7740
    %v7742 = vcombine.low %v7734, %v7741
    %v7743 = vcombine.low %v6832, %v7668
    %v7744 = vcombine.low %v7669, %v3192
    %v7746 = vunpack.c.l.s4 1966171168
    %v7747 = vunpack.c.0.s8 %v7746
    %v7748 = vlaneseq
    %v7749 = vshrl.u32 %v7748, 7
    %v7750 = vsub.s32 %v7747, %v7749
    %v7751 = vrot.slane %v7743, %v7750
    %v7753 = vunpack.c.l.s4 1966171168
    %v7754 = vunpack.c.0.s8 %v7753
    %v7755 = vlaneseq
    %v7756 = vshrl.u32 %v7755, 7
    %v7757 = vsub.s32 %v7754, %v7756
    %v7758 = vrot.slane %v7744, %v7757
    %v7759 = vcombine.low %v3347, %v6079
    %v7760 = vcombine.low %v7751, %v7758
    %v7762 = vunpack.c.l.s4 1966171168
    %v7763 = vunpack.c.0.s8 %v7762
    %v7764 = vlaneseq
    %v7765 = vshrl.u32 %v7764, 7
    %v7766 = vsub.s32 %v7763, %v7765
    %v7767 = vrot.slane %v7759, %v7766
    %v7769 = vunpack.c.l.s4 1966171168
    %v7770 = vunpack.c.0.s8 %v7769
    %v7771 = vlaneseq
    %v7772 = vshrl.u32 %v7771, 7
    %v7773 = vsub.s32 %v7770, %v7772
    %v7774 = vrot.slane %v7760, %v7773
    %v7775 = vcombine.low %v7767, %v7774
    %v7776 = vcombine.low %v6834, %v7670
    %v7778 = vunpack.c.l.s4 1966171168
    %v7779 = vunpack.c.0.s8 %v7778
    %v7780 = vlaneseq
    %v7781 = vshrl.u32 %v7780, 7
    %v7782 = vsub.s32 %v7779, %v7781
    %v7783 = vrot.slane %v7776, %v7782
    %v7784 = vcombine.low %v3396, %v6111
    %v7785 = vcombine.low %v7783, %v3438
    %v7787 = vunpack.c.l.s4 1966171168
    %v7788 = vunpack.c.0.s8 %v7787
    %v7789 = vlaneseq
    %v7790 = vshrl.u32 %v7789, 7
    %v7791 = vsub.s32 %v7788, %v7790
    %v7792 = vrot.slane %v7784, %v7791
    %v7794 = vunpack.c.l.s4 1966171168
    %v7795 = vunpack.c.0.s8 %v7794
    %v7796 = vlaneseq
    %v7797 = vshrl.u32 %v7796, 7
    %v7798 = vsub.s32 %v7795, %v7797
    %v7799 = vrot.slane %v7785, %v7798
    %v7800 = vcombine.low %v7792, %v7799
    %v7801 = vcombine.low %v5999, %v6835
    %v7802 = vcombine.low %v7671, %v7672
    %v7804 = vunpack.c.l.s4 1966171168
    %v7805 = vunpack.c.0.s8 %v7804
    %v7806 = vlaneseq
    %v7807 = vshrl.u32 %v7806, 7
    %v7808 = vsub.s32 %v7805, %v7807
    %v7809 = vrot.slane %v7801, %v7808
    %v7811 = vunpack.c.l.s4 1966171168
    %v7812 = vunpack.c.0.s8 %v7811
    %v7813 = vlaneseq
    %v7814 = vshrl.u32 %v7813, 7
    %v7815 = vsub.s32 %v7812, %v7814
    %v7816 = vrot.slane %v7802, %v7815
    %v7817 = vcombine.low %v6137, %v7809
    %v7818 = vcombine.low %v7816, %v3487
    %v7820 = vunpack.c.l.s4 1966171168
    %v7821 = vunpack.c.0.s8 %v7820
    %v7822 = vlaneseq
    %v7823 = vshrl.u32 %v7822, 7
    %v7824 = vsub.s32 %v7821, %v7823
    %v7825 = vrot.slane %v7817, %v7824
    %v7827 = vunpack.c.l.s4 1966171168
    %v7828 = vunpack.c.0.s8 %v7827
    %v7829 = vlaneseq
    %v7830 = vshrl.u32 %v7829, 7
    %v7831 = vsub.s32 %v7828, %v7830
    %v7832 = vrot.slane %v7818, %v7831
    %v7833 = vcombine.low %v7825, %v7832
    %v7834 = vcombine.low %v6001, %v6837
    %v7835 = vcombine.low %v7673, %v3214
    %v7837 = vunpack.c.l.s4 1966171168
    %v7838 = vunpack.c.0.s8 %v7837
    %v7839 = vlaneseq
    %v7840 = vshrl.u32 %v7839, 7
    %v7841 = vsub.s32 %v7838, %v7840
    %v7842 = vrot.slane %v7834, %v7841
    %v7844 = vunpack.c.l.s4 1966171168
    %v7845 = vunpack.c.0.s8 %v7844
    %v7846 = vlaneseq
    %v7847 = vshrl.u32 %v7846, 7
    %v7848 = vsub.s32 %v7845, %v7847
    %v7849 = vrot.slane %v7835, %v7848
    %v7850 = vcombine.low %v6170, %v7842
    %v7851 = vcombine.low %v7849, %v3536
    %v7853 = vunpack.c.l.s4 1966171168
    %v7854 = vunpack.c.0.s8 %v7853
    %v7855 = vlaneseq
    %v7856 = vshrl.u32 %v7855, 7
    %v7857 = vsub.s32 %v7854, %v7856
    %v7858 = vrot.slane %v7850, %v7857
    %v7860 = vunpack.c.l.s4 1966171168
    %v7861 = vunpack.c.0.s8 %v7860
    %v7862 = vlaneseq
    %v7863 = vshrl.u32 %v7862, 7
    %v7864 = vsub.s32 %v7861, %v7863
    %v7865 = vrot.slane %v7851, %v7864
    %v7866 = vcombine.low %v7858, %v7865
    %v7867 = vcombine.low %v6838, %v7674
    %v7868 = vcombine.low %v7675, %v3222
    %v7870 = vunpack.c.l.s4 1966171168
    %v7871 = vunpack.c.0.s8 %v7870
    %v7872 = vlaneseq
    %v7873 = vshrl.u32 %v7872, 7
    %v7874 = vsub.s32 %v7871, %v7873
    %v7875 = vrot.slane %v7867, %v7874
    %v7877 = vunpack.c.l.s4 1966171168
    %v7878 = vunpack.c.0.s8 %v7877
    %v7879 = vlaneseq
    %v7880 = vshrl.u32 %v7879, 7
    %v7881 = vsub.s32 %v7878, %v7880
    %v7882 = vrot.slane %v7868, %v7881
    %v7883 = vcombine.low %v6203, %v7875
    %v7884 = vcombine.low %v7882, %v3583
    %v7886 = vunpack.c.l.s4 1966171168
    %v7887 = vunpack.c.0.s8 %v7886
    %v7888 = vlaneseq
    %v7889 = vshrl.u32 %v7888, 7
    %v7890 = vsub.s32 %v7887, %v7889
    %v7891 = vrot.slane %v7883, %v7890
    %v7893 = vunpack.c.l.s4 1966171168
    %v7894 = vunpack.c.0.s8 %v7893
    %v7895 = vlaneseq
    %v7896 = vshrl.u32 %v7895, 7
    %v7897 = vsub.s32 %v7894, %v7896
    %v7898 = vrot.slane %v7884, %v7897
    %v7899 = vcombine.low %v7891, %v7898
    %v7900 = vcombine.low %v6840, %v7676
    %v7902 = vunpack.c.l.s4 1966171168
    %v7903 = vunpack.c.0.s8 %v7902
    %v7904 = vlaneseq
    %v7905 = vshrl.u32 %v7904, 7
    %v7906 = vsub.s32 %v7903, %v7905
    %v7907 = vrot.slane %v7900, %v7906
    %v7908 = vcombine.low %v6235, %v7907
    %v7910 = vunpack.c.l.s4 1966171168
    %v7911 = vunpack.c.0.s8 %v7910
    %v7912 = vlaneseq
    %v7913 = vshrl.u32 %v7912, 7
    %v7914 = vsub.s32 %v7911, %v7913
    %v7915 = vrot.slane %v7908, %v7914
    %v7917 = vsel %vm3619, %v7709, 0
    %v7920 = vsel %vm3619, %v7742, 0
    %v7923 = vsel %vm3619, %v7775, 0
    %v7926 = vsel %vm3619, %v7800, 0
    %v7929 = vsel %vm3619, %v7833, 0
    %v7932 = vsel %vm3619, %v7866, 0
    %v7935 = vsel %vm3619, %v7899, 0
    %v7938 = vsel %vm3619, %v7915, 0
    %7940 = vmatprep.subr.bf16.mxu0 0
    %7941 = vmatpush1.bf16.msra.mxu0 %v7510
    %7942 = vmatprep.subr.bf16.mxu0 0
    %7943 = vmatpush1.bf16.msra.mxu0 %v7511
    %7944 = vmatprep.subr.bf16.mxu0 0
    %7945 = vmatpush1.bf16.msra.mxu0 %v7512
    %7946 = vmatprep.subr.bf16.mxu0 0
    %7947 = vmatpush1.bf16.msra.mxu0 %v7513
    %7948 = vmatprep.subr.bf16.mxu0 0
    %7949 = vmatpush1.bf16.msra.mxu0 %v7544
    %7950 = vmatprep.subr.bf16.mxu0 0
    %7951 = vmatpush1.bf16.msra.mxu0 0
    %7952 = vmatprep.subr.bf16.mxu0 0
    %7953 = vmatpush1.bf16.msra.mxu0 0
    %7954 = vmatprep.subr.bf16.mxu0 0
    %7955 = vmatpush1.bf16.msra.mxu0 0
    %7956 = vmatprep.subr.bf16.mxu0 0
    %7957 = vmatpush1.bf16.msra.mxu0 0
    %7958 = vmatprep.subr.bf16.mxu0 0
    %7959 = vmatpush1.bf16.msra.mxu0 0
    %7960 = vmatprep.subr.bf16.mxu0 0
    %7961 = vmatpush1.bf16.msra.mxu0 0
    %7962 = vmatprep.subr.bf16.mxu0 0
    %7963 = vmatpush1.bf16.msra.mxu0 0
    %7964 = vmatprep.subr.bf16.mxu0 0
    %7965 = vmatpush1.bf16.msra.mxu0 0
    %7966 = vmatprep.subr.bf16.mxu0 0
    %7967 = vmatpush1.bf16.msra.mxu0 0
    %7968 = vmatprep.subr.bf16.mxu0 0
    %7969 = vmatpush1.bf16.msra.mxu0 0
    %7970 = vmatprep.subr.bf16.mxu0 0
    %7971 = vmatpush1.bf16.msra.mxu0 0
    %7972 = vmatprep.mubr.bf16.mxu0 0
    %7973 = vmatmul.mubr.bf16.gmra.mrb[0].mxu0 %v7917
    %v7974 = vpop.f32.mrb[0].mxu0
    %v7975 = vadd.f32 0.0, %v7974
    %v7976 = vpop.f32.mrb[0].mxu0
    %v7977 = vpop.f32.mrb[0].mxu0
    %v7978 = vadd.f32 0.0, %v7977
    %v7979 = vpop.f32.mrb[0].mxu0
    %7980 = vmatprep.mubr.bf16.mxu0 0
    %7981 = vmatmul.mubr.bf16.gmra.mrb[0].mxu0 %v7920
    %v7982 = vpop.f32.mrb[0].mxu0
    %v7983 = vadd.f32 0.0, %v7982
    %v7984 = vpop.f32.mrb[0].mxu0
    %v7985 = vpop.f32.mrb[0].mxu0
    %v7986 = vadd.f32 0.0, %v7985
    %v7987 = vpop.f32.mrb[0].mxu0
    %7988 = vmatprep.mubr.bf16.mxu0 0
    %7989 = vmatmul.mubr.bf16.gmra.mrb[0].mxu0 %v7923
    %v7990 = vpop.f32.mrb[0].mxu0
    %v7991 = vadd.f32 0.0, %v7990
    %v7992 = vpop.f32.mrb[0].mxu0
    %v7993 = vpop.f32.mrb[0].mxu0
    %v7994 = vadd.f32 0.0, %v7993
    %v7995 = vpop.f32.mrb[0].mxu0
    %7996 = vmatprep.mubr.bf16.mxu0 0
    %7997 = vmatmul.mubr.bf16.gmra.mrb[0].mxu0 %v7926
    %v7998 = vpop.f32.mrb[0].mxu0
    %v7999 = vadd.f32 0.0, %v7998
    %v8000 = vpop.f32.mrb[0].mxu0
    %v8001 = vpop.f32.mrb[0].mxu0
    %v8002 = vadd.f32 0.0, %v8001
    %v8003 = vpop.f32.mrb[0].mxu0
    %8004 = vmatprep.mubr.bf16.mxu0 0
    %8005 = vmatmul.mubr.bf16.gmra.mrb[0].mxu0 %v7929
    %v8006 = vpop.f32.mrb[0].mxu0
    %v8007 = vadd.f32 0.0, %v8006
    %v8008 = vpop.f32.mrb[0].mxu0
    %v8009 = vpop.f32.mrb[0].mxu0
    %v8010 = vadd.f32 0.0, %v8009
    %v8011 = vpop.f32.mrb[0].mxu0
    %8012 = vmatprep.mubr.bf16.mxu0 0
    %8013 = vmatmul.mubr.bf16.gmra.mrb[0].mxu0 %v7932
    %v8014 = vpop.f32.mrb[0].mxu0
    %v8015 = vadd.f32 0.0, %v8014
    %v8016 = vpop.f32.mrb[0].mxu0
    %v8017 = vpop.f32.mrb[0].mxu0
    %v8018 = vadd.f32 0.0, %v8017
    %v8019 = vpop.f32.mrb[0].mxu0
    %8020 = vmatprep.mubr.bf16.mxu0 0
    %8021 = vmatmul.mubr.bf16.gmra.mrb[0].mxu0 %v7935
    %v8022 = vpop.f32.mrb[0].mxu0
    %v8023 = vadd.f32 0.0, %v8022
    %v8024 = vpop.f32.mrb[0].mxu0
    %v8025 = vpop.f32.mrb[0].mxu0
    %v8026 = vadd.f32 0.0, %v8025
    %v8027 = vpop.f32.mrb[0].mxu0
    %8028 = vmatprep.mubr.bf16.mxu0 0
    %8029 = vmatmul.mubr.bf16.gmra.mrb[0].mxu0 %v7938
    %v8030 = vpop.f32.mrb[0].mxu0
    %v8031 = vadd.f32 0.0, %v8030
    %v8032 = vpop.f32.mrb[0].mxu0
    %v8033 = vpop.f32.mrb[0].mxu0
    %v8034 = vpop.f32.mrb[0].mxu0
    %8035 = vdwg.mxu0
    %v8036 = vadd.f32 %v7642, %v7975
    %v8037 = vadd.f32 %v7643, %v7978
    %v8038 = vadd.f32 %v7644, %v7983
    %v8039 = vadd.f32 %v7645, %v7986
    %v8040 = vadd.f32 %v7646, %v7991
    %v8041 = vadd.f32 %v7647, %v7994
    %v8042 = vadd.f32 %v7648, %v7999
    %v8043 = vadd.f32 %v7649, %v8002
    %v8044 = vadd.f32 %v7650, %v8007
    %v8045 = vadd.f32 %v7651, %v8010
    %v8046 = vadd.f32 %v7652, %v8015
    %v8047 = vadd.f32 %v7653, %v8018
    %v8048 = vadd.f32 %v7654, %v8023
    %v8049 = vadd.f32 %v7655, %v8026
    %v8050 = vadd.f32 %v7656, %v8031
    %v8051 = vld [vmem:[#allocation2] sm:$0x1]
    %v8053 = vlaneseq
    %v8054 = vshrl.u32 %v8053, 7
    %v8055 = vsub.s32 0, %v8054
    %v8056 = vrot.slane %v8051, %v8055
    %v8058 = vadd.f32 %v8036, %v8056
    %v8059 = vadd.f32 %v8037, %v8056
    %v8060 = vadd.f32 %v8038, %v8056
    %v8061 = vadd.f32 %v8039, %v8056
    %v8062 = vadd.f32 %v8040, %v8056
    %v8063 = vadd.f32 %v8041, %v8056
    %v8064 = vadd.f32 %v8042, %v8056
    %v8065 = vadd.f32 %v8043, %v8056
    %v8066 = vadd.f32 %v8044, %v8056
    %v8067 = vadd.f32 %v8045, %v8056
    %v8068 = vadd.f32 %v8046, %v8056
    %v8069 = vadd.f32 %v8047, %v8056
    %v8070 = vadd.f32 %v8048, %v8056
    %v8071 = vadd.f32 %v8049, %v8056
    %v8072 = vadd.f32 %v8050, %v8056
    %v8073 = vmax.f32 %v8058, 0.0
    %v8074 = vmax.f32 %v8059, 0.0
    %v8075 = vmax.f32 %v8060, 0.0
    %v8076 = vmax.f32 %v8061, 0.0
    %v8077 = vmax.f32 %v8062, 0.0
    %v8078 = vmax.f32 %v8063, 0.0
    %v8079 = vmax.f32 %v8064, 0.0
    %v8080 = vmax.f32 %v8065, 0.0
    %v8081 = vmax.f32 %v8066, 0.0
    %v8082 = vmax.f32 %v8067, 0.0
    %v8083 = vmax.f32 %v8068, 0.0
    %v8084 = vmax.f32 %v8069, 0.0
    %v8085 = vmax.f32 %v8070, 0.0
    %v8086 = vmax.f32 %v8071, 0.0
    %v8087 = vmax.f32 %v8072, 0.0
    %v8088 = vpack.c.bf16 %v8074, %v8073
    %v8089 = vpack.c.bf16 %v8076, %v8075
    %v8090 = vpack.c.bf16 %v8078, %v8077
    %v8091 = vpack.c.bf16 %v8080, %v8079
    %v8092 = vpack.c.bf16 %v8082, %v8081
    %v8093 = vpack.c.bf16 %v8084, %v8083
    %v8094 = vpack.c.bf16 %v8086, %v8085
    %v8095 = vpack.c.bf16 %v8087, %v8087
    %v8096 = vld [vmem:[%s6] sm:$0xf]
    %v8097 = vld [vmem:[%s6 + $0x4] sm:$0xf]
    %v8098 = vld [vmem:[%s6 + $0x8] sm:$0xf]
    %v8099 = vld [vmem:[%s6 + $0xc] sm:$0xf]
    %v8100 = vld [vmem:[%s6 + $0x10] sm:$0xf]
    %v8101 = vld [vmem:[%s6 + $0x14] sm:$0xf]
    %v8102 = vld [vmem:[%s6 + $0x18] sm:$0xf]
    %v8103 = vld [vmem:[%s6 + $0x1c] sm:$0xf]
    %v8104 = vld [vmem:[%s6 + $0x20] sm:$0xf]
    %v8105 = vld [vmem:[%s6 + $0x24] sm:$0xf]
    %v8106 = vld [vmem:[%s6 + $0x28] sm:$0xf]
    %v8107 = vld [vmem:[%s6 + $0x2c] sm:$0xf]
    %v8108 = vld [vmem:[%s6 + $0x30] sm:$0xf]
    %v8109 = vld [vmem:[%s6 + $0x34] sm:$0xf]
    %v8110 = vld [vmem:[%s6 + $0x38] sm:$0xf]
    %v8111 = vld [vmem:[%s6 + $0x3c] sm:$0xf]
    %v8128 = vunpack.c.l.b16 %v8096
    %v8129 = vunpack.c.l.b16 %v8097
    %v8130 = vunpack.c.l.b16 %v8098
    %v8131 = vunpack.c.l.b16 %v8099
    %v8132 = vunpack.c.l.b16 %v8100
    %v8133 = vunpack.c.l.b16 %v8101
    %v8134 = vunpack.c.l.b16 %v8102
    %v8135 = vunpack.c.l.b16 %v8103
    %v8136 = vunpack.c.l.b16 %v8104
    %v8137 = vunpack.c.l.b16 %v8105
    %v8138 = vunpack.c.l.b16 %v8106
    %v8139 = vunpack.c.l.b16 %v8107
    %v8140 = vunpack.c.l.b16 %v8108
    %v8141 = vunpack.c.l.b16 %v8109
    %v8142 = vunpack.c.l.b16 %v8110
    %v8143 = vunpack.c.l.b16 %v8111
    %v8144 = vpack.c.b16 %v8129, %v8128
    %v8145 = vpack.c.b16 %v8131, %v8130
    %v8146 = vpack.c.b16 %v8133, %v8132
    %v8147 = vpack.c.b16 %v8135, %v8134
    %v8148 = vpack.c.b16 %v8137, %v8136
    %v8149 = vpack.c.b16 %v8139, %v8138
    %v8150 = vpack.c.b16 %v8141, %v8140
    %v8151 = vpack.c.b16 %v8143, %v8142
    %8160 = vmatprep.subr.bf16.mxu0 0
    %8161 = vmatpush1.bf16.msra.mxu0 %v8144
    %8162 = vmatprep.subr.bf16.mxu0 0
    %8163 = vmatpush1.bf16.msra.mxu0 %v8145
    %8164 = vmatprep.subr.bf16.mxu0 0
    %8165 = vmatpush1.bf16.msra.mxu0 %v8146
    %8166 = vmatprep.subr.bf16.mxu0 0
    %8167 = vmatpush1.bf16.msra.mxu0 %v8147
    %8168 = vmatprep.subr.bf16.mxu0 0
    %8169 = vmatpush1.bf16.msra.mxu0 %v8148
    %8170 = vmatprep.subr.bf16.mxu0 0
    %8171 = vmatpush1.bf16.msra.mxu0 %v8149
    %8172 = vmatprep.subr.bf16.mxu0 0
    %8173 = vmatpush1.bf16.msra.mxu0 %v8150
    %8174 = vmatprep.subr.bf16.mxu0 0
    %8175 = vmatpush1.bf16.msra.mxu0 %v8151
    %8176 = vmatprep.subr.bf16.mxu0 0
    %8177 = vmatpush1.bf16.msra.mxu0 0
    %8178 = vmatprep.subr.bf16.mxu0 0
    %8179 = vmatpush1.bf16.msra.mxu0 0
    %8180 = vmatprep.subr.bf16.mxu0 0
    %8181 = vmatpush1.bf16.msra.mxu0 0
    %8182 = vmatprep.subr.bf16.mxu0 0
    %8183 = vmatpush1.bf16.msra.mxu0 0
    %8184 = vmatprep.subr.bf16.mxu0 0
    %8185 = vmatpush1.bf16.msra.mxu0 0
    %8186 = vmatprep.subr.bf16.mxu0 0
    %8187 = vmatpush1.bf16.msra.mxu0 0
    %8188 = vmatprep.subr.bf16.mxu0 0
    %8189 = vmatpush1.bf16.msra.mxu0 0
    %8190 = vmatprep.subr.bf16.mxu0 0
    %8191 = vmatpush1.bf16.msra.mxu0 0
    %8192 = vmatprep.mubr.bf16.mxu0 0
    %8193 = vmatmul.mubr.bf16.gmra.mrb[0].mxu0 %v8088
    %v8194 = vpop.f32.mrb[0].mxu0
    %v8195 = vadd.f32 0.0, %v8194
    %v8196 = vpop.f32.mrb[0].mxu0
    %v8197 = vpop.f32.mrb[0].mxu0
    %v8198 = vadd.f32 0.0, %v8197
    %v8199 = vpop.f32.mrb[0].mxu0
    %8200 = vmatprep.mubr.bf16.mxu0 0
    %8201 = vmatmul.mubr.bf16.gmra.mrb[0].mxu0 %v8089
    %v8202 = vpop.f32.mrb[0].mxu0
    %v8203 = vadd.f32 0.0, %v8202
    %v8204 = vpop.f32.mrb[0].mxu0
    %v8205 = vpop.f32.mrb[0].mxu0
    %v8206 = vadd.f32 0.0, %v8205
    %v8207 = vpop.f32.mrb[0].mxu0
    %8208 = vmatprep.mubr.bf16.mxu0 0
    %8209 = vmatmul.mubr.bf16.gmra.mrb[0].mxu0 %v8090
    %v8210 = vpop.f32.mrb[0].mxu0
    %v8211 = vadd.f32 0.0, %v8210
    %v8212 = vpop.f32.mrb[0].mxu0
    %v8213 = vpop.f32.mrb[0].mxu0
    %v8214 = vadd.f32 0.0, %v8213
    %v8215 = vpop.f32.mrb[0].mxu0
    %8216 = vmatprep.mubr.bf16.mxu0 0
    %8217 = vmatmul.mubr.bf16.gmra.mrb[0].mxu0 %v8091
    %v8218 = vpop.f32.mrb[0].mxu0
    %v8219 = vadd.f32 0.0, %v8218
    %v8220 = vpop.f32.mrb[0].mxu0
    %v8221 = vpop.f32.mrb[0].mxu0
    %v8222 = vadd.f32 0.0, %v8221
    %v8223 = vpop.f32.mrb[0].mxu0
    %8224 = vmatprep.mubr.bf16.mxu0 0
    %8225 = vmatmul.mubr.bf16.gmra.mrb[0].mxu0 %v8092
    %v8226 = vpop.f32.mrb[0].mxu0
    %v8227 = vadd.f32 0.0, %v8226
    %v8228 = vpop.f32.mrb[0].mxu0
    %v8229 = vpop.f32.mrb[0].mxu0
    %v8230 = vadd.f32 0.0, %v8229
    %v8231 = vpop.f32.mrb[0].mxu0
    %8232 = vmatprep.mubr.bf16.mxu0 0
    %8233 = vmatmul.mubr.bf16.gmra.mrb[0].mxu0 %v8093
    %v8234 = vpop.f32.mrb[0].mxu0
    %v8235 = vadd.f32 0.0, %v8234
    %v8236 = vpop.f32.mrb[0].mxu0
    %v8237 = vpop.f32.mrb[0].mxu0
    %v8238 = vadd.f32 0.0, %v8237
    %v8239 = vpop.f32.mrb[0].mxu0
    %8240 = vmatprep.mubr.bf16.mxu0 0
    %8241 = vmatmul.mubr.bf16.gmra.mrb[0].mxu0 %v8094
    %v8242 = vpop.f32.mrb[0].mxu0
    %v8243 = vadd.f32 0.0, %v8242
    %v8244 = vpop.f32.mrb[0].mxu0
    %v8245 = vpop.f32.mrb[0].mxu0
    %v8246 = vadd.f32 0.0, %v8245
    %v8247 = vpop.f32.mrb[0].mxu0
    %8248 = vmatprep.mubr.bf16.mxu0 0
    %8249 = vmatmul.mubr.bf16.gmra.mrb[0].mxu0 %v8095
    %v8250 = vpop.f32.mrb[0].mxu0
    %v8251 = vadd.f32 0.0, %v8250
    %v8252 = vpop.f32.mrb[0].mxu0
    %v8253 = vpop.f32.mrb[0].mxu0
    %v8254 = vpop.f32.mrb[0].mxu0
    %8255 = vdwg.mxu0
    %v8256 = vpack.c.bf16 %v8198, %v8195
    %v8257 = vpack.c.bf16 %v8206, %v8203
    %v8258 = vpack.c.bf16 %v8214, %v8211
    %v8259 = vpack.c.bf16 %v8222, %v8219
    %v8260 = vpack.c.bf16 %v8230, %v8227
    %v8261 = vpack.c.bf16 %v8238, %v8235
    %v8262 = vpack.c.bf16 %v8246, %v8243
    %v8263 = vpack.c.bf16 %v8251, %v8251
    %v8272 = vcombine.high %v8256, %v8256
    %v8274 = vunpack.c.l.s4 1966171168
    %v8275 = vunpack.c.0.s8 %v8274
    %v8276 = vlaneseq
    %v8277 = vshrl.u32 %v8276, 7
    %v8278 = vsub.s32 %v8275, %v8277
    %v8279 = vrot.slane %v8256, %v8278
    %v8281 = vunpack.c.l.s4 1966171168
    %v8282 = vunpack.c.0.s8 %v8281
    %v8283 = vlaneseq
    %v8284 = vshrl.u32 %v8283, 7
    %v8285 = vsub.s32 %v8282, %v8284
    %v8286 = vrot.slane %v8272, %v8285
    %v8287 = vcombine.high %v8279, %v8279
    %v8288 = vcombine.high %v8286, %v8286
    %v8290 = vunpack.c.l.s4 1966171168
    %v8291 = vunpack.c.0.s8 %v8290
    %v8292 = vlaneseq
    %v8293 = vshrl.u32 %v8292, 7
    %v8294 = vsub.s32 %v8291, %v8293
    %v8295 = vrot.slane %v8279, %v8294
    %v8297 = vunpack.c.l.s4 1966171168
    %v8298 = vunpack.c.0.s8 %v8297
    %v8299 = vlaneseq
    %v8300 = vshrl.u32 %v8299, 7
    %v8301 = vsub.s32 %v8298, %v8300
    %v8302 = vrot.slane %v8286, %v8301
    %v8304 = vunpack.c.l.s4 1966171168
    %v8305 = vunpack.c.0.s8 %v8304
    %v8306 = vlaneseq
    %v8307 = vshrl.u32 %v8306, 7
    %v8308 = vsub.s32 %v8305, %v8307
    %v8309 = vrot.slane %v8287, %v8308
    %v8311 = vunpack.c.l.s4 1966171168
    %v8312 = vunpack.c.0.s8 %v8311
    %v8313 = vlaneseq
    %v8314 = vshrl.u32 %v8313, 7
    %v8315 = vsub.s32 %v8312, %v8314
    %v8316 = vrot.slane %v8288, %v8315
    %v8317 = vcombine.high %v8295, %v8295
    %v8318 = vcombine.high %v8302, %v8302
    %v8319 = vcombine.high %v8309, %v8309
    %v8320 = vcombine.high %v8316, %v8316
    %v8321 = vcombine.high %v8257, %v8257
    %v8323 = vunpack.c.l.s4 1966171168
    %v8324 = vunpack.c.0.s8 %v8323
    %v8325 = vlaneseq
    %v8326 = vshrl.u32 %v8325, 7
    %v8327 = vsub.s32 %v8324, %v8326
    %v8328 = vrot.slane %v8257, %v8327
    %v8330 = vunpack.c.l.s4 1966171168
    %v8331 = vunpack.c.0.s8 %v8330
    %v8332 = vlaneseq
    %v8333 = vshrl.u32 %v8332, 7
    %v8334 = vsub.s32 %v8331, %v8333
    %v8335 = vrot.slane %v8321, %v8334
    %v8336 = vcombine.high %v8328, %v8328
    %v8337 = vcombine.high %v8335, %v8335
    %v8339 = vunpack.c.l.s4 1966171168
    %v8340 = vunpack.c.0.s8 %v8339
    %v8341 = vlaneseq
    %v8342 = vshrl.u32 %v8341, 7
    %v8343 = vsub.s32 %v8340, %v8342
    %v8344 = vrot.slane %v8328, %v8343
    %v8346 = vunpack.c.l.s4 1966171168
    %v8347 = vunpack.c.0.s8 %v8346
    %v8348 = vlaneseq
    %v8349 = vshrl.u32 %v8348, 7
    %v8350 = vsub.s32 %v8347, %v8349
    %v8351 = vrot.slane %v8335, %v8350
    %v8353 = vunpack.c.l.s4 1966171168
    %v8354 = vunpack.c.0.s8 %v8353
    %v8355 = vlaneseq
    %v8356 = vshrl.u32 %v8355, 7
    %v8357 = vsub.s32 %v8354, %v8356
    %v8358 = vrot.slane %v8336, %v8357
    %v8360 = vunpack.c.l.s4 1966171168
    %v8361 = vunpack.c.0.s8 %v8360
    %v8362 = vlaneseq
    %v8363 = vshrl.u32 %v8362, 7
    %v8364 = vsub.s32 %v8361, %v8363
    %v8365 = vrot.slane %v8337, %v8364
    %v8366 = vcombine.high %v8344, %v8344
    %v8367 = vcombine.high %v8351, %v8351
    %v8368 = vcombine.high %v8358, %v8358
    %v8369 = vcombine.high %v8365, %v8365
    %v8370 = vcombine.high %v8258, %v8258
    %v8372 = vunpack.c.l.s4 1966171168
    %v8373 = vunpack.c.0.s8 %v8372
    %v8374 = vlaneseq
    %v8375 = vshrl.u32 %v8374, 7
    %v8376 = vsub.s32 %v8373, %v8375
    %v8377 = vrot.slane %v8258, %v8376
    %v8379 = vunpack.c.l.s4 1966171168
    %v8380 = vunpack.c.0.s8 %v8379
    %v8381 = vlaneseq
    %v8382 = vshrl.u32 %v8381, 7
    %v8383 = vsub.s32 %v8380, %v8382
    %v8384 = vrot.slane %v8370, %v8383
    %v8385 = vcombine.high %v8377, %v8377
    %v8386 = vcombine.high %v8384, %v8384
    %v8388 = vunpack.c.l.s4 1966171168
    %v8389 = vunpack.c.0.s8 %v8388
    %v8390 = vlaneseq
    %v8391 = vshrl.u32 %v8390, 7
    %v8392 = vsub.s32 %v8389, %v8391
    %v8393 = vrot.slane %v8377, %v8392
    %v8395 = vunpack.c.l.s4 1966171168
    %v8396 = vunpack.c.0.s8 %v8395
    %v8397 = vlaneseq
    %v8398 = vshrl.u32 %v8397, 7
    %v8399 = vsub.s32 %v8396, %v8398
    %v8400 = vrot.slane %v8384, %v8399
    %v8402 = vunpack.c.l.s4 1966171168
    %v8403 = vunpack.c.0.s8 %v8402
    %v8404 = vlaneseq
    %v8405 = vshrl.u32 %v8404, 7
    %v8406 = vsub.s32 %v8403, %v8405
    %v8407 = vrot.slane %v8385, %v8406
    %v8409 = vunpack.c.l.s4 1966171168
    %v8410 = vunpack.c.0.s8 %v8409
    %v8411 = vlaneseq
    %v8412 = vshrl.u32 %v8411, 7
    %v8413 = vsub.s32 %v8410, %v8412
    %v8414 = vrot.slane %v8386, %v8413
    %v8415 = vcombine.high %v8393, %v8393
    %v8416 = vcombine.high %v8400, %v8400
    %v8417 = vcombine.high %v8407, %v8407
    %v8418 = vcombine.high %v8414, %v8414
    %v8419 = vcombine.high %v8259, %v8259
    %v8421 = vunpack.c.l.s4 1966171168
    %v8422 = vunpack.c.0.s8 %v8421
    %v8423 = vlaneseq
    %v8424 = vshrl.u32 %v8423, 7
    %v8425 = vsub.s32 %v8422, %v8424
    %v8426 = vrot.slane %v8259, %v8425
    %v8428 = vunpack.c.l.s4 1966171168
    %v8429 = vunpack.c.0.s8 %v8428
    %v8430 = vlaneseq
    %v8431 = vshrl.u32 %v8430, 7
    %v8432 = vsub.s32 %v8429, %v8431
    %v8433 = vrot.slane %v8419, %v8432
    %v8434 = vcombine.high %v8426, %v8426
    %v8435 = vcombine.high %v8433, %v8433
    %v8437 = vunpack.c.l.s4 1966171168
    %v8438 = vunpack.c.0.s8 %v8437
    %v8439 = vlaneseq
    %v8440 = vshrl.u32 %v8439, 7
    %v8441 = vsub.s32 %v8438, %v8440
    %v8442 = vrot.slane %v8426, %v8441
    %v8444 = vunpack.c.l.s4 1966171168
    %v8445 = vunpack.c.0.s8 %v8444
    %v8446 = vlaneseq
    %v8447 = vshrl.u32 %v8446, 7
    %v8448 = vsub.s32 %v8445, %v8447
    %v8449 = vrot.slane %v8433, %v8448
    %v8451 = vunpack.c.l.s4 1966171168
    %v8452 = vunpack.c.0.s8 %v8451
    %v8453 = vlaneseq
    %v8454 = vshrl.u32 %v8453, 7
    %v8455 = vsub.s32 %v8452, %v8454
    %v8456 = vrot.slane %v8434, %v8455
    %v8458 = vunpack.c.l.s4 1966171168
    %v8459 = vunpack.c.0.s8 %v8458
    %v8460 = vlaneseq
    %v8461 = vshrl.u32 %v8460, 7
    %v8462 = vsub.s32 %v8459, %v8461
    %v8463 = vrot.slane %v8435, %v8462
    %v8464 = vcombine.high %v8442, %v8442
    %v8465 = vcombine.high %v8449, %v8449
    %v8466 = vcombine.high %v8456, %v8456
    %v8467 = vcombine.high %v8463, %v8463
    %v8468 = vcombine.high %v8260, %v8260
    %v8470 = vunpack.c.l.s4 1966171168
    %v8471 = vunpack.c.0.s8 %v8470
    %v8472 = vlaneseq
    %v8473 = vshrl.u32 %v8472, 7
    %v8474 = vsub.s32 %v8471, %v8473
    %v8475 = vrot.slane %v8260, %v8474
    %v8477 = vunpack.c.l.s4 1966171168
    %v8478 = vunpack.c.0.s8 %v8477
    %v8479 = vlaneseq
    %v8480 = vshrl.u32 %v8479, 7
    %v8481 = vsub.s32 %v8478, %v8480
    %v8482 = vrot.slane %v8468, %v8481
    %v8483 = vcombine.high %v8475, %v8475
    %v8484 = vcombine.high %v8482, %v8482
    %v8486 = vunpack.c.l.s4 1966171168
    %v8487 = vunpack.c.0.s8 %v8486
    %v8488 = vlaneseq
    %v8489 = vshrl.u32 %v8488, 7
    %v8490 = vsub.s32 %v8487, %v8489
    %v8491 = vrot.slane %v8475, %v8490
    %v8493 = vunpack.c.l.s4 1966171168
    %v8494 = vunpack.c.0.s8 %v8493
    %v8495 = vlaneseq
    %v8496 = vshrl.u32 %v8495, 7
    %v8497 = vsub.s32 %v8494, %v8496
    %v8498 = vrot.slane %v8482, %v8497
    %v8500 = vunpack.c.l.s4 1966171168
    %v8501 = vunpack.c.0.s8 %v8500
    %v8502 = vlaneseq
    %v8503 = vshrl.u32 %v8502, 7
    %v8504 = vsub.s32 %v8501, %v8503
    %v8505 = vrot.slane %v8483, %v8504
    %v8507 = vunpack.c.l.s4 1966171168
    %v8508 = vunpack.c.0.s8 %v8507
    %v8509 = vlaneseq
    %v8510 = vshrl.u32 %v8509, 7
    %v8511 = vsub.s32 %v8508, %v8510
    %v8512 = vrot.slane %v8484, %v8511
    %v8513 = vcombine.high %v8491, %v8491
    %v8514 = vcombine.high %v8498, %v8498
    %v8515 = vcombine.high %v8505, %v8505
    %v8516 = vcombine.high %v8512, %v8512
    %v8517 = vcombine.high %v8261, %v8261
    %v8519 = vunpack.c.l.s4 1966171168
    %v8520 = vunpack.c.0.s8 %v8519
    %v8521 = vlaneseq
    %v8522 = vshrl.u32 %v8521, 7
    %v8523 = vsub.s32 %v8520, %v8522
    %v8524 = vrot.slane %v8261, %v8523
    %v8526 = vunpack.c.l.s4 1966171168
    %v8527 = vunpack.c.0.s8 %v8526
    %v8528 = vlaneseq
    %v8529 = vshrl.u32 %v8528, 7
    %v8530 = vsub.s32 %v8527, %v8529
    %v8531 = vrot.slane %v8517, %v8530
    %v8532 = vcombine.high %v8524, %v8524
    %v8533 = vcombine.high %v8531, %v8531
    %v8535 = vunpack.c.l.s4 1966171168
    %v8536 = vunpack.c.0.s8 %v8535
    %v8537 = vlaneseq
    %v8538 = vshrl.u32 %v8537, 7
    %v8539 = vsub.s32 %v8536, %v8538
    %v8540 = vrot.slane %v8524, %v8539
    %v8542 = vunpack.c.l.s4 1966171168
    %v8543 = vunpack.c.0.s8 %v8542
    %v8544 = vlaneseq
    %v8545 = vshrl.u32 %v8544, 7
    %v8546 = vsub.s32 %v8543, %v8545
    %v8547 = vrot.slane %v8531, %v8546
    %v8549 = vunpack.c.l.s4 1966171168
    %v8550 = vunpack.c.0.s8 %v8549
    %v8551 = vlaneseq
    %v8552 = vshrl.u32 %v8551, 7
    %v8553 = vsub.s32 %v8550, %v8552
    %v8554 = vrot.slane %v8532, %v8553
    %v8556 = vunpack.c.l.s4 1966171168
    %v8557 = vunpack.c.0.s8 %v8556
    %v8558 = vlaneseq
    %v8559 = vshrl.u32 %v8558, 7
    %v8560 = vsub.s32 %v8557, %v8559
    %v8561 = vrot.slane %v8533, %v8560
    %v8562 = vcombine.high %v8540, %v8540
    %v8563 = vcombine.high %v8547, %v8547
    %v8564 = vcombine.high %v8554, %v8554
    %v8565 = vcombine.high %v8561, %v8561
    %v8566 = vcombine.high %v8262, %v8262
    %v8568 = vunpack.c.l.s4 1966171168
    %v8569 = vunpack.c.0.s8 %v8568
    %v8570 = vlaneseq
    %v8571 = vshrl.u32 %v8570, 7
    %v8572 = vsub.s32 %v8569, %v8571
    %v8573 = vrot.slane %v8262, %v8572
    %v8575 = vunpack.c.l.s4 1966171168
    %v8576 = vunpack.c.0.s8 %v8575
    %v8577 = vlaneseq
    %v8578 = vshrl.u32 %v8577, 7
    %v8579 = vsub.s32 %v8576, %v8578
    %v8580 = vrot.slane %v8566, %v8579
    %v8581 = vcombine.high %v8573, %v8573
    %v8582 = vcombine.high %v8580, %v8580
    %v8584 = vunpack.c.l.s4 1966171168
    %v8585 = vunpack.c.0.s8 %v8584
    %v8586 = vlaneseq
    %v8587 = vshrl.u32 %v8586, 7
    %v8588 = vsub.s32 %v8585, %v8587
    %v8589 = vrot.slane %v8573, %v8588
    %v8591 = vunpack.c.l.s4 1966171168
    %v8592 = vunpack.c.0.s8 %v8591
    %v8593 = vlaneseq
    %v8594 = vshrl.u32 %v8593, 7
    %v8595 = vsub.s32 %v8592, %v8594
    %v8596 = vrot.slane %v8580, %v8595
    %v8598 = vunpack.c.l.s4 1966171168
    %v8599 = vunpack.c.0.s8 %v8598
    %v8600 = vlaneseq
    %v8601 = vshrl.u32 %v8600, 7
    %v8602 = vsub.s32 %v8599, %v8601
    %v8603 = vrot.slane %v8581, %v8602
    %v8605 = vunpack.c.l.s4 1966171168
    %v8606 = vunpack.c.0.s8 %v8605
    %v8607 = vlaneseq
    %v8608 = vshrl.u32 %v8607, 7
    %v8609 = vsub.s32 %v8606, %v8608
    %v8610 = vrot.slane %v8582, %v8609
    %v8611 = vcombine.high %v8589, %v8589
    %v8612 = vcombine.high %v8596, %v8596
    %v8613 = vcombine.high %v8603, %v8603
    %v8614 = vcombine.high %v8610, %v8610
    %v8616 = vunpack.c.l.s4 1966171168
    %v8617 = vunpack.c.0.s8 %v8616
    %v8618 = vlaneseq
    %v8619 = vshrl.u32 %v8618, 7
    %v8620 = vsub.s32 %v8617, %v8619
    %v8621 = vrot.slane %v8263, %v8620
    %v8622 = vcombine.high %v8621, %v8621
    %v8624 = vunpack.c.l.s4 1966171168
    %v8625 = vunpack.c.0.s8 %v8624
    %v8626 = vlaneseq
    %v8627 = vshrl.u32 %v8626, 7
    %v8628 = vsub.s32 %v8625, %v8627
    %v8629 = vrot.slane %v8621, %v8628
    %v8631 = vunpack.c.l.s4 1966171168
    %v8632 = vunpack.c.0.s8 %v8631
    %v8633 = vlaneseq
    %v8634 = vshrl.u32 %v8633, 7
    %v8635 = vsub.s32 %v8632, %v8634
    %v8636 = vrot.slane %v8622, %v8635
    %v8637 = vcombine.high %v8629, %v8629
    %v8638 = vcombine.high %v8636, %v8636
    %v8639 = vunpack.i.l.s16 %v8295
    %v8640 = vunpack.i.l.s16 %v8309
    %v8641 = vunpack.i.l.s16 %v8317
    %v8642 = vunpack.i.l.s16 %v8319
    %v8643 = vunpack.i.l.s16 %v8302
    %v8644 = vunpack.i.l.s16 %v8316
    %v8645 = vunpack.i.l.s16 %v8318
    %v8646 = vunpack.i.l.s16 %v8320
    %v8647 = vunpack.i.h.s16 %v8320
    %v8648 = vunpack.i.h.s16 %v8344
    %v8649 = vunpack.i.h.s16 %v8358
    %v8650 = vunpack.i.h.s16 %v8366
    %v8651 = vunpack.i.h.s16 %v8368
    %v8652 = vunpack.i.h.s16 %v8351
    %v8653 = vunpack.i.h.s16 %v8365
    %v8654 = vunpack.i.h.s16 %v8367
    %v8655 = vunpack.i.l.s16 %v8369
    %v8656 = vunpack.i.l.s16 %v8393
    %v8657 = vunpack.i.l.s16 %v8407
    %v8658 = vunpack.i.l.s16 %v8415
    %v8659 = vunpack.i.l.s16 %v8417
    %v8660 = vunpack.i.l.s16 %v8400
    %v8661 = vunpack.i.l.s16 %v8414
    %v8662 = vunpack.i.l.s16 %v8416
    %v8663 = vunpack.i.h.s16 %v8416
    %v8664 = vunpack.i.h.s16 %v8418
    %v8665 = vunpack.i.h.s16 %v8442
    %v8666 = vunpack.i.h.s16 %v8456
    %v8667 = vunpack.i.h.s16 %v8464
    %v8668 = vunpack.i.h.s16 %v8466
    %v8669 = vunpack.i.h.s16 %v8449
    %v8670 = vunpack.i.h.s16 %v8463
    %v8671 = vunpack.i.l.s16 %v8465
    %v8672 = vunpack.i.l.s16 %v8467
    %v8673 = vunpack.i.l.s16 %v8491
    %v8674 = vunpack.i.l.s16 %v8505
    %v8675 = vunpack.i.l.s16 %v8513
    %v8676 = vunpack.i.l.s16 %v8515
    %v8677 = vunpack.i.l.s16 %v8498
    %v8678 = vunpack.i.l.s16 %v8512
    %v8679 = vunpack.i.h.s16 %v8512
    %v8680 = vunpack.i.h.s16 %v8514
    %v8681 = vunpack.i.h.s16 %v8516
    %v8682 = vunpack.i.h.s16 %v8540
    %v8683 = vunpack.i.h.s16 %v8554
    %v8684 = vunpack.i.h.s16 %v8562
    %v8685 = vunpack.i.h.s16 %v8564
    %v8686 = vunpack.i.h.s16 %v8547
    %v8687 = vunpack.i.l.s16 %v8561
    %v8688 = vunpack.i.l.s16 %v8563
    %v8689 = vunpack.i.l.s16 %v8565
    %v8690 = vunpack.i.l.s16 %v8589
    %v8691 = vunpack.i.l.s16 %v8603
    %v8692 = vunpack.i.l.s16 %v8611
    %v8693 = vunpack.i.l.s16 %v8613
    %v8694 = vunpack.i.l.s16 %v8596
    %v8695 = vunpack.i.h.s16 %v8596
    %v8696 = vunpack.i.h.s16 %v8610
    %v8697 = vunpack.i.h.s16 %v8612
    %v8698 = vunpack.i.h.s16 %v8614
    %v8699 = vunpack.i.h.s16 %v8629
    %v8700 = vunpack.i.h.s16 %v8636
    %v8701 = vunpack.i.h.s16 %v8637
    %v8702 = vunpack.i.h.s16 %v8638
    %v8703 = vpack.c.b16 %v8639, %v8639
    %v8704 = vpack.c.b16 %v8640, %v8640
    %v8705 = vpack.c.b16 %v8641, %v8641
    %v8706 = vpack.c.b16 %v8642, %v8642
    %v8707 = vpack.c.b16 %v8643, %v8643
    %v8708 = vpack.c.b16 %v8644, %v8644
    %v8709 = vpack.c.b16 %v8645, %v8645
    %v8710 = vpack.c.b16 %v8646, %v8646
    %v8711 = vpack.c.b16 %v8647, %v8647
    %v8712 = vpack.c.b16 %v8648, %v8648
    %v8713 = vpack.c.b16 %v8649, %v8649
    %v8714 = vpack.c.b16 %v8650, %v8650
    %v8715 = vpack.c.b16 %v8651, %v8651
    %v8716 = vpack.c.b16 %v8652, %v8652
    %v8717 = vpack.c.b16 %v8653, %v8653
    %v8718 = vpack.c.b16 %v8654, %v8654
    %v8719 = vpack.c.b16 %v8655, %v8655
    %v8720 = vpack.c.b16 %v8656, %v8656
    %v8721 = vpack.c.b16 %v8657, %v8657
    %v8722 = vpack.c.b16 %v8658, %v8658
    %v8723 = vpack.c.b16 %v8659, %v8659
    %v8724 = vpack.c.b16 %v8660, %v8660
    %v8725 = vpack.c.b16 %v8661, %v8661
    %v8726 = vpack.c.b16 %v8662, %v8662
    %v8727 = vpack.c.b16 %v8663, %v8663
    %v8728 = vpack.c.b16 %v8664, %v8664
    %v8729 = vpack.c.b16 %v8665, %v8665
    %v8730 = vpack.c.b16 %v8666, %v8666
    %v8731 = vpack.c.b16 %v8667, %v8667
    %v8732 = vpack.c.b16 %v8668, %v8668
    %v8733 = vpack.c.b16 %v8669, %v8669
    %v8734 = vpack.c.b16 %v8670, %v8670
    %v8735 = vpack.c.b16 %v8671, %v8671
    %v8736 = vpack.c.b16 %v8672, %v8672
    %v8737 = vpack.c.b16 %v8673, %v8673
    %v8738 = vpack.c.b16 %v8674, %v8674
    %v8739 = vpack.c.b16 %v8675, %v8675
    %v8740 = vpack.c.b16 %v8676, %v8676
    %v8741 = vpack.c.b16 %v8677, %v8677
    %v8742 = vpack.c.b16 %v8678, %v8678
    %v8743 = vpack.c.b16 %v8679, %v8679
    %v8744 = vpack.c.b16 %v8680, %v8680
    %v8745 = vpack.c.b16 %v8681, %v8681
    %v8746 = vpack.c.b16 %v8682, %v8682
    %v8747 = vpack.c.b16 %v8683, %v8683
    %v8748 = vpack.c.b16 %v8684, %v8684
    %v8749 = vpack.c.b16 %v8685, %v8685
    %v8750 = vpack.c.b16 %v8686, %v8686
    %v8751 = vpack.c.b16 %v8687, %v8687
    %v8752 = vpack.c.b16 %v8688, %v8688
    %v8753 = vpack.c.b16 %v8689, %v8689
    %v8754 = vpack.c.b16 %v8690, %v8690
    %v8755 = vpack.c.b16 %v8691, %v8691
    %v8756 = vpack.c.b16 %v8692, %v8692
    %v8757 = vpack.c.b16 %v8693, %v8693
    %v8758 = vpack.c.b16 %v8694, %v8694
    %v8759 = vpack.c.b16 %v8695, %v8695
    %v8760 = vpack.c.b16 %v8696, %v8696
    %v8761 = vpack.c.b16 %v8697, %v8697
    %v8762 = vpack.c.b16 %v8698, %v8698
    %v8763 = vpack.c.b16 %v8699, %v8699
    %v8764 = vpack.c.b16 %v8700, %v8700
    %v8765 = vpack.c.b16 %v8701, %v8701
    %v8766 = vpack.c.b16 %v8702, %v8702
    %v8831 = vadd.bf16 %v8703, %v8704
    %v8832 = vadd.bf16 %v8711, %v8712
    %v8833 = vadd.bf16 %v8719, %v8720
    %v8834 = vadd.bf16 %v8727, %v8728
    %v8835 = vadd.bf16 %v8735, %v8736
    %v8836 = vadd.bf16 %v8743, %v8744
    %v8837 = vadd.bf16 %v8751, %v8752
    %v8838 = vadd.bf16 %v8759, %v8760
    %v8839 = vld [vmem:[#allocation4] sm:$0xf]
    %v8840 = vld [vmem:[#allocation4 + $0x4] sm:$0xf]
    %v8841 = vld [vmem:[#allocation4 + $0x8] sm:$0xf]
    %v8842 = vld [vmem:[#allocation4 + $0xc] sm:$0xf]
    %v8843 = vld [vmem:[#allocation4 + $0x10] sm:$0xf]
    %v8844 = vld [vmem:[#allocation4 + $0x14] sm:$0xf]
    %v8845 = vld [vmem:[#allocation4 + $0x18] sm:$0xf]
    %v8846 = vld [vmem:[#allocation4 + $0x1c] sm:$0xf]
    %v8847 = vadd.bf16 %v8705, %v8706
    %v8848 = vadd.bf16 %v8713, %v8714
    %v8849 = vadd.bf16 %v8721, %v8722
    %v8850 = vadd.bf16 %v8729, %v8730
    %v8851 = vadd.bf16 %v8737, %v8738
    %v8852 = vadd.bf16 %v8745, %v8746
    %v8853 = vadd.bf16 %v8753, %v8754
    %v8854 = vadd.bf16 %v8761, %v8762
    %s8855 = scalar_lea.vmem [#allocation4], 32
    %v8856 = vld [vmem:[%s8855] sm:$0xf]
    %v8857 = vld [vmem:[%s8855 + $0x4] sm:$0xf]
    %v8858 = vld [vmem:[%s8855 + $0x8] sm:$0xf]
    %v8859 = vld [vmem:[%s8855 + $0xc] sm:$0xf]
    %v8860 = vld [vmem:[%s8855 + $0x10] sm:$0xf]
    %v8861 = vld [vmem:[%s8855 + $0x14] sm:$0xf]
    %v8862 = vld [vmem:[%s8855 + $0x18] sm:$0xf]
    %v8863 = vld [vmem:[%s8855 + $0x1c] sm:$0xf]
    %v8872 = vunpack.c.l.b16 %v8847
    %v8873 = vunpack.c.l.b16 %v8848
    %v8874 = vunpack.c.l.b16 %v8849
    %v8875 = vunpack.c.l.b16 %v8850
    %v8876 = vunpack.c.l.b16 %v8851
    %v8877 = vunpack.c.l.b16 %v8852
    %v8878 = vunpack.c.l.b16 %v8853
    %v8879 = vunpack.c.l.b16 %v8854
    %v8880 = vpack.i.b16 %v8873, %v8872
    %v8881 = vpack.i.b16 %v8875, %v8874
    %v8882 = vpack.i.b16 %v8877, %v8876
    %v8883 = vpack.i.b16 %v8879, %v8878
    %v8884 = vcombine.low %v8880, %v8881
    %v8885 = vcombine.low %v8882, %v8883
    %v8887 = vunpack.c.l.s4 1966171168
    %v8888 = vunpack.c.0.s8 %v8887
    %v8889 = vlaneseq
    %v8890 = vshrl.u32 %v8889, 7
    %v8891 = vsub.s32 %v8888, %v8890
    %v8892 = vrot.slane %v8884, %v8891
    %v8894 = vunpack.c.l.s4 1966171168
    %v8895 = vunpack.c.0.s8 %v8894
    %v8896 = vlaneseq
    %v8897 = vshrl.u32 %v8896, 7
    %v8898 = vsub.s32 %v8895, %v8897
    %v8899 = vrot.slane %v8885, %v8898
    %v8900 = vcombine.low %v8892, %v8899
    %v8902 = vunpack.c.l.s4 1966171168
    %v8903 = vunpack.c.0.s8 %v8902
    %v8904 = vlaneseq
    %v8905 = vshrl.u32 %v8904, 7
    %v8906 = vsub.s32 %v8903, %v8905
    %v8907 = vrot.slane %v8900, %v8906
    %v8916 = vunpack.c.l.b16 %v8856
    %v8917 = vunpack.c.l.b16 %v8857
    %v8918 = vunpack.c.l.b16 %v8858
    %v8919 = vunpack.c.l.b16 %v8859
    %v8920 = vunpack.c.l.b16 %v8860
    %v8921 = vunpack.c.l.b16 %v8861
    %v8922 = vunpack.c.l.b16 %v8862
    %v8923 = vunpack.c.l.b16 %v8863
    %v8924 = vpack.c.b16 %v8917, %v8916
    %v8925 = vpack.c.b16 %v8919, %v8918
    %v8926 = vpack.c.b16 %v8921, %v8920
    %v8927 = vpack.c.b16 %v8923, %v8922
    %vm8932 = vcmask 523264
    %v8934 = vsel %vm8932, %v8907, 0
    %8936 = vmatprep.subr.bf16.mxu0 0
    %8937 = vmatpush1.bf16.msra.mxu0 %v8924
    %8938 = vmatprep.subr.bf16.mxu0 0
    %8939 = vmatpush1.bf16.msra.mxu0 %v8925
    %8940 = vmatprep.subr.bf16.mxu0 0
    %8941 = vmatpush1.bf16.msra.mxu0 %v8926
    %8942 = vmatprep.subr.bf16.mxu0 0
    %8943 = vmatpush1.bf16.msra.mxu0 %v8927
    %8944 = vmatprep.subr.bf16.mxu0 0
    %8945 = vmatpush1.bf16.msra.mxu0 0
    %8946 = vmatprep.subr.bf16.mxu0 0
    %8947 = vmatpush1.bf16.msra.mxu0 0
    %8948 = vmatprep.subr.bf16.mxu0 0
    %8949 = vmatpush1.bf16.msra.mxu0 0
    %8950 = vmatprep.subr.bf16.mxu0 0
    %8951 = vmatpush1.bf16.msra.mxu0 0
    %8952 = vmatprep.subr.bf16.mxu0 0
    %8953 = vmatpush1.bf16.msra.mxu0 0
    %8954 = vmatprep.subr.bf16.mxu0 0
    %8955 = vmatpush1.bf16.msra.mxu0 0
    %8956 = vmatprep.subr.bf16.mxu0 0
    %8957 = vmatpush1.bf16.msra.mxu0 0
    %8958 = vmatprep.subr.bf16.mxu0 0
    %8959 = vmatpush1.bf16.msra.mxu0 0
    %8960 = vmatprep.subr.bf16.mxu0 0
    %8961 = vmatpush1.bf16.msra.mxu0 0
    %8962 = vmatprep.subr.bf16.mxu0 0
    %8963 = vmatpush1.bf16.msra.mxu0 0
    %8964 = vmatprep.subr.bf16.mxu0 0
    %8965 = vmatpush1.bf16.msra.mxu0 0
    %8966 = vmatprep.subr.bf16.mxu0 0
    %8967 = vmatpush1.bf16.msra.mxu0 0
    %8968 = vmatprep.mubr.bf16.mxu0 0
    %8969 = vmatmul.mubr.bf16.gmra.mrb[0].mxu0 %v8934
    %v8970 = vpop.f32.mrb[0].mxu0
    %v8971 = vadd.f32 0.0, %v8970
    %v8972 = vpop.f32.mrb[0].mxu0
    %v8973 = vpop.f32.mrb[0].mxu0
    %v8974 = vpop.f32.mrb[0].mxu0
    %8975 = vdwg.mxu0
    %v8984 = vunpack.c.l.b16 %v8831
    %v8985 = vunpack.c.l.b16 %v8832
    %v8986 = vunpack.c.l.b16 %v8833
    %v8987 = vunpack.c.l.b16 %v8834
    %v8988 = vunpack.c.l.b16 %v8835
    %v8989 = vunpack.c.l.b16 %v8836
    %v8990 = vunpack.c.l.b16 %v8837
    %v8991 = vunpack.c.l.b16 %v8838
    %v8992 = vpack.i.b16 %v8985, %v8984
    %v8993 = vpack.i.b16 %v8987, %v8986
    %v8994 = vpack.i.b16 %v8989, %v8988
    %v8995 = vpack.i.b16 %v8991, %v8990
    %v8996 = vcombine.low %v8992, %v8993
    %v8997 = vcombine.low %v8994, %v8995
    %v8999 = vunpack.c.l.s4 1966171168
    %v9000 = vunpack.c.0.s8 %v8999
    %v9001 = vlaneseq
    %v9002 = vshrl.u32 %v9001, 7
    %v9003 = vsub.s32 %v9000, %v9002
    %v9004 = vrot.slane %v8996, %v9003
    %v9006 = vunpack.c.l.s4 1966171168
    %v9007 = vunpack.c.0.s8 %v9006
    %v9008 = vlaneseq
    %v9009 = vshrl.u32 %v9008, 7
    %v9010 = vsub.s32 %v9007, %v9009
    %v9011 = vrot.slane %v8997, %v9010
    %v9012 = vcombine.low %v9004, %v9011
    %v9014 = vunpack.c.l.s4 1966171168
    %v9015 = vunpack.c.0.s8 %v9014
    %v9016 = vlaneseq
    %v9017 = vshrl.u32 %v9016, 7
    %v9018 = vsub.s32 %v9015, %v9017
    %v9019 = vrot.slane %v9012, %v9018
    %v9028 = vunpack.c.l.b16 %v8839
    %v9029 = vunpack.c.l.b16 %v8840
    %v9030 = vunpack.c.l.b16 %v8841
    %v9031 = vunpack.c.l.b16 %v8842
    %v9032 = vunpack.c.l.b16 %v8843
    %v9033 = vunpack.c.l.b16 %v8844
    %v9034 = vunpack.c.l.b16 %v8845
    %v9035 = vunpack.c.l.b16 %v8846
    %v9036 = vpack.c.b16 %v9029, %v9028
    %v9037 = vpack.c.b16 %v9031, %v9030
    %v9038 = vpack.c.b16 %v9033, %v9032
    %v9039 = vpack.c.b16 %v9035, %v9034
    %v9045 = vsel %vm8932, %v9019, 0
    %9047 = vmatprep.subr.bf16.mxu0 0
    %9048 = vmatpush1.bf16.msra.mxu0 %v9036
    %9049 = vmatprep.subr.bf16.mxu0 0
    %9050 = vmatpush1.bf16.msra.mxu0 %v9037
    %9051 = vmatprep.subr.bf16.mxu0 0
    %9052 = vmatpush1.bf16.msra.mxu0 %v9038
    %9053 = vmatprep.subr.bf16.mxu0 0
    %9054 = vmatpush1.bf16.msra.mxu0 %v9039
    %9055 = vmatprep.subr.bf16.mxu0 0
    %9056 = vmatpush1.bf16.msra.mxu0 0
    %9057 = vmatprep.subr.bf16.mxu0 0
    %9058 = vmatpush1.bf16.msra.mxu0 0
    %9059 = vmatprep.subr.bf16.mxu0 0
    %9060 = vmatpush1.bf16.msra.mxu0 0
    %9061 = vmatprep.subr.bf16.mxu0 0
    %9062 = vmatpush1.bf16.msra.mxu0 0
    %9063 = vmatprep.subr.bf16.mxu0 0
    %9064 = vmatpush1.bf16.msra.mxu0 0
    %9065 = vmatprep.subr.bf16.mxu0 0
    %9066 = vmatpush1.bf16.msra.mxu0 0
    %9067 = vmatprep.subr.bf16.mxu0 0
    %9068 = vmatpush1.bf16.msra.mxu0 0
    %9069 = vmatprep.subr.bf16.mxu0 0
    %9070 = vmatpush1.bf16.msra.mxu0 0
    %9071 = vmatprep.subr.bf16.mxu0 0
    %9072 = vmatpush1.bf16.msra.mxu0 0
    %9073 = vmatprep.subr.bf16.mxu0 0
    %9074 = vmatpush1.bf16.msra.mxu0 0
    %9075 = vmatprep.subr.bf16.mxu0 0
    %9076 = vmatpush1.bf16.msra.mxu0 0
    %9077 = vmatprep.subr.bf16.mxu0 0
    %9078 = vmatpush1.bf16.msra.mxu0 0
    %9079 = vmatprep.mubr.bf16.mxu0 0
    %9080 = vmatmul.mubr.bf16.gmra.mrb[0].mxu0 %v9045
    %v9081 = vpop.f32.mrb[0].mxu0
    %v9082 = vadd.f32 %v8971, %v9081
    %v9083 = vpop.f32.mrb[0].mxu0
    %v9084 = vpop.f32.mrb[0].mxu0
    %v9085 = vpop.f32.mrb[0].mxu0
    %9086 = vdwg.mxu0
    %v9087 = vadd.bf16 %v8707, %v8708
    %v9088 = vadd.bf16 %v8715, %v8716
    %v9089 = vadd.bf16 %v8723, %v8724
    %v9090 = vadd.bf16 %v8731, %v8732
    %v9091 = vadd.bf16 %v8739, %v8740
    %v9092 = vadd.bf16 %v8747, %v8748
    %v9093 = vadd.bf16 %v8755, %v8756
    %v9094 = vadd.bf16 %v8763, %v8764
    %s9095 = scalar_lea.vmem [#allocation4], 64
    %v9096 = vld [vmem:[%s9095] sm:$0xf]
    %v9097 = vld [vmem:[%s9095 + $0x4] sm:$0xf]
    %v9098 = vld [vmem:[%s9095 + $0x8] sm:$0xf]
    %v9099 = vld [vmem:[%s9095 + $0xc] sm:$0xf]
    %v9100 = vld [vmem:[%s9095 + $0x10] sm:$0xf]
    %v9101 = vld [vmem:[%s9095 + $0x14] sm:$0xf]
    %v9102 = vld [vmem:[%s9095 + $0x18] sm:$0xf]
    %v9103 = vld [vmem:[%s9095 + $0x1c] sm:$0xf]
    %v9112 = vunpack.c.l.b16 %v9087
    %v9113 = vunpack.c.l.b16 %v9088
    %v9114 = vunpack.c.l.b16 %v9089
    %v9115 = vunpack.c.l.b16 %v9090
    %v9116 = vunpack.c.l.b16 %v9091
    %v9117 = vunpack.c.l.b16 %v9092
    %v9118 = vunpack.c.l.b16 %v9093
    %v9119 = vunpack.c.l.b16 %v9094
    %v9120 = vpack.i.b16 %v9113, %v9112
    %v9121 = vpack.i.b16 %v9115, %v9114
    %v9122 = vpack.i.b16 %v9117, %v9116
    %v9123 = vpack.i.b16 %v9119, %v9118
    %v9124 = vcombine.low %v9120, %v9121
    %v9125 = vcombine.low %v9122, %v9123
    %v9127 = vunpack.c.l.s4 1966171168
    %v9128 = vunpack.c.0.s8 %v9127
    %v9129 = vlaneseq
    %v9130 = vshrl.u32 %v9129, 7
    %v9131 = vsub.s32 %v9128, %v9130
    %v9132 = vrot.slane %v9124, %v9131
    %v9134 = vunpack.c.l.s4 1966171168
    %v9135 = vunpack.c.0.s8 %v9134
    %v9136 = vlaneseq
    %v9137 = vshrl.u32 %v9136, 7
    %v9138 = vsub.s32 %v9135, %v9137
    %v9139 = vrot.slane %v9125, %v9138
    %v9140 = vcombine.low %v9132, %v9139
    %v9142 = vunpack.c.l.s4 1966171168
    %v9143 = vunpack.c.0.s8 %v9142
    %v9144 = vlaneseq
    %v9145 = vshrl.u32 %v9144, 7
    %v9146 = vsub.s32 %v9143, %v9145
    %v9147 = vrot.slane %v9140, %v9146
    %v9156 = vunpack.c.l.b16 %v9096
    %v9157 = vunpack.c.l.b16 %v9097
    %v9158 = vunpack.c.l.b16 %v9098
    %v9159 = vunpack.c.l.b16 %v9099
    %v9160 = vunpack.c.l.b16 %v9100
    %v9161 = vunpack.c.l.b16 %v9101
    %v9162 = vunpack.c.l.b16 %v9102
    %v9163 = vunpack.c.l.b16 %v9103
    %v9164 = vpack.c.b16 %v9157, %v9156
    %v9165 = vpack.c.b16 %v9159, %v9158
    %v9166 = vpack.c.b16 %v9161, %v9160
    %v9167 = vpack.c.b16 %v9163, %v9162
    %v9173 = vsel %vm8932, %v9147, 0
    %9175 = vmatprep.subr.bf16.mxu0 0
    %9176 = vmatpush1.bf16.msra.mxu0 %v9164
    %9177 = vmatprep.subr.bf16.mxu0 0
    %9178 = vmatpush1.bf16.msra.mxu0 %v9165
    %9179 = vmatprep.subr.bf16.mxu0 0
    %9180 = vmatpush1.bf16.msra.mxu0 %v9166
    %9181 = vmatprep.subr.bf16.mxu0 0
    %9182 = vmatpush1.bf16.msra.mxu0 %v9167
    %9183 = vmatprep.subr.bf16.mxu0 0
    %9184 = vmatpush1.bf16.msra.mxu0 0
    %9185 = vmatprep.subr.bf16.mxu0 0
    %9186 = vmatpush1.bf16.msra.mxu0 0
    %9187 = vmatprep.subr.bf16.mxu0 0
    %9188 = vmatpush1.bf16.msra.mxu0 0
    %9189 = vmatprep.subr.bf16.mxu0 0
    %9190 = vmatpush1.bf16.msra.mxu0 0
    %9191 = vmatprep.subr.bf16.mxu0 0
    %9192 = vmatpush1.bf16.msra.mxu0 0
    %9193 = vmatprep.subr.bf16.mxu0 0
    %9194 = vmatpush1.bf16.msra.mxu0 0
    %9195 = vmatprep.subr.bf16.mxu0 0
    %9196 = vmatpush1.bf16.msra.mxu0 0
    %9197 = vmatprep.subr.bf16.mxu0 0
    %9198 = vmatpush1.bf16.msra.mxu0 0
    %9199 = vmatprep.subr.bf16.mxu0 0
    %9200 = vmatpush1.bf16.msra.mxu0 0
    %9201 = vmatprep.subr.bf16.mxu0 0
    %9202 = vmatpush1.bf16.msra.mxu0 0
    %9203 = vmatprep.subr.bf16.mxu0 0
    %9204 = vmatpush1.bf16.msra.mxu0 0
    %9205 = vmatprep.subr.bf16.mxu0 0
    %9206 = vmatpush1.bf16.msra.mxu0 0
    %9207 = vmatprep.mubr.bf16.mxu0 0
    %9208 = vmatmul.mubr.bf16.gmra.mrb[0].mxu0 %v9173
    %v9209 = vpop.f32.mrb[0].mxu0
    %v9210 = vadd.f32 0.0, %v9209
    %v9211 = vpop.f32.mrb[0].mxu0
    %v9212 = vpop.f32.mrb[0].mxu0
    %v9213 = vpop.f32.mrb[0].mxu0
    %9214 = vdwg.mxu0
    %v9215 = vadd.f32 %v9082, %v9210
    %v9216 = vadd.bf16 %v8709, %v8710
    %v9217 = vadd.bf16 %v8717, %v8718
    %v9218 = vadd.bf16 %v8725, %v8726
    %v9219 = vadd.bf16 %v8733, %v8734
    %v9220 = vadd.bf16 %v8741, %v8742
    %v9221 = vadd.bf16 %v8749, %v8750
    %v9222 = vadd.bf16 %v8757, %v8758
    %v9223 = vadd.bf16 %v8765, %v8766
    %s9224 = scalar_lea.vmem [#allocation4], 96
    %v9225 = vld [vmem:[%s9224] sm:$0xf]
    %v9226 = vld [vmem:[%s9224 + $0x4] sm:$0xf]
    %v9227 = vld [vmem:[%s9224 + $0x8] sm:$0xf]
    %v9228 = vld [vmem:[%s9224 + $0xc] sm:$0xf]
    %v9229 = vld [vmem:[%s9224 + $0x10] sm:$0xf]
    %v9230 = vld [vmem:[%s9224 + $0x14] sm:$0xf]
    %v9231 = vld [vmem:[%s9224 + $0x18] sm:$0xf]
    %v9232 = vld [vmem:[%s9224 + $0x1c] sm:$0xf]
    %v9241 = vunpack.c.l.b16 %v9216
    %v9242 = vunpack.c.l.b16 %v9217
    %v9243 = vunpack.c.l.b16 %v9218
    %v9244 = vunpack.c.l.b16 %v9219
    %v9245 = vunpack.c.l.b16 %v9220
    %v9246 = vunpack.c.l.b16 %v9221
    %v9247 = vunpack.c.l.b16 %v9222
    %v9248 = vunpack.c.l.b16 %v9223
    %v9249 = vpack.i.b16 %v9242, %v9241
    %v9250 = vpack.i.b16 %v9244, %v9243
    %v9251 = vpack.i.b16 %v9246, %v9245
    %v9252 = vpack.i.b16 %v9248, %v9247
    %v9253 = vcombine.low %v9249, %v9250
    %v9254 = vcombine.low %v9251, %v9252
    %v9256 = vunpack.c.l.s4 1966171168
    %v9257 = vunpack.c.0.s8 %v9256
    %v9258 = vlaneseq
    %v9259 = vshrl.u32 %v9258, 7
    %v9260 = vsub.s32 %v9257, %v9259
    %v9261 = vrot.slane %v9253, %v9260
    %v9263 = vunpack.c.l.s4 1966171168
    %v9264 = vunpack.c.0.s8 %v9263
    %v9265 = vlaneseq
    %v9266 = vshrl.u32 %v9265, 7
    %v9267 = vsub.s32 %v9264, %v9266
    %v9268 = vrot.slane %v9254, %v9267
    %v9269 = vcombine.low %v9261, %v9268
    %v9271 = vunpack.c.l.s4 1966171168
    %v9272 = vunpack.c.0.s8 %v9271
    %v9273 = vlaneseq
    %v9274 = vshrl.u32 %v9273, 7
    %v9275 = vsub.s32 %v9272, %v9274
    %v9276 = vrot.slane %v9269, %v9275
    %v9285 = vunpack.c.l.b16 %v9225
    %v9286 = vunpack.c.l.b16 %v9226
    %v9287 = vunpack.c.l.b16 %v9227
    %v9288 = vunpack.c.l.b16 %v9228
    %v9289 = vunpack.c.l.b16 %v9229
    %v9290 = vunpack.c.l.b16 %v9230
    %v9291 = vunpack.c.l.b16 %v9231
    %v9292 = vunpack.c.l.b16 %v9232
    %v9293 = vpack.c.b16 %v9286, %v9285
    %v9294 = vpack.c.b16 %v9288, %v9287
    %v9295 = vpack.c.b16 %v9290, %v9289
    %v9296 = vpack.c.b16 %v9292, %v9291
    %v9302 = vsel %vm8932, %v9276, 0
    %9304 = vmatprep.subr.bf16.mxu0 0
    %9305 = vmatpush1.bf16.msra.mxu0 %v9293
    %9306 = vmatprep.subr.bf16.mxu0 0
    %9307 = vmatpush1.bf16.msra.mxu0 %v9294
    %9308 = vmatprep.subr.bf16.mxu0 0
    %9309 = vmatpush1.bf16.msra.mxu0 %v9295
    %9310 = vmatprep.subr.bf16.mxu0 0
    %9311 = vmatpush1.bf16.msra.mxu0 %v9296
    %9312 = vmatprep.subr.bf16.mxu0 0
    %9313 = vmatpush1.bf16.msra.mxu0 0
    %9314 = vmatprep.subr.bf16.mxu0 0
    %9315 = vmatpush1.bf16.msra.mxu0 0
    %9316 = vmatprep.subr.bf16.mxu0 0
    %9317 = vmatpush1.bf16.msra.mxu0 0
    %9318 = vmatprep.subr.bf16.mxu0 0
    %9319 = vmatpush1.bf16.msra.mxu0 0
    %9320 = vmatprep.subr.bf16.mxu0 0
    %9321 = vmatpush1.bf16.msra.mxu0 0
    %9322 = vmatprep.subr.bf16.mxu0 0
    %9323 = vmatpush1.bf16.msra.mxu0 0
    %9324 = vmatprep.subr.bf16.mxu0 0
    %9325 = vmatpush1.bf16.msra.mxu0 0
    %9326 = vmatprep.subr.bf16.mxu0 0
    %9327 = vmatpush1.bf16.msra.mxu0 0
    %9328 = vmatprep.subr.bf16.mxu0 0
    %9329 = vmatpush1.bf16.msra.mxu0 0
    %9330 = vmatprep.subr.bf16.mxu0 0
    %9331 = vmatpush1.bf16.msra.mxu0 0
    %9332 = vmatprep.subr.bf16.mxu0 0
    %9333 = vmatpush1.bf16.msra.mxu0 0
    %9334 = vmatprep.subr.bf16.mxu0 0
    %9335 = vmatpush1.bf16.msra.mxu0 0
    %9336 = vmatprep.mubr.bf16.mxu0 0
    %9337 = vmatmul.mubr.bf16.gmra.mrb[0].mxu0 %v9302
    %v9338 = vpop.f32.mrb[0].mxu0
    %v9339 = vadd.f32 0.0, %v9338
    %v9340 = vpop.f32.mrb[0].mxu0
    %v9341 = vpop.f32.mrb[0].mxu0
    %v9342 = vpop.f32.mrb[0].mxu0
    %9343 = vdwg.mxu0
    %v9344 = vadd.f32 %v9215, %v9339
    %v9345 = vld [vmem:[#allocation6] sm:$0x1]
    %v9347 = vlaneseq
    %v9348 = vshrl.u32 %v9347, 7
    %v9349 = vsub.s32 0, %v9348
    %v9350 = vrot.slane %v9345, %v9349
    %v9352 = vadd.f32 %v9344, %v9350
    %v9353 = vmax.f32 %v9352, 0.0
    %v9354 = vpack.c.bf16 %v9353, %v9353
    %v9355 = vld [vmem:[%s9] sm:$0xf]
    %v9356 = vld [vmem:[%s9 + $0x4] sm:$0xf]
    %v9357 = vld [vmem:[%s9 + $0x8] sm:$0xf]
    %v9358 = vld [vmem:[%s9 + $0xc] sm:$0xf]
    %v9359 = vld [vmem:[%s9 + $0x10] sm:$0xf]
    %v9360 = vld [vmem:[%s9 + $0x14] sm:$0xf]
    %v9361 = vld [vmem:[%s9 + $0x18] sm:$0xf]
    %v9362 = vld [vmem:[%s9 + $0x1c] sm:$0xf]
    %v9363 = vld [vmem:[%s9 + $0x20] sm:$0xf]
    %v9364 = vld [vmem:[%s9 + $0x24] sm:$0xf]
    %v9365 = vld [vmem:[%s9 + $0x28] sm:$0xf]
    %v9366 = vld [vmem:[%s9 + $0x2c] sm:$0xf]
    %v9367 = vld [vmem:[%s9 + $0x30] sm:$0xf]
    %v9368 = vld [vmem:[%s9 + $0x34] sm:$0xf]
    %v9369 = vld [vmem:[%s9 + $0x38] sm:$0xf]
    %v9370 = vld [vmem:[#allocation7] sm:$0x1]
    %v9372 = vlaneseq
    %v9373 = vshrl.u32 %v9372, 7
    %v9374 = vsub.s32 0, %v9373
    %v9375 = vrot.slane %v9370, %v9374
    %v9392 = vunpack.c.l.b16 %v9355
    %v9393 = vunpack.c.l.b16 %v9356
    %v9394 = vunpack.c.l.b16 %v9357
    %v9395 = vunpack.c.l.b16 %v9358
    %v9396 = vunpack.c.l.b16 %v9359
    %v9397 = vunpack.c.l.b16 %v9360
    %v9398 = vunpack.c.l.b16 %v9361
    %v9399 = vunpack.c.l.b16 %v9362
    %v9400 = vunpack.c.l.b16 %v9363
    %v9401 = vunpack.c.l.b16 %v9364
    %v9402 = vunpack.c.l.b16 %v9365
    %v9403 = vunpack.c.l.b16 %v9366
    %v9404 = vunpack.c.l.b16 %v9367
    %v9405 = vunpack.c.l.b16 %v9368
    %v9406 = vunpack.c.l.b16 %v9369
    %v9407 = vpack.c.b16 %v9393, %v9392
    %v9408 = vpack.c.b16 %v9395, %v9394
    %v9409 = vpack.c.b16 %v9397, %v9396
    %v9410 = vpack.c.b16 %v9399, %v9398
    %v9411 = vpack.c.b16 %v9401, %v9400
    %v9412 = vpack.c.b16 %v9403, %v9402
    %v9413 = vpack.c.b16 %v9405, %v9404
    %v9414 = vpack.c.b16 %v9406, %v9406
    %vm9422 = vcmask 982016
    %v9424 = vsel %vm9422, %v9354, 0
    %v9427 = vsel %vm3644, %v9414, 0
    %9429 = vmatprep.subr.bf16.mxu0 0
    %9430 = vmatpush1.bf16.msra.mxu0 %v9407
    %9431 = vmatprep.subr.bf16.mxu0 0
    %9432 = vmatpush1.bf16.msra.mxu0 %v9408
    %9433 = vmatprep.subr.bf16.mxu0 0
    %9434 = vmatpush1.bf16.msra.mxu0 %v9409
    %9435 = vmatprep.subr.bf16.mxu0 0
    %9436 = vmatpush1.bf16.msra.mxu0 %v9410
    %9437 = vmatprep.subr.bf16.mxu0 0
    %9438 = vmatpush1.bf16.msra.mxu0 %v9411
    %9439 = vmatprep.subr.bf16.mxu0 0
    %9440 = vmatpush1.bf16.msra.mxu0 %v9412
    %9441 = vmatprep.subr.bf16.mxu0 0
    %9442 = vmatpush1.bf16.msra.mxu0 %v9413
    %9443 = vmatprep.subr.bf16.mxu0 0
    %9444 = vmatpush1.bf16.msra.mxu0 %v9427
    %9445 = vmatprep.subr.bf16.mxu0 0
    %9446 = vmatpush1.bf16.msra.mxu0 0
    %9447 = vmatprep.subr.bf16.mxu0 0
    %9448 = vmatpush1.bf16.msra.mxu0 0
    %9449 = vmatprep.subr.bf16.mxu0 0
    %9450 = vmatpush1.bf16.msra.mxu0 0
    %9451 = vmatprep.subr.bf16.mxu0 0
    %9452 = vmatpush1.bf16.msra.mxu0 0
    %9453 = vmatprep.subr.bf16.mxu0 0
    %9454 = vmatpush1.bf16.msra.mxu0 0
    %9455 = vmatprep.subr.bf16.mxu0 0
    %9456 = vmatpush1.bf16.msra.mxu0 0
    %9457 = vmatprep.subr.bf16.mxu0 0
    %9458 = vmatpush1.bf16.msra.mxu0 0
    %9459 = vmatprep.subr.bf16.mxu0 0
    %9460 = vmatpush1.bf16.msra.mxu0 0
    %9461 = vmatprep.mubr.bf16.mxu0 0
    %9462 = vmatmul.mubr.bf16.gmra.mrb[0].mxu0 %v9424
    %v9463 = vpop.f32.mrb[0].mxu0
    %v9464 = vadd.f32 %v9375, %v9463
    %v9465 = vpop.f32.mrb[0].mxu0
    %v9466 = vpop.f32.mrb[0].mxu0
    %v9467 = vpop.f32.mrb[0].mxu0
    %9468 = vdwg.mxu0
    %v9469 = vtanh.pop %v9464
    %v9470 = vpack.c.bf16 %v9469, %v9469
    %v9471 = vld [vmem:[#allocation9] sm:$0xf]
    %v9472 = vld [vmem:[#allocation9 + $0x4] sm:$0xf]
    %v9473 = vld [vmem:[#allocation9 + $0x8] sm:$0xf]
    %v9474 = vld [vmem:[#allocation9 + $0xc] sm:$0xf]
    %v9475 = vld [vmem:[#allocation9 + $0x10] sm:$0xf]
    %v9476 = vld [vmem:[#allocation9 + $0x14] sm:$0xf]
    %v9477 = vld [vmem:[#allocation9 + $0x18] sm:$0xf]
    %v9478 = vld [vmem:[#allocation9 + $0x1c] sm:$0xf]
    %v9479 = vld [vmem:[#allocation9 + $0x20] sm:$0xf]
    %v9480 = vld [vmem:[#allocation9 + $0x24] sm:$0xf]
    %v9481 = vld [vmem:[#allocation9 + $0x28] sm:$0x3]
    %v9482 = vld [vmem:[#allocation10] sm:$0x1]
    %v9484 = vlaneseq
    %v9485 = vshrl.u32 %v9484, 7
    %v9486 = vsub.s32 0, %v9485
    %v9487 = vrot.slane %v9482, %v9486
    %v9500 = vunpack.c.l.b16 %v9471
    %v9501 = vunpack.c.l.b16 %v9472
    %v9502 = vunpack.c.l.b16 %v9473
    %v9503 = vunpack.c.l.b16 %v9474
    %v9504 = vunpack.c.l.b16 %v9475
    %v9505 = vunpack.c.l.b16 %v9476
    %v9506 = vunpack.c.l.b16 %v9477
    %v9507 = vunpack.c.l.b16 %v9478
    %v9508 = vunpack.c.l.b16 %v9479
    %v9509 = vunpack.c.l.b16 %v9480
    %v9510 = vunpack.c.l.b16 %v9481
    %v9511 = vpack.c.b16 %v9501, %v9500
    %v9512 = vpack.c.b16 %v9503, %v9502
    %v9513 = vpack.c.b16 %v9505, %v9504
    %v9514 = vpack.c.b16 %v9507, %v9506
    %v9515 = vpack.c.b16 %v9509, %v9508
    %v9516 = vpack.c.b16 %v9510, %v9510
    %vm9522 = vcmask 687104
    %v9524 = vsel %vm9522, %v9470, 0
    %vm9526 = vcmask 1041408
    %v9528 = vsel %vm9526, %v9516, 0
    %9530 = vmatprep.subr.bf16.mxu0 0
    %9531 = vmatpush1.bf16.msra.mxu0 %v9511
    %9532 = vmatprep.subr.bf16.mxu0 0
    %9533 = vmatpush1.bf16.msra.mxu0 %v9512
    %9534 = vmatprep.subr.bf16.mxu0 0
    %9535 = vmatpush1.bf16.msra.mxu0 %v9513
    %9536 = vmatprep.subr.bf16.mxu0 0
    %9537 = vmatpush1.bf16.msra.mxu0 %v9514
    %9538 = vmatprep.subr.bf16.mxu0 0
    %9539 = vmatpush1.bf16.msra.mxu0 %v9515
    %9540 = vmatprep.subr.bf16.mxu0 0
    %9541 = vmatpush1.bf16.msra.mxu0 %v9528
    %9542 = vmatprep.subr.bf16.mxu0 0
    %9543 = vmatpush1.bf16.msra.mxu0 0
    %9544 = vmatprep.subr.bf16.mxu0 0
    %9545 = vmatpush1.bf16.msra.mxu0 0
    %9546 = vmatprep.subr.bf16.mxu0 0
    %9547 = vmatpush1.bf16.msra.mxu0 0
    %9548 = vmatprep.subr.bf16.mxu0 0
    %9549 = vmatpush1.bf16.msra.mxu0 0
    %9550 = vmatprep.subr.bf16.mxu0 0
    %9551 = vmatpush1.bf16.msra.mxu0 0
    %9552 = vmatprep.subr.bf16.mxu0 0
    %9553 = vmatpush1.bf16.msra.mxu0 0
    %9554 = vmatprep.subr.bf16.mxu0 0
    %9555 = vmatpush1.bf16.msra.mxu0 0
    %9556 = vmatprep.subr.bf16.mxu0 0
    %9557 = vmatpush1.bf16.msra.mxu0 0
    %9558 = vmatprep.subr.bf16.mxu0 0
    %9559 = vmatpush1.bf16.msra.mxu0 0
    %9560 = vmatprep.subr.bf16.mxu0 0
    %9561 = vmatpush1.bf16.msra.mxu0 0
    %9562 = vmatprep.mubr.bf16.mxu0 0
    %9563 = vmatmul.mubr.bf16.gmra.mrb[0].mxu0 %v9524
    %v9564 = vpop.f32.mrb[0].mxu0
    %v9565 = vadd.f32 %v9487, %v9564
    %v9566 = vpop.f32.mrb[0].mxu0
    %v9567 = vpop.f32.mrb[0].mxu0
    %v9568 = vpop.f32.mrb[0].mxu0
    %9569 = vdwg.mxu0
    %9570 = vst [vmem:[%s13] sm:$0xff] %v9565
    // Predicated region
    $region78: #{lenet5_tanh_forward.1} parent=1 // pred_check
      _
    $region79: #{lenet5_tanh_forward.1} parent=1 // pred_check_branch
      %9572 = sbr.rel (0) target = $region81
    $region80: #{lenet5_tanh_forward.1} parent=1 // pred_region
      _
    $region81: #{lenet5_tanh_forward.1} parent=1 // pred_fallthru
      _
    // Predicated region
    $region82: #{lenet5_tanh_forward.1} parent=1 // pred_check
      _
    $region83: #{lenet5_tanh_forward.1} parent=1 // pred_check_branch
      %9574 = sbr.rel (0) target = $region85
    $region84: #{lenet5_tanh_forward.1} parent=1 // pred_region
      _
    $region85: #{lenet5_tanh_forward.1} parent=1 // pred_fallthru
      _
    %9575 = vsyncpa [#allocation3], 1
    %9576 = vsyncpa [#allocation5], 1
    %9577 = vsyncpa [#allocation8], 1
    %9578 = vsyncpa [#allocation11], 1

</llo_original>
